<compile_context>
chip_gen: v7x
topology: tpu7x:2x2x1
jax: 0.10.0
libtpu: 0.0.40
codegen_flags: <defaults>
</compile_context>

<pallas_src>
import math

import jax
import jax.numpy as jnp
from jax import lax
from jax.experimental import pallas as pl
from jax.experimental.pallas import tpu as pltpu


def _round_up(x, m):
    return ((x + m - 1) // m) * m


def _pick_fold(c4i, c4m, c4o, weight_budget=8 << 20, cap=64):
    """Pixel-group fold factor G: output lanes a multiple of 128, all streams
    lane-dense, block-diagonal weights within a VMEM budget."""
    def wbytes(g):
        return 2 * g * g * (c4i * c4m + c4m * c4o)   # bf16 wp_blk + wc_blk
    g = 128 // math.gcd(c4o, 128)                    # G*c4o % 128 == 0
    while g > 1 and wbytes(g) > weight_budget:
        g //= 2
    while (g * min(c4i, c4m, c4o) < 128 and g * 2 <= cap
           and wbytes(g * 2) <= weight_budget):
        g *= 2
    return max(g, 1)


def _pick_tile_rows(n_rows, g, c4i, c4m, c4o, vmem_budget=20 << 20, max_rows=1024):
    """Folded-row tile size from a kernel-2 VMEM model (double-buffered taps/out
    blocks + f32 intermediates + resident block-diag weights)."""
    per_row = 2 * (g * c4i * 2) + 2 * (g * c4o * 4) + 2 * (g * c4m * 4)
    weight_bytes = 2 * 2 * g * g * (c4i * c4m + c4m * c4o)
    avail = max(vmem_budget - weight_bytes, 8 * per_row)
    cap = max(8, min((avail // per_row) // 8 * 8, max_rows))
    tr = min(cap, _round_up(n_rows, 8))
    if tr >= n_rows and n_rows > 8:          # keep >=2 grid steps for v7x's 2 TCs
        tr = min(tr, _round_up((n_rows + 1) // 2, 8))
    return max(tr, 8)


def _stats_kernel(taps_ref, wp_ref, psum_ref, psq_ref):
    # taps_ref: (TR, G*4*Cin) bf16, wp_ref: (G*4*Cin, G*4*Cmid) bf16 block-diag.
    # Emits per-tile BN partial sums; cross-sublane reduce lands on the idle XLU.
    h = jnp.dot(taps_ref[...], wp_ref[...], preferred_element_type=jnp.float32)
    psum_ref[...] = jnp.sum(h, axis=0, keepdims=True)[None]
    psq_ref[...] = jnp.sum(h * h, axis=0, keepdims=True)[None]


def _fused_kernel(taps_ref, wp_ref, scale_ref, shift_ref, wc_ref, bc_ref, o_ref):
    # Recompute h in f32 (no HBM round trip), then fused BN + ReLU + 1x1 conv
    # with a block-diagonal weight (no layout shuffle of folded activations).
    h = jnp.dot(taps_ref[...], wp_ref[...], preferred_element_type=jnp.float32)
    a = jnp.maximum(h * scale_ref[...] + shift_ref[...], 0.0)
    o_ref[...] = (
        jnp.dot(a.astype(jnp.bfloat16), wc_ref[...], preferred_element_type=jnp.float32)
        + bc_ref[...]
    )


def part_seg_forward(x, w_deconv, bn_gamma, bn_beta, w_conv, b_conv, eps=1e-5):
    """x: (N, Cin, H, W) NCHW.  Returns (N, num_classes, 2H, 2W) NCHW."""
    N, Cin, H, W = x.shape
    Cmid = w_deconv.shape[1]
    Cout = w_conv.shape[0]
    OH, OW = 2 * H, 2 * W
    Mi = N * H * W                 # input pixels
    M = N * OH * OW                # output pixels (BN sample count)
    C4i, C4m, C4o = 4 * Cin, 4 * Cmid, 4 * Cout

    G = _pick_fold(C4i, C4m, C4o)
    GKi, GKm, GKo = G * C4i, G * C4m, G * C4o

    # ---- 4-tap neighbourhood of x (NHWC, bf16 cast first) ----
    x_nhwc = jnp.transpose(x, (0, 2, 3, 1)).astype(jnp.bfloat16)
    x_p = jnp.pad(x_nhwc, ((0, 0), (0, 1), (0, 1), (0, 0)))   # bottom/right halo = 0
    taps = jnp.concatenate(
        [x_p[:, di:di + H, dj:dj + W, :] for di in (0, 1) for dj in (0, 1)],
        axis=-1).reshape(Mi, C4i)
    # TODO(synk): gather the 4-tap halo in-kernel from a raw bf16 x_nhwc HBM ref
    # (pl.ANY + manual halo DMA) to drop this remaining (Mi, 4*Cin) wrapper slab.

    # phase-blocked deconv weight (tap blocks x phase blocks), then block-diag over G
    cfg = [(0, 0, 1), (1, 0, 2), (1, 1, 0)]   # (output_parity, input_offset, kernel_tap)
    wp = jnp.zeros((4, Cin, 4, Cmid), jnp.float32)
    for dh, di, kh in cfg:
        for dw, dj, kw in cfg:
            wp = wp.at[2 * di + dj, :, 2 * dh + dw, :].set(w_deconv[:, :, kh, kw])
    wp = wp.reshape(C4i, C4m)
    wp_blk = jnp.kron(jnp.eye(G, dtype=jnp.float32), wp).astype(jnp.bfloat16)

    # ---- fold G pixels into the lane axis and tile the folded-row axis ----
    n_rows = -(-Mi // G)
    tile_rows = _pick_tile_rows(n_rows, G, C4i, C4m, C4o)
    rows_pad = _round_up(n_rows, tile_rows)
    grid = (rows_pad // tile_rows,)
    pad_pix = rows_pad * G - Mi
    if pad_pix:
        taps = jnp.pad(taps, ((0, pad_pix), (0, 0)))   # zero rows: h==0, stats exact
    taps = taps.reshape(rows_pad, GKi)

    cparams = pltpu.CompilerParams(
        dimension_semantics=("parallel",), vmem_limit_bytes=32 * 1024 * 1024)

    # ---- kernel 1: phase-blocked deconv matmul + per-tile BN partials ----
    psum, psq = pl.pallas_call(
        _stats_kernel,
        out_shape=(
            jax.ShapeDtypeStruct((grid[0], 1, GKm), jnp.float32),
            jax.ShapeDtypeStruct((grid[0], 1, GKm), jnp.float32),
        ),
        grid_spec=pltpu.PrefetchScalarGridSpec(
            num_scalar_prefetch=0,
            grid=grid,
            in_specs=[
                pl.BlockSpec((tile_rows, GKi), lambda i: (i, 0)),
                pl.BlockSpec((GKi, GKm), lambda i: (0, 0)),
            ],
            out_specs=[
                pl.BlockSpec((1, 1, GKm), lambda i: (i, 0, 0)),
                pl.BlockSpec((1, 1, GKm), lambda i: (i, 0, 0)),
            ],
        ),
        compiler_params=cparams,
    )(taps, wp_blk)

    # ---- BatchNorm2d batch statistics (training mode, PyTorch default) ----
    s_sum = jnp.sum(psum, axis=(0, 1)).reshape(G * 4, Cmid).sum(axis=0)
    s_sq = jnp.sum(psq, axis=(0, 1)).reshape(G * 4, Cmid).sum(axis=0)
    mean = s_sum / M
    var = jnp.maximum(s_sq / M - mean * mean, 0.0)     # biased variance
    inv_std = lax.rsqrt(var + eps)
    scale = bn_gamma * inv_std
    shift = bn_beta - mean * scale
    scale_f = jnp.tile(scale, G * 4)[None, :]          # (1, G*4*Cmid), fold-blocked
    shift_f = jnp.tile(shift, G * 4)[None, :]
    # TODO(synk): running_mean/running_var momentum buffer updates are not
    # materialized (training-state side effect; forward output unaffected).
    # TODO(synk): E[x^2]-E[x]^2 can cancel for large-mean activations; switch to a
    # shifted/Welford accumulation if this head sees non-toy activation scales.

    # block-diagonal 1x1-conv weight (one copy per pixel-in-group x phase) + bias
    wc = w_conv.reshape(Cout, Cmid).T                                   # (Cmid, Cout)
    wc_blk = jnp.kron(jnp.eye(4 * G, dtype=jnp.float32), wc).astype(jnp.bfloat16)
    bc = jnp.tile(b_conv.astype(jnp.float32), 4 * G)[None, :]           # (1, G*4*Cout)

    # ---- kernel 2: recompute h (f32) + fused BN + ReLU + 1x1 conv ----
    out_f = pl.pallas_call(
        _fused_kernel,
        out_shape=jax.ShapeDtypeStruct((rows_pad, GKo), jnp.float32),
        grid_spec=pltpu.PrefetchScalarGridSpec(
            num_scalar_prefetch=0,
            grid=grid,
            in_specs=[
                pl.BlockSpec((tile_rows, GKi), lambda i: (i, 0)),
                pl.BlockSpec((GKi, GKm), lambda i: (0, 0)),
                pl.BlockSpec((1, GKm), lambda i: (0, 0)),
                pl.BlockSpec((1, GKm), lambda i: (0, 0)),
                pl.BlockSpec((GKm, GKo), lambda i: (0, 0)),
                pl.BlockSpec((1, GKo), lambda i: (0, 0)),
            ],
            out_specs=pl.BlockSpec((tile_rows, GKo), lambda i: (i, 0)),
        ),
        compiler_params=cparams,
    )(taps, wp_blk, scale_f, shift_f, wc_blk, bc)

    # Single layout pass back to NCHW (also undoes the phase/group blocking).
    # TODO(synk): fold this de-phase transpose into kernel 2's output path when
    # OW is >=128-lane friendly; at small widths XLA's single copy is cheaper.
    out = out_f.reshape(rows_pad * G, C4o)[:Mi].reshape(N, H, W, 2, 2, Cout)
    out = out.transpose(0, 5, 1, 3, 2, 4).reshape(N, Cout, OH, OW)
    return out


def reference_forward(x, w_deconv, bn_gamma, bn_beta, w_conv, b_conv, eps=1e-5):
    """Pure-JAX f32 reference of the PyTorch forward (training-mode BatchNorm)."""
    Cout = w_conv.shape[0]
    w_equiv = jnp.transpose(w_deconv[:, :, ::-1, ::-1], (1, 0, 2, 3))   # (Cmid,Cin,3,3)
    y = lax.conv_general_dilated(
        x, w_equiv, window_strides=(1, 1), padding=((1, 2), (1, 2)),
        lhs_dilation=(2, 2), dimension_numbers=("NCHW", "OIHW", "NCHW"))
    mean = jnp.mean(y, axis=(0, 2, 3), keepdims=True)
    var = jnp.mean((y - mean) ** 2, axis=(0, 2, 3), keepdims=True)
    yn = (y - mean) * lax.rsqrt(var + eps)
    yn = yn * bn_gamma[None, :, None, None] + bn_beta[None, :, None, None]
    a = jnp.maximum(yn, 0.0)
    out = jnp.einsum("nchw,oc->nohw", a, w_conv.reshape(Cout, -1))
    return out + b_conv[None, :, None, None]


if __name__ == "__main__":
    key = jax.random.PRNGKey(0)
    N, Cin, H, W = 2, 4, 16, 16
    Cmid, Cout = 8, 5
    k1, k2, k3, k4, k5, k6 = jax.random.split(key, 6)

    x = jax.random.normal(k1, (N, Cin, H, W), jnp.float32)
    # parameters consistent with the PyTorch module (deconv/conv std=0.001), with
    # small perturbations on BN affine / conv bias so those paths are exercised.
    w_deconv = 0.001 * jax.random.normal(k2, (Cin, Cmid, 3, 3), jnp.float32)
    w_conv = 0.001 * jax.random.normal(k3, (Cout, Cmid, 1, 1), jnp.float32)
    b_conv = 0.001 * jax.random.normal(k4, (Cout,), jnp.float32)
    bn_gamma = 1.0 + 0.1 * jax.random.normal(k5, (Cmid,), jnp.float32)
    bn_beta = 0.1 * jax.random.normal(k6, (Cmid,), jnp.float32)

    out = jax.jit(part_seg_forward)(x, w_deconv, bn_gamma, bn_beta, w_conv, b_conv)
    out = jax.block_until_ready(out)

    ref = reference_forward(x, w_deconv, bn_gamma, bn_beta, w_conv, b_conv)
    assert out.shape == (N, Cout, 2 * H, 2 * W), out.shape
    # bf16 matmul operands (x, deconv/conv weights, post-BN activations) give an
    # expected relative error of ~1% of the output scale vs the f32 reference.
    err = float(jnp.max(jnp.abs(out - ref)))
    ref_scale = float(jnp.max(jnp.abs(ref)))
    assert err <= 5e-2 * ref_scale + 1e-6, f"max abs err {err} vs ref scale {ref_scale}"
    print("KERNEL_OK")
</pallas_src>

<mosaic_0001>
module attributes {stable_mosaic.version = 11 : i64} {
  func.func @_stats_kernel(%arg0: i32, %arg1: memref<8x512xbf16, #tpu.memory_space<vmem>>, %arg2: memref<512x1024xbf16, #tpu.memory_space<vmem>>, %arg3: memref<1x1x1024xf32, #tpu.memory_space<vmem>>, %arg4: memref<1x1x1024xf32, #tpu.memory_space<vmem>>) attributes {dimension_semantics = [#tpu.dimension_semantics<parallel>], iteration_bounds = array<i64: 2>, scalar_prefetch = 0 : i64, scratch_operands = 0 : i64, tpu.core_type = #tpu.core_type<tc>, window_params = [{transform_indices = @transform_0, window_bounds = array<i64: 8, 512>}, {pipeline_mode = #tpu.pipeline_mode<synchronous>, transform_indices = @transform_1, window_bounds = array<i64: 512, 1024>}, {transform_indices = @transform_2, window_bounds = array<i64: 1, 1, 1024>}, {transform_indices = @transform_3, window_bounds = array<i64: 1, 1, 1024>}]} {
    %c0 = arith.constant 0 : index
    %c0_0 = arith.constant 0 : index
    %0 = vector.load %arg1[%c0, %c0_0] : memref<8x512xbf16, #tpu.memory_space<vmem>>, vector<8x512xbf16>
    %c0_1 = arith.constant 0 : index
    %c0_2 = arith.constant 0 : index
    %1 = vector.load %arg2[%c0_1, %c0_2] : memref<512x1024xbf16, #tpu.memory_space<vmem>>, vector<512x1024xbf16>
    %cst = arith.constant dense<0.000000e+00> : vector<8x1024xf32>
    %2 = tpu.matmul %0, %1, %cst {dimension_numbers = #tpu.dot_dimension_numbers<[1], [0], [0], [1], [0, 0, 1, 1], [], []>} : vector<8x512xbf16>, vector<512x1024xbf16>, vector<8x1024xf32> -> vector<8x1024xf32>
    %cst_3 = arith.constant dense<0.000000e+00> : vector<1024xf32>
    %3 = vector.multi_reduction <add>, %2, %cst_3 [0] : vector<8x1024xf32> to vector<1024xf32>
    %4 = vector.shape_cast %3 : vector<1024xf32> to vector<1x1024xf32>
    %5 = vector.shape_cast %4 : vector<1x1024xf32> to vector<1x1x1024xf32>
    %c0_4 = arith.constant 0 : index
    %c0_5 = arith.constant 0 : index
    %c0_6 = arith.constant 0 : index
    %6 = vector.load %arg3[%c0_4, %c0_5, %c0_6] : memref<1x1x1024xf32, #tpu.memory_space<vmem>>, vector<1x1x1024xf32>
    tpu.vector_store %arg3[%c0_4, %c0_5, %c0_6], %5 {strides = array<i32>} : memref<1x1x1024xf32, #tpu.memory_space<vmem>>, vector<1x1x1024xf32>,
    %7 = arith.mulf %2, %2 : vector<8x1024xf32>
    %cst_7 = arith.constant dense<0.000000e+00> : vector<1024xf32>
    %8 = vector.multi_reduction <add>, %7, %cst_7 [0] : vector<8x1024xf32> to vector<1024xf32>
    %9 = vector.shape_cast %8 : vector<1024xf32> to vector<1x1024xf32>
    %10 = vector.shape_cast %9 : vector<1x1024xf32> to vector<1x1x1024xf32>
    %c0_8 = arith.constant 0 : index
    %c0_9 = arith.constant 0 : index
    %c0_10 = arith.constant 0 : index
    %11 = vector.load %arg4[%c0_8, %c0_9, %c0_10] : memref<1x1x1024xf32, #tpu.memory_space<vmem>>, vector<1x1x1024xf32>
    tpu.vector_store %arg4[%c0_8, %c0_9, %c0_10], %10 {strides = array<i32>} : memref<1x1x1024xf32, #tpu.memory_space<vmem>>, vector<1x1x1024xf32>,
    return
  }
  func.func @transform_0(%arg0: i32) -> (i32, i32) {
    %c0_i32 = arith.constant 0 : i32
    %c0_i32_0 = arith.constant 0 : i32
    return %arg0, %c0_i32 : i32, i32
  }
  func.func @transform_1(%arg0: i32) -> (i32, i32) {
    %c0_i32 = arith.constant 0 : i32
    %c0_i32_0 = arith.constant 0 : i32
    %c0_i32_1 = arith.constant 0 : i32
    return %c0_i32, %c0_i32_0 : i32, i32
  }
  func.func @transform_2(%arg0: i32) -> (i32, i32, i32) {
    %c0_i32 = arith.constant 0 : i32
    %c0_i32_0 = arith.constant 0 : i32
    %c0_i32_1 = arith.constant 0 : i32
    return %arg0, %c0_i32, %c0_i32_0 : i32, i32, i32
  }
  func.func @transform_3(%arg0: i32) -> (i32, i32, i32) {
    %c0_i32 = arith.constant 0 : i32
    %c0_i32_0 = arith.constant 0 : i32
    %c0_i32_1 = arith.constant 0 : i32
    return %arg0, %c0_i32, %c0_i32_0 : i32, i32, i32
  }
}

module attributes {stable_mosaic.version = 11 : i64} {
  func.func @_fused_kernel(%arg0: i32, %arg1: memref<8x512xbf16, #tpu.memory_space<vmem>>, %arg2: memref<512x1024xbf16, #tpu.memory_space<vmem>>, %arg3: memref<1x1024xf32, #tpu.memory_space<vmem>>, %arg4: memref<1x1024xf32, #tpu.memory_space<vmem>>, %arg5: memref<1024x640xbf16, #tpu.memory_space<vmem>>, %arg6: memref<1x640xf32, #tpu.memory_space<vmem>>, %arg7: memref<8x640xf32, #tpu.memory_space<vmem>>) attributes {dimension_semantics = [#tpu.dimension_semantics<parallel>], iteration_bounds = array<i64: 2>, scalar_prefetch = 0 : i64, scratch_operands = 0 : i64, tpu.core_type = #tpu.core_type<tc>, window_params = [{transform_indices = @transform_0, window_bounds = array<i64: 8, 512>}, {pipeline_mode = #tpu.pipeline_mode<synchronous>, transform_indices = @transform_1, window_bounds = array<i64: 512, 1024>}, {pipeline_mode = #tpu.pipeline_mode<synchronous>, transform_indices = @transform_2, window_bounds = array<i64: 1, 1024>}, {pipeline_mode = #tpu.pipeline_mode<synchronous>, transform_indices = @transform_3, window_bounds = array<i64: 1, 1024>}, {pipeline_mode = #tpu.pipeline_mode<synchronous>, transform_indices = @transform_4, window_bounds = array<i64: 1024, 640>}, {pipeline_mode = #tpu.pipeline_mode<synchronous>, transform_indices = @transform_5, window_bounds = array<i64: 1, 640>}, {transform_indices = @transform_6, window_bounds = array<i64: 8, 640>}]} {
    %c0 = arith.constant 0 : index
    %c0_0 = arith.constant 0 : index
    %0 = vector.load %arg1[%c0, %c0_0] : memref<8x512xbf16, #tpu.memory_space<vmem>>, vector<8x512xbf16>
    %c0_1 = arith.constant 0 : index
    %c0_2 = arith.constant 0 : index
    %1 = vector.load %arg2[%c0_1, %c0_2] : memref<512x1024xbf16, #tpu.memory_space<vmem>>, vector<512x1024xbf16>
    %cst = arith.constant dense<0.000000e+00> : vector<8x1024xf32>
    %2 = tpu.matmul %0, %1, %cst {dimension_numbers = #tpu.dot_dimension_numbers<[1], [0], [0], [1], [0, 0, 1, 1], [], []>} : vector<8x512xbf16>, vector<512x1024xbf16>, vector<8x1024xf32> -> vector<8x1024xf32>
    %c0_3 = arith.constant 0 : index
    %c0_4 = arith.constant 0 : index
    %3 = vector.load %arg3[%c0_3, %c0_4] : memref<1x1024xf32, #tpu.memory_space<vmem>>, vector<1x1024xf32>
    %4 = vector.broadcast %3 : vector<1x1024xf32> to vector<8x1024xf32>
    %5 = arith.mulf %2, %4 : vector<8x1024xf32>
    %c0_5 = arith.constant 0 : index
    %c0_6 = arith.constant 0 : index
    %6 = vector.load %arg4[%c0_5, %c0_6] : memref<1x1024xf32, #tpu.memory_space<vmem>>, vector<1x1024xf32>
    %7 = vector.broadcast %6 : vector<1x1024xf32> to vector<8x1024xf32>
    %8 = arith.addf %5, %7 : vector<8x1024xf32>
    %cst_7 = arith.constant 0.000000e+00 : f32
    %9 = vector.broadcast %cst_7 : f32 to vector<8x1024xf32>
    %10 = arith.maximumf %8, %9 : vector<8x1024xf32>
    %11 = arith.truncf %10 : vector<8x1024xf32> to vector<8x1024xbf16>
    %c0_8 = arith.constant 0 : index
    %c0_9 = arith.constant 0 : index
    %12 = vector.load %arg5[%c0_8, %c0_9] : memref<1024x640xbf16, #tpu.memory_space<vmem>>, vector<1024x640xbf16>
    %cst_10 = arith.constant dense<0.000000e+00> : vector<8x640xf32>
    %13 = tpu.matmul %11, %12, %cst_10 {dimension_numbers = #tpu.dot_dimension_numbers<[1], [0], [0], [1], [0, 0, 1, 1], [], []>} : vector<8x1024xbf16>, vector<1024x640xbf16>, vector<8x640xf32> -> vector<8x640xf32>
    %c0_11 = arith.constant 0 : index
    %c0_12 = arith.constant 0 : index
    %14 = vector.load %arg6[%c0_11, %c0_12] : memref<1x640xf32, #tpu.memory_space<vmem>>, vector<1x640xf32>
    %15 = vector.broadcast %14 : vector<1x640xf32> to vector<8x640xf32>
    %16 = arith.addf %13, %15 : vector<8x640xf32>
    %c0_13 = arith.constant 0 : index
    %c0_14 = arith.constant 0 : index
    %17 = vector.load %arg7[%c0_13, %c0_14] : memref<8x640xf32, #tpu.memory_space<vmem>>, vector<8x640xf32>
    tpu.vector_store %arg7[%c0_13, %c0_14], %16 {strides = array<i32>} : memref<8x640xf32, #tpu.memory_space<vmem>>, vector<8x640xf32>,
    return
  }
  func.func @transform_0(%arg0: i32) -> (i32, i32) {
    %c0_i32 = arith.constant 0 : i32
    %c0_i32_0 = arith.constant 0 : i32
    return %arg0, %c0_i32 : i32, i32
  }
  func.func @transform_1(%arg0: i32) -> (i32, i32) {
    %c0_i32 = arith.constant 0 : i32
    %c0_i32_0 = arith.constant 0 : i32
    %c0_i32_1 = arith.constant 0 : i32
    return %c0_i32, %c0_i32_0 : i32, i32
  }
  func.func @transform_2(%arg0: i32) -> (i32, i32) {
    %c0_i32 = arith.constant 0 : i32
    %c0_i32_0 = arith.constant 0 : i32
    %c0_i32_1 = arith.constant 0 : i32
    return %c0_i32, %c0_i32_0 : i32, i32
  }
  func.func @transform_3(%arg0: i32) -> (i32, i32) {
    %c0_i32 = arith.constant 0 : i32
    %c0_i32_0 = arith.constant 0 : i32
    %c0_i32_1 = arith.constant 0 : i32
    return %c0_i32, %c0_i32_0 : i32, i32
  }
  func.func @transform_4(%arg0: i32) -> (i32, i32) {
    %c0_i32 = arith.constant 0 : i32
    %c0_i32_0 = arith.constant 0 : i32
    %c0_i32_1 = arith.constant 0 : i32
    return %c0_i32, %c0_i32_0 : i32, i32
  }
  func.func @transform_5(%arg0: i32) -> (i32, i32) {
    %c0_i32 = arith.constant 0 : i32
    %c0_i32_0 = arith.constant 0 : i32
    %c0_i32_1 = arith.constant 0 : i32
    return %c0_i32, %c0_i32_0 : i32, i32
  }
  func.func @transform_6(%arg0: i32) -> (i32, i32) {
    %c0_i32 = arith.constant 0 : i32
    %c0_i32_0 = arith.constant 0 : i32
    return %arg0, %c0_i32 : i32, i32
  }
}

</mosaic_0001>

<llo_original>
// kernel: mul.4
$region0: #{mul.4}
  %s0 = inlined_call_operand.vmem [shape: f32[4,4,4,8], index: 0, kind: input, shape index: {}]
  %s1 = inlined_call_operand.vmem [shape: f32[16,32], index: 1, kind: output, shape index: {}]
  $region1: #{mul.4} parent=0
    #allocation0 [shape = 'u8[65536]{0}', space=vmem, size = 0x10000, scoped, tag = 'scoped mem for input reshape']
    %s3 = sshllo.u32 0, 4
    %s4 = smul.addr 4, 15
    %s5 = scalar_lea.vmem %s0, %s4
    %v6 = vld [vmem:[%s5] sm:%s3]
    %s7 = scalar_lea.vmem [#allocation0], 120
    %8 = vst [vmem:[%s7] sm:%s3] %v6
    %s9 = smul.addr 4, 14
    %s10 = scalar_lea.vmem %s0, %s9
    %v11 = vld [vmem:[%s10] sm:%s3]
    %s12 = scalar_lea.vmem [#allocation0], 112
    %13 = vst [vmem:[%s12] sm:%s3] %v11
    %s14 = smul.addr 4, 13
    %s15 = scalar_lea.vmem %s0, %s14
    %v16 = vld [vmem:[%s15] sm:%s3]
    %s17 = scalar_lea.vmem [#allocation0], 104
    %18 = vst [vmem:[%s17] sm:%s3] %v16
    %s19 = smul.addr 4, 12
    %s20 = scalar_lea.vmem %s0, %s19
    %v21 = vld [vmem:[%s20] sm:%s3]
    %s22 = scalar_lea.vmem [#allocation0], 96
    %23 = vst [vmem:[%s22] sm:%s3] %v21
    %s24 = smul.addr 4, 11
    %s25 = scalar_lea.vmem %s0, %s24
    %v26 = vld [vmem:[%s25] sm:%s3]
    %s27 = scalar_lea.vmem [#allocation0], 88
    %28 = vst [vmem:[%s27] sm:%s3] %v26
    %s29 = smul.addr 4, 10
    %s30 = scalar_lea.vmem %s0, %s29
    %v31 = vld [vmem:[%s30] sm:%s3]
    %s32 = scalar_lea.vmem [#allocation0], 80
    %33 = vst [vmem:[%s32] sm:%s3] %v31
    %s34 = smul.addr 4, 9
    %s35 = scalar_lea.vmem %s0, %s34
    %v36 = vld [vmem:[%s35] sm:%s3]
    %s37 = scalar_lea.vmem [#allocation0], 72
    %38 = vst [vmem:[%s37] sm:%s3] %v36
    %s39 = smul.addr 4, 8
    %s40 = scalar_lea.vmem %s0, %s39
    %v41 = vld [vmem:[%s40] sm:%s3]
    %s42 = scalar_lea.vmem [#allocation0], 64
    %43 = vst [vmem:[%s42] sm:%s3] %v41
    %s44 = smul.addr 4, 7
    %s45 = scalar_lea.vmem %s0, %s44
    %v46 = vld [vmem:[%s45] sm:%s3]
    %s47 = scalar_lea.vmem [#allocation0], 56
    %48 = vst [vmem:[%s47] sm:%s3] %v46
    %s49 = smul.addr 4, 6
    %s50 = scalar_lea.vmem %s0, %s49
    %v51 = vld [vmem:[%s50] sm:%s3]
    %s52 = scalar_lea.vmem [#allocation0], 48
    %53 = vst [vmem:[%s52] sm:%s3] %v51
    %s54 = smul.addr 4, 5
    %s55 = scalar_lea.vmem %s0, %s54
    %v56 = vld [vmem:[%s55] sm:%s3]
    %s57 = scalar_lea.vmem [#allocation0], 40
    %58 = vst [vmem:[%s57] sm:%s3] %v56
    %s59 = smul.addr 4, 4
    %s60 = scalar_lea.vmem %s0, %s59
    %v61 = vld [vmem:[%s60] sm:%s3]
    %s62 = scalar_lea.vmem [#allocation0], 32
    %63 = vst [vmem:[%s62] sm:%s3] %v61
    %s64 = smul.addr 4, 3
    %s65 = scalar_lea.vmem %s0, %s64
    %v66 = vld [vmem:[%s65] sm:%s3]
    %s67 = scalar_lea.vmem [#allocation0], 24
    %68 = vst [vmem:[%s67] sm:%s3] %v66
    %s69 = smul.addr 4, 2
    %s70 = scalar_lea.vmem %s0, %s69
    %v71 = vld [vmem:[%s70] sm:%s3]
    %s72 = scalar_lea.vmem [#allocation0], 16
    %73 = vst [vmem:[%s72] sm:%s3] %v71
    %s74 = scalar_lea.vmem %s0, 4
    %v75 = vld [vmem:[%s74] sm:%s3]
    %s76 = scalar_lea.vmem [#allocation0], 8
    %77 = vst [vmem:[%s76] sm:%s3] %v75
    %v78 = vld [vmem:[%s0] sm:%s3]
    %79 = vst [vmem:[#allocation0] sm:%s3] %v78
    %v80 = vld [vmem:[#allocation0] ss:$8 sm:$0xf]
    %v81 = vld [vmem:[#allocation0] ss:$8 sm:$0xf0]
    %vm82 = vcmask 1047556
    %v83 = vsel %vm82, %v81, %v80
    %vm84 = vcmask 64512
    %85 = vst.msk [vmem:[%s1] sm:$0xff] %vm84, %v83
    %s86 = scalar_lea.vmem [#allocation0], 64
    %v87 = vld [vmem:[%s86] ss:$8 sm:$0xf]
    %s88 = scalar_lea.vmem [#allocation0], 64
    %v89 = vld [vmem:[%s88] ss:$8 sm:$0xf0]
    %vm90 = vcmask 1047556
    %v91 = vsel %vm90, %v89, %v87
    %vm92 = vcmask 64512
    %s93 = scalar_lea.vmem %s1, 8
    %94 = vst.msk [vmem:[%s93] sm:$0xff] %vm92, %v91
    %s95 = scalar_lea.vmem [#allocation0], 3
    %v96 = vld [vmem:[%s95] ss:$8 sm:$0xf]
    %s97 = scalar_lea.vmem [#allocation0], 3
    %v98 = vld [vmem:[%s97] ss:$8 sm:$0xf0]
    %vm99 = vcmask 1047556
    %v100 = vsel %vm99, %v98, %v96
    %101 = vrot.lane.b32.xlu0 %v100, 24
    %v102 = vpop.permute.xlu0 %101
    %vm103 = vcmask 261312
    %104 = vst.msk [vmem:[%s1] sm:$0xff] %vm103, %v102
    %s105 = scalar_lea.vmem [#allocation0], 67
    %v106 = vld [vmem:[%s105] ss:$8 sm:$0xf]
    %s107 = scalar_lea.vmem [#allocation0], 67
    %v108 = vld [vmem:[%s107] ss:$8 sm:$0xf0]
    %vm109 = vcmask 1047556
    %v110 = vsel %vm109, %v108, %v106
    %111 = vrot.lane.b32.xlu0 %v110, 24
    %v112 = vpop.permute.xlu0 %111
    %vm113 = vcmask 261312
    %s114 = scalar_lea.vmem %s1, 8
    %115 = vst.msk [vmem:[%s114] sm:$0xff] %vm113, %v112
    %s116 = scalar_lea.vmem [#allocation0], 2
    %v117 = vld [vmem:[%s116] ss:$8 sm:$0xf]
    %s118 = scalar_lea.vmem [#allocation0], 2
    %v119 = vld [vmem:[%s118] ss:$8 sm:$0xf0]
    %vm120 = vcmask 1047556
    %v121 = vsel %vm120, %v119, %v117
    %122 = vrot.lane.b32.xlu0 %v121, 16
    %v123 = vpop.permute.xlu0 %122
    %vm124 = vcmask 195712
    %125 = vst.msk [vmem:[%s1] sm:$0xff] %vm124, %v123
    %s126 = scalar_lea.vmem [#allocation0], 66
    %v127 = vld [vmem:[%s126] ss:$8 sm:$0xf]
    %s128 = scalar_lea.vmem [#allocation0], 66
    %v129 = vld [vmem:[%s128] ss:$8 sm:$0xf0]
    %vm130 = vcmask 1047556
    %v131 = vsel %vm130, %v129, %v127
    %132 = vrot.lane.b32.xlu0 %v131, 16
    %v133 = vpop.permute.xlu0 %132
    %vm134 = vcmask 195712
    %s135 = scalar_lea.vmem %s1, 8
    %136 = vst.msk [vmem:[%s135] sm:$0xff] %vm134, %v133
    %s137 = scalar_lea.vmem [#allocation0], 1
    %v138 = vld [vmem:[%s137] ss:$8 sm:$0xf]
    %s139 = scalar_lea.vmem [#allocation0], 1
    %v140 = vld [vmem:[%s139] ss:$8 sm:$0xf0]
    %vm141 = vcmask 1047556
    %v142 = vsel %vm141, %v140, %v138
    %143 = vrot.lane.b32.xlu0 %v142, 8
    %v144 = vpop.permute.xlu0 %143
    %vm145 = vcmask 130112
    %146 = vst.msk [vmem:[%s1] sm:$0xff] %vm145, %v144
    %s147 = scalar_lea.vmem [#allocation0], 65
    %v148 = vld [vmem:[%s147] ss:$8 sm:$0xf]
    %s149 = scalar_lea.vmem [#allocation0], 65
    %v150 = vld [vmem:[%s149] ss:$8 sm:$0xf0]
    %vm151 = vcmask 1047556
    %v152 = vsel %vm151, %v150, %v148
    %153 = vrot.lane.b32.xlu0 %v152, 8
    %v154 = vpop.permute.xlu0 %153
    %vm155 = vcmask 130112
    %s156 = scalar_lea.vmem %s1, 8
    %157 = vst.msk [vmem:[%s156] sm:$0xff] %vm155, %v154

// kernel: tile.18
$region0: #{tile.18}
  #allocation0 [shape = 's32[1]{0}', space=sflag, size = 0x4, scoped, tag = 'scoped memory for tile.18']
  %s0 = inlined_call_operand.vmem [shape: f32[8], index: 0, kind: input, shape index: {}]
  %s1 = inlined_call_operand.vmem [shape: f32[128,8], index: 1, kind: output, shape index: {}]
  // Predicated region
  $region2: #{tile.18} parent=0 // pred_check
    _
  $region3: #{tile.18} parent=0 // pred_check_branch
    %3 = sbr.rel (0) target = $region5
  $region4: #{tile.18} parent=0 // pred_region
    _
  $region5: #{tile.18} parent=0 // pred_fallthru
    _
  %v4 = vld [vmem:[%s0] ss:$0 sm:$0xff]
  %5 = vst [vmem:[%s1] sm:$0xff] %v4
  %s6 = scalar_lea.vmem %s1, 8
  %7 = vst [vmem:[%s6] sm:$0xff] %v4
  %s8 = scalar_lea.vmem %s1, 16
  %9 = vst [vmem:[%s8] sm:$0xff] %v4
  %s10 = scalar_lea.vmem %s1, 24
  %11 = vst [vmem:[%s10] sm:$0xff] %v4
  %s12 = scalar_lea.vmem %s1, 32
  %13 = vst [vmem:[%s12] sm:$0xff] %v4
  %s14 = scalar_lea.vmem %s1, 40
  %15 = vst [vmem:[%s14] sm:$0xff] %v4
  %s16 = scalar_lea.vmem %s1, 48
  %17 = vst [vmem:[%s16] sm:$0xff] %v4
  %s18 = scalar_lea.vmem %s1, 56
  %19 = vst [vmem:[%s18] sm:$0xff] %v4
  %s20 = scalar_lea.vmem %s1, 64
  %21 = vst [vmem:[%s20] sm:$0xff] %v4
  %s22 = scalar_lea.vmem %s1, 72
  %23 = vst [vmem:[%s22] sm:$0xff] %v4
  %s24 = scalar_lea.vmem %s1, 80
  %25 = vst [vmem:[%s24] sm:$0xff] %v4
  %s26 = scalar_lea.vmem %s1, 88
  %27 = vst [vmem:[%s26] sm:$0xff] %v4
  %s28 = scalar_lea.vmem %s1, 96
  %29 = vst [vmem:[%s28] sm:$0xff] %v4
  %s30 = scalar_lea.vmem %s1, 104
  %31 = vst [vmem:[%s30] sm:$0xff] %v4
  %s32 = scalar_lea.vmem %s1, 112
  %33 = vst [vmem:[%s32] sm:$0xff] %v4
  %s34 = scalar_lea.vmem %s1, 120
  %35 = vst [vmem:[%s34] sm:$0xff] %v4

// kernel: tile.19
$region0: #{tile.19}
  %s0 = inlined_call_operand.vmem [shape: f32[128,8], index: 0, kind: input, shape index: {}]
  %s1 = inlined_call_operand.vmem [shape: f32[1,1024], index: 1, kind: output, shape index: {}]
  $region1: #{tile.19} parent=0
    #allocation0 [shape = 'u8[32768]{0}', space=vmem, size = 0x8000, scoped, tag = 'scoped mem for output reshape']
    %s2 = smov 3
    %v3 = vld [vmem:[%s0] ss:$16 sm:%s2]
    %s4 = smov 12
    %v5 = vld [vmem:[%s0] ss:$16 sm:%s4]
    %vm6 = vcmask 1043458
    %v7 = vsel %vm6, %v5, %v3
    %s8 = smov 48
    %v9 = vld [vmem:[%s0] ss:$16 sm:%s8]
    %vm10 = vcmask 1045508
    %v11 = vsel %vm10, %v9, %v7
    %s12 = smov 192
    %v13 = vld [vmem:[%s0] ss:$16 sm:%s12]
    %vm14 = vcmask 1047558
    %v15 = vsel %vm14, %v13, %v11
    %vm16 = vcmask 64512
    %17 = vst.msk [vmem:[#allocation0] ss:$8 sm:$0xf] %vm16, %v15
    %18 = vst.msk [vmem:[#allocation0] ss:$8 sm:$0xf0] %vm16, %v15
    %s19 = scalar_lea.vmem %s0, 15
    %s20 = smov 3
    %v21 = vld [vmem:[%s19] ss:$16 sm:%s20]
    %s22 = scalar_lea.vmem %s0, 15
    %s23 = smov 12
    %v24 = vld [vmem:[%s22] ss:$16 sm:%s23]
    %vm25 = vcmask 1043458
    %v26 = vsel %vm25, %v24, %v21
    %s27 = scalar_lea.vmem %s0, 15
    %s28 = smov 48
    %v29 = vld [vmem:[%s27] ss:$16 sm:%s28]
    %vm30 = vcmask 1045508
    %v31 = vsel %vm30, %v29, %v26
    %s32 = scalar_lea.vmem %s0, 15
    %s33 = smov 192
    %v34 = vld [vmem:[%s32] ss:$16 sm:%s33]
    %vm35 = vcmask 1047558
    %v36 = vsel %vm35, %v34, %v31
    %37 = vrot.lane.b32.xlu0 %v36, 120
    %v38 = vpop.permute.xlu0 %37
    %vm39 = vcmask 1048512
    %40 = vst.msk [vmem:[#allocation0] ss:$8 sm:$0xf] %vm39, %v38
    %41 = vst.msk [vmem:[#allocation0] ss:$8 sm:$0xf0] %vm39, %v38
    %s42 = scalar_lea.vmem %s0, 14
    %s43 = smov 3
    %v44 = vld [vmem:[%s42] ss:$16 sm:%s43]
    %s45 = scalar_lea.vmem %s0, 14
    %s46 = smov 12
    %v47 = vld [vmem:[%s45] ss:$16 sm:%s46]
    %vm48 = vcmask 1043458
    %v49 = vsel %vm48, %v47, %v44
    %s50 = scalar_lea.vmem %s0, 14
    %s51 = smov 48
    %v52 = vld [vmem:[%s50] ss:$16 sm:%s51]
    %vm53 = vcmask 1045508
    %v54 = vsel %vm53, %v52, %v49
    %s55 = scalar_lea.vmem %s0, 14
    %s56 = smov 192
    %v57 = vld [vmem:[%s55] ss:$16 sm:%s56]
    %vm58 = vcmask 1047558
    %v59 = vsel %vm58, %v57, %v54
    %60 = vrot.lane.b32.xlu0 %v59, 112
    %v61 = vpop.permute.xlu0 %60
    %vm62 = vcmask 982912
    %63 = vst.msk [vmem:[#allocation0] ss:$8 sm:$0xf] %vm62, %v61
    %64 = vst.msk [vmem:[#allocation0] ss:$8 sm:$0xf0] %vm62, %v61
    %s65 = scalar_lea.vmem %s0, 13
    %s66 = smov 3
    %v67 = vld [vmem:[%s65] ss:$16 sm:%s66]
    %s68 = scalar_lea.vmem %s0, 13
    %s69 = smov 12
    %v70 = vld [vmem:[%s68] ss:$16 sm:%s69]
    %vm71 = vcmask 1043458
    %v72 = vsel %vm71, %v70, %v67
    %s73 = scalar_lea.vmem %s0, 13
    %s74 = smov 48
    %v75 = vld [vmem:[%s73] ss:$16 sm:%s74]
    %vm76 = vcmask 1045508
    %v77 = vsel %vm76, %v75, %v72
    %s78 = scalar_lea.vmem %s0, 13
    %s79 = smov 192
    %v80 = vld [vmem:[%s78] ss:$16 sm:%s79]
    %vm81 = vcmask 1047558
    %v82 = vsel %vm81, %v80, %v77
    %83 = vrot.lane.b32.xlu0 %v82, 104
    %v84 = vpop.permute.xlu0 %83
    %vm85 = vcmask 917312
    %86 = vst.msk [vmem:[#allocation0] ss:$8 sm:$0xf] %vm85, %v84
    %87 = vst.msk [vmem:[#allocation0] ss:$8 sm:$0xf0] %vm85, %v84
    %s88 = scalar_lea.vmem %s0, 12
    %s89 = smov 3
    %v90 = vld [vmem:[%s88] ss:$16 sm:%s89]
    %s91 = scalar_lea.vmem %s0, 12
    %s92 = smov 12
    %v93 = vld [vmem:[%s91] ss:$16 sm:%s92]
    %vm94 = vcmask 1043458
    %v95 = vsel %vm94, %v93, %v90
    %s96 = scalar_lea.vmem %s0, 12
    %s97 = smov 48
    %v98 = vld [vmem:[%s96] ss:$16 sm:%s97]
    %vm99 = vcmask 1045508
    %v100 = vsel %vm99, %v98, %v95
    %s101 = scalar_lea.vmem %s0, 12
    %s102 = smov 192
    %v103 = vld [vmem:[%s101] ss:$16 sm:%s102]
    %vm104 = vcmask 1047558
    %v105 = vsel %vm104, %v103, %v100
    %106 = vrot.lane.b32.xlu0 %v105, 96
    %v107 = vpop.permute.xlu0 %106
    %vm108 = vcmask 851712
    %109 = vst.msk [vmem:[#allocation0] ss:$8 sm:$0xf] %vm108, %v107
    %110 = vst.msk [vmem:[#allocation0] ss:$8 sm:$0xf0] %vm108, %v107
    %s111 = scalar_lea.vmem %s0, 11
    %s112 = smov 3
    %v113 = vld [vmem:[%s111] ss:$16 sm:%s112]
    %s114 = scalar_lea.vmem %s0, 11
    %s115 = smov 12
    %v116 = vld [vmem:[%s114] ss:$16 sm:%s115]
    %vm117 = vcmask 1043458
    %v118 = vsel %vm117, %v116, %v113
    %s119 = scalar_lea.vmem %s0, 11
    %s120 = smov 48
    %v121 = vld [vmem:[%s119] ss:$16 sm:%s120]
    %vm122 = vcmask 1045508
    %v123 = vsel %vm122, %v121, %v118
    %s124 = scalar_lea.vmem %s0, 11
    %s125 = smov 192
    %v126 = vld [vmem:[%s124] ss:$16 sm:%s125]
    %vm127 = vcmask 1047558
    %v128 = vsel %vm127, %v126, %v123
    %129 = vrot.lane.b32.xlu0 %v128, 88
    %v130 = vpop.permute.xlu0 %129
    %vm131 = vcmask 786112
    %132 = vst.msk [vmem:[#allocation0] ss:$8 sm:$0xf] %vm131, %v130
    %133 = vst.msk [vmem:[#allocation0] ss:$8 sm:$0xf0] %vm131, %v130
    %s134 = scalar_lea.vmem %s0, 10
    %s135 = smov 3
    %v136 = vld [vmem:[%s134] ss:$16 sm:%s135]
    %s137 = scalar_lea.vmem %s0, 10
    %s138 = smov 12
    %v139 = vld [vmem:[%s137] ss:$16 sm:%s138]
    %vm140 = vcmask 1043458
    %v141 = vsel %vm140, %v139, %v136
    %s142 = scalar_lea.vmem %s0, 10
    %s143 = smov 48
    %v144 = vld [vmem:[%s142] ss:$16 sm:%s143]
    %vm145 = vcmask 1045508
    %v146 = vsel %vm145, %v144, %v141
    %s147 = scalar_lea.vmem %s0, 10
    %s148 = smov 192
    %v149 = vld [vmem:[%s147] ss:$16 sm:%s148]
    %vm150 = vcmask 1047558
    %v151 = vsel %vm150, %v149, %v146
    %152 = vrot.lane.b32.xlu0 %v151, 80
    %v153 = vpop.permute.xlu0 %152
    %vm154 = vcmask 720512
    %155 = vst.msk [vmem:[#allocation0] ss:$8 sm:$0xf] %vm154, %v153
    %156 = vst.msk [vmem:[#allocation0] ss:$8 sm:$0xf0] %vm154, %v153
    %s157 = scalar_lea.vmem %s0, 9
    %s158 = smov 3
    %v159 = vld [vmem:[%s157] ss:$16 sm:%s158]
    %s160 = scalar_lea.vmem %s0, 9
    %s161 = smov 12
    %v162 = vld [vmem:[%s160] ss:$16 sm:%s161]
    %vm163 = vcmask 1043458
    %v164 = vsel %vm163, %v162, %v159
    %s165 = scalar_lea.vmem %s0, 9
    %s166 = smov 48
    %v167 = vld [vmem:[%s165] ss:$16 sm:%s166]
    %vm168 = vcmask 1045508
    %v169 = vsel %vm168, %v167, %v164
    %s170 = scalar_lea.vmem %s0, 9
    %s171 = smov 192
    %v172 = vld [vmem:[%s170] ss:$16 sm:%s171]
    %vm173 = vcmask 1047558
    %v174 = vsel %vm173, %v172, %v169
    %175 = vrot.lane.b32.xlu0 %v174, 72
    %v176 = vpop.permute.xlu0 %175
    %vm177 = vcmask 654912
    %178 = vst.msk [vmem:[#allocation0] ss:$8 sm:$0xf] %vm177, %v176
    %179 = vst.msk [vmem:[#allocation0] ss:$8 sm:$0xf0] %vm177, %v176
    %s180 = scalar_lea.vmem %s0, 8
    %s181 = smov 3
    %v182 = vld [vmem:[%s180] ss:$16 sm:%s181]
    %s183 = scalar_lea.vmem %s0, 8
    %s184 = smov 12
    %v185 = vld [vmem:[%s183] ss:$16 sm:%s184]
    %vm186 = vcmask 1043458
    %v187 = vsel %vm186, %v185, %v182
    %s188 = scalar_lea.vmem %s0, 8
    %s189 = smov 48
    %v190 = vld [vmem:[%s188] ss:$16 sm:%s189]
    %vm191 = vcmask 1045508
    %v192 = vsel %vm191, %v190, %v187
    %s193 = scalar_lea.vmem %s0, 8
    %s194 = smov 192
    %v195 = vld [vmem:[%s193] ss:$16 sm:%s194]
    %vm196 = vcmask 1047558
    %v197 = vsel %vm196, %v195, %v192
    %198 = vrot.lane.b32.xlu0 %v197, 64
    %v199 = vpop.permute.xlu0 %198
    %vm200 = vcmask 589312
    %201 = vst.msk [vmem:[#allocation0] ss:$8 sm:$0xf] %vm200, %v199
    %202 = vst.msk [vmem:[#allocation0] ss:$8 sm:$0xf0] %vm200, %v199
    %s203 = scalar_lea.vmem %s0, 7
    %s204 = smov 3
    %v205 = vld [vmem:[%s203] ss:$16 sm:%s204]
    %s206 = scalar_lea.vmem %s0, 7
    %s207 = smov 12
    %v208 = vld [vmem:[%s206] ss:$16 sm:%s207]
    %vm209 = vcmask 1043458
    %v210 = vsel %vm209, %v208, %v205
    %s211 = scalar_lea.vmem %s0, 7
    %s212 = smov 48
    %v213 = vld [vmem:[%s211] ss:$16 sm:%s212]
    %vm214 = vcmask 1045508
    %v215 = vsel %vm214, %v213, %v210
    %s216 = scalar_lea.vmem %s0, 7
    %s217 = smov 192
    %v218 = vld [vmem:[%s216] ss:$16 sm:%s217]
    %vm219 = vcmask 1047558
    %v220 = vsel %vm219, %v218, %v215
    %221 = vrot.lane.b32.xlu0 %v220, 56
    %v222 = vpop.permute.xlu0 %221
    %vm223 = vcmask 523712
    %224 = vst.msk [vmem:[#allocation0] ss:$8 sm:$0xf] %vm223, %v222
    %225 = vst.msk [vmem:[#allocation0] ss:$8 sm:$0xf0] %vm223, %v222
    %s226 = scalar_lea.vmem %s0, 6
    %s227 = smov 3
    %v228 = vld [vmem:[%s226] ss:$16 sm:%s227]
    %s229 = scalar_lea.vmem %s0, 6
    %s230 = smov 12
    %v231 = vld [vmem:[%s229] ss:$16 sm:%s230]
    %vm232 = vcmask 1043458
    %v233 = vsel %vm232, %v231, %v228
    %s234 = scalar_lea.vmem %s0, 6
    %s235 = smov 48
    %v236 = vld [vmem:[%s234] ss:$16 sm:%s235]
    %vm237 = vcmask 1045508
    %v238 = vsel %vm237, %v236, %v233
    %s239 = scalar_lea.vmem %s0, 6
    %s240 = smov 192
    %v241 = vld [vmem:[%s239] ss:$16 sm:%s240]
    %vm242 = vcmask 1047558
    %v243 = vsel %vm242, %v241, %v238
    %244 = vrot.lane.b32.xlu0 %v243, 48
    %v245 = vpop.permute.xlu0 %244
    %vm246 = vcmask 458112
    %247 = vst.msk [vmem:[#allocation0] ss:$8 sm:$0xf] %vm246, %v245
    %248 = vst.msk [vmem:[#allocation0] ss:$8 sm:$0xf0] %vm246, %v245
    %s249 = scalar_lea.vmem %s0, 5
    %s250 = smov 3
    %v251 = vld [vmem:[%s249] ss:$16 sm:%s250]
    %s252 = scalar_lea.vmem %s0, 5
    %s253 = smov 12
    %v254 = vld [vmem:[%s252] ss:$16 sm:%s253]
    %vm255 = vcmask 1043458
    %v256 = vsel %vm255, %v254, %v251
    %s257 = scalar_lea.vmem %s0, 5
    %s258 = smov 48
    %v259 = vld [vmem:[%s257] ss:$16 sm:%s258]
    %vm260 = vcmask 1045508
    %v261 = vsel %vm260, %v259, %v256
    %s262 = scalar_lea.vmem %s0, 5
    %s263 = smov 192
    %v264 = vld [vmem:[%s262] ss:$16 sm:%s263]
    %vm265 = vcmask 1047558
    %v266 = vsel %vm265, %v264, %v261
    %267 = vrot.lane.b32.xlu0 %v266, 40
    %v268 = vpop.permute.xlu0 %267
    %vm269 = vcmask 392512
    %270 = vst.msk [vmem:[#allocation0] ss:$8 sm:$0xf] %vm269, %v268
    %271 = vst.msk [vmem:[#allocation0] ss:$8 sm:$0xf0] %vm269, %v268
    %s272 = scalar_lea.vmem %s0, 4
    %s273 = smov 3
    %v274 = vld [vmem:[%s272] ss:$16 sm:%s273]
    %s275 = scalar_lea.vmem %s0, 4
    %s276 = smov 12
    %v277 = vld [vmem:[%s275] ss:$16 sm:%s276]
    %vm278 = vcmask 1043458
    %v279 = vsel %vm278, %v277, %v274
    %s280 = scalar_lea.vmem %s0, 4
    %s281 = smov 48
    %v282 = vld [vmem:[%s280] ss:$16 sm:%s281]
    %vm283 = vcmask 1045508
    %v284 = vsel %vm283, %v282, %v279
    %s285 = scalar_lea.vmem %s0, 4
    %s286 = smov 192
    %v287 = vld [vmem:[%s285] ss:$16 sm:%s286]
    %vm288 = vcmask 1047558
    %v289 = vsel %vm288, %v287, %v284
    %290 = vrot.lane.b32.xlu0 %v289, 32
    %v291 = vpop.permute.xlu0 %290
    %vm292 = vcmask 326912
    %293 = vst.msk [vmem:[#allocation0] ss:$8 sm:$0xf] %vm292, %v291
    %294 = vst.msk [vmem:[#allocation0] ss:$8 sm:$0xf0] %vm292, %v291
    %s295 = scalar_lea.vmem %s0, 3
    %s296 = smov 3
    %v297 = vld [vmem:[%s295] ss:$16 sm:%s296]
    %s298 = scalar_lea.vmem %s0, 3
    %s299 = smov 12
    %v300 = vld [vmem:[%s298] ss:$16 sm:%s299]
    %vm301 = vcmask 1043458
    %v302 = vsel %vm301, %v300, %v297
    %s303 = scalar_lea.vmem %s0, 3
    %s304 = smov 48
    %v305 = vld [vmem:[%s303] ss:$16 sm:%s304]
    %vm306 = vcmask 1045508
    %v307 = vsel %vm306, %v305, %v302
    %s308 = scalar_lea.vmem %s0, 3
    %s309 = smov 192
    %v310 = vld [vmem:[%s308] ss:$16 sm:%s309]
    %vm311 = vcmask 1047558
    %v312 = vsel %vm311, %v310, %v307
    %313 = vrot.lane.b32.xlu0 %v312, 24
    %v314 = vpop.permute.xlu0 %313
    %vm315 = vcmask 261312
    %316 = vst.msk [vmem:[#allocation0] ss:$8 sm:$0xf] %vm315, %v314
    %317 = vst.msk [vmem:[#allocation0] ss:$8 sm:$0xf0] %vm315, %v314
    %s318 = scalar_lea.vmem %s0, 2
    %s319 = smov 3
    %v320 = vld [vmem:[%s318] ss:$16 sm:%s319]
    %s321 = scalar_lea.vmem %s0, 2
    %s322 = smov 12
    %v323 = vld [vmem:[%s321] ss:$16 sm:%s322]
    %vm324 = vcmask 1043458
    %v325 = vsel %vm324, %v323, %v320
    %s326 = scalar_lea.vmem %s0, 2
    %s327 = smov 48
    %v328 = vld [vmem:[%s326] ss:$16 sm:%s327]
    %vm329 = vcmask 1045508
    %v330 = vsel %vm329, %v328, %v325
    %s331 = scalar_lea.vmem %s0, 2
    %s332 = smov 192
    %v333 = vld [vmem:[%s331] ss:$16 sm:%s332]
    %vm334 = vcmask 1047558
    %v335 = vsel %vm334, %v333, %v330
    %336 = vrot.lane.b32.xlu0 %v335, 16
    %v337 = vpop.permute.xlu0 %336
    %vm338 = vcmask 195712
    %339 = vst.msk [vmem:[#allocation0] ss:$8 sm:$0xf] %vm338, %v337
    %340 = vst.msk [vmem:[#allocation0] ss:$8 sm:$0xf0] %vm338, %v337
    %s341 = scalar_lea.vmem %s0, 1
    %s342 = smov 3
    %v343 = vld [vmem:[%s341] ss:$16 sm:%s342]
    %s344 = scalar_lea.vmem %s0, 1
    %s345 = smov 12
    %v346 = vld [vmem:[%s344] ss:$16 sm:%s345]
    %vm347 = vcmask 1043458
    %v348 = vsel %vm347, %v346, %v343
    %s349 = scalar_lea.vmem %s0, 1
    %s350 = smov 48
    %v351 = vld [vmem:[%s349] ss:$16 sm:%s350]
    %vm352 = vcmask 1045508
    %v353 = vsel %vm352, %v351, %v348
    %s354 = scalar_lea.vmem %s0, 1
    %s355 = smov 192
    %v356 = vld [vmem:[%s354] ss:$16 sm:%s355]
    %vm357 = vcmask 1047558
    %v358 = vsel %vm357, %v356, %v353
    %359 = vrot.lane.b32.xlu0 %v358, 8
    %v360 = vpop.permute.xlu0 %359
    %vm361 = vcmask 130112
    %362 = vst.msk [vmem:[#allocation0] ss:$8 sm:$0xf] %vm361, %v360
    %363 = vst.msk [vmem:[#allocation0] ss:$8 sm:$0xf0] %vm361, %v360
    %s365 = sshllo.u32 0, 1
    %v367 = vld [vmem:[#allocation0] sm:%s365]
    %s368 = sshllo.u32 0, 1
    %369 = vst [vmem:[%s1] sm:%s368] %v367
    %s370 = scalar_lea.vmem [#allocation0], 8
    %v371 = vld [vmem:[%s370] sm:%s365]
    %s372 = sshllo.u32 0, 1
    %s373 = scalar_lea.vmem %s1, 1
    %374 = vst [vmem:[%s373] sm:%s372] %v371
    %s375 = scalar_lea.vmem [#allocation0], 16
    %v376 = vld [vmem:[%s375] sm:%s365]
    %s377 = sshllo.u32 0, 1
    %s378 = smul.addr 1, 2
    %s379 = scalar_lea.vmem %s1, %s378
    %380 = vst [vmem:[%s379] sm:%s377] %v376
    %s381 = scalar_lea.vmem [#allocation0], 24
    %v382 = vld [vmem:[%s381] sm:%s365]
    %s383 = sshllo.u32 0, 1
    %s384 = smul.addr 1, 3
    %s385 = scalar_lea.vmem %s1, %s384
    %386 = vst [vmem:[%s385] sm:%s383] %v382
    %s387 = scalar_lea.vmem [#allocation0], 32
    %v388 = vld [vmem:[%s387] sm:%s365]
    %s389 = sshllo.u32 0, 1
    %s390 = smul.addr 1, 4
    %s391 = scalar_lea.vmem %s1, %s390
    %392 = vst [vmem:[%s391] sm:%s389] %v388
    %s393 = scalar_lea.vmem [#allocation0], 40
    %v394 = vld [vmem:[%s393] sm:%s365]
    %s395 = sshllo.u32 0, 1
    %s396 = smul.addr 1, 5
    %s397 = scalar_lea.vmem %s1, %s396
    %398 = vst [vmem:[%s397] sm:%s395] %v394
    %s399 = scalar_lea.vmem [#allocation0], 48
    %v400 = vld [vmem:[%s399] sm:%s365]
    %s401 = sshllo.u32 0, 1
    %s402 = smul.addr 1, 6
    %s403 = scalar_lea.vmem %s1, %s402
    %404 = vst [vmem:[%s403] sm:%s401] %v400
    %s405 = scalar_lea.vmem [#allocation0], 56
    %v406 = vld [vmem:[%s405] sm:%s365]
    %s407 = sshllo.u32 0, 1
    %s408 = smul.addr 1, 7
    %s409 = scalar_lea.vmem %s1, %s408
    %410 = vst [vmem:[%s409] sm:%s407] %v406

// kernel: part_seg_forward.2
$region0: #{part_seg_forward.2}
  #allocation0 [shape = 'u32[]', space=smem, size = 0x4, offset = 0x4, fixed_abs, tag = 'smem constant byte address 0x4 - core index']
  #allocation1 [shape = 'u32[144,128]{1,0:T(1,128)}', space=vmem, size = 0x12000, scoped, tag = 'internal scratch']
  %s0 = inlined_call_operand.vmem [shape: bf16[16,512], index: 0, kind: input, shape index: {}]
  %s1 = inlined_call_operand.vmem [shape: bf16[512,1024], index: 1, kind: input, shape index: {}]
  %s2 = inlined_call_operand.vmem [shape: f32[2,1,1024], index: 2, kind: output, shape index: {0}]
  %s3 = inlined_call_operand.vmem [shape: f32[2,1,1024], index: 3, kind: output, shape index: {1}]
  %4 = xla_tuple %s2, %s3
  %s5 = sld [smem:[#allocation0]]
  $region49: #{part_seg_forward.2} parent=0
    _
  %s7 = ssub.s32 1, %s5
  %s8 = scalar_select 0, %s7, %s5
  loop: start=0, step=1, limit=4
  $region2: #{part_seg_forward.2} parent=0 // loop_pre_header
    _
  $region3: #{part_seg_forward.2} parent=0 // loop_header
    %s10 = sphi 0, %s14
    %p11 = scmp.ge.s32.totalorder %s10, 4
    %s20 = sphi 0, %s22
    %s23 = sphi 0, %s20
    %s24 = sphi 0, %s23
    %s40 = sphi 0, %s24
    %s44 = sphi 0, %s44
    %s46 = sphi 0, %s44
    %s47 = sphi 0, %s46
    %s61 = sphi 0, %s47
    %s67 = sphi 0, %s69
    %s70 = sphi 0, %s67
    %s71 = sphi 0, %s70
    %s87 = sphi 0, %s71
    %s93 = sphi 0, %s95
    %s96 = sphi 0, %s93
    %s97 = sphi 0, %s96
    %s113 = sphi 0, %s97
  $region4: #{part_seg_forward.2} parent=0 // loop_header_branch
    %13 = sbr.rel (%p11) target = $region8
  $region5: #{part_seg_forward.2} parent=0 // loop_body
    %s15 = ssub.s32 %s10, 1
    %s16 = ssub.s32 %s10, 2
    %s17 = sadd.s32 %s10, 1
    %s18 = ssub.s32 %s10, %s17
    %p19 = scmp.eq.s32.totalorder %s18, 0
    %s21 = sadd.s32 %s20, 1
    %s22 = scalar_select %p19, %s20, %s21
    %p25 = pneg %p19
    %p26 = scmp.eq.s32.totalorder %s10, 1
    %p27 = por %p25, %p26
    %p28 = scmp.ne.s32.totalorder %s20, %s23
    %p29 = scmp.eq.s32.totalorder %s10, 0
    %p30 = por %p28, %p29
    %p31 = scmp.ne.s32.totalorder %s20, %s23
    %p32 = scmp.eq.s32.totalorder %s15, 1
    %p33 = por %p31, %p32
    %p34 = scmp.ne.s32.totalorder %s23, %s24
    %p35 = scmp.eq.s32.totalorder %s15, 0
    %p36 = por %p34, %p35
    %p37 = scmp.ne.s32.totalorder %s23, %s24
    %p38 = scmp.eq.s32.totalorder %s16, 1
    %p39 = por %p37, %p38
    %p41 = scmp.ne.s32.totalorder %s24, %s40
    %p42 = scmp.eq.s32.totalorder %s16, 0
    %p43 = por %p41, %p42
    %s45 = sadd.s32 %s44, 1
    %p48 = scmp.eq.s32.totalorder %s10, 1
    %p49 = scmp.ne.s32.totalorder %s44, %s46
    %p50 = scmp.eq.s32.totalorder %s10, 0
    %p51 = por %p49, %p50
    %p52 = scmp.ne.s32.totalorder %s44, %s46
    %p53 = scmp.eq.s32.totalorder %s15, 1
    %p54 = por %p52, %p53
    %p55 = scmp.ne.s32.totalorder %s46, %s47
    %p56 = scmp.eq.s32.totalorder %s15, 0
    %p57 = por %p55, %p56
    %p58 = scmp.ne.s32.totalorder %s46, %s47
    %p59 = scmp.eq.s32.totalorder %s16, 1
    %p60 = por %p58, %p59
    %p62 = scmp.ne.s32.totalorder %s47, %s61
    %p63 = scmp.eq.s32.totalorder %s16, 0
    %p64 = por %p62, %p63
    %s65 = ssub.s32 %s10, %s17
    %p66 = scmp.eq.s32.totalorder %s65, 0
    %s68 = sadd.s32 %s67, 1
    %s69 = scalar_select %p66, %s67, %s68
    %p72 = pneg %p66
    %p73 = scmp.eq.s32.totalorder %s10, 1
    %p74 = por %p72, %p73
    %p75 = scmp.ne.s32.totalorder %s67, %s70
    %p76 = scmp.eq.s32.totalorder %s10, 0
    %p77 = por %p75, %p76
    %p78 = scmp.ne.s32.totalorder %s67, %s70
    %p79 = scmp.eq.s32.totalorder %s15, 1
    %p80 = por %p78, %p79
    %p81 = scmp.ne.s32.totalorder %s70, %s71
    %p82 = scmp.eq.s32.totalorder %s15, 0
    %p83 = por %p81, %p82
    %p84 = scmp.ne.s32.totalorder %s70, %s71
    %p85 = scmp.eq.s32.totalorder %s16, 1
    %p86 = por %p84, %p85
    %p88 = scmp.ne.s32.totalorder %s71, %s87
    %p89 = scmp.eq.s32.totalorder %s16, 0
    %p90 = por %p88, %p89
    %s91 = ssub.s32 %s10, %s17
    %p92 = scmp.eq.s32.totalorder %s91, 0
    %s94 = sadd.s32 %s93, 1
    %s95 = scalar_select %p92, %s93, %s94
    %p98 = pneg %p92
    %p99 = scmp.eq.s32.totalorder %s10, 1
    %p100 = por %p98, %p99
    %p101 = scmp.ne.s32.totalorder %s93, %s96
    %p102 = scmp.eq.s32.totalorder %s10, 0
    %p103 = por %p101, %p102
    %p104 = scmp.ne.s32.totalorder %s93, %s96
    %p105 = scmp.eq.s32.totalorder %s15, 1
    %p106 = por %p104, %p105
    %p107 = scmp.ne.s32.totalorder %s96, %s97
    %p108 = scmp.eq.s32.totalorder %s15, 0
    %p109 = por %p107, %p108
    %p110 = scmp.ne.s32.totalorder %s96, %s97
    %p111 = scmp.eq.s32.totalorder %s16, 1
    %p112 = por %p110, %p111
    %p114 = scmp.ne.s32.totalorder %s97, %s113
    %p115 = scmp.eq.s32.totalorder %s16, 0
    %p116 = por %p114, %p115
    %p117 = scmp.le.s32.totalorder 1, %s10
    %p118 = scmp.lt.s32.totalorder %s10, 3
    %p119 = pnand %p117, %p118
    %p120 = pneg %p119
    // Predicated region
    $region9: #{part_seg_forward.2} parent=5 // pred_check
      _
    $region10: #{part_seg_forward.2} parent=5 // pred_check_branch
      %122 = sbr.rel (%p119) target = $region12
    $region11: #{part_seg_forward.2} parent=5 // pred_region
      %s123 = ssub.s32 %s10, 1
      // Predicated region
      $region13: #{part_seg_forward.2} parent=11 // pred_check
        %p124 = pneg %p57
      $region14: #{part_seg_forward.2} parent=11 // pred_check_branch
        %126 = sbr.rel (%p124) target = $region16
      $region15: #{part_seg_forward.2} parent=11 // pred_region
        _
      $region16: #{part_seg_forward.2} parent=11 // pred_fallthru
        _
    $region12: #{part_seg_forward.2} parent=5 // pred_fallthru
      _
    %p127 = scmp.lt.s32.totalorder %s10, 2
    // Predicated region
    $region17: #{part_seg_forward.2} parent=5 // pred_check
      %p128 = pneg %p127
    $region18: #{part_seg_forward.2} parent=5 // pred_check_branch
      %130 = sbr.rel (%p128) target = $region20
    $region19: #{part_seg_forward.2} parent=5 // pred_region
      // Predicated region
      $region21: #{part_seg_forward.2} parent=19 // pred_check
        %p131 = pneg %p30
      $region22: #{part_seg_forward.2} parent=19 // pred_check_branch
        %133 = sbr.rel (%p131) target = $region24
      $region23: #{part_seg_forward.2} parent=19 // pred_region
        %p134 = scmp.lt.s32.totalorder %s10, 1
        %s135 = scalar_select %p134, %s10, 1
        %s136 = smul.addr %s135, 4
        %s137 = smul.addr %s136, 4
        %s138 = scalar_lea.vmem %s0, %s137
      $region24: #{part_seg_forward.2} parent=19 // pred_fallthru
        _
    $region20: #{part_seg_forward.2} parent=5 // pred_fallthru
      _
    %p139 = scmp.le.s32.totalorder 1, %s10
    %p140 = scmp.lt.s32.totalorder %s10, 3
    %p141 = pnand %p139, %p140
    %p142 = pneg %p141
    // Predicated region
    $region25: #{part_seg_forward.2} parent=5 // pred_check
      _
    $region26: #{part_seg_forward.2} parent=5 // pred_check_branch
      %144 = sbr.rel (%p141) target = $region28
    $region27: #{part_seg_forward.2} parent=5 // pred_region
      %s145 = ssub.s32 %s10, 1
      %p146 = scmp.lt.s32.totalorder %s15, 1
      %s147 = scalar_select %p146, %s15, 1
      %s148 = smul.addr %s147, 4
      %s149 = smul.addr %s148, 4
      %s150 = scalar_lea.vmem %s0, %s149
      %p151 = pneg %p36
      %p152 = pneg %p33
      %p153 = pneg %p57
      %p154 = pneg %p54
      %p155 = pneg %p83
      %p156 = pneg %p80
      %p157 = scmp.lt.s32.totalorder %s15, 1
      %s158 = scalar_select %p157, %s15, 1
      %s159 = smul.addr %s158, 8
      %s160 = scalar_lea.vmem %s2, %s159
      %p161 = pneg %p109
      %p162 = pneg %p106
      %p163 = scmp.lt.s32.totalorder %s15, 1
      %s164 = scalar_select %p163, %s15, 1
      %s165 = smul.addr %s164, 8
      %s166 = scalar_lea.vmem %s3, %s165
      %p167 = scmp.lt.s32.totalorder %s15, 1
      %s168 = scalar_select %p167, %s15, 1
      %s169 = smul.addr %s168, 4
      %s170 = smul.addr %s169, 4
      %s171 = scalar_lea.vmem %s0, %s170
      %p172 = scmp.lt.s32.totalorder %s15, 1
      %s173 = scalar_select %p172, %s15, 1
      %s174 = smul.addr %s173, 8
      %s175 = scalar_lea.vmem %s2, %s174
      %p176 = scmp.lt.s32.totalorder %s15, 1
      %s177 = scalar_select %p176, %s15, 1
      %s178 = smul.addr %s177, 8
      %s179 = scalar_lea.vmem %s3, %s178
      %v180 = vld [vmem:[%s171] sm:$0xff]
      %v181 = vld [vmem:[%s171 + $0x8] sm:$0xff]
      %v182 = vld [vmem:[%s1] sm:$0xff]
      %v183 = vld [vmem:[%s1 + $0x8] sm:$0xff]
      %v184 = vld [vmem:[%s1 + $0x10] sm:$0xff]
      %v185 = vld [vmem:[%s1 + $0x18] sm:$0xff]
      %v186 = vld [vmem:[%s1 + $0x20] sm:$0xff]
      %v187 = vld [vmem:[%s1 + $0x28] sm:$0xff]
      %v188 = vld [vmem:[%s1 + $0x30] sm:$0xff]
      %v189 = vld [vmem:[%s1 + $0x38] sm:$0xff]
      %v190 = vld [vmem:[%s1 + $0x40] sm:$0xff]
      %v191 = vld [vmem:[%s1 + $0x48] sm:$0xff]
      %v192 = vld [vmem:[%s1 + $0x50] sm:$0xff]
      %v193 = vld [vmem:[%s1 + $0x58] sm:$0xff]
      %v194 = vld [vmem:[%s1 + $0x60] sm:$0xff]
      %v195 = vld [vmem:[%s1 + $0x68] sm:$0xff]
      %v196 = vld [vmem:[%s1 + $0x70] sm:$0xff]
      %v197 = vld [vmem:[%s1 + $0x78] sm:$0xff]
      %v198 = vld [vmem:[%s1 + $0x80] sm:$0xff]
      %v199 = vld [vmem:[%s1 + $0x88] sm:$0xff]
      %v200 = vld [vmem:[%s1 + $0x90] sm:$0xff]
      %v201 = vld [vmem:[%s1 + $0x98] sm:$0xff]
      %v202 = vld [vmem:[%s1 + $0xa0] sm:$0xff]
      %v203 = vld [vmem:[%s1 + $0xa8] sm:$0xff]
      %v204 = vld [vmem:[%s1 + $0xb0] sm:$0xff]
      %v205 = vld [vmem:[%s1 + $0xb8] sm:$0xff]
      %v206 = vld [vmem:[%s1 + $0xc0] sm:$0xff]
      %v207 = vld [vmem:[%s1 + $0xc8] sm:$0xff]
      %v208 = vld [vmem:[%s1 + $0xd0] sm:$0xff]
      %v209 = vld [vmem:[%s1 + $0xd8] sm:$0xff]
      %v210 = vld [vmem:[%s1 + $0xe0] sm:$0xff]
      %v211 = vld [vmem:[%s1 + $0xe8] sm:$0xff]
      %v212 = vld [vmem:[%s1 + $0xf0] sm:$0xff]
      %v213 = vld [vmem:[%s1 + $0xf8] sm:$0xff]
      %v214 = vld [vmem:[%s1 + $0x100] sm:$0xff]
      %v215 = vld [vmem:[%s1 + $0x108] sm:$0xff]
      %v216 = vld [vmem:[%s1 + $0x110] sm:$0xff]
      %v217 = vld [vmem:[%s1 + $0x118] sm:$0xff]
      %v218 = vld [vmem:[%s1 + $0x120] sm:$0xff]
      %v219 = vld [vmem:[%s1 + $0x128] sm:$0xff]
      %v220 = vld [vmem:[%s1 + $0x130] sm:$0xff]
      %v221 = vld [vmem:[%s1 + $0x138] sm:$0xff]
      %v222 = vld [vmem:[%s1 + $0x140] sm:$0xff]
      %v223 = vld [vmem:[%s1 + $0x148] sm:$0xff]
      %v224 = vld [vmem:[%s1 + $0x150] sm:$0xff]
      %v225 = vld [vmem:[%s1 + $0x158] sm:$0xff]
      %v226 = vld [vmem:[%s1 + $0x160] sm:$0xff]
      %v227 = vld [vmem:[%s1 + $0x168] sm:$0xff]
      %v228 = vld [vmem:[%s1 + $0x170] sm:$0xff]
      %v229 = vld [vmem:[%s1 + $0x178] sm:$0xff]
      %v230 = vld [vmem:[%s1 + $0x180] sm:$0xff]
      %v231 = vld [vmem:[%s1 + $0x188] sm:$0xff]
      %v232 = vld [vmem:[%s1 + $0x190] sm:$0xff]
      %v233 = vld [vmem:[%s1 + $0x198] sm:$0xff]
      %v234 = vld [vmem:[%s1 + $0x1a0] sm:$0xff]
      %v235 = vld [vmem:[%s1 + $0x1a8] sm:$0xff]
      %v236 = vld [vmem:[%s1 + $0x1b0] sm:$0xff]
      %v237 = vld [vmem:[%s1 + $0x1b8] sm:$0xff]
      %v238 = vld [vmem:[%s1 + $0x1c0] sm:$0xff]
      %v239 = vld [vmem:[%s1 + $0x1c8] sm:$0xff]
      %v240 = vld [vmem:[%s1 + $0x1d0] sm:$0xff]
      %v241 = vld [vmem:[%s1 + $0x1d8] sm:$0xff]
      %v242 = vld [vmem:[%s1 + $0x1e0] sm:$0xff]
      %v243 = vld [vmem:[%s1 + $0x1e8] sm:$0xff]
      %v244 = vld [vmem:[%s1 + $0x1f0] sm:$0xff]
      %v245 = vld [vmem:[%s1 + $0x1f8] sm:$0xff]
      %v246 = vld [vmem:[%s1 + $0x200] sm:$0xff]
      %v247 = vld [vmem:[%s1 + $0x208] sm:$0xff]
      %v248 = vld [vmem:[%s1 + $0x210] sm:$0xff]
      %v249 = vld [vmem:[%s1 + $0x218] sm:$0xff]
      %v250 = vld [vmem:[%s1 + $0x220] sm:$0xff]
      %v251 = vld [vmem:[%s1 + $0x228] sm:$0xff]
      %v252 = vld [vmem:[%s1 + $0x230] sm:$0xff]
      %v253 = vld [vmem:[%s1 + $0x238] sm:$0xff]
      %v254 = vld [vmem:[%s1 + $0x240] sm:$0xff]
      %v255 = vld [vmem:[%s1 + $0x248] sm:$0xff]
      %v256 = vld [vmem:[%s1 + $0x250] sm:$0xff]
      %v257 = vld [vmem:[%s1 + $0x258] sm:$0xff]
      %v258 = vld [vmem:[%s1 + $0x260] sm:$0xff]
      %v259 = vld [vmem:[%s1 + $0x268] sm:$0xff]
      %v260 = vld [vmem:[%s1 + $0x270] sm:$0xff]
      %v261 = vld [vmem:[%s1 + $0x278] sm:$0xff]
      %v262 = vld [vmem:[%s1 + $0x280] sm:$0xff]
      %v263 = vld [vmem:[%s1 + $0x288] sm:$0xff]
      %v264 = vld [vmem:[%s1 + $0x290] sm:$0xff]
      %v265 = vld [vmem:[%s1 + $0x298] sm:$0xff]
      %v266 = vld [vmem:[%s1 + $0x2a0] sm:$0xff]
      %v267 = vld [vmem:[%s1 + $0x2a8] sm:$0xff]
      %v268 = vld [vmem:[%s1 + $0x2b0] sm:$0xff]
      %v269 = vld [vmem:[%s1 + $0x2b8] sm:$0xff]
      %v270 = vld [vmem:[%s1 + $0x2c0] sm:$0xff]
      %v271 = vld [vmem:[%s1 + $0x2c8] sm:$0xff]
      %v272 = vld [vmem:[%s1 + $0x2d0] sm:$0xff]
      %v273 = vld [vmem:[%s1 + $0x2d8] sm:$0xff]
      %v274 = vld [vmem:[%s1 + $0x2e0] sm:$0xff]
      %v275 = vld [vmem:[%s1 + $0x2e8] sm:$0xff]
      %v276 = vld [vmem:[%s1 + $0x2f0] sm:$0xff]
      %v277 = vld [vmem:[%s1 + $0x2f8] sm:$0xff]
      %v278 = vld [vmem:[%s1 + $0x300] sm:$0xff]
      %v279 = vld [vmem:[%s1 + $0x308] sm:$0xff]
      %v280 = vld [vmem:[%s1 + $0x310] sm:$0xff]
      %v281 = vld [vmem:[%s1 + $0x318] sm:$0xff]
      %v282 = vld [vmem:[%s1 + $0x320] sm:$0xff]
      %v283 = vld [vmem:[%s1 + $0x328] sm:$0xff]
      %v284 = vld [vmem:[%s1 + $0x330] sm:$0xff]
      %v285 = vld [vmem:[%s1 + $0x338] sm:$0xff]
      %v286 = vld [vmem:[%s1 + $0x340] sm:$0xff]
      %v287 = vld [vmem:[%s1 + $0x348] sm:$0xff]
      %v288 = vld [vmem:[%s1 + $0x350] sm:$0xff]
      %v289 = vld [vmem:[%s1 + $0x358] sm:$0xff]
      %v290 = vld [vmem:[%s1 + $0x360] sm:$0xff]
      %v291 = vld [vmem:[%s1 + $0x368] sm:$0xff]
      %v292 = vld [vmem:[%s1 + $0x370] sm:$0xff]
      %v293 = vld [vmem:[%s1 + $0x378] sm:$0xff]
      %v294 = vld [vmem:[%s1 + $0x380] sm:$0xff]
      %v295 = vld [vmem:[%s1 + $0x388] sm:$0xff]
      %v296 = vld [vmem:[%s1 + $0x390] sm:$0xff]
      %v297 = vld [vmem:[%s1 + $0x398] sm:$0xff]
      %v298 = vld [vmem:[%s1 + $0x3a0] sm:$0xff]
      %v299 = vld [vmem:[%s1 + $0x3a8] sm:$0xff]
      %v300 = vld [vmem:[%s1 + $0x3b0] sm:$0xff]
      %v301 = vld [vmem:[%s1 + $0x3b8] sm:$0xff]
      %v302 = vld [vmem:[%s1 + $0x3c0] sm:$0xff]
      %v303 = vld [vmem:[%s1 + $0x3c8] sm:$0xff]
      %v304 = vld [vmem:[%s1 + $0x3d0] sm:$0xff]
      %v305 = vld [vmem:[%s1 + $0x3d8] sm:$0xff]
      %v306 = vld [vmem:[%s1 + $0x3e0] sm:$0xff]
      %v307 = vld [vmem:[%s1 + $0x3e8] sm:$0xff]
      %v308 = vld [vmem:[%s1 + $0x3f0] sm:$0xff]
      %v309 = vld [vmem:[%s1 + $0x3f8] sm:$0xff]
      %v310 = vld [vmem:[%s1 + $0x400] sm:$0xff]
      %v311 = vld [vmem:[%s1 + $0x408] sm:$0xff]
      %v312 = vld [vmem:[%s1 + $0x410] sm:$0xff]
      %v313 = vld [vmem:[%s1 + $0x418] sm:$0xff]
      %v314 = vld [vmem:[%s1 + $0x420] sm:$0xff]
      %v315 = vld [vmem:[%s1 + $0x428] sm:$0xff]
      %v316 = vld [vmem:[%s1 + $0x430] sm:$0xff]
      %v317 = vld [vmem:[%s1 + $0x438] sm:$0xff]
      %v318 = vld [vmem:[%s1 + $0x440] sm:$0xff]
      %v319 = vld [vmem:[%s1 + $0x448] sm:$0xff]
      %v320 = vld [vmem:[%s1 + $0x450] sm:$0xff]
      %v321 = vld [vmem:[%s1 + $0x458] sm:$0xff]
      %v322 = vld [vmem:[%s1 + $0x460] sm:$0xff]
      %v323 = vld [vmem:[%s1 + $0x468] sm:$0xff]
      %v324 = vld [vmem:[%s1 + $0x470] sm:$0xff]
      %v325 = vld [vmem:[%s1 + $0x478] sm:$0xff]
      %v326 = vld [vmem:[%s1 + $0x480] sm:$0xff]
      %v327 = vld [vmem:[%s1 + $0x488] sm:$0xff]
      %v328 = vld [vmem:[%s1 + $0x490] sm:$0xff]
      %v329 = vld [vmem:[%s1 + $0x498] sm:$0xff]
      %v330 = vld [vmem:[%s1 + $0x4a0] sm:$0xff]
      %v331 = vld [vmem:[%s1 + $0x4a8] sm:$0xff]
      %v332 = vld [vmem:[%s1 + $0x4b0] sm:$0xff]
      %v333 = vld [vmem:[%s1 + $0x4b8] sm:$0xff]
      %v334 = vld [vmem:[%s1 + $0x4c0] sm:$0xff]
      %v335 = vld [vmem:[%s1 + $0x4c8] sm:$0xff]
      %v336 = vld [vmem:[%s1 + $0x4d0] sm:$0xff]
      %v337 = vld [vmem:[%s1 + $0x4d8] sm:$0xff]
      %v338 = vld [vmem:[%s1 + $0x4e0] sm:$0xff]
      %v339 = vld [vmem:[%s1 + $0x4e8] sm:$0xff]
      %v340 = vld [vmem:[%s1 + $0x4f0] sm:$0xff]
      %v341 = vld [vmem:[%s1 + $0x4f8] sm:$0xff]
      %v342 = vld [vmem:[%s1 + $0x500] sm:$0xff]
      %v343 = vld [vmem:[%s1 + $0x508] sm:$0xff]
      %v344 = vld [vmem:[%s1 + $0x510] sm:$0xff]
      %v345 = vld [vmem:[%s1 + $0x518] sm:$0xff]
      %v346 = vld [vmem:[%s1 + $0x520] sm:$0xff]
      %v347 = vld [vmem:[%s1 + $0x528] sm:$0xff]
      %v348 = vld [vmem:[%s1 + $0x530] sm:$0xff]
      %v349 = vld [vmem:[%s1 + $0x538] sm:$0xff]
      %v350 = vld [vmem:[%s1 + $0x540] sm:$0xff]
      %v351 = vld [vmem:[%s1 + $0x548] sm:$0xff]
      %v352 = vld [vmem:[%s1 + $0x550] sm:$0xff]
      %v353 = vld [vmem:[%s1 + $0x558] sm:$0xff]
      %v354 = vld [vmem:[%s1 + $0x560] sm:$0xff]
      %v355 = vld [vmem:[%s1 + $0x568] sm:$0xff]
      %v356 = vld [vmem:[%s1 + $0x570] sm:$0xff]
      %v357 = vld [vmem:[%s1 + $0x578] sm:$0xff]
      %v358 = vld [vmem:[%s1 + $0x580] sm:$0xff]
      %v359 = vld [vmem:[%s1 + $0x588] sm:$0xff]
      %v360 = vld [vmem:[%s1 + $0x590] sm:$0xff]
      %v361 = vld [vmem:[%s1 + $0x598] sm:$0xff]
      %v362 = vld [vmem:[%s1 + $0x5a0] sm:$0xff]
      %v363 = vld [vmem:[%s1 + $0x5a8] sm:$0xff]
      %v364 = vld [vmem:[%s1 + $0x5b0] sm:$0xff]
      %v365 = vld [vmem:[%s1 + $0x5b8] sm:$0xff]
      %v366 = vld [vmem:[%s1 + $0x5c0] sm:$0xff]
      %v367 = vld [vmem:[%s1 + $0x5c8] sm:$0xff]
      %v368 = vld [vmem:[%s1 + $0x5d0] sm:$0xff]
      %v369 = vld [vmem:[%s1 + $0x5d8] sm:$0xff]
      %v370 = vld [vmem:[%s1 + $0x5e0] sm:$0xff]
      %v371 = vld [vmem:[%s1 + $0x5e8] sm:$0xff]
      %v372 = vld [vmem:[%s1 + $0x5f0] sm:$0xff]
      %v373 = vld [vmem:[%s1 + $0x5f8] sm:$0xff]
      %v374 = vld [vmem:[%s1 + $0x600] sm:$0xff]
      %v375 = vld [vmem:[%s1 + $0x608] sm:$0xff]
      %v376 = vld [vmem:[%s1 + $0x610] sm:$0xff]
      %v377 = vld [vmem:[%s1 + $0x618] sm:$0xff]
      %v378 = vld [vmem:[%s1 + $0x620] sm:$0xff]
      %v379 = vld [vmem:[%s1 + $0x628] sm:$0xff]
      %v380 = vld [vmem:[%s1 + $0x630] sm:$0xff]
      %v381 = vld [vmem:[%s1 + $0x638] sm:$0xff]
      %v382 = vld [vmem:[%s1 + $0x640] sm:$0xff]
      %v383 = vld [vmem:[%s1 + $0x648] sm:$0xff]
      %v384 = vld [vmem:[%s1 + $0x650] sm:$0xff]
      %v385 = vld [vmem:[%s1 + $0x658] sm:$0xff]
      %v386 = vld [vmem:[%s1 + $0x660] sm:$0xff]
      %v387 = vld [vmem:[%s1 + $0x668] sm:$0xff]
      %v388 = vld [vmem:[%s1 + $0x670] sm:$0xff]
      %v389 = vld [vmem:[%s1 + $0x678] sm:$0xff]
      %v390 = vld [vmem:[%s1 + $0x680] sm:$0xff]
      %v391 = vld [vmem:[%s1 + $0x688] sm:$0xff]
      %v392 = vld [vmem:[%s1 + $0x690] sm:$0xff]
      %v393 = vld [vmem:[%s1 + $0x698] sm:$0xff]
      %v394 = vld [vmem:[%s1 + $0x6a0] sm:$0xff]
      %v395 = vld [vmem:[%s1 + $0x6a8] sm:$0xff]
      %v396 = vld [vmem:[%s1 + $0x6b0] sm:$0xff]
      %v397 = vld [vmem:[%s1 + $0x6b8] sm:$0xff]
      %v398 = vld [vmem:[%s1 + $0x6c0] sm:$0xff]
      %v399 = vld [vmem:[%s1 + $0x6c8] sm:$0xff]
      %v400 = vld [vmem:[%s1 + $0x6d0] sm:$0xff]
      %v401 = vld [vmem:[%s1 + $0x6d8] sm:$0xff]
      %v402 = vld [vmem:[%s1 + $0x6e0] sm:$0xff]
      %v403 = vld [vmem:[%s1 + $0x6e8] sm:$0xff]
      %v404 = vld [vmem:[%s1 + $0x6f0] sm:$0xff]
      %v405 = vld [vmem:[%s1 + $0x6f8] sm:$0xff]
      %v406 = vld [vmem:[%s1 + $0x700] sm:$0xff]
      %v407 = vld [vmem:[%s1 + $0x708] sm:$0xff]
      %v408 = vld [vmem:[%s1 + $0x710] sm:$0xff]
      %v409 = vld [vmem:[%s1 + $0x718] sm:$0xff]
      %v410 = vld [vmem:[%s1 + $0x720] sm:$0xff]
      %v411 = vld [vmem:[%s1 + $0x728] sm:$0xff]
      %v412 = vld [vmem:[%s1 + $0x730] sm:$0xff]
      %v413 = vld [vmem:[%s1 + $0x738] sm:$0xff]
      %v414 = vld [vmem:[%s1 + $0x740] sm:$0xff]
      %v415 = vld [vmem:[%s1 + $0x748] sm:$0xff]
      %v416 = vld [vmem:[%s1 + $0x750] sm:$0xff]
      %v417 = vld [vmem:[%s1 + $0x758] sm:$0xff]
      %v418 = vld [vmem:[%s1 + $0x760] sm:$0xff]
      %v419 = vld [vmem:[%s1 + $0x768] sm:$0xff]
      %v420 = vld [vmem:[%s1 + $0x770] sm:$0xff]
      %v421 = vld [vmem:[%s1 + $0x778] sm:$0xff]
      %v422 = vld [vmem:[%s1 + $0x780] sm:$0xff]
      %v423 = vld [vmem:[%s1 + $0x788] sm:$0xff]
      %v424 = vld [vmem:[%s1 + $0x790] sm:$0xff]
      %v425 = vld [vmem:[%s1 + $0x798] sm:$0xff]
      %v426 = vld [vmem:[%s1 + $0x7a0] sm:$0xff]
      %v427 = vld [vmem:[%s1 + $0x7a8] sm:$0xff]
      %v428 = vld [vmem:[%s1 + $0x7b0] sm:$0xff]
      %v429 = vld [vmem:[%s1 + $0x7b8] sm:$0xff]
      %v430 = vld [vmem:[%s1 + $0x7c0] sm:$0xff]
      %v431 = vld [vmem:[%s1 + $0x7c8] sm:$0xff]
      %v432 = vld [vmem:[%s1 + $0x7d0] sm:$0xff]
      %v433 = vld [vmem:[%s1 + $0x7d8] sm:$0xff]
      %v434 = vld [vmem:[%s1 + $0x7e0] sm:$0xff]
      %v435 = vld [vmem:[%s1 + $0x7e8] sm:$0xff]
      %v436 = vld [vmem:[%s1 + $0x7f0] sm:$0xff]
      %v437 = vld [vmem:[%s1 + $0x7f8] sm:$0xff]
      %v440 = vunpack.c.l.b16 %v180
      %v441 = vunpack.c.h.b16 %v180
      %v442 = vunpack.c.l.b16 %v181
      %v443 = vunpack.c.h.b16 %v181
      %v444 = vpack.c.b16 %v440, %v440
      %v445 = vpack.c.b16 %v441, %v441
      %v446 = vpack.c.b16 %v442, %v442
      %v447 = vpack.c.b16 %v443, %v443
      %v708 = vunpack.c.l.b16 %v182
      %v709 = vunpack.c.h.b16 %v182
      %v710 = vunpack.c.l.b16 %v183
      %v711 = vunpack.c.h.b16 %v183
      %v712 = vunpack.c.l.b16 %v184
      %v713 = vunpack.c.h.b16 %v184
      %v714 = vunpack.c.l.b16 %v185
      %v715 = vunpack.c.h.b16 %v185
      %v716 = vunpack.c.l.b16 %v186
      %v717 = vunpack.c.h.b16 %v186
      %v718 = vunpack.c.l.b16 %v187
      %v719 = vunpack.c.h.b16 %v187
      %v720 = vunpack.c.l.b16 %v188
      %v721 = vunpack.c.h.b16 %v188
      %v722 = vunpack.c.l.b16 %v189
      %v723 = vunpack.c.h.b16 %v189
      %v724 = vunpack.c.l.b16 %v190
      %v725 = vunpack.c.h.b16 %v190
      %v726 = vunpack.c.l.b16 %v191
      %v727 = vunpack.c.h.b16 %v191
      %v728 = vunpack.c.l.b16 %v192
      %v729 = vunpack.c.h.b16 %v192
      %v730 = vunpack.c.l.b16 %v193
      %v731 = vunpack.c.h.b16 %v193
      %v732 = vunpack.c.l.b16 %v194
      %v733 = vunpack.c.h.b16 %v194
      %v734 = vunpack.c.l.b16 %v195
      %v735 = vunpack.c.h.b16 %v195
      %v736 = vunpack.c.l.b16 %v196
      %v737 = vunpack.c.h.b16 %v196
      %v738 = vunpack.c.l.b16 %v197
      %v739 = vunpack.c.h.b16 %v197
      %v740 = vunpack.c.l.b16 %v198
      %v741 = vunpack.c.h.b16 %v198
      %v742 = vunpack.c.l.b16 %v199
      %v743 = vunpack.c.h.b16 %v199
      %v744 = vunpack.c.l.b16 %v200
      %v745 = vunpack.c.h.b16 %v200
      %v746 = vunpack.c.l.b16 %v201
      %v747 = vunpack.c.h.b16 %v201
      %v748 = vunpack.c.l.b16 %v202
      %v749 = vunpack.c.h.b16 %v202
      %v750 = vunpack.c.l.b16 %v203
      %v751 = vunpack.c.h.b16 %v203
      %v752 = vunpack.c.l.b16 %v204
      %v753 = vunpack.c.h.b16 %v204
      %v754 = vunpack.c.l.b16 %v205
      %v755 = vunpack.c.h.b16 %v205
      %v756 = vunpack.c.l.b16 %v206
      %v757 = vunpack.c.h.b16 %v206
      %v758 = vunpack.c.l.b16 %v207
      %v759 = vunpack.c.h.b16 %v207
      %v760 = vunpack.c.l.b16 %v208
      %v761 = vunpack.c.h.b16 %v208
      %v762 = vunpack.c.l.b16 %v209
      %v763 = vunpack.c.h.b16 %v209
      %v764 = vunpack.c.l.b16 %v210
      %v765 = vunpack.c.h.b16 %v210
      %v766 = vunpack.c.l.b16 %v211
      %v767 = vunpack.c.h.b16 %v211
      %v768 = vunpack.c.l.b16 %v212
      %v769 = vunpack.c.h.b16 %v212
      %v770 = vunpack.c.l.b16 %v213
      %v771 = vunpack.c.h.b16 %v213
      %v772 = vunpack.c.l.b16 %v214
      %v773 = vunpack.c.h.b16 %v214
      %v774 = vunpack.c.l.b16 %v215
      %v775 = vunpack.c.h.b16 %v215
      %v776 = vunpack.c.l.b16 %v216
      %v777 = vunpack.c.h.b16 %v216
      %v778 = vunpack.c.l.b16 %v217
      %v779 = vunpack.c.h.b16 %v217
      %v780 = vunpack.c.l.b16 %v218
      %v781 = vunpack.c.h.b16 %v218
      %v782 = vunpack.c.l.b16 %v219
      %v783 = vunpack.c.h.b16 %v219
      %v784 = vunpack.c.l.b16 %v220
      %v785 = vunpack.c.h.b16 %v220
      %v786 = vunpack.c.l.b16 %v221
      %v787 = vunpack.c.h.b16 %v221
      %v788 = vunpack.c.l.b16 %v222
      %v789 = vunpack.c.h.b16 %v222
      %v790 = vunpack.c.l.b16 %v223
      %v791 = vunpack.c.h.b16 %v223
      %v792 = vunpack.c.l.b16 %v224
      %v793 = vunpack.c.h.b16 %v224
      %v794 = vunpack.c.l.b16 %v225
      %v795 = vunpack.c.h.b16 %v225
      %v796 = vunpack.c.l.b16 %v226
      %v797 = vunpack.c.h.b16 %v226
      %v798 = vunpack.c.l.b16 %v227
      %v799 = vunpack.c.h.b16 %v227
      %v800 = vunpack.c.l.b16 %v228
      %v801 = vunpack.c.h.b16 %v228
      %v802 = vunpack.c.l.b16 %v229
      %v803 = vunpack.c.h.b16 %v229
      %v804 = vunpack.c.l.b16 %v230
      %v805 = vunpack.c.h.b16 %v230
      %v806 = vunpack.c.l.b16 %v231
      %v807 = vunpack.c.h.b16 %v231
      %v808 = vunpack.c.l.b16 %v232
      %v809 = vunpack.c.h.b16 %v232
      %v810 = vunpack.c.l.b16 %v233
      %v811 = vunpack.c.h.b16 %v233
      %v812 = vunpack.c.l.b16 %v234
      %v813 = vunpack.c.h.b16 %v234
      %v814 = vunpack.c.l.b16 %v235
      %v815 = vunpack.c.h.b16 %v235
      %v816 = vunpack.c.l.b16 %v236
      %v817 = vunpack.c.h.b16 %v236
      %v818 = vunpack.c.l.b16 %v237
      %v819 = vunpack.c.h.b16 %v237
      %v820 = vunpack.c.l.b16 %v238
      %v821 = vunpack.c.h.b16 %v238
      %v822 = vunpack.c.l.b16 %v239
      %v823 = vunpack.c.h.b16 %v239
      %v824 = vunpack.c.l.b16 %v240
      %v825 = vunpack.c.h.b16 %v240
      %v826 = vunpack.c.l.b16 %v241
      %v827 = vunpack.c.h.b16 %v241
      %v828 = vunpack.c.l.b16 %v242
      %v829 = vunpack.c.h.b16 %v242
      %v830 = vunpack.c.l.b16 %v243
      %v831 = vunpack.c.h.b16 %v243
      %v832 = vunpack.c.l.b16 %v244
      %v833 = vunpack.c.h.b16 %v244
      %v834 = vunpack.c.l.b16 %v245
      %v835 = vunpack.c.h.b16 %v245
      %v836 = vunpack.c.l.b16 %v246
      %v837 = vunpack.c.h.b16 %v246
      %v838 = vunpack.c.l.b16 %v247
      %v839 = vunpack.c.h.b16 %v247
      %v840 = vunpack.c.l.b16 %v248
      %v841 = vunpack.c.h.b16 %v248
      %v842 = vunpack.c.l.b16 %v249
      %v843 = vunpack.c.h.b16 %v249
      %v844 = vunpack.c.l.b16 %v250
      %v845 = vunpack.c.h.b16 %v250
      %v846 = vunpack.c.l.b16 %v251
      %v847 = vunpack.c.h.b16 %v251
      %v848 = vunpack.c.l.b16 %v252
      %v849 = vunpack.c.h.b16 %v252
      %v850 = vunpack.c.l.b16 %v253
      %v851 = vunpack.c.h.b16 %v253
      %v852 = vunpack.c.l.b16 %v254
      %v853 = vunpack.c.h.b16 %v254
      %v854 = vunpack.c.l.b16 %v255
      %v855 = vunpack.c.h.b16 %v255
      %v856 = vunpack.c.l.b16 %v256
      %v857 = vunpack.c.h.b16 %v256
      %v858 = vunpack.c.l.b16 %v257
      %v859 = vunpack.c.h.b16 %v257
      %v860 = vunpack.c.l.b16 %v258
      %v861 = vunpack.c.h.b16 %v258
      %v862 = vunpack.c.l.b16 %v259
      %v863 = vunpack.c.h.b16 %v259
      %v864 = vunpack.c.l.b16 %v260
      %v865 = vunpack.c.h.b16 %v260
      %v866 = vunpack.c.l.b16 %v261
      %v867 = vunpack.c.h.b16 %v261
      %v868 = vunpack.c.l.b16 %v262
      %v869 = vunpack.c.h.b16 %v262
      %v870 = vunpack.c.l.b16 %v263
      %v871 = vunpack.c.h.b16 %v263
      %v872 = vunpack.c.l.b16 %v264
      %v873 = vunpack.c.h.b16 %v264
      %v874 = vunpack.c.l.b16 %v265
      %v875 = vunpack.c.h.b16 %v265
      %v876 = vunpack.c.l.b16 %v266
      %v877 = vunpack.c.h.b16 %v266
      %v878 = vunpack.c.l.b16 %v267
      %v879 = vunpack.c.h.b16 %v267
      %v880 = vunpack.c.l.b16 %v268
      %v881 = vunpack.c.h.b16 %v268
      %v882 = vunpack.c.l.b16 %v269
      %v883 = vunpack.c.h.b16 %v269
      %v884 = vunpack.c.l.b16 %v270
      %v885 = vunpack.c.h.b16 %v270
      %v886 = vunpack.c.l.b16 %v271
      %v887 = vunpack.c.h.b16 %v271
      %v888 = vunpack.c.l.b16 %v272
      %v889 = vunpack.c.h.b16 %v272
      %v890 = vunpack.c.l.b16 %v273
      %v891 = vunpack.c.h.b16 %v273
      %v892 = vunpack.c.l.b16 %v274
      %v893 = vunpack.c.h.b16 %v274
      %v894 = vunpack.c.l.b16 %v275
      %v895 = vunpack.c.h.b16 %v275
      %v896 = vunpack.c.l.b16 %v276
      %v897 = vunpack.c.h.b16 %v276
      %v898 = vunpack.c.l.b16 %v277
      %v899 = vunpack.c.h.b16 %v277
      %v900 = vunpack.c.l.b16 %v278
      %v901 = vunpack.c.h.b16 %v278
      %v902 = vunpack.c.l.b16 %v279
      %v903 = vunpack.c.h.b16 %v279
      %v904 = vunpack.c.l.b16 %v280
      %v905 = vunpack.c.h.b16 %v280
      %v906 = vunpack.c.l.b16 %v281
      %v907 = vunpack.c.h.b16 %v281
      %v908 = vunpack.c.l.b16 %v282
      %v909 = vunpack.c.h.b16 %v282
      %v910 = vunpack.c.l.b16 %v283
      %v911 = vunpack.c.h.b16 %v283
      %v912 = vunpack.c.l.b16 %v284
      %v913 = vunpack.c.h.b16 %v284
      %v914 = vunpack.c.l.b16 %v285
      %v915 = vunpack.c.h.b16 %v285
      %v916 = vunpack.c.l.b16 %v286
      %v917 = vunpack.c.h.b16 %v286
      %v918 = vunpack.c.l.b16 %v287
      %v919 = vunpack.c.h.b16 %v287
      %v920 = vunpack.c.l.b16 %v288
      %v921 = vunpack.c.h.b16 %v288
      %v922 = vunpack.c.l.b16 %v289
      %v923 = vunpack.c.h.b16 %v289
      %v924 = vunpack.c.l.b16 %v290
      %v925 = vunpack.c.h.b16 %v290
      %v926 = vunpack.c.l.b16 %v291
      %v927 = vunpack.c.h.b16 %v291
      %v928 = vunpack.c.l.b16 %v292
      %v929 = vunpack.c.h.b16 %v292
      %v930 = vunpack.c.l.b16 %v293
      %v931 = vunpack.c.h.b16 %v293
      %v932 = vunpack.c.l.b16 %v294
      %v933 = vunpack.c.h.b16 %v294
      %v934 = vunpack.c.l.b16 %v295
      %v935 = vunpack.c.h.b16 %v295
      %v936 = vunpack.c.l.b16 %v296
      %v937 = vunpack.c.h.b16 %v296
      %v938 = vunpack.c.l.b16 %v297
      %v939 = vunpack.c.h.b16 %v297
      %v940 = vunpack.c.l.b16 %v298
      %v941 = vunpack.c.h.b16 %v298
      %v942 = vunpack.c.l.b16 %v299
      %v943 = vunpack.c.h.b16 %v299
      %v944 = vunpack.c.l.b16 %v300
      %v945 = vunpack.c.h.b16 %v300
      %v946 = vunpack.c.l.b16 %v301
      %v947 = vunpack.c.h.b16 %v301
      %v948 = vunpack.c.l.b16 %v302
      %v949 = vunpack.c.h.b16 %v302
      %v950 = vunpack.c.l.b16 %v303
      %v951 = vunpack.c.h.b16 %v303
      %v952 = vunpack.c.l.b16 %v304
      %v953 = vunpack.c.h.b16 %v304
      %v954 = vunpack.c.l.b16 %v305
      %v955 = vunpack.c.h.b16 %v305
      %v956 = vunpack.c.l.b16 %v306
      %v957 = vunpack.c.h.b16 %v306
      %v958 = vunpack.c.l.b16 %v307
      %v959 = vunpack.c.h.b16 %v307
      %v960 = vunpack.c.l.b16 %v308
      %v961 = vunpack.c.h.b16 %v308
      %v962 = vunpack.c.l.b16 %v309
      %v963 = vunpack.c.h.b16 %v309
      %v964 = vunpack.c.l.b16 %v310
      %v965 = vunpack.c.h.b16 %v310
      %v966 = vunpack.c.l.b16 %v311
      %v967 = vunpack.c.h.b16 %v311
      %v968 = vunpack.c.l.b16 %v312
      %v969 = vunpack.c.h.b16 %v312
      %v970 = vunpack.c.l.b16 %v313
      %v971 = vunpack.c.h.b16 %v313
      %v972 = vunpack.c.l.b16 %v314
      %v973 = vunpack.c.h.b16 %v314
      %v974 = vunpack.c.l.b16 %v315
      %v975 = vunpack.c.h.b16 %v315
      %v976 = vunpack.c.l.b16 %v316
      %v977 = vunpack.c.h.b16 %v316
      %v978 = vunpack.c.l.b16 %v317
      %v979 = vunpack.c.h.b16 %v317
      %v980 = vunpack.c.l.b16 %v318
      %v981 = vunpack.c.h.b16 %v318
      %v982 = vunpack.c.l.b16 %v319
      %v983 = vunpack.c.h.b16 %v319
      %v984 = vunpack.c.l.b16 %v320
      %v985 = vunpack.c.h.b16 %v320
      %v986 = vunpack.c.l.b16 %v321
      %v987 = vunpack.c.h.b16 %v321
      %v988 = vunpack.c.l.b16 %v322
      %v989 = vunpack.c.h.b16 %v322
      %v990 = vunpack.c.l.b16 %v323
      %v991 = vunpack.c.h.b16 %v323
      %v992 = vunpack.c.l.b16 %v324
      %v993 = vunpack.c.h.b16 %v324
      %v994 = vunpack.c.l.b16 %v325
      %v995 = vunpack.c.h.b16 %v325
      %v996 = vunpack.c.l.b16 %v326
      %v997 = vunpack.c.h.b16 %v326
      %v998 = vunpack.c.l.b16 %v327
      %v999 = vunpack.c.h.b16 %v327
      %v1000 = vunpack.c.l.b16 %v328
      %v1001 = vunpack.c.h.b16 %v328
      %v1002 = vunpack.c.l.b16 %v329
      %v1003 = vunpack.c.h.b16 %v329
      %v1004 = vunpack.c.l.b16 %v330
      %v1005 = vunpack.c.h.b16 %v330
      %v1006 = vunpack.c.l.b16 %v331
      %v1007 = vunpack.c.h.b16 %v331
      %v1008 = vunpack.c.l.b16 %v332
      %v1009 = vunpack.c.h.b16 %v332
      %v1010 = vunpack.c.l.b16 %v333
      %v1011 = vunpack.c.h.b16 %v333
      %v1012 = vunpack.c.l.b16 %v334
      %v1013 = vunpack.c.h.b16 %v334
      %v1014 = vunpack.c.l.b16 %v335
      %v1015 = vunpack.c.h.b16 %v335
      %v1016 = vunpack.c.l.b16 %v336
      %v1017 = vunpack.c.h.b16 %v336
      %v1018 = vunpack.c.l.b16 %v337
      %v1019 = vunpack.c.h.b16 %v337
      %v1020 = vunpack.c.l.b16 %v338
      %v1021 = vunpack.c.h.b16 %v338
      %v1022 = vunpack.c.l.b16 %v339
      %v1023 = vunpack.c.h.b16 %v339
      %v1024 = vunpack.c.l.b16 %v340
      %v1025 = vunpack.c.h.b16 %v340
      %v1026 = vunpack.c.l.b16 %v341
      %v1027 = vunpack.c.h.b16 %v341
      %v1028 = vunpack.c.l.b16 %v342
      %v1029 = vunpack.c.h.b16 %v342
      %v1030 = vunpack.c.l.b16 %v343
      %v1031 = vunpack.c.h.b16 %v343
      %v1032 = vunpack.c.l.b16 %v344
      %v1033 = vunpack.c.h.b16 %v344
      %v1034 = vunpack.c.l.b16 %v345
      %v1035 = vunpack.c.h.b16 %v345
      %v1036 = vunpack.c.l.b16 %v346
      %v1037 = vunpack.c.h.b16 %v346
      %v1038 = vunpack.c.l.b16 %v347
      %v1039 = vunpack.c.h.b16 %v347
      %v1040 = vunpack.c.l.b16 %v348
      %v1041 = vunpack.c.h.b16 %v348
      %v1042 = vunpack.c.l.b16 %v349
      %v1043 = vunpack.c.h.b16 %v349
      %v1044 = vunpack.c.l.b16 %v350
      %v1045 = vunpack.c.h.b16 %v350
      %v1046 = vunpack.c.l.b16 %v351
      %v1047 = vunpack.c.h.b16 %v351
      %v1048 = vunpack.c.l.b16 %v352
      %v1049 = vunpack.c.h.b16 %v352
      %v1050 = vunpack.c.l.b16 %v353
      %v1051 = vunpack.c.h.b16 %v353
      %v1052 = vunpack.c.l.b16 %v354
      %v1053 = vunpack.c.h.b16 %v354
      %v1054 = vunpack.c.l.b16 %v355
      %v1055 = vunpack.c.h.b16 %v355
      %v1056 = vunpack.c.l.b16 %v356
      %v1057 = vunpack.c.h.b16 %v356
      %v1058 = vunpack.c.l.b16 %v357
      %v1059 = vunpack.c.h.b16 %v357
      %v1060 = vunpack.c.l.b16 %v358
      %v1061 = vunpack.c.h.b16 %v358
      %v1062 = vunpack.c.l.b16 %v359
      %v1063 = vunpack.c.h.b16 %v359
      %v1064 = vunpack.c.l.b16 %v360
      %v1065 = vunpack.c.h.b16 %v360
      %v1066 = vunpack.c.l.b16 %v361
      %v1067 = vunpack.c.h.b16 %v361
      %v1068 = vunpack.c.l.b16 %v362
      %v1069 = vunpack.c.h.b16 %v362
      %v1070 = vunpack.c.l.b16 %v363
      %v1071 = vunpack.c.h.b16 %v363
      %v1072 = vunpack.c.l.b16 %v364
      %v1073 = vunpack.c.h.b16 %v364
      %v1074 = vunpack.c.l.b16 %v365
      %v1075 = vunpack.c.h.b16 %v365
      %v1076 = vunpack.c.l.b16 %v366
      %v1077 = vunpack.c.h.b16 %v366
      %v1078 = vunpack.c.l.b16 %v367
      %v1079 = vunpack.c.h.b16 %v367
      %v1080 = vunpack.c.l.b16 %v368
      %v1081 = vunpack.c.h.b16 %v368
      %v1082 = vunpack.c.l.b16 %v369
      %v1083 = vunpack.c.h.b16 %v369
      %v1084 = vunpack.c.l.b16 %v370
      %v1085 = vunpack.c.h.b16 %v370
      %v1086 = vunpack.c.l.b16 %v371
      %v1087 = vunpack.c.h.b16 %v371
      %v1088 = vunpack.c.l.b16 %v372
      %v1089 = vunpack.c.h.b16 %v372
      %v1090 = vunpack.c.l.b16 %v373
      %v1091 = vunpack.c.h.b16 %v373
      %v1092 = vunpack.c.l.b16 %v374
      %v1093 = vunpack.c.h.b16 %v374
      %v1094 = vunpack.c.l.b16 %v375
      %v1095 = vunpack.c.h.b16 %v375
      %v1096 = vunpack.c.l.b16 %v376
      %v1097 = vunpack.c.h.b16 %v376
      %v1098 = vunpack.c.l.b16 %v377
      %v1099 = vunpack.c.h.b16 %v377
      %v1100 = vunpack.c.l.b16 %v378
      %v1101 = vunpack.c.h.b16 %v378
      %v1102 = vunpack.c.l.b16 %v379
      %v1103 = vunpack.c.h.b16 %v379
      %v1104 = vunpack.c.l.b16 %v380
      %v1105 = vunpack.c.h.b16 %v380
      %v1106 = vunpack.c.l.b16 %v381
      %v1107 = vunpack.c.h.b16 %v381
      %v1108 = vunpack.c.l.b16 %v382
      %v1109 = vunpack.c.h.b16 %v382
      %v1110 = vunpack.c.l.b16 %v383
      %v1111 = vunpack.c.h.b16 %v383
      %v1112 = vunpack.c.l.b16 %v384
      %v1113 = vunpack.c.h.b16 %v384
      %v1114 = vunpack.c.l.b16 %v385
      %v1115 = vunpack.c.h.b16 %v385
      %v1116 = vunpack.c.l.b16 %v386
      %v1117 = vunpack.c.h.b16 %v386
      %v1118 = vunpack.c.l.b16 %v387
      %v1119 = vunpack.c.h.b16 %v387
      %v1120 = vunpack.c.l.b16 %v388
      %v1121 = vunpack.c.h.b16 %v388
      %v1122 = vunpack.c.l.b16 %v389
      %v1123 = vunpack.c.h.b16 %v389
      %v1124 = vunpack.c.l.b16 %v390
      %v1125 = vunpack.c.h.b16 %v390
      %v1126 = vunpack.c.l.b16 %v391
      %v1127 = vunpack.c.h.b16 %v391
      %v1128 = vunpack.c.l.b16 %v392
      %v1129 = vunpack.c.h.b16 %v392
      %v1130 = vunpack.c.l.b16 %v393
      %v1131 = vunpack.c.h.b16 %v393
      %v1132 = vunpack.c.l.b16 %v394
      %v1133 = vunpack.c.h.b16 %v394
      %v1134 = vunpack.c.l.b16 %v395
      %v1135 = vunpack.c.h.b16 %v395
      %v1136 = vunpack.c.l.b16 %v396
      %v1137 = vunpack.c.h.b16 %v396
      %v1138 = vunpack.c.l.b16 %v397
      %v1139 = vunpack.c.h.b16 %v397
      %v1140 = vunpack.c.l.b16 %v398
      %v1141 = vunpack.c.h.b16 %v398
      %v1142 = vunpack.c.l.b16 %v399
      %v1143 = vunpack.c.h.b16 %v399
      %v1144 = vunpack.c.l.b16 %v400
      %v1145 = vunpack.c.h.b16 %v400
      %v1146 = vunpack.c.l.b16 %v401
      %v1147 = vunpack.c.h.b16 %v401
      %v1148 = vunpack.c.l.b16 %v402
      %v1149 = vunpack.c.h.b16 %v402
      %v1150 = vunpack.c.l.b16 %v403
      %v1151 = vunpack.c.h.b16 %v403
      %v1152 = vunpack.c.l.b16 %v404
      %v1153 = vunpack.c.h.b16 %v404
      %v1154 = vunpack.c.l.b16 %v405
      %v1155 = vunpack.c.h.b16 %v405
      %v1156 = vunpack.c.l.b16 %v406
      %v1157 = vunpack.c.h.b16 %v406
      %v1158 = vunpack.c.l.b16 %v407
      %v1159 = vunpack.c.h.b16 %v407
      %v1160 = vunpack.c.l.b16 %v408
      %v1161 = vunpack.c.h.b16 %v408
      %v1162 = vunpack.c.l.b16 %v409
      %v1163 = vunpack.c.h.b16 %v409
      %v1164 = vunpack.c.l.b16 %v410
      %v1165 = vunpack.c.h.b16 %v410
      %v1166 = vunpack.c.l.b16 %v411
      %v1167 = vunpack.c.h.b16 %v411
      %v1168 = vunpack.c.l.b16 %v412
      %v1169 = vunpack.c.h.b16 %v412
      %v1170 = vunpack.c.l.b16 %v413
      %v1171 = vunpack.c.h.b16 %v413
      %v1172 = vunpack.c.l.b16 %v414
      %v1173 = vunpack.c.h.b16 %v414
      %v1174 = vunpack.c.l.b16 %v415
      %v1175 = vunpack.c.h.b16 %v415
      %v1176 = vunpack.c.l.b16 %v416
      %v1177 = vunpack.c.h.b16 %v416
      %v1178 = vunpack.c.l.b16 %v417
      %v1179 = vunpack.c.h.b16 %v417
      %v1180 = vunpack.c.l.b16 %v418
      %v1181 = vunpack.c.h.b16 %v418
      %v1182 = vunpack.c.l.b16 %v419
      %v1183 = vunpack.c.h.b16 %v419
      %v1184 = vunpack.c.l.b16 %v420
      %v1185 = vunpack.c.h.b16 %v420
      %v1186 = vunpack.c.l.b16 %v421
      %v1187 = vunpack.c.h.b16 %v421
      %v1188 = vunpack.c.l.b16 %v422
      %v1189 = vunpack.c.h.b16 %v422
      %v1190 = vunpack.c.l.b16 %v423
      %v1191 = vunpack.c.h.b16 %v423
      %v1192 = vunpack.c.l.b16 %v424
      %v1193 = vunpack.c.h.b16 %v424
      %v1194 = vunpack.c.l.b16 %v425
      %v1195 = vunpack.c.h.b16 %v425
      %v1196 = vunpack.c.l.b16 %v426
      %v1197 = vunpack.c.h.b16 %v426
      %v1198 = vunpack.c.l.b16 %v427
      %v1199 = vunpack.c.h.b16 %v427
      %v1200 = vunpack.c.l.b16 %v428
      %v1201 = vunpack.c.h.b16 %v428
      %v1202 = vunpack.c.l.b16 %v429
      %v1203 = vunpack.c.h.b16 %v429
      %v1204 = vunpack.c.l.b16 %v430
      %v1205 = vunpack.c.h.b16 %v430
      %v1206 = vunpack.c.l.b16 %v431
      %v1207 = vunpack.c.h.b16 %v431
      %v1208 = vunpack.c.l.b16 %v432
      %v1209 = vunpack.c.h.b16 %v432
      %v1210 = vunpack.c.l.b16 %v433
      %v1211 = vunpack.c.h.b16 %v433
      %v1212 = vunpack.c.l.b16 %v434
      %v1213 = vunpack.c.h.b16 %v434
      %v1214 = vunpack.c.l.b16 %v435
      %v1215 = vunpack.c.h.b16 %v435
      %v1216 = vunpack.c.l.b16 %v436
      %v1217 = vunpack.c.h.b16 %v436
      %v1218 = vunpack.c.l.b16 %v437
      %v1219 = vunpack.c.h.b16 %v437
      %v1220 = vpack.c.b16 %v716, %v708
      %v1221 = vpack.c.b16 %v717, %v709
      %v1222 = vpack.c.b16 %v718, %v710
      %v1223 = vpack.c.b16 %v719, %v711
      %v1224 = vpack.c.b16 %v720, %v712
      %v1225 = vpack.c.b16 %v721, %v713
      %v1226 = vpack.c.b16 %v722, %v714
      %v1227 = vpack.c.b16 %v723, %v715
      %v1228 = vpack.c.b16 %v732, %v724
      %v1229 = vpack.c.b16 %v733, %v725
      %v1230 = vpack.c.b16 %v734, %v726
      %v1231 = vpack.c.b16 %v735, %v727
      %v1232 = vpack.c.b16 %v736, %v728
      %v1233 = vpack.c.b16 %v737, %v729
      %v1234 = vpack.c.b16 %v738, %v730
      %v1235 = vpack.c.b16 %v739, %v731
      %v1236 = vpack.c.b16 %v748, %v740
      %v1237 = vpack.c.b16 %v749, %v741
      %v1238 = vpack.c.b16 %v750, %v742
      %v1239 = vpack.c.b16 %v751, %v743
      %v1240 = vpack.c.b16 %v752, %v744
      %v1241 = vpack.c.b16 %v753, %v745
      %v1242 = vpack.c.b16 %v754, %v746
      %v1243 = vpack.c.b16 %v755, %v747
      %v1244 = vpack.c.b16 %v764, %v756
      %v1245 = vpack.c.b16 %v765, %v757
      %v1246 = vpack.c.b16 %v766, %v758
      %v1247 = vpack.c.b16 %v767, %v759
      %v1248 = vpack.c.b16 %v768, %v760
      %v1249 = vpack.c.b16 %v769, %v761
      %v1250 = vpack.c.b16 %v770, %v762
      %v1251 = vpack.c.b16 %v771, %v763
      %v1252 = vpack.c.b16 %v780, %v772
      %v1253 = vpack.c.b16 %v781, %v773
      %v1254 = vpack.c.b16 %v782, %v774
      %v1255 = vpack.c.b16 %v783, %v775
      %v1256 = vpack.c.b16 %v784, %v776
      %v1257 = vpack.c.b16 %v785, %v777
      %v1258 = vpack.c.b16 %v786, %v778
      %v1259 = vpack.c.b16 %v787, %v779
      %v1260 = vpack.c.b16 %v796, %v788
      %v1261 = vpack.c.b16 %v797, %v789
      %v1262 = vpack.c.b16 %v798, %v790
      %v1263 = vpack.c.b16 %v799, %v791
      %v1264 = vpack.c.b16 %v800, %v792
      %v1265 = vpack.c.b16 %v801, %v793
      %v1266 = vpack.c.b16 %v802, %v794
      %v1267 = vpack.c.b16 %v803, %v795
      %v1268 = vpack.c.b16 %v812, %v804
      %v1269 = vpack.c.b16 %v813, %v805
      %v1270 = vpack.c.b16 %v814, %v806
      %v1271 = vpack.c.b16 %v815, %v807
      %v1272 = vpack.c.b16 %v816, %v808
      %v1273 = vpack.c.b16 %v817, %v809
      %v1274 = vpack.c.b16 %v818, %v810
      %v1275 = vpack.c.b16 %v819, %v811
      %v1276 = vpack.c.b16 %v828, %v820
      %v1277 = vpack.c.b16 %v829, %v821
      %v1278 = vpack.c.b16 %v830, %v822
      %v1279 = vpack.c.b16 %v831, %v823
      %v1280 = vpack.c.b16 %v832, %v824
      %v1281 = vpack.c.b16 %v833, %v825
      %v1282 = vpack.c.b16 %v834, %v826
      %v1283 = vpack.c.b16 %v835, %v827
      %v1284 = vpack.c.b16 %v844, %v836
      %v1285 = vpack.c.b16 %v845, %v837
      %v1286 = vpack.c.b16 %v846, %v838
      %v1287 = vpack.c.b16 %v847, %v839
      %v1288 = vpack.c.b16 %v848, %v840
      %v1289 = vpack.c.b16 %v849, %v841
      %v1290 = vpack.c.b16 %v850, %v842
      %v1291 = vpack.c.b16 %v851, %v843
      %v1292 = vpack.c.b16 %v860, %v852
      %v1293 = vpack.c.b16 %v861, %v853
      %v1294 = vpack.c.b16 %v862, %v854
      %v1295 = vpack.c.b16 %v863, %v855
      %v1296 = vpack.c.b16 %v864, %v856
      %v1297 = vpack.c.b16 %v865, %v857
      %v1298 = vpack.c.b16 %v866, %v858
      %v1299 = vpack.c.b16 %v867, %v859
      %v1300 = vpack.c.b16 %v876, %v868
      %v1301 = vpack.c.b16 %v877, %v869
      %v1302 = vpack.c.b16 %v878, %v870
      %v1303 = vpack.c.b16 %v879, %v871
      %v1304 = vpack.c.b16 %v880, %v872
      %v1305 = vpack.c.b16 %v881, %v873
      %v1306 = vpack.c.b16 %v882, %v874
      %v1307 = vpack.c.b16 %v883, %v875
      %v1308 = vpack.c.b16 %v892, %v884
      %v1309 = vpack.c.b16 %v893, %v885
      %v1310 = vpack.c.b16 %v894, %v886
      %v1311 = vpack.c.b16 %v895, %v887
      %v1312 = vpack.c.b16 %v896, %v888
      %v1313 = vpack.c.b16 %v897, %v889
      %v1314 = vpack.c.b16 %v898, %v890
      %v1315 = vpack.c.b16 %v899, %v891
      %v1316 = vpack.c.b16 %v908, %v900
      %v1317 = vpack.c.b16 %v909, %v901
      %v1318 = vpack.c.b16 %v910, %v902
      %v1319 = vpack.c.b16 %v911, %v903
      %v1320 = vpack.c.b16 %v912, %v904
      %v1321 = vpack.c.b16 %v913, %v905
      %v1322 = vpack.c.b16 %v914, %v906
      %v1323 = vpack.c.b16 %v915, %v907
      %v1324 = vpack.c.b16 %v924, %v916
      %v1325 = vpack.c.b16 %v925, %v917
      %v1326 = vpack.c.b16 %v926, %v918
      %v1327 = vpack.c.b16 %v927, %v919
      %v1328 = vpack.c.b16 %v928, %v920
      %v1329 = vpack.c.b16 %v929, %v921
      %v1330 = vpack.c.b16 %v930, %v922
      %v1331 = vpack.c.b16 %v931, %v923
      %v1332 = vpack.c.b16 %v940, %v932
      %v1333 = vpack.c.b16 %v941, %v933
      %v1334 = vpack.c.b16 %v942, %v934
      %v1335 = vpack.c.b16 %v943, %v935
      %v1336 = vpack.c.b16 %v944, %v936
      %v1337 = vpack.c.b16 %v945, %v937
      %v1338 = vpack.c.b16 %v946, %v938
      %v1339 = vpack.c.b16 %v947, %v939
      %v1340 = vpack.c.b16 %v956, %v948
      %v1341 = vpack.c.b16 %v957, %v949
      %v1342 = vpack.c.b16 %v958, %v950
      %v1343 = vpack.c.b16 %v959, %v951
      %v1344 = vpack.c.b16 %v960, %v952
      %v1345 = vpack.c.b16 %v961, %v953
      %v1346 = vpack.c.b16 %v962, %v954
      %v1347 = vpack.c.b16 %v963, %v955
      %v1348 = vpack.c.b16 %v972, %v964
      %v1349 = vpack.c.b16 %v973, %v965
      %v1350 = vpack.c.b16 %v974, %v966
      %v1351 = vpack.c.b16 %v975, %v967
      %v1352 = vpack.c.b16 %v976, %v968
      %v1353 = vpack.c.b16 %v977, %v969
      %v1354 = vpack.c.b16 %v978, %v970
      %v1355 = vpack.c.b16 %v979, %v971
      %v1356 = vpack.c.b16 %v988, %v980
      %v1357 = vpack.c.b16 %v989, %v981
      %v1358 = vpack.c.b16 %v990, %v982
      %v1359 = vpack.c.b16 %v991, %v983
      %v1360 = vpack.c.b16 %v992, %v984
      %v1361 = vpack.c.b16 %v993, %v985
      %v1362 = vpack.c.b16 %v994, %v986
      %v1363 = vpack.c.b16 %v995, %v987
      %v1364 = vpack.c.b16 %v1004, %v996
      %v1365 = vpack.c.b16 %v1005, %v997
      %v1366 = vpack.c.b16 %v1006, %v998
      %v1367 = vpack.c.b16 %v1007, %v999
      %v1368 = vpack.c.b16 %v1008, %v1000
      %v1369 = vpack.c.b16 %v1009, %v1001
      %v1370 = vpack.c.b16 %v1010, %v1002
      %v1371 = vpack.c.b16 %v1011, %v1003
      %v1372 = vpack.c.b16 %v1020, %v1012
      %v1373 = vpack.c.b16 %v1021, %v1013
      %v1374 = vpack.c.b16 %v1022, %v1014
      %v1375 = vpack.c.b16 %v1023, %v1015
      %v1376 = vpack.c.b16 %v1024, %v1016
      %v1377 = vpack.c.b16 %v1025, %v1017
      %v1378 = vpack.c.b16 %v1026, %v1018
      %v1379 = vpack.c.b16 %v1027, %v1019
      %v1380 = vpack.c.b16 %v1036, %v1028
      %v1381 = vpack.c.b16 %v1037, %v1029
      %v1382 = vpack.c.b16 %v1038, %v1030
      %v1383 = vpack.c.b16 %v1039, %v1031
      %v1384 = vpack.c.b16 %v1040, %v1032
      %v1385 = vpack.c.b16 %v1041, %v1033
      %v1386 = vpack.c.b16 %v1042, %v1034
      %v1387 = vpack.c.b16 %v1043, %v1035
      %v1388 = vpack.c.b16 %v1052, %v1044
      %v1389 = vpack.c.b16 %v1053, %v1045
      %v1390 = vpack.c.b16 %v1054, %v1046
      %v1391 = vpack.c.b16 %v1055, %v1047
      %v1392 = vpack.c.b16 %v1056, %v1048
      %v1393 = vpack.c.b16 %v1057, %v1049
      %v1394 = vpack.c.b16 %v1058, %v1050
      %v1395 = vpack.c.b16 %v1059, %v1051
      %v1396 = vpack.c.b16 %v1068, %v1060
      %v1397 = vpack.c.b16 %v1069, %v1061
      %v1398 = vpack.c.b16 %v1070, %v1062
      %v1399 = vpack.c.b16 %v1071, %v1063
      %v1400 = vpack.c.b16 %v1072, %v1064
      %v1401 = vpack.c.b16 %v1073, %v1065
      %v1402 = vpack.c.b16 %v1074, %v1066
      %v1403 = vpack.c.b16 %v1075, %v1067
      %v1404 = vpack.c.b16 %v1084, %v1076
      %v1405 = vpack.c.b16 %v1085, %v1077
      %v1406 = vpack.c.b16 %v1086, %v1078
      %v1407 = vpack.c.b16 %v1087, %v1079
      %v1408 = vpack.c.b16 %v1088, %v1080
      %v1409 = vpack.c.b16 %v1089, %v1081
      %v1410 = vpack.c.b16 %v1090, %v1082
      %v1411 = vpack.c.b16 %v1091, %v1083
      %v1412 = vpack.c.b16 %v1100, %v1092
      %v1413 = vpack.c.b16 %v1101, %v1093
      %v1414 = vpack.c.b16 %v1102, %v1094
      %v1415 = vpack.c.b16 %v1103, %v1095
      %v1416 = vpack.c.b16 %v1104, %v1096
      %v1417 = vpack.c.b16 %v1105, %v1097
      %v1418 = vpack.c.b16 %v1106, %v1098
      %v1419 = vpack.c.b16 %v1107, %v1099
      %v1420 = vpack.c.b16 %v1116, %v1108
      %v1421 = vpack.c.b16 %v1117, %v1109
      %v1422 = vpack.c.b16 %v1118, %v1110
      %v1423 = vpack.c.b16 %v1119, %v1111
      %v1424 = vpack.c.b16 %v1120, %v1112
      %v1425 = vpack.c.b16 %v1121, %v1113
      %v1426 = vpack.c.b16 %v1122, %v1114
      %v1427 = vpack.c.b16 %v1123, %v1115
      %v1428 = vpack.c.b16 %v1132, %v1124
      %v1429 = vpack.c.b16 %v1133, %v1125
      %v1430 = vpack.c.b16 %v1134, %v1126
      %v1431 = vpack.c.b16 %v1135, %v1127
      %v1432 = vpack.c.b16 %v1136, %v1128
      %v1433 = vpack.c.b16 %v1137, %v1129
      %v1434 = vpack.c.b16 %v1138, %v1130
      %v1435 = vpack.c.b16 %v1139, %v1131
      %v1436 = vpack.c.b16 %v1148, %v1140
      %v1437 = vpack.c.b16 %v1149, %v1141
      %v1438 = vpack.c.b16 %v1150, %v1142
      %v1439 = vpack.c.b16 %v1151, %v1143
      %v1440 = vpack.c.b16 %v1152, %v1144
      %v1441 = vpack.c.b16 %v1153, %v1145
      %v1442 = vpack.c.b16 %v1154, %v1146
      %v1443 = vpack.c.b16 %v1155, %v1147
      %v1444 = vpack.c.b16 %v1164, %v1156
      %v1445 = vpack.c.b16 %v1165, %v1157
      %v1446 = vpack.c.b16 %v1166, %v1158
      %v1447 = vpack.c.b16 %v1167, %v1159
      %v1448 = vpack.c.b16 %v1168, %v1160
      %v1449 = vpack.c.b16 %v1169, %v1161
      %v1450 = vpack.c.b16 %v1170, %v1162
      %v1451 = vpack.c.b16 %v1171, %v1163
      %v1452 = vpack.c.b16 %v1180, %v1172
      %v1453 = vpack.c.b16 %v1181, %v1173
      %v1454 = vpack.c.b16 %v1182, %v1174
      %v1455 = vpack.c.b16 %v1183, %v1175
      %v1456 = vpack.c.b16 %v1184, %v1176
      %v1457 = vpack.c.b16 %v1185, %v1177
      %v1458 = vpack.c.b16 %v1186, %v1178
      %v1459 = vpack.c.b16 %v1187, %v1179
      %v1460 = vpack.c.b16 %v1196, %v1188
      %v1461 = vpack.c.b16 %v1197, %v1189
      %v1462 = vpack.c.b16 %v1198, %v1190
      %v1463 = vpack.c.b16 %v1199, %v1191
      %v1464 = vpack.c.b16 %v1200, %v1192
      %v1465 = vpack.c.b16 %v1201, %v1193
      %v1466 = vpack.c.b16 %v1202, %v1194
      %v1467 = vpack.c.b16 %v1203, %v1195
      %v1468 = vpack.c.b16 %v1212, %v1204
      %v1469 = vpack.c.b16 %v1213, %v1205
      %v1470 = vpack.c.b16 %v1214, %v1206
      %v1471 = vpack.c.b16 %v1215, %v1207
      %v1472 = vpack.c.b16 %v1216, %v1208
      %v1473 = vpack.c.b16 %v1217, %v1209
      %v1474 = vpack.c.b16 %v1218, %v1210
      %v1475 = vpack.c.b16 %v1219, %v1211
      %1732 = vmatprep.subr.bf16.mxu0 %v1221
      %1733 = vmatpush1.bf16.msra.mxu0 %v1220
      %1734 = vmatprep.subr.bf16.mxu0 %v1229
      %1735 = vmatpush1.bf16.msra.mxu0 %v1228
      %1736 = vmatprep.subr.bf16.mxu0 %v1237
      %1737 = vmatpush1.bf16.msra.mxu0 %v1236
      %1738 = vmatprep.subr.bf16.mxu0 %v1245
      %1739 = vmatpush1.bf16.msra.mxu0 %v1244
      %1740 = vmatprep.subr.bf16.mxu0 %v1253
      %1741 = vmatpush1.bf16.msra.mxu0 %v1252
      %1742 = vmatprep.subr.bf16.mxu0 %v1261
      %1743 = vmatpush1.bf16.msra.mxu0 %v1260
      %1744 = vmatprep.subr.bf16.mxu0 %v1269
      %1745 = vmatpush1.bf16.msra.mxu0 %v1268
      %1746 = vmatprep.subr.bf16.mxu0 %v1277
      %1747 = vmatpush1.bf16.msra.mxu0 %v1276
      %1748 = vmatprep.subr.bf16.mxu0 %v1285
      %1749 = vmatpush1.bf16.msra.mxu0 %v1284
      %1750 = vmatprep.subr.bf16.mxu0 %v1293
      %1751 = vmatpush1.bf16.msra.mxu0 %v1292
      %1752 = vmatprep.subr.bf16.mxu0 %v1301
      %1753 = vmatpush1.bf16.msra.mxu0 %v1300
      %1754 = vmatprep.subr.bf16.mxu0 %v1309
      %1755 = vmatpush1.bf16.msra.mxu0 %v1308
      %1756 = vmatprep.subr.bf16.mxu0 %v1317
      %1757 = vmatpush1.bf16.msra.mxu0 %v1316
      %1758 = vmatprep.subr.bf16.mxu0 %v1325
      %1759 = vmatpush1.bf16.msra.mxu0 %v1324
      %1760 = vmatprep.subr.bf16.mxu0 %v1333
      %1761 = vmatpush1.bf16.msra.mxu0 %v1332
      %1762 = vmatprep.subr.bf16.mxu0 %v1341
      %1763 = vmatpush1.bf16.msra.mxu0 %v1340
      %1764 = vmatprep.mubr.bf16.mxu0 %v445
      %1765 = vmatmul.mubr.bf16.gmra.mrb[0].mxu0 %v444
      %v1766 = vpop.f32.mrb[0].mxu0
      %v1767 = vadd.f32 0.0, %v1766
      %v1768 = vpop.f32.mrb[0].mxu0
      %v1769 = vadd.f32 0.0, %v1768
      %v1770 = vpop.f32.mrb[0].mxu0
      %v1771 = vpop.f32.mrb[0].mxu0
      %1772 = vdwg.mxu0
      %1773 = vmatprep.subr.bf16.mxu0 %v1349
      %1774 = vmatpush1.bf16.msra.mxu0 %v1348
      %1775 = vmatprep.subr.bf16.mxu0 %v1357
      %1776 = vmatpush1.bf16.msra.mxu0 %v1356
      %1777 = vmatprep.subr.bf16.mxu0 %v1365
      %1778 = vmatpush1.bf16.msra.mxu0 %v1364
      %1779 = vmatprep.subr.bf16.mxu0 %v1373
      %1780 = vmatpush1.bf16.msra.mxu0 %v1372
      %1781 = vmatprep.subr.bf16.mxu0 %v1381
      %1782 = vmatpush1.bf16.msra.mxu0 %v1380
      %1783 = vmatprep.subr.bf16.mxu0 %v1389
      %1784 = vmatpush1.bf16.msra.mxu0 %v1388
      %1785 = vmatprep.subr.bf16.mxu0 %v1397
      %1786 = vmatpush1.bf16.msra.mxu0 %v1396
      %1787 = vmatprep.subr.bf16.mxu0 %v1405
      %1788 = vmatpush1.bf16.msra.mxu0 %v1404
      %1789 = vmatprep.subr.bf16.mxu0 %v1413
      %1790 = vmatpush1.bf16.msra.mxu0 %v1412
      %1791 = vmatprep.subr.bf16.mxu0 %v1421
      %1792 = vmatpush1.bf16.msra.mxu0 %v1420
      %1793 = vmatprep.subr.bf16.mxu0 %v1429
      %1794 = vmatpush1.bf16.msra.mxu0 %v1428
      %1795 = vmatprep.subr.bf16.mxu0 %v1437
      %1796 = vmatpush1.bf16.msra.mxu0 %v1436
      %1797 = vmatprep.subr.bf16.mxu0 %v1445
      %1798 = vmatpush1.bf16.msra.mxu0 %v1444
      %1799 = vmatprep.subr.bf16.mxu0 %v1453
      %1800 = vmatpush1.bf16.msra.mxu0 %v1452
      %1801 = vmatprep.subr.bf16.mxu0 %v1461
      %1802 = vmatpush1.bf16.msra.mxu0 %v1460
      %1803 = vmatprep.subr.bf16.mxu0 %v1469
      %1804 = vmatpush1.bf16.msra.mxu0 %v1468
      %1805 = vmatprep.mubr.bf16.mxu0 %v447
      %1806 = vmatmul.mubr.bf16.gmra.mrb[0].mxu0 %v446
      %v1807 = vpop.f32.mrb[0].mxu0
      %v1808 = vadd.f32 %v1767, %v1807
      %v1809 = vpop.f32.mrb[0].mxu0
      %v1810 = vadd.f32 %v1769, %v1809
      %v1811 = vpop.f32.mrb[0].mxu0
      %v1812 = vpop.f32.mrb[0].mxu0
      %1813 = vdwg.mxu0
      %1814 = vmatprep.subr.bf16.mxu0 %v1223
      %1815 = vmatpush1.bf16.msra.mxu0 %v1222
      %1816 = vmatprep.subr.bf16.mxu0 %v1231
      %1817 = vmatpush1.bf16.msra.mxu0 %v1230
      %1818 = vmatprep.subr.bf16.mxu0 %v1239
      %1819 = vmatpush1.bf16.msra.mxu0 %v1238
      %1820 = vmatprep.subr.bf16.mxu0 %v1247
      %1821 = vmatpush1.bf16.msra.mxu0 %v1246
      %1822 = vmatprep.subr.bf16.mxu0 %v1255
      %1823 = vmatpush1.bf16.msra.mxu0 %v1254
      %1824 = vmatprep.subr.bf16.mxu0 %v1263
      %1825 = vmatpush1.bf16.msra.mxu0 %v1262
      %1826 = vmatprep.subr.bf16.mxu0 %v1271
      %1827 = vmatpush1.bf16.msra.mxu0 %v1270
      %1828 = vmatprep.subr.bf16.mxu0 %v1279
      %1829 = vmatpush1.bf16.msra.mxu0 %v1278
      %1830 = vmatprep.subr.bf16.mxu0 %v1287
      %1831 = vmatpush1.bf16.msra.mxu0 %v1286
      %1832 = vmatprep.subr.bf16.mxu0 %v1295
      %1833 = vmatpush1.bf16.msra.mxu0 %v1294
      %1834 = vmatprep.subr.bf16.mxu0 %v1303
      %1835 = vmatpush1.bf16.msra.mxu0 %v1302
      %1836 = vmatprep.subr.bf16.mxu0 %v1311
      %1837 = vmatpush1.bf16.msra.mxu0 %v1310
      %1838 = vmatprep.subr.bf16.mxu0 %v1319
      %1839 = vmatpush1.bf16.msra.mxu0 %v1318
      %1840 = vmatprep.subr.bf16.mxu0 %v1327
      %1841 = vmatpush1.bf16.msra.mxu0 %v1326
      %1842 = vmatprep.subr.bf16.mxu0 %v1335
      %1843 = vmatpush1.bf16.msra.mxu0 %v1334
      %1844 = vmatprep.subr.bf16.mxu0 %v1343
      %1845 = vmatpush1.bf16.msra.mxu0 %v1342
      %1846 = vmatprep.mubr.bf16.mxu0 %v445
      %1847 = vmatmul.mubr.bf16.gmra.mrb[0].mxu0 %v444
      %v1848 = vpop.f32.mrb[0].mxu0
      %v1849 = vadd.f32 0.0, %v1848
      %v1850 = vpop.f32.mrb[0].mxu0
      %v1851 = vadd.f32 0.0, %v1850
      %v1852 = vpop.f32.mrb[0].mxu0
      %v1853 = vpop.f32.mrb[0].mxu0
      %1854 = vdwg.mxu0
      %1855 = vmatprep.subr.bf16.mxu0 %v1351
      %1856 = vmatpush1.bf16.msra.mxu0 %v1350
      %1857 = vmatprep.subr.bf16.mxu0 %v1359
      %1858 = vmatpush1.bf16.msra.mxu0 %v1358
      %1859 = vmatprep.subr.bf16.mxu0 %v1367
      %1860 = vmatpush1.bf16.msra.mxu0 %v1366
      %1861 = vmatprep.subr.bf16.mxu0 %v1375
      %1862 = vmatpush1.bf16.msra.mxu0 %v1374
      %1863 = vmatprep.subr.bf16.mxu0 %v1383
      %1864 = vmatpush1.bf16.msra.mxu0 %v1382
      %1865 = vmatprep.subr.bf16.mxu0 %v1391
      %1866 = vmatpush1.bf16.msra.mxu0 %v1390
      %1867 = vmatprep.subr.bf16.mxu0 %v1399
      %1868 = vmatpush1.bf16.msra.mxu0 %v1398
      %1869 = vmatprep.subr.bf16.mxu0 %v1407
      %1870 = vmatpush1.bf16.msra.mxu0 %v1406
      %1871 = vmatprep.subr.bf16.mxu0 %v1415
      %1872 = vmatpush1.bf16.msra.mxu0 %v1414
      %1873 = vmatprep.subr.bf16.mxu0 %v1423
      %1874 = vmatpush1.bf16.msra.mxu0 %v1422
      %1875 = vmatprep.subr.bf16.mxu0 %v1431
      %1876 = vmatpush1.bf16.msra.mxu0 %v1430
      %1877 = vmatprep.subr.bf16.mxu0 %v1439
      %1878 = vmatpush1.bf16.msra.mxu0 %v1438
      %1879 = vmatprep.subr.bf16.mxu0 %v1447
      %1880 = vmatpush1.bf16.msra.mxu0 %v1446
      %1881 = vmatprep.subr.bf16.mxu0 %v1455
      %1882 = vmatpush1.bf16.msra.mxu0 %v1454
      %1883 = vmatprep.subr.bf16.mxu0 %v1463
      %1884 = vmatpush1.bf16.msra.mxu0 %v1462
      %1885 = vmatprep.subr.bf16.mxu0 %v1471
      %1886 = vmatpush1.bf16.msra.mxu0 %v1470
      %1887 = vmatprep.mubr.bf16.mxu0 %v447
      %1888 = vmatmul.mubr.bf16.gmra.mrb[0].mxu0 %v446
      %v1889 = vpop.f32.mrb[0].mxu0
      %v1890 = vadd.f32 %v1849, %v1889
      %v1891 = vpop.f32.mrb[0].mxu0
      %v1892 = vadd.f32 %v1851, %v1891
      %v1893 = vpop.f32.mrb[0].mxu0
      %v1894 = vpop.f32.mrb[0].mxu0
      %1895 = vdwg.mxu0
      %1896 = vmatprep.subr.bf16.mxu0 %v1225
      %1897 = vmatpush1.bf16.msra.mxu0 %v1224
      %1898 = vmatprep.subr.bf16.mxu0 %v1233
      %1899 = vmatpush1.bf16.msra.mxu0 %v1232
      %1900 = vmatprep.subr.bf16.mxu0 %v1241
      %1901 = vmatpush1.bf16.msra.mxu0 %v1240
      %1902 = vmatprep.subr.bf16.mxu0 %v1249
      %1903 = vmatpush1.bf16.msra.mxu0 %v1248
      %1904 = vmatprep.subr.bf16.mxu0 %v1257
      %1905 = vmatpush1.bf16.msra.mxu0 %v1256
      %1906 = vmatprep.subr.bf16.mxu0 %v1265
      %1907 = vmatpush1.bf16.msra.mxu0 %v1264
      %1908 = vmatprep.subr.bf16.mxu0 %v1273
      %1909 = vmatpush1.bf16.msra.mxu0 %v1272
      %1910 = vmatprep.subr.bf16.mxu0 %v1281
      %1911 = vmatpush1.bf16.msra.mxu0 %v1280
      %1912 = vmatprep.subr.bf16.mxu0 %v1289
      %1913 = vmatpush1.bf16.msra.mxu0 %v1288
      %1914 = vmatprep.subr.bf16.mxu0 %v1297
      %1915 = vmatpush1.bf16.msra.mxu0 %v1296
      %1916 = vmatprep.subr.bf16.mxu0 %v1305
      %1917 = vmatpush1.bf16.msra.mxu0 %v1304
      %1918 = vmatprep.subr.bf16.mxu0 %v1313
      %1919 = vmatpush1.bf16.msra.mxu0 %v1312
      %1920 = vmatprep.subr.bf16.mxu0 %v1321
      %1921 = vmatpush1.bf16.msra.mxu0 %v1320
      %1922 = vmatprep.subr.bf16.mxu0 %v1329
      %1923 = vmatpush1.bf16.msra.mxu0 %v1328
      %1924 = vmatprep.subr.bf16.mxu0 %v1337
      %1925 = vmatpush1.bf16.msra.mxu0 %v1336
      %1926 = vmatprep.subr.bf16.mxu0 %v1345
      %1927 = vmatpush1.bf16.msra.mxu0 %v1344
      %1928 = vmatprep.mubr.bf16.mxu0 %v445
      %1929 = vmatmul.mubr.bf16.gmra.mrb[0].mxu0 %v444
      %v1930 = vpop.f32.mrb[0].mxu0
      %v1931 = vadd.f32 0.0, %v1930
      %v1932 = vpop.f32.mrb[0].mxu0
      %v1933 = vadd.f32 0.0, %v1932
      %v1934 = vpop.f32.mrb[0].mxu0
      %v1935 = vpop.f32.mrb[0].mxu0
      %1936 = vdwg.mxu0
      %1937 = vmatprep.subr.bf16.mxu0 %v1353
      %1938 = vmatpush1.bf16.msra.mxu0 %v1352
      %1939 = vmatprep.subr.bf16.mxu0 %v1361
      %1940 = vmatpush1.bf16.msra.mxu0 %v1360
      %1941 = vmatprep.subr.bf16.mxu0 %v1369
      %1942 = vmatpush1.bf16.msra.mxu0 %v1368
      %1943 = vmatprep.subr.bf16.mxu0 %v1377
      %1944 = vmatpush1.bf16.msra.mxu0 %v1376
      %1945 = vmatprep.subr.bf16.mxu0 %v1385
      %1946 = vmatpush1.bf16.msra.mxu0 %v1384
      %1947 = vmatprep.subr.bf16.mxu0 %v1393
      %1948 = vmatpush1.bf16.msra.mxu0 %v1392
      %1949 = vmatprep.subr.bf16.mxu0 %v1401
      %1950 = vmatpush1.bf16.msra.mxu0 %v1400
      %1951 = vmatprep.subr.bf16.mxu0 %v1409
      %1952 = vmatpush1.bf16.msra.mxu0 %v1408
      %1953 = vmatprep.subr.bf16.mxu0 %v1417
      %1954 = vmatpush1.bf16.msra.mxu0 %v1416
      %1955 = vmatprep.subr.bf16.mxu0 %v1425
      %1956 = vmatpush1.bf16.msra.mxu0 %v1424
      %1957 = vmatprep.subr.bf16.mxu0 %v1433
      %1958 = vmatpush1.bf16.msra.mxu0 %v1432
      %1959 = vmatprep.subr.bf16.mxu0 %v1441
      %1960 = vmatpush1.bf16.msra.mxu0 %v1440
      %1961 = vmatprep.subr.bf16.mxu0 %v1449
      %1962 = vmatpush1.bf16.msra.mxu0 %v1448
      %1963 = vmatprep.subr.bf16.mxu0 %v1457
      %1964 = vmatpush1.bf16.msra.mxu0 %v1456
      %1965 = vmatprep.subr.bf16.mxu0 %v1465
      %1966 = vmatpush1.bf16.msra.mxu0 %v1464
      %1967 = vmatprep.subr.bf16.mxu0 %v1473
      %1968 = vmatpush1.bf16.msra.mxu0 %v1472
      %1969 = vmatprep.mubr.bf16.mxu0 %v447
      %1970 = vmatmul.mubr.bf16.gmra.mrb[0].mxu0 %v446
      %v1971 = vpop.f32.mrb[0].mxu0
      %v1972 = vadd.f32 %v1931, %v1971
      %v1973 = vpop.f32.mrb[0].mxu0
      %v1974 = vadd.f32 %v1933, %v1973
      %v1975 = vpop.f32.mrb[0].mxu0
      %v1976 = vpop.f32.mrb[0].mxu0
      %1977 = vdwg.mxu0
      %1978 = vmatprep.subr.bf16.mxu0 %v1227
      %1979 = vmatpush1.bf16.msra.mxu0 %v1226
      %1980 = vmatprep.subr.bf16.mxu0 %v1235
      %1981 = vmatpush1.bf16.msra.mxu0 %v1234
      %1982 = vmatprep.subr.bf16.mxu0 %v1243
      %1983 = vmatpush1.bf16.msra.mxu0 %v1242
      %1984 = vmatprep.subr.bf16.mxu0 %v1251
      %1985 = vmatpush1.bf16.msra.mxu0 %v1250
      %1986 = vmatprep.subr.bf16.mxu0 %v1259
      %1987 = vmatpush1.bf16.msra.mxu0 %v1258
      %1988 = vmatprep.subr.bf16.mxu0 %v1267
      %1989 = vmatpush1.bf16.msra.mxu0 %v1266
      %1990 = vmatprep.subr.bf16.mxu0 %v1275
      %1991 = vmatpush1.bf16.msra.mxu0 %v1274
      %1992 = vmatprep.subr.bf16.mxu0 %v1283
      %1993 = vmatpush1.bf16.msra.mxu0 %v1282
      %1994 = vmatprep.subr.bf16.mxu0 %v1291
      %1995 = vmatpush1.bf16.msra.mxu0 %v1290
      %1996 = vmatprep.subr.bf16.mxu0 %v1299
      %1997 = vmatpush1.bf16.msra.mxu0 %v1298
      %1998 = vmatprep.subr.bf16.mxu0 %v1307
      %1999 = vmatpush1.bf16.msra.mxu0 %v1306
      %2000 = vmatprep.subr.bf16.mxu0 %v1315
      %2001 = vmatpush1.bf16.msra.mxu0 %v1314
      %2002 = vmatprep.subr.bf16.mxu0 %v1323
      %2003 = vmatpush1.bf16.msra.mxu0 %v1322
      %2004 = vmatprep.subr.bf16.mxu0 %v1331
      %2005 = vmatpush1.bf16.msra.mxu0 %v1330
      %2006 = vmatprep.subr.bf16.mxu0 %v1339
      %2007 = vmatpush1.bf16.msra.mxu0 %v1338
      %2008 = vmatprep.subr.bf16.mxu0 %v1347
      %2009 = vmatpush1.bf16.msra.mxu0 %v1346
      %2010 = vmatprep.mubr.bf16.mxu0 %v445
      %2011 = vmatmul.mubr.bf16.gmra.mrb[0].mxu0 %v444
      %v2012 = vpop.f32.mrb[0].mxu0
      %v2013 = vadd.f32 0.0, %v2012
      %v2014 = vpop.f32.mrb[0].mxu0
      %v2015 = vadd.f32 0.0, %v2014
      %v2016 = vpop.f32.mrb[0].mxu0
      %v2017 = vpop.f32.mrb[0].mxu0
      %2018 = vdwg.mxu0
      %2019 = vmatprep.subr.bf16.mxu0 %v1355
      %2020 = vmatpush1.bf16.msra.mxu0 %v1354
      %2021 = vmatprep.subr.bf16.mxu0 %v1363
      %2022 = vmatpush1.bf16.msra.mxu0 %v1362
      %2023 = vmatprep.subr.bf16.mxu0 %v1371
      %2024 = vmatpush1.bf16.msra.mxu0 %v1370
      %2025 = vmatprep.subr.bf16.mxu0 %v1379
      %2026 = vmatpush1.bf16.msra.mxu0 %v1378
      %2027 = vmatprep.subr.bf16.mxu0 %v1387
      %2028 = vmatpush1.bf16.msra.mxu0 %v1386
      %2029 = vmatprep.subr.bf16.mxu0 %v1395
      %2030 = vmatpush1.bf16.msra.mxu0 %v1394
      %2031 = vmatprep.subr.bf16.mxu0 %v1403
      %2032 = vmatpush1.bf16.msra.mxu0 %v1402
      %2033 = vmatprep.subr.bf16.mxu0 %v1411
      %2034 = vmatpush1.bf16.msra.mxu0 %v1410
      %2035 = vmatprep.subr.bf16.mxu0 %v1419
      %2036 = vmatpush1.bf16.msra.mxu0 %v1418
      %2037 = vmatprep.subr.bf16.mxu0 %v1427
      %2038 = vmatpush1.bf16.msra.mxu0 %v1426
      %2039 = vmatprep.subr.bf16.mxu0 %v1435
      %2040 = vmatpush1.bf16.msra.mxu0 %v1434
      %2041 = vmatprep.subr.bf16.mxu0 %v1443
      %2042 = vmatpush1.bf16.msra.mxu0 %v1442
      %2043 = vmatprep.subr.bf16.mxu0 %v1451
      %2044 = vmatpush1.bf16.msra.mxu0 %v1450
      %2045 = vmatprep.subr.bf16.mxu0 %v1459
      %2046 = vmatpush1.bf16.msra.mxu0 %v1458
      %2047 = vmatprep.subr.bf16.mxu0 %v1467
      %2048 = vmatpush1.bf16.msra.mxu0 %v1466
      %2049 = vmatprep.subr.bf16.mxu0 %v1475
      %2050 = vmatpush1.bf16.msra.mxu0 %v1474
      %2051 = vmatprep.mubr.bf16.mxu0 %v447
      %2052 = vmatmul.mubr.bf16.gmra.mrb[0].mxu0 %v446
      %v2053 = vpop.f32.mrb[0].mxu0
      %v2054 = vadd.f32 %v2013, %v2053
      %v2055 = vpop.f32.mrb[0].mxu0
      %v2056 = vadd.f32 %v2015, %v2055
      %v2057 = vpop.f32.mrb[0].mxu0
      %v2058 = vpop.f32.mrb[0].mxu0
      %2059 = vdwg.mxu0
      %v2060 = vrot.slane %v1808, 4
      %v2061 = vadd.f32 %v1808, %v2060
      %v2062 = vrot.slane %v2061, 2
      %v2063 = vadd.f32 %v2061, %v2062
      %v2064 = vrot.slane %v2063, 1
      %v2065 = vadd.f32 %v2063, %v2064
      %v2066 = vrot.slane %v1810, 4
      %v2067 = vadd.f32 %v1810, %v2066
      %v2068 = vrot.slane %v2067, 2
      %v2069 = vadd.f32 %v2067, %v2068
      %v2070 = vrot.slane %v2069, 1
      %v2071 = vadd.f32 %v2069, %v2070
      %v2072 = vrot.slane %v1890, 4
      %v2073 = vadd.f32 %v1890, %v2072
      %v2074 = vrot.slane %v2073, 2
      %v2075 = vadd.f32 %v2073, %v2074
      %v2076 = vrot.slane %v2075, 1
      %v2077 = vadd.f32 %v2075, %v2076
      %v2078 = vrot.slane %v1892, 4
      %v2079 = vadd.f32 %v1892, %v2078
      %v2080 = vrot.slane %v2079, 2
      %v2081 = vadd.f32 %v2079, %v2080
      %v2082 = vrot.slane %v2081, 1
      %v2083 = vadd.f32 %v2081, %v2082
      %v2084 = vrot.slane %v1972, 4
      %v2085 = vadd.f32 %v1972, %v2084
      %v2086 = vrot.slane %v2085, 2
      %v2087 = vadd.f32 %v2085, %v2086
      %v2088 = vrot.slane %v2087, 1
      %v2089 = vadd.f32 %v2087, %v2088
      %v2090 = vrot.slane %v1974, 4
      %v2091 = vadd.f32 %v1974, %v2090
      %v2092 = vrot.slane %v2091, 2
      %v2093 = vadd.f32 %v2091, %v2092
      %v2094 = vrot.slane %v2093, 1
      %v2095 = vadd.f32 %v2093, %v2094
      %v2096 = vrot.slane %v2054, 4
      %v2097 = vadd.f32 %v2054, %v2096
      %v2098 = vrot.slane %v2097, 2
      %v2099 = vadd.f32 %v2097, %v2098
      %v2100 = vrot.slane %v2099, 1
      %v2101 = vadd.f32 %v2099, %v2100
      %v2102 = vrot.slane %v2056, 4
      %v2103 = vadd.f32 %v2056, %v2102
      %v2104 = vrot.slane %v2103, 2
      %v2105 = vadd.f32 %v2103, %v2104
      %v2106 = vrot.slane %v2105, 1
      %v2107 = vadd.f32 %v2105, %v2106
      %v2116 = vcombine.low %v2065, %v2071
      %v2117 = vcombine.low %v2077, %v2083
      %v2118 = vcombine.low %v2089, %v2095
      %v2119 = vcombine.low %v2101, %v2107
      %v2121 = vunpack.c.l.s4 1966171168
      %v2122 = vunpack.c.0.s8 %v2121
      %v2123 = vlaneseq
      %v2124 = vshrl.u32 %v2123, 7
      %v2125 = vsub.s32 %v2122, %v2124
      %v2126 = vrot.slane %v2116, %v2125
      %v2128 = vunpack.c.l.s4 1966171168
      %v2129 = vunpack.c.0.s8 %v2128
      %v2130 = vlaneseq
      %v2131 = vshrl.u32 %v2130, 7
      %v2132 = vsub.s32 %v2129, %v2131
      %v2133 = vrot.slane %v2117, %v2132
      %v2135 = vunpack.c.l.s4 1966171168
      %v2136 = vunpack.c.0.s8 %v2135
      %v2137 = vlaneseq
      %v2138 = vshrl.u32 %v2137, 7
      %v2139 = vsub.s32 %v2136, %v2138
      %v2140 = vrot.slane %v2118, %v2139
      %v2142 = vunpack.c.l.s4 1966171168
      %v2143 = vunpack.c.0.s8 %v2142
      %v2144 = vlaneseq
      %v2145 = vshrl.u32 %v2144, 7
      %v2146 = vsub.s32 %v2143, %v2145
      %v2147 = vrot.slane %v2119, %v2146
      %v2148 = vcombine.low %v2126, %v2133
      %v2149 = vcombine.low %v2140, %v2147
      %v2151 = vunpack.c.l.s4 1966171168
      %v2152 = vunpack.c.0.s8 %v2151
      %v2153 = vlaneseq
      %v2154 = vshrl.u32 %v2153, 7
      %v2155 = vsub.s32 %v2152, %v2154
      %v2156 = vrot.slane %v2148, %v2155
      %v2158 = vunpack.c.l.s4 1966171168
      %v2159 = vunpack.c.0.s8 %v2158
      %v2160 = vlaneseq
      %v2161 = vshrl.u32 %v2160, 7
      %v2162 = vsub.s32 %v2159, %v2161
      %v2163 = vrot.slane %v2149, %v2162
      %v2164 = vcombine.low %v2156, %v2163
      %2166 = vst [vmem:[%s175] sm:$0xff] %v2164
      %v2167 = vmul.f32 %v1808, %v1808
      %v2168 = vmul.f32 %v1810, %v1810
      %v2169 = vmul.f32 %v1890, %v1890
      %v2170 = vmul.f32 %v1892, %v1892
      %v2171 = vmul.f32 %v1972, %v1972
      %v2172 = vmul.f32 %v1974, %v1974
      %v2173 = vmul.f32 %v2054, %v2054
      %v2174 = vmul.f32 %v2056, %v2056
      %v2175 = vrot.slane %v2167, 4
      %v2176 = vadd.f32 %v2167, %v2175
      %v2177 = vrot.slane %v2176, 2
      %v2178 = vadd.f32 %v2176, %v2177
      %v2179 = vrot.slane %v2178, 1
      %v2180 = vadd.f32 %v2178, %v2179
      %v2181 = vrot.slane %v2168, 4
      %v2182 = vadd.f32 %v2168, %v2181
      %v2183 = vrot.slane %v2182, 2
      %v2184 = vadd.f32 %v2182, %v2183
      %v2185 = vrot.slane %v2184, 1
      %v2186 = vadd.f32 %v2184, %v2185
      %v2187 = vrot.slane %v2169, 4
      %v2188 = vadd.f32 %v2169, %v2187
      %v2189 = vrot.slane %v2188, 2
      %v2190 = vadd.f32 %v2188, %v2189
      %v2191 = vrot.slane %v2190, 1
      %v2192 = vadd.f32 %v2190, %v2191
      %v2193 = vrot.slane %v2170, 4
      %v2194 = vadd.f32 %v2170, %v2193
      %v2195 = vrot.slane %v2194, 2
      %v2196 = vadd.f32 %v2194, %v2195
      %v2197 = vrot.slane %v2196, 1
      %v2198 = vadd.f32 %v2196, %v2197
      %v2199 = vrot.slane %v2171, 4
      %v2200 = vadd.f32 %v2171, %v2199
      %v2201 = vrot.slane %v2200, 2
      %v2202 = vadd.f32 %v2200, %v2201
      %v2203 = vrot.slane %v2202, 1
      %v2204 = vadd.f32 %v2202, %v2203
      %v2205 = vrot.slane %v2172, 4
      %v2206 = vadd.f32 %v2172, %v2205
      %v2207 = vrot.slane %v2206, 2
      %v2208 = vadd.f32 %v2206, %v2207
      %v2209 = vrot.slane %v2208, 1
      %v2210 = vadd.f32 %v2208, %v2209
      %v2211 = vrot.slane %v2173, 4
      %v2212 = vadd.f32 %v2173, %v2211
      %v2213 = vrot.slane %v2212, 2
      %v2214 = vadd.f32 %v2212, %v2213
      %v2215 = vrot.slane %v2214, 1
      %v2216 = vadd.f32 %v2214, %v2215
      %v2217 = vrot.slane %v2174, 4
      %v2218 = vadd.f32 %v2174, %v2217
      %v2219 = vrot.slane %v2218, 2
      %v2220 = vadd.f32 %v2218, %v2219
      %v2221 = vrot.slane %v2220, 1
      %v2222 = vadd.f32 %v2220, %v2221
      %v2231 = vcombine.low %v2180, %v2186
      %v2232 = vcombine.low %v2192, %v2198
      %v2233 = vcombine.low %v2204, %v2210
      %v2234 = vcombine.low %v2216, %v2222
      %v2236 = vunpack.c.l.s4 1966171168
      %v2237 = vunpack.c.0.s8 %v2236
      %v2238 = vlaneseq
      %v2239 = vshrl.u32 %v2238, 7
      %v2240 = vsub.s32 %v2237, %v2239
      %v2241 = vrot.slane %v2231, %v2240
      %v2243 = vunpack.c.l.s4 1966171168
      %v2244 = vunpack.c.0.s8 %v2243
      %v2245 = vlaneseq
      %v2246 = vshrl.u32 %v2245, 7
      %v2247 = vsub.s32 %v2244, %v2246
      %v2248 = vrot.slane %v2232, %v2247
      %v2250 = vunpack.c.l.s4 1966171168
      %v2251 = vunpack.c.0.s8 %v2250
      %v2252 = vlaneseq
      %v2253 = vshrl.u32 %v2252, 7
      %v2254 = vsub.s32 %v2251, %v2253
      %v2255 = vrot.slane %v2233, %v2254
      %v2257 = vunpack.c.l.s4 1966171168
      %v2258 = vunpack.c.0.s8 %v2257
      %v2259 = vlaneseq
      %v2260 = vshrl.u32 %v2259, 7
      %v2261 = vsub.s32 %v2258, %v2260
      %v2262 = vrot.slane %v2234, %v2261
      %v2263 = vcombine.low %v2241, %v2248
      %v2264 = vcombine.low %v2255, %v2262
      %v2266 = vunpack.c.l.s4 1966171168
      %v2267 = vunpack.c.0.s8 %v2266
      %v2268 = vlaneseq
      %v2269 = vshrl.u32 %v2268, 7
      %v2270 = vsub.s32 %v2267, %v2269
      %v2271 = vrot.slane %v2263, %v2270
      %v2273 = vunpack.c.l.s4 1966171168
      %v2274 = vunpack.c.0.s8 %v2273
      %v2275 = vlaneseq
      %v2276 = vshrl.u32 %v2275, 7
      %v2277 = vsub.s32 %v2274, %v2276
      %v2278 = vrot.slane %v2264, %v2277
      %v2279 = vcombine.low %v2271, %v2278
      %2281 = vst [vmem:[%s179] sm:$0xff] %v2279
      %p2282 = scmp.lt.s32.totalorder %s15, 1
      %s2283 = scalar_select %p2282, %s15, 1
      %s2284 = smul.addr %s2283, 8
      %s2285 = scalar_lea.vmem %s2, %s2284
      %p2286 = scmp.lt.s32.totalorder %s15, 1
      %s2287 = scalar_select %p2286, %s15, 1
      %s2288 = smul.addr %s2287, 8
      %s2289 = scalar_lea.vmem %s3, %s2288
      // Predicated region
      $region29: #{part_seg_forward.2} parent=27 // pred_check
        %p2290 = pneg %p80
      $region30: #{part_seg_forward.2} parent=27 // pred_check_branch
        %2292 = sbr.rel (%p2290) target = $region32
      $region31: #{part_seg_forward.2} parent=27 // pred_region
        _
      $region32: #{part_seg_forward.2} parent=27 // pred_fallthru
        _
      // Predicated region
      $region33: #{part_seg_forward.2} parent=27 // pred_check
        %p2293 = pneg %p106
      $region34: #{part_seg_forward.2} parent=27 // pred_check_branch
        %2295 = sbr.rel (%p2293) target = $region36
      $region35: #{part_seg_forward.2} parent=27 // pred_region
        _
      $region36: #{part_seg_forward.2} parent=27 // pred_fallthru
        _
    $region28: #{part_seg_forward.2} parent=5 // pred_fallthru
      _
    %p2296 = scmp.le.s32.totalorder 2, %s10
    // Predicated region
    $region37: #{part_seg_forward.2} parent=5 // pred_check
      %p2297 = pneg %p2296
    $region38: #{part_seg_forward.2} parent=5 // pred_check_branch
      %2299 = sbr.rel (%p2297) target = $region40
    $region39: #{part_seg_forward.2} parent=5 // pred_region
      %s2300 = ssub.s32 %s10, 2
      // Predicated region
      $region41: #{part_seg_forward.2} parent=39 // pred_check
        %p2301 = pneg %p86
      $region42: #{part_seg_forward.2} parent=39 // pred_check_branch
        %2303 = sbr.rel (%p2301) target = $region44
      $region43: #{part_seg_forward.2} parent=39 // pred_region
        %p2304 = scmp.lt.s32.totalorder %s16, 1
        %s2305 = scalar_select %p2304, %s16, 1
        %s2306 = smul.addr %s2305, 8
        %s2307 = scalar_lea.vmem %s2, %s2306
      $region44: #{part_seg_forward.2} parent=39 // pred_fallthru
        _
      // Predicated region
      $region45: #{part_seg_forward.2} parent=39 // pred_check
        %p2308 = pneg %p112
      $region46: #{part_seg_forward.2} parent=39 // pred_check_branch
        %2310 = sbr.rel (%p2308) target = $region48
      $region47: #{part_seg_forward.2} parent=39 // pred_region
        %p2311 = scmp.lt.s32.totalorder %s16, 1
        %s2312 = scalar_select %p2311, %s16, 1
        %s2313 = smul.addr %s2312, 8
        %s2314 = scalar_lea.vmem %s3, %s2313
      $region48: #{part_seg_forward.2} parent=39 // pred_fallthru
        _
    $region40: #{part_seg_forward.2} parent=5 // pred_fallthru
      _
  $region6: #{part_seg_forward.2} parent=0 // loop_footer
    %s14 = sadd.s32 1, %s10
  $region7: #{part_seg_forward.2} parent=0 // loop_footer_branch
    %9 = sbr.rel target = $region3
  $region8: #{part_seg_forward.2} parent=0 // loop_exit
    _

// kernel: tile.28
$region0: #{tile.28}
  #allocation0 [shape = 's32[1]{0}', space=sflag, size = 0x4, scoped, tag = 'scoped memory for tile.28']
  %s0 = inlined_call_operand.vmem [shape: f32[5], index: 0, kind: input, shape index: {}]
  %s1 = inlined_call_operand.vmem [shape: f32[128,5], index: 1, kind: output, shape index: {}]
  // Predicated region
  $region2: #{tile.28} parent=0 // pred_check
    _
  $region3: #{tile.28} parent=0 // pred_check_branch
    %3 = sbr.rel (0) target = $region5
  $region4: #{tile.28} parent=0 // pred_region
    _
  $region5: #{tile.28} parent=0 // pred_fallthru
    _
  %v4 = vld [vmem:[%s0] ss:$0 sm:$0xff]
  %5 = vst [vmem:[%s1] sm:$0xff] %v4
  %s6 = scalar_lea.vmem %s1, 8
  %7 = vst [vmem:[%s6] sm:$0xff] %v4
  %s8 = scalar_lea.vmem %s1, 16
  %9 = vst [vmem:[%s8] sm:$0xff] %v4
  %s10 = scalar_lea.vmem %s1, 24
  %11 = vst [vmem:[%s10] sm:$0xff] %v4
  %s12 = scalar_lea.vmem %s1, 32
  %13 = vst [vmem:[%s12] sm:$0xff] %v4
  %s14 = scalar_lea.vmem %s1, 40
  %15 = vst [vmem:[%s14] sm:$0xff] %v4
  %s16 = scalar_lea.vmem %s1, 48
  %17 = vst [vmem:[%s16] sm:$0xff] %v4
  %s18 = scalar_lea.vmem %s1, 56
  %19 = vst [vmem:[%s18] sm:$0xff] %v4
  %s20 = scalar_lea.vmem %s1, 64
  %21 = vst [vmem:[%s20] sm:$0xff] %v4
  %s22 = scalar_lea.vmem %s1, 72
  %23 = vst [vmem:[%s22] sm:$0xff] %v4
  %s24 = scalar_lea.vmem %s1, 80
  %25 = vst [vmem:[%s24] sm:$0xff] %v4
  %s26 = scalar_lea.vmem %s1, 88
  %27 = vst [vmem:[%s26] sm:$0xff] %v4
  %s28 = scalar_lea.vmem %s1, 96
  %29 = vst [vmem:[%s28] sm:$0xff] %v4
  %s30 = scalar_lea.vmem %s1, 104
  %31 = vst [vmem:[%s30] sm:$0xff] %v4
  %s32 = scalar_lea.vmem %s1, 112
  %33 = vst [vmem:[%s32] sm:$0xff] %v4
  %s34 = scalar_lea.vmem %s1, 120
  %35 = vst [vmem:[%s34] sm:$0xff] %v4

// kernel: tile.29
$region0: #{tile.29}
  %s0 = inlined_call_operand.vmem [shape: f32[128,5], index: 0, kind: input, shape index: {}]
  %s1 = inlined_call_operand.vmem [shape: f32[1,640], index: 1, kind: output, shape index: {}]
  $region1: #{tile.29} parent=0
    #allocation0 [shape = 'u8[20480]{0}', space=vmem, size = 0x5000, scoped, tag = 'scoped mem for output reshape']
    %v2 = vld [vmem:[%s0] sm:$0x1]
    %vm3 = vcmask 39936
    %4 = vst.msk [vmem:[#allocation0] sm:$0x1] %vm3, %v2
    %s5 = scalar_lea.vmem %s0, 51
    %v6 = vld [vmem:[%s5] sm:$0x1]
    %s7 = scalar_lea.vmem %s0, 51
    %v8 = vld [vmem:[%s7] sm:$0x1]
    %vm9 = vcmask 7168
    %v10 = vsel %vm9, %v8, %v6
    %11 = vrot.lane.b32.xlu0 %v10, 127
    %v12 = vpop.permute.xlu0 %11
    %vm13 = vcmask 31744
    %s14 = scalar_lea.vmem [#allocation0], 16
    %15 = vst.msk [vmem:[%s14] sm:$0x1] %vm13, %v12
    %vm16 = vcmask 1048568
    %s17 = scalar_lea.vmem [#allocation0], 8
    %18 = vst.msk [vmem:[%s17] sm:$0x1] %vm16, %v12
    %s19 = scalar_lea.vmem %s0, 102
    %v20 = vld [vmem:[%s19] sm:$0x1]
    %s21 = scalar_lea.vmem %s0, 102
    %v22 = vld [vmem:[%s21] sm:$0x1]
    %vm23 = vcmask 15360
    %v24 = vsel %vm23, %v22, %v20
    %25 = vrot.lane.b32.xlu0 %v24, 126
    %v26 = vpop.permute.xlu0 %25
    %vm27 = vcmask 23552
    %s28 = scalar_lea.vmem [#allocation0], 32
    %29 = vst.msk [vmem:[%s28] sm:$0x1] %vm27, %v26
    %vm30 = vcmask 1048560
    %s31 = scalar_lea.vmem [#allocation0], 24
    %32 = vst.msk [vmem:[%s31] sm:$0x1] %vm30, %v26
    %s33 = scalar_lea.vmem %s0, 25
    %v34 = vld [vmem:[%s33] sm:$0x1]
    %s35 = scalar_lea.vmem %s0, 25
    %v36 = vld [vmem:[%s35] sm:$0x1]
    %vm37 = vcmask 23552
    %v38 = vsel %vm37, %v36, %v34
    %39 = vrot.lane.b32.xlu0 %v38, 125
    %v40 = vpop.permute.xlu0 %39
    %vm41 = vcmask 15360
    %s42 = scalar_lea.vmem [#allocation0], 8
    %43 = vst.msk [vmem:[%s42] sm:$0x1] %vm41, %v40
    %vm44 = vcmask 1048552
    %45 = vst.msk [vmem:[#allocation0] sm:$0x1] %vm44, %v40
    %s46 = scalar_lea.vmem %s0, 76
    %v47 = vld [vmem:[%s46] sm:$0x1]
    %s48 = scalar_lea.vmem %s0, 76
    %v49 = vld [vmem:[%s48] sm:$0x1]
    %vm50 = vcmask 31744
    %v51 = vsel %vm50, %v49, %v47
    %52 = vrot.lane.b32.xlu0 %v51, 124
    %v53 = vpop.permute.xlu0 %52
    %vm54 = vcmask 7168
    %s55 = scalar_lea.vmem [#allocation0], 24
    %56 = vst.msk [vmem:[%s55] sm:$0x1] %vm54, %v53
    %vm57 = vcmask 1048544
    %s58 = scalar_lea.vmem [#allocation0], 16
    %59 = vst.msk [vmem:[%s58] sm:$0x1] %vm57, %v53
    %s60 = scalar_lea.vmem %s0, 127
    %v61 = vld [vmem:[%s60] sm:$0x1]
    %62 = vrot.lane.b32.xlu0 %v61, 123
    %v63 = vpop.permute.xlu0 %62
    %vm64 = vcmask 1048536
    %s65 = scalar_lea.vmem [#allocation0], 32
    %66 = vst.msk [vmem:[%s65] sm:$0x1] %vm64, %v63
    %s67 = scalar_lea.vmem %s0, 50
    %v68 = vld [vmem:[%s67] sm:$0x1]
    %69 = vrot.lane.b32.xlu0 %v68, 122
    %v70 = vpop.permute.xlu0 %69
    %vm71 = vcmask 1040336
    %s72 = scalar_lea.vmem [#allocation0], 8
    %73 = vst.msk [vmem:[%s72] sm:$0x1] %vm71, %v70
    %s74 = scalar_lea.vmem %s0, 101
    %v75 = vld [vmem:[%s74] sm:$0x1]
    %76 = vrot.lane.b32.xlu0 %v75, 121
    %v77 = vpop.permute.xlu0 %76
    %vm78 = vcmask 1032136
    %s79 = scalar_lea.vmem [#allocation0], 24
    %80 = vst.msk [vmem:[%s79] sm:$0x1] %vm78, %v77
    %s81 = scalar_lea.vmem %s0, 24
    %v82 = vld [vmem:[%s81] sm:$0x1]
    %83 = vrot.lane.b32.xlu0 %v82, 120
    %v84 = vpop.permute.xlu0 %83
    %vm85 = vcmask 1023936
    %86 = vst.msk [vmem:[#allocation0] sm:$0x1] %vm85, %v84
    %s87 = scalar_lea.vmem %s0, 75
    %v88 = vld [vmem:[%s87] sm:$0x1]
    %89 = vrot.lane.b32.xlu0 %v88, 119
    %v90 = vpop.permute.xlu0 %89
    %vm91 = vcmask 1015736
    %s92 = scalar_lea.vmem [#allocation0], 16
    %93 = vst.msk [vmem:[%s92] sm:$0x1] %vm91, %v90
    %s94 = scalar_lea.vmem %s0, 126
    %v95 = vld [vmem:[%s94] sm:$0x1]
    %96 = vrot.lane.b32.xlu0 %v95, 118
    %v97 = vpop.permute.xlu0 %96
    %vm98 = vcmask 1007536
    %s99 = scalar_lea.vmem [#allocation0], 32
    %100 = vst.msk [vmem:[%s99] sm:$0x1] %vm98, %v97
    %s101 = scalar_lea.vmem %s0, 49
    %v102 = vld [vmem:[%s101] sm:$0x1]
    %103 = vrot.lane.b32.xlu0 %v102, 117
    %v104 = vpop.permute.xlu0 %103
    %vm105 = vcmask 999336
    %s106 = scalar_lea.vmem [#allocation0], 8
    %107 = vst.msk [vmem:[%s106] sm:$0x1] %vm105, %v104
    %s108 = scalar_lea.vmem %s0, 100
    %v109 = vld [vmem:[%s108] sm:$0x1]
    %110 = vrot.lane.b32.xlu0 %v109, 116
    %v111 = vpop.permute.xlu0 %110
    %vm112 = vcmask 991136
    %s113 = scalar_lea.vmem [#allocation0], 24
    %114 = vst.msk [vmem:[%s113] sm:$0x1] %vm112, %v111
    %s115 = scalar_lea.vmem %s0, 23
    %v116 = vld [vmem:[%s115] sm:$0x1]
    %117 = vrot.lane.b32.xlu0 %v116, 115
    %v118 = vpop.permute.xlu0 %117
    %vm119 = vcmask 982936
    %120 = vst.msk [vmem:[#allocation0] sm:$0x1] %vm119, %v118
    %s121 = scalar_lea.vmem %s0, 74
    %v122 = vld [vmem:[%s121] sm:$0x1]
    %123 = vrot.lane.b32.xlu0 %v122, 114
    %v124 = vpop.permute.xlu0 %123
    %vm125 = vcmask 974736
    %s126 = scalar_lea.vmem [#allocation0], 16
    %127 = vst.msk [vmem:[%s126] sm:$0x1] %vm125, %v124
    %s128 = scalar_lea.vmem %s0, 125
    %v129 = vld [vmem:[%s128] sm:$0x1]
    %130 = vrot.lane.b32.xlu0 %v129, 113
    %v131 = vpop.permute.xlu0 %130
    %vm132 = vcmask 966536
    %s133 = scalar_lea.vmem [#allocation0], 32
    %134 = vst.msk [vmem:[%s133] sm:$0x1] %vm132, %v131
    %s135 = scalar_lea.vmem %s0, 48
    %v136 = vld [vmem:[%s135] sm:$0x1]
    %137 = vrot.lane.b32.xlu0 %v136, 112
    %v138 = vpop.permute.xlu0 %137
    %vm139 = vcmask 958336
    %s140 = scalar_lea.vmem [#allocation0], 8
    %141 = vst.msk [vmem:[%s140] sm:$0x1] %vm139, %v138
    %s142 = scalar_lea.vmem %s0, 99
    %v143 = vld [vmem:[%s142] sm:$0x1]
    %144 = vrot.lane.b32.xlu0 %v143, 111
    %v145 = vpop.permute.xlu0 %144
    %vm146 = vcmask 950136
    %s147 = scalar_lea.vmem [#allocation0], 24
    %148 = vst.msk [vmem:[%s147] sm:$0x1] %vm146, %v145
    %s149 = scalar_lea.vmem %s0, 22
    %v150 = vld [vmem:[%s149] sm:$0x1]
    %151 = vrot.lane.b32.xlu0 %v150, 110
    %v152 = vpop.permute.xlu0 %151
    %vm153 = vcmask 941936
    %154 = vst.msk [vmem:[#allocation0] sm:$0x1] %vm153, %v152
    %s155 = scalar_lea.vmem %s0, 73
    %v156 = vld [vmem:[%s155] sm:$0x1]
    %157 = vrot.lane.b32.xlu0 %v156, 109
    %v158 = vpop.permute.xlu0 %157
    %vm159 = vcmask 933736
    %s160 = scalar_lea.vmem [#allocation0], 16
    %161 = vst.msk [vmem:[%s160] sm:$0x1] %vm159, %v158
    %s162 = scalar_lea.vmem %s0, 124
    %v163 = vld [vmem:[%s162] sm:$0x1]
    %164 = vrot.lane.b32.xlu0 %v163, 108
    %v165 = vpop.permute.xlu0 %164
    %vm166 = vcmask 925536
    %s167 = scalar_lea.vmem [#allocation0], 32
    %168 = vst.msk [vmem:[%s167] sm:$0x1] %vm166, %v165
    %s169 = scalar_lea.vmem %s0, 47
    %v170 = vld [vmem:[%s169] sm:$0x1]
    %171 = vrot.lane.b32.xlu0 %v170, 107
    %v172 = vpop.permute.xlu0 %171
    %vm173 = vcmask 917336
    %s174 = scalar_lea.vmem [#allocation0], 8
    %175 = vst.msk [vmem:[%s174] sm:$0x1] %vm173, %v172
    %s176 = scalar_lea.vmem %s0, 98
    %v177 = vld [vmem:[%s176] sm:$0x1]
    %178 = vrot.lane.b32.xlu0 %v177, 106
    %v179 = vpop.permute.xlu0 %178
    %vm180 = vcmask 909136
    %s181 = scalar_lea.vmem [#allocation0], 24
    %182 = vst.msk [vmem:[%s181] sm:$0x1] %vm180, %v179
    %s183 = scalar_lea.vmem %s0, 21
    %v184 = vld [vmem:[%s183] sm:$0x1]
    %185 = vrot.lane.b32.xlu0 %v184, 105
    %v186 = vpop.permute.xlu0 %185
    %vm187 = vcmask 900936
    %188 = vst.msk [vmem:[#allocation0] sm:$0x1] %vm187, %v186
    %s189 = scalar_lea.vmem %s0, 72
    %v190 = vld [vmem:[%s189] sm:$0x1]
    %191 = vrot.lane.b32.xlu0 %v190, 104
    %v192 = vpop.permute.xlu0 %191
    %vm193 = vcmask 892736
    %s194 = scalar_lea.vmem [#allocation0], 16
    %195 = vst.msk [vmem:[%s194] sm:$0x1] %vm193, %v192
    %s196 = scalar_lea.vmem %s0, 123
    %v197 = vld [vmem:[%s196] sm:$0x1]
    %198 = vrot.lane.b32.xlu0 %v197, 103
    %v199 = vpop.permute.xlu0 %198
    %vm200 = vcmask 884536
    %s201 = scalar_lea.vmem [#allocation0], 32
    %202 = vst.msk [vmem:[%s201] sm:$0x1] %vm200, %v199
    %s203 = scalar_lea.vmem %s0, 46
    %v204 = vld [vmem:[%s203] sm:$0x1]
    %205 = vrot.lane.b32.xlu0 %v204, 102
    %v206 = vpop.permute.xlu0 %205
    %vm207 = vcmask 876336
    %s208 = scalar_lea.vmem [#allocation0], 8
    %209 = vst.msk [vmem:[%s208] sm:$0x1] %vm207, %v206
    %s210 = scalar_lea.vmem %s0, 97
    %v211 = vld [vmem:[%s210] sm:$0x1]
    %212 = vrot.lane.b32.xlu0 %v211, 101
    %v213 = vpop.permute.xlu0 %212
    %vm214 = vcmask 868136
    %s215 = scalar_lea.vmem [#allocation0], 24
    %216 = vst.msk [vmem:[%s215] sm:$0x1] %vm214, %v213
    %s217 = scalar_lea.vmem %s0, 20
    %v218 = vld [vmem:[%s217] sm:$0x1]
    %219 = vrot.lane.b32.xlu0 %v218, 100
    %v220 = vpop.permute.xlu0 %219
    %vm221 = vcmask 859936
    %222 = vst.msk [vmem:[#allocation0] sm:$0x1] %vm221, %v220
    %s223 = scalar_lea.vmem %s0, 71
    %v224 = vld [vmem:[%s223] sm:$0x1]
    %225 = vrot.lane.b32.xlu0 %v224, 99
    %v226 = vpop.permute.xlu0 %225
    %vm227 = vcmask 851736
    %s228 = scalar_lea.vmem [#allocation0], 16
    %229 = vst.msk [vmem:[%s228] sm:$0x1] %vm227, %v226
    %s230 = scalar_lea.vmem %s0, 122
    %v231 = vld [vmem:[%s230] sm:$0x1]
    %232 = vrot.lane.b32.xlu0 %v231, 98
    %v233 = vpop.permute.xlu0 %232
    %vm234 = vcmask 843536
    %s235 = scalar_lea.vmem [#allocation0], 32
    %236 = vst.msk [vmem:[%s235] sm:$0x1] %vm234, %v233
    %s237 = scalar_lea.vmem %s0, 45
    %v238 = vld [vmem:[%s237] sm:$0x1]
    %239 = vrot.lane.b32.xlu0 %v238, 97
    %v240 = vpop.permute.xlu0 %239
    %vm241 = vcmask 835336
    %s242 = scalar_lea.vmem [#allocation0], 8
    %243 = vst.msk [vmem:[%s242] sm:$0x1] %vm241, %v240
    %s244 = scalar_lea.vmem %s0, 96
    %v245 = vld [vmem:[%s244] sm:$0x1]
    %246 = vrot.lane.b32.xlu0 %v245, 96
    %v247 = vpop.permute.xlu0 %246
    %vm248 = vcmask 827136
    %s249 = scalar_lea.vmem [#allocation0], 24
    %250 = vst.msk [vmem:[%s249] sm:$0x1] %vm248, %v247
    %s251 = scalar_lea.vmem %s0, 19
    %v252 = vld [vmem:[%s251] sm:$0x1]
    %253 = vrot.lane.b32.xlu0 %v252, 95
    %v254 = vpop.permute.xlu0 %253
    %vm255 = vcmask 818936
    %256 = vst.msk [vmem:[#allocation0] sm:$0x1] %vm255, %v254
    %s257 = scalar_lea.vmem %s0, 70
    %v258 = vld [vmem:[%s257] sm:$0x1]
    %259 = vrot.lane.b32.xlu0 %v258, 94
    %v260 = vpop.permute.xlu0 %259
    %vm261 = vcmask 810736
    %s262 = scalar_lea.vmem [#allocation0], 16
    %263 = vst.msk [vmem:[%s262] sm:$0x1] %vm261, %v260
    %s264 = scalar_lea.vmem %s0, 121
    %v265 = vld [vmem:[%s264] sm:$0x1]
    %266 = vrot.lane.b32.xlu0 %v265, 93
    %v267 = vpop.permute.xlu0 %266
    %vm268 = vcmask 802536
    %s269 = scalar_lea.vmem [#allocation0], 32
    %270 = vst.msk [vmem:[%s269] sm:$0x1] %vm268, %v267
    %s271 = scalar_lea.vmem %s0, 44
    %v272 = vld [vmem:[%s271] sm:$0x1]
    %273 = vrot.lane.b32.xlu0 %v272, 92
    %v274 = vpop.permute.xlu0 %273
    %vm275 = vcmask 794336
    %s276 = scalar_lea.vmem [#allocation0], 8
    %277 = vst.msk [vmem:[%s276] sm:$0x1] %vm275, %v274
    %s278 = scalar_lea.vmem %s0, 95
    %v279 = vld [vmem:[%s278] sm:$0x1]
    %280 = vrot.lane.b32.xlu0 %v279, 91
    %v281 = vpop.permute.xlu0 %280
    %vm282 = vcmask 786136
    %s283 = scalar_lea.vmem [#allocation0], 24
    %284 = vst.msk [vmem:[%s283] sm:$0x1] %vm282, %v281
    %s285 = scalar_lea.vmem %s0, 18
    %v286 = vld [vmem:[%s285] sm:$0x1]
    %287 = vrot.lane.b32.xlu0 %v286, 90
    %v288 = vpop.permute.xlu0 %287
    %vm289 = vcmask 777936
    %290 = vst.msk [vmem:[#allocation0] sm:$0x1] %vm289, %v288
    %s291 = scalar_lea.vmem %s0, 69
    %v292 = vld [vmem:[%s291] sm:$0x1]
    %293 = vrot.lane.b32.xlu0 %v292, 89
    %v294 = vpop.permute.xlu0 %293
    %vm295 = vcmask 769736
    %s296 = scalar_lea.vmem [#allocation0], 16
    %297 = vst.msk [vmem:[%s296] sm:$0x1] %vm295, %v294
    %s298 = scalar_lea.vmem %s0, 120
    %v299 = vld [vmem:[%s298] sm:$0x1]
    %300 = vrot.lane.b32.xlu0 %v299, 88
    %v301 = vpop.permute.xlu0 %300
    %vm302 = vcmask 761536
    %s303 = scalar_lea.vmem [#allocation0], 32
    %304 = vst.msk [vmem:[%s303] sm:$0x1] %vm302, %v301
    %s305 = scalar_lea.vmem %s0, 43
    %v306 = vld [vmem:[%s305] sm:$0x1]
    %307 = vrot.lane.b32.xlu0 %v306, 87
    %v308 = vpop.permute.xlu0 %307
    %vm309 = vcmask 753336
    %s310 = scalar_lea.vmem [#allocation0], 8
    %311 = vst.msk [vmem:[%s310] sm:$0x1] %vm309, %v308
    %s312 = scalar_lea.vmem %s0, 94
    %v313 = vld [vmem:[%s312] sm:$0x1]
    %314 = vrot.lane.b32.xlu0 %v313, 86
    %v315 = vpop.permute.xlu0 %314
    %vm316 = vcmask 745136
    %s317 = scalar_lea.vmem [#allocation0], 24
    %318 = vst.msk [vmem:[%s317] sm:$0x1] %vm316, %v315
    %s319 = scalar_lea.vmem %s0, 17
    %v320 = vld [vmem:[%s319] sm:$0x1]
    %321 = vrot.lane.b32.xlu0 %v320, 85
    %v322 = vpop.permute.xlu0 %321
    %vm323 = vcmask 736936
    %324 = vst.msk [vmem:[#allocation0] sm:$0x1] %vm323, %v322
    %s325 = scalar_lea.vmem %s0, 68
    %v326 = vld [vmem:[%s325] sm:$0x1]
    %327 = vrot.lane.b32.xlu0 %v326, 84
    %v328 = vpop.permute.xlu0 %327
    %vm329 = vcmask 728736
    %s330 = scalar_lea.vmem [#allocation0], 16
    %331 = vst.msk [vmem:[%s330] sm:$0x1] %vm329, %v328
    %s332 = scalar_lea.vmem %s0, 119
    %v333 = vld [vmem:[%s332] sm:$0x1]
    %334 = vrot.lane.b32.xlu0 %v333, 83
    %v335 = vpop.permute.xlu0 %334
    %vm336 = vcmask 720536
    %s337 = scalar_lea.vmem [#allocation0], 32
    %338 = vst.msk [vmem:[%s337] sm:$0x1] %vm336, %v335
    %s339 = scalar_lea.vmem %s0, 42
    %v340 = vld [vmem:[%s339] sm:$0x1]
    %341 = vrot.lane.b32.xlu0 %v340, 82
    %v342 = vpop.permute.xlu0 %341
    %vm343 = vcmask 712336
    %s344 = scalar_lea.vmem [#allocation0], 8
    %345 = vst.msk [vmem:[%s344] sm:$0x1] %vm343, %v342
    %s346 = scalar_lea.vmem %s0, 93
    %v347 = vld [vmem:[%s346] sm:$0x1]
    %348 = vrot.lane.b32.xlu0 %v347, 81
    %v349 = vpop.permute.xlu0 %348
    %vm350 = vcmask 704136
    %s351 = scalar_lea.vmem [#allocation0], 24
    %352 = vst.msk [vmem:[%s351] sm:$0x1] %vm350, %v349
    %s353 = scalar_lea.vmem %s0, 16
    %v354 = vld [vmem:[%s353] sm:$0x1]
    %355 = vrot.lane.b32.xlu0 %v354, 80
    %v356 = vpop.permute.xlu0 %355
    %vm357 = vcmask 695936
    %358 = vst.msk [vmem:[#allocation0] sm:$0x1] %vm357, %v356
    %s359 = scalar_lea.vmem %s0, 67
    %v360 = vld [vmem:[%s359] sm:$0x1]
    %361 = vrot.lane.b32.xlu0 %v360, 79
    %v362 = vpop.permute.xlu0 %361
    %vm363 = vcmask 687736
    %s364 = scalar_lea.vmem [#allocation0], 16
    %365 = vst.msk [vmem:[%s364] sm:$0x1] %vm363, %v362
    %s366 = scalar_lea.vmem %s0, 118
    %v367 = vld [vmem:[%s366] sm:$0x1]
    %368 = vrot.lane.b32.xlu0 %v367, 78
    %v369 = vpop.permute.xlu0 %368
    %vm370 = vcmask 679536
    %s371 = scalar_lea.vmem [#allocation0], 32
    %372 = vst.msk [vmem:[%s371] sm:$0x1] %vm370, %v369
    %s373 = scalar_lea.vmem %s0, 41
    %v374 = vld [vmem:[%s373] sm:$0x1]
    %375 = vrot.lane.b32.xlu0 %v374, 77
    %v376 = vpop.permute.xlu0 %375
    %vm377 = vcmask 671336
    %s378 = scalar_lea.vmem [#allocation0], 8
    %379 = vst.msk [vmem:[%s378] sm:$0x1] %vm377, %v376
    %s380 = scalar_lea.vmem %s0, 92
    %v381 = vld [vmem:[%s380] sm:$0x1]
    %382 = vrot.lane.b32.xlu0 %v381, 76
    %v383 = vpop.permute.xlu0 %382
    %vm384 = vcmask 663136
    %s385 = scalar_lea.vmem [#allocation0], 24
    %386 = vst.msk [vmem:[%s385] sm:$0x1] %vm384, %v383
    %s387 = scalar_lea.vmem %s0, 15
    %v388 = vld [vmem:[%s387] sm:$0x1]
    %389 = vrot.lane.b32.xlu0 %v388, 75
    %v390 = vpop.permute.xlu0 %389
    %vm391 = vcmask 654936
    %392 = vst.msk [vmem:[#allocation0] sm:$0x1] %vm391, %v390
    %s393 = scalar_lea.vmem %s0, 66
    %v394 = vld [vmem:[%s393] sm:$0x1]
    %395 = vrot.lane.b32.xlu0 %v394, 74
    %v396 = vpop.permute.xlu0 %395
    %vm397 = vcmask 646736
    %s398 = scalar_lea.vmem [#allocation0], 16
    %399 = vst.msk [vmem:[%s398] sm:$0x1] %vm397, %v396
    %s400 = scalar_lea.vmem %s0, 117
    %v401 = vld [vmem:[%s400] sm:$0x1]
    %402 = vrot.lane.b32.xlu0 %v401, 73
    %v403 = vpop.permute.xlu0 %402
    %vm404 = vcmask 638536
    %s405 = scalar_lea.vmem [#allocation0], 32
    %406 = vst.msk [vmem:[%s405] sm:$0x1] %vm404, %v403
    %s407 = scalar_lea.vmem %s0, 40
    %v408 = vld [vmem:[%s407] sm:$0x1]
    %409 = vrot.lane.b32.xlu0 %v408, 72
    %v410 = vpop.permute.xlu0 %409
    %vm411 = vcmask 630336
    %s412 = scalar_lea.vmem [#allocation0], 8
    %413 = vst.msk [vmem:[%s412] sm:$0x1] %vm411, %v410
    %s414 = scalar_lea.vmem %s0, 91
    %v415 = vld [vmem:[%s414] sm:$0x1]
    %416 = vrot.lane.b32.xlu0 %v415, 71
    %v417 = vpop.permute.xlu0 %416
    %vm418 = vcmask 622136
    %s419 = scalar_lea.vmem [#allocation0], 24
    %420 = vst.msk [vmem:[%s419] sm:$0x1] %vm418, %v417
    %s421 = scalar_lea.vmem %s0, 14
    %v422 = vld [vmem:[%s421] sm:$0x1]
    %423 = vrot.lane.b32.xlu0 %v422, 70
    %v424 = vpop.permute.xlu0 %423
    %vm425 = vcmask 613936
    %426 = vst.msk [vmem:[#allocation0] sm:$0x1] %vm425, %v424
    %s427 = scalar_lea.vmem %s0, 65
    %v428 = vld [vmem:[%s427] sm:$0x1]
    %429 = vrot.lane.b32.xlu0 %v428, 69
    %v430 = vpop.permute.xlu0 %429
    %vm431 = vcmask 605736
    %s432 = scalar_lea.vmem [#allocation0], 16
    %433 = vst.msk [vmem:[%s432] sm:$0x1] %vm431, %v430
    %s434 = scalar_lea.vmem %s0, 116
    %v435 = vld [vmem:[%s434] sm:$0x1]
    %436 = vrot.lane.b32.xlu0 %v435, 68
    %v437 = vpop.permute.xlu0 %436
    %vm438 = vcmask 597536
    %s439 = scalar_lea.vmem [#allocation0], 32
    %440 = vst.msk [vmem:[%s439] sm:$0x1] %vm438, %v437
    %s441 = scalar_lea.vmem %s0, 39
    %v442 = vld [vmem:[%s441] sm:$0x1]
    %443 = vrot.lane.b32.xlu0 %v442, 67
    %v444 = vpop.permute.xlu0 %443
    %vm445 = vcmask 589336
    %s446 = scalar_lea.vmem [#allocation0], 8
    %447 = vst.msk [vmem:[%s446] sm:$0x1] %vm445, %v444
    %s448 = scalar_lea.vmem %s0, 90
    %v449 = vld [vmem:[%s448] sm:$0x1]
    %450 = vrot.lane.b32.xlu0 %v449, 66
    %v451 = vpop.permute.xlu0 %450
    %vm452 = vcmask 581136
    %s453 = scalar_lea.vmem [#allocation0], 24
    %454 = vst.msk [vmem:[%s453] sm:$0x1] %vm452, %v451
    %s455 = scalar_lea.vmem %s0, 13
    %v456 = vld [vmem:[%s455] sm:$0x1]
    %457 = vrot.lane.b32.xlu0 %v456, 65
    %v458 = vpop.permute.xlu0 %457
    %vm459 = vcmask 572936
    %460 = vst.msk [vmem:[#allocation0] sm:$0x1] %vm459, %v458
    %s461 = scalar_lea.vmem %s0, 64
    %v462 = vld [vmem:[%s461] sm:$0x1]
    %463 = vrot.lane.b32.xlu0 %v462, 64
    %v464 = vpop.permute.xlu0 %463
    %vm465 = vcmask 564736
    %s466 = scalar_lea.vmem [#allocation0], 16
    %467 = vst.msk [vmem:[%s466] sm:$0x1] %vm465, %v464
    %s468 = scalar_lea.vmem %s0, 115
    %v469 = vld [vmem:[%s468] sm:$0x1]
    %470 = vrot.lane.b32.xlu0 %v469, 63
    %v471 = vpop.permute.xlu0 %470
    %vm472 = vcmask 556536
    %s473 = scalar_lea.vmem [#allocation0], 32
    %474 = vst.msk [vmem:[%s473] sm:$0x1] %vm472, %v471
    %s475 = scalar_lea.vmem %s0, 38
    %v476 = vld [vmem:[%s475] sm:$0x1]
    %477 = vrot.lane.b32.xlu0 %v476, 62
    %v478 = vpop.permute.xlu0 %477
    %vm479 = vcmask 548336
    %s480 = scalar_lea.vmem [#allocation0], 8
    %481 = vst.msk [vmem:[%s480] sm:$0x1] %vm479, %v478
    %s482 = scalar_lea.vmem %s0, 89
    %v483 = vld [vmem:[%s482] sm:$0x1]
    %484 = vrot.lane.b32.xlu0 %v483, 61
    %v485 = vpop.permute.xlu0 %484
    %vm486 = vcmask 540136
    %s487 = scalar_lea.vmem [#allocation0], 24
    %488 = vst.msk [vmem:[%s487] sm:$0x1] %vm486, %v485
    %s489 = scalar_lea.vmem %s0, 12
    %v490 = vld [vmem:[%s489] sm:$0x1]
    %491 = vrot.lane.b32.xlu0 %v490, 60
    %v492 = vpop.permute.xlu0 %491
    %vm493 = vcmask 531936
    %494 = vst.msk [vmem:[#allocation0] sm:$0x1] %vm493, %v492
    %s495 = scalar_lea.vmem %s0, 63
    %v496 = vld [vmem:[%s495] sm:$0x1]
    %497 = vrot.lane.b32.xlu0 %v496, 59
    %v498 = vpop.permute.xlu0 %497
    %vm499 = vcmask 523736
    %s500 = scalar_lea.vmem [#allocation0], 16
    %501 = vst.msk [vmem:[%s500] sm:$0x1] %vm499, %v498
    %s502 = scalar_lea.vmem %s0, 114
    %v503 = vld [vmem:[%s502] sm:$0x1]
    %504 = vrot.lane.b32.xlu0 %v503, 58
    %v505 = vpop.permute.xlu0 %504
    %vm506 = vcmask 515536
    %s507 = scalar_lea.vmem [#allocation0], 32
    %508 = vst.msk [vmem:[%s507] sm:$0x1] %vm506, %v505
    %s509 = scalar_lea.vmem %s0, 37
    %v510 = vld [vmem:[%s509] sm:$0x1]
    %511 = vrot.lane.b32.xlu0 %v510, 57
    %v512 = vpop.permute.xlu0 %511
    %vm513 = vcmask 507336
    %s514 = scalar_lea.vmem [#allocation0], 8
    %515 = vst.msk [vmem:[%s514] sm:$0x1] %vm513, %v512
    %s516 = scalar_lea.vmem %s0, 88
    %v517 = vld [vmem:[%s516] sm:$0x1]
    %518 = vrot.lane.b32.xlu0 %v517, 56
    %v519 = vpop.permute.xlu0 %518
    %vm520 = vcmask 499136
    %s521 = scalar_lea.vmem [#allocation0], 24
    %522 = vst.msk [vmem:[%s521] sm:$0x1] %vm520, %v519
    %s523 = scalar_lea.vmem %s0, 11
    %v524 = vld [vmem:[%s523] sm:$0x1]
    %525 = vrot.lane.b32.xlu0 %v524, 55
    %v526 = vpop.permute.xlu0 %525
    %vm527 = vcmask 490936
    %528 = vst.msk [vmem:[#allocation0] sm:$0x1] %vm527, %v526
    %s529 = scalar_lea.vmem %s0, 62
    %v530 = vld [vmem:[%s529] sm:$0x1]
    %531 = vrot.lane.b32.xlu0 %v530, 54
    %v532 = vpop.permute.xlu0 %531
    %vm533 = vcmask 482736
    %s534 = scalar_lea.vmem [#allocation0], 16
    %535 = vst.msk [vmem:[%s534] sm:$0x1] %vm533, %v532
    %s536 = scalar_lea.vmem %s0, 113
    %v537 = vld [vmem:[%s536] sm:$0x1]
    %538 = vrot.lane.b32.xlu0 %v537, 53
    %v539 = vpop.permute.xlu0 %538
    %vm540 = vcmask 474536
    %s541 = scalar_lea.vmem [#allocation0], 32
    %542 = vst.msk [vmem:[%s541] sm:$0x1] %vm540, %v539
    %s543 = scalar_lea.vmem %s0, 36
    %v544 = vld [vmem:[%s543] sm:$0x1]
    %545 = vrot.lane.b32.xlu0 %v544, 52
    %v546 = vpop.permute.xlu0 %545
    %vm547 = vcmask 466336
    %s548 = scalar_lea.vmem [#allocation0], 8
    %549 = vst.msk [vmem:[%s548] sm:$0x1] %vm547, %v546
    %s550 = scalar_lea.vmem %s0, 87
    %v551 = vld [vmem:[%s550] sm:$0x1]
    %552 = vrot.lane.b32.xlu0 %v551, 51
    %v553 = vpop.permute.xlu0 %552
    %vm554 = vcmask 458136
    %s555 = scalar_lea.vmem [#allocation0], 24
    %556 = vst.msk [vmem:[%s555] sm:$0x1] %vm554, %v553
    %s557 = scalar_lea.vmem %s0, 10
    %v558 = vld [vmem:[%s557] sm:$0x1]
    %559 = vrot.lane.b32.xlu0 %v558, 50
    %v560 = vpop.permute.xlu0 %559
    %vm561 = vcmask 449936
    %562 = vst.msk [vmem:[#allocation0] sm:$0x1] %vm561, %v560
    %s563 = scalar_lea.vmem %s0, 61
    %v564 = vld [vmem:[%s563] sm:$0x1]
    %565 = vrot.lane.b32.xlu0 %v564, 49
    %v566 = vpop.permute.xlu0 %565
    %vm567 = vcmask 441736
    %s568 = scalar_lea.vmem [#allocation0], 16
    %569 = vst.msk [vmem:[%s568] sm:$0x1] %vm567, %v566
    %s570 = scalar_lea.vmem %s0, 112
    %v571 = vld [vmem:[%s570] sm:$0x1]
    %572 = vrot.lane.b32.xlu0 %v571, 48
    %v573 = vpop.permute.xlu0 %572
    %vm574 = vcmask 433536
    %s575 = scalar_lea.vmem [#allocation0], 32
    %576 = vst.msk [vmem:[%s575] sm:$0x1] %vm574, %v573
    %s577 = scalar_lea.vmem %s0, 35
    %v578 = vld [vmem:[%s577] sm:$0x1]
    %579 = vrot.lane.b32.xlu0 %v578, 47
    %v580 = vpop.permute.xlu0 %579
    %vm581 = vcmask 425336
    %s582 = scalar_lea.vmem [#allocation0], 8
    %583 = vst.msk [vmem:[%s582] sm:$0x1] %vm581, %v580
    %s584 = scalar_lea.vmem %s0, 86
    %v585 = vld [vmem:[%s584] sm:$0x1]
    %586 = vrot.lane.b32.xlu0 %v585, 46
    %v587 = vpop.permute.xlu0 %586
    %vm588 = vcmask 417136
    %s589 = scalar_lea.vmem [#allocation0], 24
    %590 = vst.msk [vmem:[%s589] sm:$0x1] %vm588, %v587
    %s591 = scalar_lea.vmem %s0, 9
    %v592 = vld [vmem:[%s591] sm:$0x1]
    %593 = vrot.lane.b32.xlu0 %v592, 45
    %v594 = vpop.permute.xlu0 %593
    %vm595 = vcmask 408936
    %596 = vst.msk [vmem:[#allocation0] sm:$0x1] %vm595, %v594
    %s597 = scalar_lea.vmem %s0, 60
    %v598 = vld [vmem:[%s597] sm:$0x1]
    %599 = vrot.lane.b32.xlu0 %v598, 44
    %v600 = vpop.permute.xlu0 %599
    %vm601 = vcmask 400736
    %s602 = scalar_lea.vmem [#allocation0], 16
    %603 = vst.msk [vmem:[%s602] sm:$0x1] %vm601, %v600
    %s604 = scalar_lea.vmem %s0, 111
    %v605 = vld [vmem:[%s604] sm:$0x1]
    %606 = vrot.lane.b32.xlu0 %v605, 43
    %v607 = vpop.permute.xlu0 %606
    %vm608 = vcmask 392536
    %s609 = scalar_lea.vmem [#allocation0], 32
    %610 = vst.msk [vmem:[%s609] sm:$0x1] %vm608, %v607
    %s611 = scalar_lea.vmem %s0, 34
    %v612 = vld [vmem:[%s611] sm:$0x1]
    %613 = vrot.lane.b32.xlu0 %v612, 42
    %v614 = vpop.permute.xlu0 %613
    %vm615 = vcmask 384336
    %s616 = scalar_lea.vmem [#allocation0], 8
    %617 = vst.msk [vmem:[%s616] sm:$0x1] %vm615, %v614
    %s618 = scalar_lea.vmem %s0, 85
    %v619 = vld [vmem:[%s618] sm:$0x1]
    %620 = vrot.lane.b32.xlu0 %v619, 41
    %v621 = vpop.permute.xlu0 %620
    %vm622 = vcmask 376136
    %s623 = scalar_lea.vmem [#allocation0], 24
    %624 = vst.msk [vmem:[%s623] sm:$0x1] %vm622, %v621
    %s625 = scalar_lea.vmem %s0, 8
    %v626 = vld [vmem:[%s625] sm:$0x1]
    %627 = vrot.lane.b32.xlu0 %v626, 40
    %v628 = vpop.permute.xlu0 %627
    %vm629 = vcmask 367936
    %630 = vst.msk [vmem:[#allocation0] sm:$0x1] %vm629, %v628
    %s631 = scalar_lea.vmem %s0, 59
    %v632 = vld [vmem:[%s631] sm:$0x1]
    %633 = vrot.lane.b32.xlu0 %v632, 39
    %v634 = vpop.permute.xlu0 %633
    %vm635 = vcmask 359736
    %s636 = scalar_lea.vmem [#allocation0], 16
    %637 = vst.msk [vmem:[%s636] sm:$0x1] %vm635, %v634
    %s638 = scalar_lea.vmem %s0, 110
    %v639 = vld [vmem:[%s638] sm:$0x1]
    %640 = vrot.lane.b32.xlu0 %v639, 38
    %v641 = vpop.permute.xlu0 %640
    %vm642 = vcmask 351536
    %s643 = scalar_lea.vmem [#allocation0], 32
    %644 = vst.msk [vmem:[%s643] sm:$0x1] %vm642, %v641
    %s645 = scalar_lea.vmem %s0, 33
    %v646 = vld [vmem:[%s645] sm:$0x1]
    %647 = vrot.lane.b32.xlu0 %v646, 37
    %v648 = vpop.permute.xlu0 %647
    %vm649 = vcmask 343336
    %s650 = scalar_lea.vmem [#allocation0], 8
    %651 = vst.msk [vmem:[%s650] sm:$0x1] %vm649, %v648
    %s652 = scalar_lea.vmem %s0, 84
    %v653 = vld [vmem:[%s652] sm:$0x1]
    %654 = vrot.lane.b32.xlu0 %v653, 36
    %v655 = vpop.permute.xlu0 %654
    %vm656 = vcmask 335136
    %s657 = scalar_lea.vmem [#allocation0], 24
    %658 = vst.msk [vmem:[%s657] sm:$0x1] %vm656, %v655
    %s659 = scalar_lea.vmem %s0, 7
    %v660 = vld [vmem:[%s659] sm:$0x1]
    %661 = vrot.lane.b32.xlu0 %v660, 35
    %v662 = vpop.permute.xlu0 %661
    %vm663 = vcmask 326936
    %664 = vst.msk [vmem:[#allocation0] sm:$0x1] %vm663, %v662
    %s665 = scalar_lea.vmem %s0, 58
    %v666 = vld [vmem:[%s665] sm:$0x1]
    %667 = vrot.lane.b32.xlu0 %v666, 34
    %v668 = vpop.permute.xlu0 %667
    %vm669 = vcmask 318736
    %s670 = scalar_lea.vmem [#allocation0], 16
    %671 = vst.msk [vmem:[%s670] sm:$0x1] %vm669, %v668
    %s672 = scalar_lea.vmem %s0, 109
    %v673 = vld [vmem:[%s672] sm:$0x1]
    %674 = vrot.lane.b32.xlu0 %v673, 33
    %v675 = vpop.permute.xlu0 %674
    %vm676 = vcmask 310536
    %s677 = scalar_lea.vmem [#allocation0], 32
    %678 = vst.msk [vmem:[%s677] sm:$0x1] %vm676, %v675
    %s679 = scalar_lea.vmem %s0, 32
    %v680 = vld [vmem:[%s679] sm:$0x1]
    %681 = vrot.lane.b32.xlu0 %v680, 32
    %v682 = vpop.permute.xlu0 %681
    %vm683 = vcmask 302336
    %s684 = scalar_lea.vmem [#allocation0], 8
    %685 = vst.msk [vmem:[%s684] sm:$0x1] %vm683, %v682
    %s686 = scalar_lea.vmem %s0, 83
    %v687 = vld [vmem:[%s686] sm:$0x1]
    %688 = vrot.lane.b32.xlu0 %v687, 31
    %v689 = vpop.permute.xlu0 %688
    %vm690 = vcmask 294136
    %s691 = scalar_lea.vmem [#allocation0], 24
    %692 = vst.msk [vmem:[%s691] sm:$0x1] %vm690, %v689
    %s693 = scalar_lea.vmem %s0, 6
    %v694 = vld [vmem:[%s693] sm:$0x1]
    %695 = vrot.lane.b32.xlu0 %v694, 30
    %v696 = vpop.permute.xlu0 %695
    %vm697 = vcmask 285936
    %698 = vst.msk [vmem:[#allocation0] sm:$0x1] %vm697, %v696
    %s699 = scalar_lea.vmem %s0, 57
    %v700 = vld [vmem:[%s699] sm:$0x1]
    %701 = vrot.lane.b32.xlu0 %v700, 29
    %v702 = vpop.permute.xlu0 %701
    %vm703 = vcmask 277736
    %s704 = scalar_lea.vmem [#allocation0], 16
    %705 = vst.msk [vmem:[%s704] sm:$0x1] %vm703, %v702
    %s706 = scalar_lea.vmem %s0, 108
    %v707 = vld [vmem:[%s706] sm:$0x1]
    %708 = vrot.lane.b32.xlu0 %v707, 28
    %v709 = vpop.permute.xlu0 %708
    %vm710 = vcmask 269536
    %s711 = scalar_lea.vmem [#allocation0], 32
    %712 = vst.msk [vmem:[%s711] sm:$0x1] %vm710, %v709
    %s713 = scalar_lea.vmem %s0, 31
    %v714 = vld [vmem:[%s713] sm:$0x1]
    %715 = vrot.lane.b32.xlu0 %v714, 27
    %v716 = vpop.permute.xlu0 %715
    %vm717 = vcmask 261336
    %s718 = scalar_lea.vmem [#allocation0], 8
    %719 = vst.msk [vmem:[%s718] sm:$0x1] %vm717, %v716
    %s720 = scalar_lea.vmem %s0, 82
    %v721 = vld [vmem:[%s720] sm:$0x1]
    %722 = vrot.lane.b32.xlu0 %v721, 26
    %v723 = vpop.permute.xlu0 %722
    %vm724 = vcmask 253136
    %s725 = scalar_lea.vmem [#allocation0], 24
    %726 = vst.msk [vmem:[%s725] sm:$0x1] %vm724, %v723
    %s727 = scalar_lea.vmem %s0, 5
    %v728 = vld [vmem:[%s727] sm:$0x1]
    %729 = vrot.lane.b32.xlu0 %v728, 25
    %v730 = vpop.permute.xlu0 %729
    %vm731 = vcmask 244936
    %732 = vst.msk [vmem:[#allocation0] sm:$0x1] %vm731, %v730
    %s733 = scalar_lea.vmem %s0, 56
    %v734 = vld [vmem:[%s733] sm:$0x1]
    %735 = vrot.lane.b32.xlu0 %v734, 24
    %v736 = vpop.permute.xlu0 %735
    %vm737 = vcmask 236736
    %s738 = scalar_lea.vmem [#allocation0], 16
    %739 = vst.msk [vmem:[%s738] sm:$0x1] %vm737, %v736
    %s740 = scalar_lea.vmem %s0, 107
    %v741 = vld [vmem:[%s740] sm:$0x1]
    %742 = vrot.lane.b32.xlu0 %v741, 23
    %v743 = vpop.permute.xlu0 %742
    %vm744 = vcmask 228536
    %s745 = scalar_lea.vmem [#allocation0], 32
    %746 = vst.msk [vmem:[%s745] sm:$0x1] %vm744, %v743
    %s747 = scalar_lea.vmem %s0, 30
    %v748 = vld [vmem:[%s747] sm:$0x1]
    %749 = vrot.lane.b32.xlu0 %v748, 22
    %v750 = vpop.permute.xlu0 %749
    %vm751 = vcmask 220336
    %s752 = scalar_lea.vmem [#allocation0], 8
    %753 = vst.msk [vmem:[%s752] sm:$0x1] %vm751, %v750
    %s754 = scalar_lea.vmem %s0, 81
    %v755 = vld [vmem:[%s754] sm:$0x1]
    %756 = vrot.lane.b32.xlu0 %v755, 21
    %v757 = vpop.permute.xlu0 %756
    %vm758 = vcmask 212136
    %s759 = scalar_lea.vmem [#allocation0], 24
    %760 = vst.msk [vmem:[%s759] sm:$0x1] %vm758, %v757
    %s761 = scalar_lea.vmem %s0, 4
    %v762 = vld [vmem:[%s761] sm:$0x1]
    %763 = vrot.lane.b32.xlu0 %v762, 20
    %v764 = vpop.permute.xlu0 %763
    %vm765 = vcmask 203936
    %766 = vst.msk [vmem:[#allocation0] sm:$0x1] %vm765, %v764
    %s767 = scalar_lea.vmem %s0, 55
    %v768 = vld [vmem:[%s767] sm:$0x1]
    %769 = vrot.lane.b32.xlu0 %v768, 19
    %v770 = vpop.permute.xlu0 %769
    %vm771 = vcmask 195736
    %s772 = scalar_lea.vmem [#allocation0], 16
    %773 = vst.msk [vmem:[%s772] sm:$0x1] %vm771, %v770
    %s774 = scalar_lea.vmem %s0, 106
    %v775 = vld [vmem:[%s774] sm:$0x1]
    %776 = vrot.lane.b32.xlu0 %v775, 18
    %v777 = vpop.permute.xlu0 %776
    %vm778 = vcmask 187536
    %s779 = scalar_lea.vmem [#allocation0], 32
    %780 = vst.msk [vmem:[%s779] sm:$0x1] %vm778, %v777
    %s781 = scalar_lea.vmem %s0, 29
    %v782 = vld [vmem:[%s781] sm:$0x1]
    %783 = vrot.lane.b32.xlu0 %v782, 17
    %v784 = vpop.permute.xlu0 %783
    %vm785 = vcmask 179336
    %s786 = scalar_lea.vmem [#allocation0], 8
    %787 = vst.msk [vmem:[%s786] sm:$0x1] %vm785, %v784
    %s788 = scalar_lea.vmem %s0, 80
    %v789 = vld [vmem:[%s788] sm:$0x1]
    %790 = vrot.lane.b32.xlu0 %v789, 16
    %v791 = vpop.permute.xlu0 %790
    %vm792 = vcmask 171136
    %s793 = scalar_lea.vmem [#allocation0], 24
    %794 = vst.msk [vmem:[%s793] sm:$0x1] %vm792, %v791
    %s795 = scalar_lea.vmem %s0, 3
    %v796 = vld [vmem:[%s795] sm:$0x1]
    %797 = vrot.lane.b32.xlu0 %v796, 15
    %v798 = vpop.permute.xlu0 %797
    %vm799 = vcmask 162936
    %800 = vst.msk [vmem:[#allocation0] sm:$0x1] %vm799, %v798
    %s801 = scalar_lea.vmem %s0, 54
    %v802 = vld [vmem:[%s801] sm:$0x1]
    %803 = vrot.lane.b32.xlu0 %v802, 14
    %v804 = vpop.permute.xlu0 %803
    %vm805 = vcmask 154736
    %s806 = scalar_lea.vmem [#allocation0], 16
    %807 = vst.msk [vmem:[%s806] sm:$0x1] %vm805, %v804
    %s808 = scalar_lea.vmem %s0, 105
    %v809 = vld [vmem:[%s808] sm:$0x1]
    %810 = vrot.lane.b32.xlu0 %v809, 13
    %v811 = vpop.permute.xlu0 %810
    %vm812 = vcmask 146536
    %s813 = scalar_lea.vmem [#allocation0], 32
    %814 = vst.msk [vmem:[%s813] sm:$0x1] %vm812, %v811
    %s815 = scalar_lea.vmem %s0, 28
    %v816 = vld [vmem:[%s815] sm:$0x1]
    %817 = vrot.lane.b32.xlu0 %v816, 12
    %v818 = vpop.permute.xlu0 %817
    %vm819 = vcmask 138336
    %s820 = scalar_lea.vmem [#allocation0], 8
    %821 = vst.msk [vmem:[%s820] sm:$0x1] %vm819, %v818
    %s822 = scalar_lea.vmem %s0, 79
    %v823 = vld [vmem:[%s822] sm:$0x1]
    %824 = vrot.lane.b32.xlu0 %v823, 11
    %v825 = vpop.permute.xlu0 %824
    %vm826 = vcmask 130136
    %s827 = scalar_lea.vmem [#allocation0], 24
    %828 = vst.msk [vmem:[%s827] sm:$0x1] %vm826, %v825
    %s829 = scalar_lea.vmem %s0, 2
    %v830 = vld [vmem:[%s829] sm:$0x1]
    %831 = vrot.lane.b32.xlu0 %v830, 10
    %v832 = vpop.permute.xlu0 %831
    %vm833 = vcmask 121936
    %834 = vst.msk [vmem:[#allocation0] sm:$0x1] %vm833, %v832
    %s835 = scalar_lea.vmem %s0, 53
    %v836 = vld [vmem:[%s835] sm:$0x1]
    %837 = vrot.lane.b32.xlu0 %v836, 9
    %v838 = vpop.permute.xlu0 %837
    %vm839 = vcmask 113736
    %s840 = scalar_lea.vmem [#allocation0], 16
    %841 = vst.msk [vmem:[%s840] sm:$0x1] %vm839, %v838
    %s842 = scalar_lea.vmem %s0, 104
    %v843 = vld [vmem:[%s842] sm:$0x1]
    %844 = vrot.lane.b32.xlu0 %v843, 8
    %v845 = vpop.permute.xlu0 %844
    %vm846 = vcmask 105536
    %s847 = scalar_lea.vmem [#allocation0], 32
    %848 = vst.msk [vmem:[%s847] sm:$0x1] %vm846, %v845
    %s849 = scalar_lea.vmem %s0, 27
    %v850 = vld [vmem:[%s849] sm:$0x1]
    %851 = vrot.lane.b32.xlu0 %v850, 7
    %v852 = vpop.permute.xlu0 %851
    %vm853 = vcmask 97336
    %s854 = scalar_lea.vmem [#allocation0], 8
    %855 = vst.msk [vmem:[%s854] sm:$0x1] %vm853, %v852
    %s856 = scalar_lea.vmem %s0, 78
    %v857 = vld [vmem:[%s856] sm:$0x1]
    %858 = vrot.lane.b32.xlu0 %v857, 6
    %v859 = vpop.permute.xlu0 %858
    %vm860 = vcmask 89136
    %s861 = scalar_lea.vmem [#allocation0], 24
    %862 = vst.msk [vmem:[%s861] sm:$0x1] %vm860, %v859
    %s863 = scalar_lea.vmem %s0, 1
    %v864 = vld [vmem:[%s863] sm:$0x1]
    %865 = vrot.lane.b32.xlu0 %v864, 5
    %v866 = vpop.permute.xlu0 %865
    %vm867 = vcmask 80936
    %868 = vst.msk [vmem:[#allocation0] sm:$0x1] %vm867, %v866
    %s869 = scalar_lea.vmem %s0, 52
    %v870 = vld [vmem:[%s869] sm:$0x1]
    %871 = vrot.lane.b32.xlu0 %v870, 4
    %v872 = vpop.permute.xlu0 %871
    %vm873 = vcmask 72736
    %s874 = scalar_lea.vmem [#allocation0], 16
    %875 = vst.msk [vmem:[%s874] sm:$0x1] %vm873, %v872
    %s876 = scalar_lea.vmem %s0, 103
    %v877 = vld [vmem:[%s876] sm:$0x1]
    %878 = vrot.lane.b32.xlu0 %v877, 3
    %v879 = vpop.permute.xlu0 %878
    %vm880 = vcmask 64536
    %s881 = scalar_lea.vmem [#allocation0], 32
    %882 = vst.msk [vmem:[%s881] sm:$0x1] %vm880, %v879
    %s883 = scalar_lea.vmem %s0, 26
    %v884 = vld [vmem:[%s883] sm:$0x1]
    %885 = vrot.lane.b32.xlu0 %v884, 2
    %v886 = vpop.permute.xlu0 %885
    %vm887 = vcmask 56336
    %s888 = scalar_lea.vmem [#allocation0], 8
    %889 = vst.msk [vmem:[%s888] sm:$0x1] %vm887, %v886
    %s890 = scalar_lea.vmem %s0, 77
    %v891 = vld [vmem:[%s890] sm:$0x1]
    %892 = vrot.lane.b32.xlu0 %v891, 1
    %v893 = vpop.permute.xlu0 %892
    %vm894 = vcmask 48136
    %s895 = scalar_lea.vmem [#allocation0], 24
    %896 = vst.msk [vmem:[%s895] sm:$0x1] %vm894, %v893
    %s898 = sshllo.u32 0, 1
    %v900 = vld [vmem:[#allocation0] sm:%s898]
    %s901 = sshllo.u32 0, 1
    %902 = vst [vmem:[%s1] sm:%s901] %v900
    %s903 = scalar_lea.vmem [#allocation0], 8
    %v904 = vld [vmem:[%s903] sm:%s898]
    %s905 = sshllo.u32 0, 1
    %s906 = scalar_lea.vmem %s1, 1
    %907 = vst [vmem:[%s906] sm:%s905] %v904
    %s908 = scalar_lea.vmem [#allocation0], 16
    %v909 = vld [vmem:[%s908] sm:%s898]
    %s910 = sshllo.u32 0, 1
    %s911 = smul.addr 1, 2
    %s912 = scalar_lea.vmem %s1, %s911
    %913 = vst [vmem:[%s912] sm:%s910] %v909
    %s914 = scalar_lea.vmem [#allocation0], 24
    %v915 = vld [vmem:[%s914] sm:%s898]
    %s916 = sshllo.u32 0, 1
    %s917 = smul.addr 1, 3
    %s918 = scalar_lea.vmem %s1, %s917
    %919 = vst [vmem:[%s918] sm:%s916] %v915
    %s920 = scalar_lea.vmem [#allocation0], 32
    %v921 = vld [vmem:[%s920] sm:%s898]
    %s922 = sshllo.u32 0, 1
    %s923 = smul.addr 1, 4
    %s924 = scalar_lea.vmem %s1, %s923
    %925 = vst [vmem:[%s924] sm:%s922] %v921

// kernel: part_seg_forward.3
$region0: #{part_seg_forward.3}
  #allocation0 [shape = 'u32[]', space=smem, size = 0x4, offset = 0x4, fixed_abs, tag = 'smem constant byte address 0x4 - core index']
  #allocation1 [shape = 'u32[144,128]{1,0:T(1,128)}', space=vmem, size = 0x12000, scoped, tag = 'internal scratch']
  %s0 = inlined_call_operand.vmem [shape: bf16[16,512], index: 0, kind: input, shape index: {}]
  %s1 = inlined_call_operand.vmem [shape: bf16[512,1024], index: 1, kind: input, shape index: {}]
  %s2 = inlined_call_operand.vmem [shape: f32[1,1024], index: 2, kind: input, shape index: {}]
  %s3 = inlined_call_operand.vmem [shape: f32[1,1024], index: 3, kind: input, shape index: {}]
  %s4 = inlined_call_operand.vmem [shape: bf16[1024,640], index: 4, kind: input, shape index: {}]
  %s5 = inlined_call_operand.vmem [shape: f32[1,640], index: 5, kind: input, shape index: {}]
  %s6 = inlined_call_operand.vmem [shape: f32[16,640], index: 6, kind: output, shape index: {}]
  %s7 = sld [smem:[#allocation0]]
  $region57: #{part_seg_forward.3} parent=0
    _
  %s9 = ssub.s32 1, %s7
  %s10 = scalar_select 0, %s9, %s7
  loop: start=0, step=1, limit=4
  $region2: #{part_seg_forward.3} parent=0 // loop_pre_header
    _
  $region3: #{part_seg_forward.3} parent=0 // loop_header
    %s12 = sphi 0, %s16
    %p13 = scmp.ge.s32.totalorder %s12, 4
    %s22 = sphi 0, %s24
    %s25 = sphi 0, %s22
    %s26 = sphi 0, %s25
    %s42 = sphi 0, %s26
    %s46 = sphi 0, %s46
    %s48 = sphi 0, %s46
    %s49 = sphi 0, %s48
    %s63 = sphi 0, %s49
    %s67 = sphi 0, %s67
    %s69 = sphi 0, %s67
    %s70 = sphi 0, %s69
    %s84 = sphi 0, %s70
    %s88 = sphi 0, %s88
    %s90 = sphi 0, %s88
    %s91 = sphi 0, %s90
    %s105 = sphi 0, %s91
    %s109 = sphi 0, %s109
    %s111 = sphi 0, %s109
    %s112 = sphi 0, %s111
    %s126 = sphi 0, %s112
    %s130 = sphi 0, %s130
    %s132 = sphi 0, %s130
    %s133 = sphi 0, %s132
    %s147 = sphi 0, %s133
    %s153 = sphi 0, %s155
    %s156 = sphi 0, %s153
    %s157 = sphi 0, %s156
    %s173 = sphi 0, %s157
  $region4: #{part_seg_forward.3} parent=0 // loop_header_branch
    %15 = sbr.rel (%p13) target = $region8
  $region5: #{part_seg_forward.3} parent=0 // loop_body
    %s17 = ssub.s32 %s12, 1
    %s18 = ssub.s32 %s12, 2
    %s19 = sadd.s32 %s12, 1
    %s20 = ssub.s32 %s12, %s19
    %p21 = scmp.eq.s32.totalorder %s20, 0
    %s23 = sadd.s32 %s22, 1
    %s24 = scalar_select %p21, %s22, %s23
    %p27 = pneg %p21
    %p28 = scmp.eq.s32.totalorder %s12, 1
    %p29 = por %p27, %p28
    %p30 = scmp.ne.s32.totalorder %s22, %s25
    %p31 = scmp.eq.s32.totalorder %s12, 0
    %p32 = por %p30, %p31
    %p33 = scmp.ne.s32.totalorder %s22, %s25
    %p34 = scmp.eq.s32.totalorder %s17, 1
    %p35 = por %p33, %p34
    %p36 = scmp.ne.s32.totalorder %s25, %s26
    %p37 = scmp.eq.s32.totalorder %s17, 0
    %p38 = por %p36, %p37
    %p39 = scmp.ne.s32.totalorder %s25, %s26
    %p40 = scmp.eq.s32.totalorder %s18, 1
    %p41 = por %p39, %p40
    %p43 = scmp.ne.s32.totalorder %s26, %s42
    %p44 = scmp.eq.s32.totalorder %s18, 0
    %p45 = por %p43, %p44
    %s47 = sadd.s32 %s46, 1
    %p50 = scmp.eq.s32.totalorder %s12, 1
    %p51 = scmp.ne.s32.totalorder %s46, %s48
    %p52 = scmp.eq.s32.totalorder %s12, 0
    %p53 = por %p51, %p52
    %p54 = scmp.ne.s32.totalorder %s46, %s48
    %p55 = scmp.eq.s32.totalorder %s17, 1
    %p56 = por %p54, %p55
    %p57 = scmp.ne.s32.totalorder %s48, %s49
    %p58 = scmp.eq.s32.totalorder %s17, 0
    %p59 = por %p57, %p58
    %p60 = scmp.ne.s32.totalorder %s48, %s49
    %p61 = scmp.eq.s32.totalorder %s18, 1
    %p62 = por %p60, %p61
    %p64 = scmp.ne.s32.totalorder %s49, %s63
    %p65 = scmp.eq.s32.totalorder %s18, 0
    %p66 = por %p64, %p65
    %s68 = sadd.s32 %s67, 1
    %p71 = scmp.eq.s32.totalorder %s12, 1
    %p72 = scmp.ne.s32.totalorder %s67, %s69
    %p73 = scmp.eq.s32.totalorder %s12, 0
    %p74 = por %p72, %p73
    %p75 = scmp.ne.s32.totalorder %s67, %s69
    %p76 = scmp.eq.s32.totalorder %s17, 1
    %p77 = por %p75, %p76
    %p78 = scmp.ne.s32.totalorder %s69, %s70
    %p79 = scmp.eq.s32.totalorder %s17, 0
    %p80 = por %p78, %p79
    %p81 = scmp.ne.s32.totalorder %s69, %s70
    %p82 = scmp.eq.s32.totalorder %s18, 1
    %p83 = por %p81, %p82
    %p85 = scmp.ne.s32.totalorder %s70, %s84
    %p86 = scmp.eq.s32.totalorder %s18, 0
    %p87 = por %p85, %p86
    %s89 = sadd.s32 %s88, 1
    %p92 = scmp.eq.s32.totalorder %s12, 1
    %p93 = scmp.ne.s32.totalorder %s88, %s90
    %p94 = scmp.eq.s32.totalorder %s12, 0
    %p95 = por %p93, %p94
    %p96 = scmp.ne.s32.totalorder %s88, %s90
    %p97 = scmp.eq.s32.totalorder %s17, 1
    %p98 = por %p96, %p97
    %p99 = scmp.ne.s32.totalorder %s90, %s91
    %p100 = scmp.eq.s32.totalorder %s17, 0
    %p101 = por %p99, %p100
    %p102 = scmp.ne.s32.totalorder %s90, %s91
    %p103 = scmp.eq.s32.totalorder %s18, 1
    %p104 = por %p102, %p103
    %p106 = scmp.ne.s32.totalorder %s91, %s105
    %p107 = scmp.eq.s32.totalorder %s18, 0
    %p108 = por %p106, %p107
    %s110 = sadd.s32 %s109, 1
    %p113 = scmp.eq.s32.totalorder %s12, 1
    %p114 = scmp.ne.s32.totalorder %s109, %s111
    %p115 = scmp.eq.s32.totalorder %s12, 0
    %p116 = por %p114, %p115
    %p117 = scmp.ne.s32.totalorder %s109, %s111
    %p118 = scmp.eq.s32.totalorder %s17, 1
    %p119 = por %p117, %p118
    %p120 = scmp.ne.s32.totalorder %s111, %s112
    %p121 = scmp.eq.s32.totalorder %s17, 0
    %p122 = por %p120, %p121
    %p123 = scmp.ne.s32.totalorder %s111, %s112
    %p124 = scmp.eq.s32.totalorder %s18, 1
    %p125 = por %p123, %p124
    %p127 = scmp.ne.s32.totalorder %s112, %s126
    %p128 = scmp.eq.s32.totalorder %s18, 0
    %p129 = por %p127, %p128
    %s131 = sadd.s32 %s130, 1
    %p134 = scmp.eq.s32.totalorder %s12, 1
    %p135 = scmp.ne.s32.totalorder %s130, %s132
    %p136 = scmp.eq.s32.totalorder %s12, 0
    %p137 = por %p135, %p136
    %p138 = scmp.ne.s32.totalorder %s130, %s132
    %p139 = scmp.eq.s32.totalorder %s17, 1
    %p140 = por %p138, %p139
    %p141 = scmp.ne.s32.totalorder %s132, %s133
    %p142 = scmp.eq.s32.totalorder %s17, 0
    %p143 = por %p141, %p142
    %p144 = scmp.ne.s32.totalorder %s132, %s133
    %p145 = scmp.eq.s32.totalorder %s18, 1
    %p146 = por %p144, %p145
    %p148 = scmp.ne.s32.totalorder %s133, %s147
    %p149 = scmp.eq.s32.totalorder %s18, 0
    %p150 = por %p148, %p149
    %s151 = ssub.s32 %s12, %s19
    %p152 = scmp.eq.s32.totalorder %s151, 0
    %s154 = sadd.s32 %s153, 1
    %s155 = scalar_select %p152, %s153, %s154
    %p158 = pneg %p152
    %p159 = scmp.eq.s32.totalorder %s12, 1
    %p160 = por %p158, %p159
    %p161 = scmp.ne.s32.totalorder %s153, %s156
    %p162 = scmp.eq.s32.totalorder %s12, 0
    %p163 = por %p161, %p162
    %p164 = scmp.ne.s32.totalorder %s153, %s156
    %p165 = scmp.eq.s32.totalorder %s17, 1
    %p166 = por %p164, %p165
    %p167 = scmp.ne.s32.totalorder %s156, %s157
    %p168 = scmp.eq.s32.totalorder %s17, 0
    %p169 = por %p167, %p168
    %p170 = scmp.ne.s32.totalorder %s156, %s157
    %p171 = scmp.eq.s32.totalorder %s18, 1
    %p172 = por %p170, %p171
    %p174 = scmp.ne.s32.totalorder %s157, %s173
    %p175 = scmp.eq.s32.totalorder %s18, 0
    %p176 = por %p174, %p175
    %p177 = scmp.le.s32.totalorder 1, %s12
    %p178 = scmp.lt.s32.totalorder %s12, 3
    %p179 = pnand %p177, %p178
    %p180 = pneg %p179
    // Predicated region
    $region9: #{part_seg_forward.3} parent=5 // pred_check
      _
    $region10: #{part_seg_forward.3} parent=5 // pred_check_branch
      %182 = sbr.rel (%p179) target = $region12
    $region11: #{part_seg_forward.3} parent=5 // pred_region
      %s183 = ssub.s32 %s12, 1
      // Predicated region
      $region13: #{part_seg_forward.3} parent=11 // pred_check
        %p184 = pneg %p59
      $region14: #{part_seg_forward.3} parent=11 // pred_check_branch
        %186 = sbr.rel (%p184) target = $region16
      $region15: #{part_seg_forward.3} parent=11 // pred_region
        _
      $region16: #{part_seg_forward.3} parent=11 // pred_fallthru
        _
      // Predicated region
      $region17: #{part_seg_forward.3} parent=11 // pred_check
        %p187 = pneg %p80
      $region18: #{part_seg_forward.3} parent=11 // pred_check_branch
        %189 = sbr.rel (%p187) target = $region20
      $region19: #{part_seg_forward.3} parent=11 // pred_region
        _
      $region20: #{part_seg_forward.3} parent=11 // pred_fallthru
        _
      // Predicated region
      $region21: #{part_seg_forward.3} parent=11 // pred_check
        %p190 = pneg %p101
      $region22: #{part_seg_forward.3} parent=11 // pred_check_branch
        %192 = sbr.rel (%p190) target = $region24
      $region23: #{part_seg_forward.3} parent=11 // pred_region
        _
      $region24: #{part_seg_forward.3} parent=11 // pred_fallthru
        _
      // Predicated region
      $region25: #{part_seg_forward.3} parent=11 // pred_check
        %p193 = pneg %p122
      $region26: #{part_seg_forward.3} parent=11 // pred_check_branch
        %195 = sbr.rel (%p193) target = $region28
      $region27: #{part_seg_forward.3} parent=11 // pred_region
        _
      $region28: #{part_seg_forward.3} parent=11 // pred_fallthru
        _
      // Predicated region
      $region29: #{part_seg_forward.3} parent=11 // pred_check
        %p196 = pneg %p143
      $region30: #{part_seg_forward.3} parent=11 // pred_check_branch
        %198 = sbr.rel (%p196) target = $region32
      $region31: #{part_seg_forward.3} parent=11 // pred_region
        _
      $region32: #{part_seg_forward.3} parent=11 // pred_fallthru
        _
    $region12: #{part_seg_forward.3} parent=5 // pred_fallthru
      _
    %p199 = scmp.lt.s32.totalorder %s12, 2
    // Predicated region
    $region33: #{part_seg_forward.3} parent=5 // pred_check
      %p200 = pneg %p199
    $region34: #{part_seg_forward.3} parent=5 // pred_check_branch
      %202 = sbr.rel (%p200) target = $region36
    $region35: #{part_seg_forward.3} parent=5 // pred_region
      // Predicated region
      $region37: #{part_seg_forward.3} parent=35 // pred_check
        %p203 = pneg %p32
      $region38: #{part_seg_forward.3} parent=35 // pred_check_branch
        %205 = sbr.rel (%p203) target = $region40
      $region39: #{part_seg_forward.3} parent=35 // pred_region
        %p206 = scmp.lt.s32.totalorder %s12, 1
        %s207 = scalar_select %p206, %s12, 1
        %s208 = smul.addr %s207, 4
        %s209 = smul.addr %s208, 4
        %s210 = scalar_lea.vmem %s0, %s209
      $region40: #{part_seg_forward.3} parent=35 // pred_fallthru
        _
    $region36: #{part_seg_forward.3} parent=5 // pred_fallthru
      _
    %p211 = scmp.le.s32.totalorder 1, %s12
    %p212 = scmp.lt.s32.totalorder %s12, 3
    %p213 = pnand %p211, %p212
    %p214 = pneg %p213
    // Predicated region
    $region41: #{part_seg_forward.3} parent=5 // pred_check
      _
    $region42: #{part_seg_forward.3} parent=5 // pred_check_branch
      %216 = sbr.rel (%p213) target = $region44
    $region43: #{part_seg_forward.3} parent=5 // pred_region
      %s217 = ssub.s32 %s12, 1
      %p218 = scmp.lt.s32.totalorder %s17, 1
      %s219 = scalar_select %p218, %s17, 1
      %s220 = smul.addr %s219, 4
      %s221 = smul.addr %s220, 4
      %s222 = scalar_lea.vmem %s0, %s221
      %p223 = pneg %p38
      %p224 = pneg %p35
      %p225 = pneg %p59
      %p226 = pneg %p56
      %p227 = pneg %p80
      %p228 = pneg %p77
      %p229 = pneg %p101
      %p230 = pneg %p98
      %p231 = pneg %p122
      %p232 = pneg %p119
      %p233 = pneg %p143
      %p234 = pneg %p140
      %p235 = pneg %p169
      %p236 = pneg %p166
      %p237 = scmp.lt.s32.totalorder %s17, 1
      %s238 = scalar_select %p237, %s17, 1
      %s239 = smul.addr %s238, 5
      %s240 = smul.addr %s239, 8
      %s241 = scalar_lea.vmem %s6, %s240
      %p242 = scmp.lt.s32.totalorder %s17, 1
      %s243 = scalar_select %p242, %s17, 1
      %s244 = smul.addr %s243, 4
      %s245 = smul.addr %s244, 4
      %s246 = scalar_lea.vmem %s0, %s245
      %p247 = scmp.lt.s32.totalorder %s17, 1
      %s248 = scalar_select %p247, %s17, 1
      %s249 = smul.addr %s248, 5
      %s250 = smul.addr %s249, 8
      %s251 = scalar_lea.vmem %s6, %s250
      %v253 = vld [vmem:[%s246] sm:$0xff]
      %v254 = vld [vmem:[%s246 + $0x8] sm:$0xff]
      %v255 = vld [vmem:[%s1] sm:$0xff]
      %v256 = vld [vmem:[%s1 + $0x8] sm:$0xff]
      %v257 = vld [vmem:[%s1 + $0x10] sm:$0xff]
      %v258 = vld [vmem:[%s1 + $0x18] sm:$0xff]
      %v259 = vld [vmem:[%s1 + $0x20] sm:$0xff]
      %v260 = vld [vmem:[%s1 + $0x28] sm:$0xff]
      %v261 = vld [vmem:[%s1 + $0x30] sm:$0xff]
      %v262 = vld [vmem:[%s1 + $0x38] sm:$0xff]
      %v263 = vld [vmem:[%s1 + $0x40] sm:$0xff]
      %v264 = vld [vmem:[%s1 + $0x48] sm:$0xff]
      %v265 = vld [vmem:[%s1 + $0x50] sm:$0xff]
      %v266 = vld [vmem:[%s1 + $0x58] sm:$0xff]
      %v267 = vld [vmem:[%s1 + $0x60] sm:$0xff]
      %v268 = vld [vmem:[%s1 + $0x68] sm:$0xff]
      %v269 = vld [vmem:[%s1 + $0x70] sm:$0xff]
      %v270 = vld [vmem:[%s1 + $0x78] sm:$0xff]
      %v271 = vld [vmem:[%s1 + $0x80] sm:$0xff]
      %v272 = vld [vmem:[%s1 + $0x88] sm:$0xff]
      %v273 = vld [vmem:[%s1 + $0x90] sm:$0xff]
      %v274 = vld [vmem:[%s1 + $0x98] sm:$0xff]
      %v275 = vld [vmem:[%s1 + $0xa0] sm:$0xff]
      %v276 = vld [vmem:[%s1 + $0xa8] sm:$0xff]
      %v277 = vld [vmem:[%s1 + $0xb0] sm:$0xff]
      %v278 = vld [vmem:[%s1 + $0xb8] sm:$0xff]
      %v279 = vld [vmem:[%s1 + $0xc0] sm:$0xff]
      %v280 = vld [vmem:[%s1 + $0xc8] sm:$0xff]
      %v281 = vld [vmem:[%s1 + $0xd0] sm:$0xff]
      %v282 = vld [vmem:[%s1 + $0xd8] sm:$0xff]
      %v283 = vld [vmem:[%s1 + $0xe0] sm:$0xff]
      %v284 = vld [vmem:[%s1 + $0xe8] sm:$0xff]
      %v285 = vld [vmem:[%s1 + $0xf0] sm:$0xff]
      %v286 = vld [vmem:[%s1 + $0xf8] sm:$0xff]
      %v287 = vld [vmem:[%s1 + $0x100] sm:$0xff]
      %v288 = vld [vmem:[%s1 + $0x108] sm:$0xff]
      %v289 = vld [vmem:[%s1 + $0x110] sm:$0xff]
      %v290 = vld [vmem:[%s1 + $0x118] sm:$0xff]
      %v291 = vld [vmem:[%s1 + $0x120] sm:$0xff]
      %v292 = vld [vmem:[%s1 + $0x128] sm:$0xff]
      %v293 = vld [vmem:[%s1 + $0x130] sm:$0xff]
      %v294 = vld [vmem:[%s1 + $0x138] sm:$0xff]
      %v295 = vld [vmem:[%s1 + $0x140] sm:$0xff]
      %v296 = vld [vmem:[%s1 + $0x148] sm:$0xff]
      %v297 = vld [vmem:[%s1 + $0x150] sm:$0xff]
      %v298 = vld [vmem:[%s1 + $0x158] sm:$0xff]
      %v299 = vld [vmem:[%s1 + $0x160] sm:$0xff]
      %v300 = vld [vmem:[%s1 + $0x168] sm:$0xff]
      %v301 = vld [vmem:[%s1 + $0x170] sm:$0xff]
      %v302 = vld [vmem:[%s1 + $0x178] sm:$0xff]
      %v303 = vld [vmem:[%s1 + $0x180] sm:$0xff]
      %v304 = vld [vmem:[%s1 + $0x188] sm:$0xff]
      %v305 = vld [vmem:[%s1 + $0x190] sm:$0xff]
      %v306 = vld [vmem:[%s1 + $0x198] sm:$0xff]
      %v307 = vld [vmem:[%s1 + $0x1a0] sm:$0xff]
      %v308 = vld [vmem:[%s1 + $0x1a8] sm:$0xff]
      %v309 = vld [vmem:[%s1 + $0x1b0] sm:$0xff]
      %v310 = vld [vmem:[%s1 + $0x1b8] sm:$0xff]
      %v311 = vld [vmem:[%s1 + $0x1c0] sm:$0xff]
      %v312 = vld [vmem:[%s1 + $0x1c8] sm:$0xff]
      %v313 = vld [vmem:[%s1 + $0x1d0] sm:$0xff]
      %v314 = vld [vmem:[%s1 + $0x1d8] sm:$0xff]
      %v315 = vld [vmem:[%s1 + $0x1e0] sm:$0xff]
      %v316 = vld [vmem:[%s1 + $0x1e8] sm:$0xff]
      %v317 = vld [vmem:[%s1 + $0x1f0] sm:$0xff]
      %v318 = vld [vmem:[%s1 + $0x1f8] sm:$0xff]
      %v319 = vld [vmem:[%s1 + $0x200] sm:$0xff]
      %v320 = vld [vmem:[%s1 + $0x208] sm:$0xff]
      %v321 = vld [vmem:[%s1 + $0x210] sm:$0xff]
      %v322 = vld [vmem:[%s1 + $0x218] sm:$0xff]
      %v323 = vld [vmem:[%s1 + $0x220] sm:$0xff]
      %v324 = vld [vmem:[%s1 + $0x228] sm:$0xff]
      %v325 = vld [vmem:[%s1 + $0x230] sm:$0xff]
      %v326 = vld [vmem:[%s1 + $0x238] sm:$0xff]
      %v327 = vld [vmem:[%s1 + $0x240] sm:$0xff]
      %v328 = vld [vmem:[%s1 + $0x248] sm:$0xff]
      %v329 = vld [vmem:[%s1 + $0x250] sm:$0xff]
      %v330 = vld [vmem:[%s1 + $0x258] sm:$0xff]
      %v331 = vld [vmem:[%s1 + $0x260] sm:$0xff]
      %v332 = vld [vmem:[%s1 + $0x268] sm:$0xff]
      %v333 = vld [vmem:[%s1 + $0x270] sm:$0xff]
      %v334 = vld [vmem:[%s1 + $0x278] sm:$0xff]
      %v335 = vld [vmem:[%s1 + $0x280] sm:$0xff]
      %v336 = vld [vmem:[%s1 + $0x288] sm:$0xff]
      %v337 = vld [vmem:[%s1 + $0x290] sm:$0xff]
      %v338 = vld [vmem:[%s1 + $0x298] sm:$0xff]
      %v339 = vld [vmem:[%s1 + $0x2a0] sm:$0xff]
      %v340 = vld [vmem:[%s1 + $0x2a8] sm:$0xff]
      %v341 = vld [vmem:[%s1 + $0x2b0] sm:$0xff]
      %v342 = vld [vmem:[%s1 + $0x2b8] sm:$0xff]
      %v343 = vld [vmem:[%s1 + $0x2c0] sm:$0xff]
      %v344 = vld [vmem:[%s1 + $0x2c8] sm:$0xff]
      %v345 = vld [vmem:[%s1 + $0x2d0] sm:$0xff]
      %v346 = vld [vmem:[%s1 + $0x2d8] sm:$0xff]
      %v347 = vld [vmem:[%s1 + $0x2e0] sm:$0xff]
      %v348 = vld [vmem:[%s1 + $0x2e8] sm:$0xff]
      %v349 = vld [vmem:[%s1 + $0x2f0] sm:$0xff]
      %v350 = vld [vmem:[%s1 + $0x2f8] sm:$0xff]
      %v351 = vld [vmem:[%s1 + $0x300] sm:$0xff]
      %v352 = vld [vmem:[%s1 + $0x308] sm:$0xff]
      %v353 = vld [vmem:[%s1 + $0x310] sm:$0xff]
      %v354 = vld [vmem:[%s1 + $0x318] sm:$0xff]
      %v355 = vld [vmem:[%s1 + $0x320] sm:$0xff]
      %v356 = vld [vmem:[%s1 + $0x328] sm:$0xff]
      %v357 = vld [vmem:[%s1 + $0x330] sm:$0xff]
      %v358 = vld [vmem:[%s1 + $0x338] sm:$0xff]
      %v359 = vld [vmem:[%s1 + $0x340] sm:$0xff]
      %v360 = vld [vmem:[%s1 + $0x348] sm:$0xff]
      %v361 = vld [vmem:[%s1 + $0x350] sm:$0xff]
      %v362 = vld [vmem:[%s1 + $0x358] sm:$0xff]
      %v363 = vld [vmem:[%s1 + $0x360] sm:$0xff]
      %v364 = vld [vmem:[%s1 + $0x368] sm:$0xff]
      %v365 = vld [vmem:[%s1 + $0x370] sm:$0xff]
      %v366 = vld [vmem:[%s1 + $0x378] sm:$0xff]
      %v367 = vld [vmem:[%s1 + $0x380] sm:$0xff]
      %v368 = vld [vmem:[%s1 + $0x388] sm:$0xff]
      %v369 = vld [vmem:[%s1 + $0x390] sm:$0xff]
      %v370 = vld [vmem:[%s1 + $0x398] sm:$0xff]
      %v371 = vld [vmem:[%s1 + $0x3a0] sm:$0xff]
      %v372 = vld [vmem:[%s1 + $0x3a8] sm:$0xff]
      %v373 = vld [vmem:[%s1 + $0x3b0] sm:$0xff]
      %v374 = vld [vmem:[%s1 + $0x3b8] sm:$0xff]
      %v375 = vld [vmem:[%s1 + $0x3c0] sm:$0xff]
      %v376 = vld [vmem:[%s1 + $0x3c8] sm:$0xff]
      %v377 = vld [vmem:[%s1 + $0x3d0] sm:$0xff]
      %v378 = vld [vmem:[%s1 + $0x3d8] sm:$0xff]
      %v379 = vld [vmem:[%s1 + $0x3e0] sm:$0xff]
      %v380 = vld [vmem:[%s1 + $0x3e8] sm:$0xff]
      %v381 = vld [vmem:[%s1 + $0x3f0] sm:$0xff]
      %v382 = vld [vmem:[%s1 + $0x3f8] sm:$0xff]
      %v383 = vld [vmem:[%s1 + $0x400] sm:$0xff]
      %v384 = vld [vmem:[%s1 + $0x408] sm:$0xff]
      %v385 = vld [vmem:[%s1 + $0x410] sm:$0xff]
      %v386 = vld [vmem:[%s1 + $0x418] sm:$0xff]
      %v387 = vld [vmem:[%s1 + $0x420] sm:$0xff]
      %v388 = vld [vmem:[%s1 + $0x428] sm:$0xff]
      %v389 = vld [vmem:[%s1 + $0x430] sm:$0xff]
      %v390 = vld [vmem:[%s1 + $0x438] sm:$0xff]
      %v391 = vld [vmem:[%s1 + $0x440] sm:$0xff]
      %v392 = vld [vmem:[%s1 + $0x448] sm:$0xff]
      %v393 = vld [vmem:[%s1 + $0x450] sm:$0xff]
      %v394 = vld [vmem:[%s1 + $0x458] sm:$0xff]
      %v395 = vld [vmem:[%s1 + $0x460] sm:$0xff]
      %v396 = vld [vmem:[%s1 + $0x468] sm:$0xff]
      %v397 = vld [vmem:[%s1 + $0x470] sm:$0xff]
      %v398 = vld [vmem:[%s1 + $0x478] sm:$0xff]
      %v399 = vld [vmem:[%s1 + $0x480] sm:$0xff]
      %v400 = vld [vmem:[%s1 + $0x488] sm:$0xff]
      %v401 = vld [vmem:[%s1 + $0x490] sm:$0xff]
      %v402 = vld [vmem:[%s1 + $0x498] sm:$0xff]
      %v403 = vld [vmem:[%s1 + $0x4a0] sm:$0xff]
      %v404 = vld [vmem:[%s1 + $0x4a8] sm:$0xff]
      %v405 = vld [vmem:[%s1 + $0x4b0] sm:$0xff]
      %v406 = vld [vmem:[%s1 + $0x4b8] sm:$0xff]
      %v407 = vld [vmem:[%s1 + $0x4c0] sm:$0xff]
      %v408 = vld [vmem:[%s1 + $0x4c8] sm:$0xff]
      %v409 = vld [vmem:[%s1 + $0x4d0] sm:$0xff]
      %v410 = vld [vmem:[%s1 + $0x4d8] sm:$0xff]
      %v411 = vld [vmem:[%s1 + $0x4e0] sm:$0xff]
      %v412 = vld [vmem:[%s1 + $0x4e8] sm:$0xff]
      %v413 = vld [vmem:[%s1 + $0x4f0] sm:$0xff]
      %v414 = vld [vmem:[%s1 + $0x4f8] sm:$0xff]
      %v415 = vld [vmem:[%s1 + $0x500] sm:$0xff]
      %v416 = vld [vmem:[%s1 + $0x508] sm:$0xff]
      %v417 = vld [vmem:[%s1 + $0x510] sm:$0xff]
      %v418 = vld [vmem:[%s1 + $0x518] sm:$0xff]
      %v419 = vld [vmem:[%s1 + $0x520] sm:$0xff]
      %v420 = vld [vmem:[%s1 + $0x528] sm:$0xff]
      %v421 = vld [vmem:[%s1 + $0x530] sm:$0xff]
      %v422 = vld [vmem:[%s1 + $0x538] sm:$0xff]
      %v423 = vld [vmem:[%s1 + $0x540] sm:$0xff]
      %v424 = vld [vmem:[%s1 + $0x548] sm:$0xff]
      %v425 = vld [vmem:[%s1 + $0x550] sm:$0xff]
      %v426 = vld [vmem:[%s1 + $0x558] sm:$0xff]
      %v427 = vld [vmem:[%s1 + $0x560] sm:$0xff]
      %v428 = vld [vmem:[%s1 + $0x568] sm:$0xff]
      %v429 = vld [vmem:[%s1 + $0x570] sm:$0xff]
      %v430 = vld [vmem:[%s1 + $0x578] sm:$0xff]
      %v431 = vld [vmem:[%s1 + $0x580] sm:$0xff]
      %v432 = vld [vmem:[%s1 + $0x588] sm:$0xff]
      %v433 = vld [vmem:[%s1 + $0x590] sm:$0xff]
      %v434 = vld [vmem:[%s1 + $0x598] sm:$0xff]
      %v435 = vld [vmem:[%s1 + $0x5a0] sm:$0xff]
      %v436 = vld [vmem:[%s1 + $0x5a8] sm:$0xff]
      %v437 = vld [vmem:[%s1 + $0x5b0] sm:$0xff]
      %v438 = vld [vmem:[%s1 + $0x5b8] sm:$0xff]
      %v439 = vld [vmem:[%s1 + $0x5c0] sm:$0xff]
      %v440 = vld [vmem:[%s1 + $0x5c8] sm:$0xff]
      %v441 = vld [vmem:[%s1 + $0x5d0] sm:$0xff]
      %v442 = vld [vmem:[%s1 + $0x5d8] sm:$0xff]
      %v443 = vld [vmem:[%s1 + $0x5e0] sm:$0xff]
      %v444 = vld [vmem:[%s1 + $0x5e8] sm:$0xff]
      %v445 = vld [vmem:[%s1 + $0x5f0] sm:$0xff]
      %v446 = vld [vmem:[%s1 + $0x5f8] sm:$0xff]
      %v447 = vld [vmem:[%s1 + $0x600] sm:$0xff]
      %v448 = vld [vmem:[%s1 + $0x608] sm:$0xff]
      %v449 = vld [vmem:[%s1 + $0x610] sm:$0xff]
      %v450 = vld [vmem:[%s1 + $0x618] sm:$0xff]
      %v451 = vld [vmem:[%s1 + $0x620] sm:$0xff]
      %v452 = vld [vmem:[%s1 + $0x628] sm:$0xff]
      %v453 = vld [vmem:[%s1 + $0x630] sm:$0xff]
      %v454 = vld [vmem:[%s1 + $0x638] sm:$0xff]
      %v455 = vld [vmem:[%s1 + $0x640] sm:$0xff]
      %v456 = vld [vmem:[%s1 + $0x648] sm:$0xff]
      %v457 = vld [vmem:[%s1 + $0x650] sm:$0xff]
      %v458 = vld [vmem:[%s1 + $0x658] sm:$0xff]
      %v459 = vld [vmem:[%s1 + $0x660] sm:$0xff]
      %v460 = vld [vmem:[%s1 + $0x668] sm:$0xff]
      %v461 = vld [vmem:[%s1 + $0x670] sm:$0xff]
      %v462 = vld [vmem:[%s1 + $0x678] sm:$0xff]
      %v463 = vld [vmem:[%s1 + $0x680] sm:$0xff]
      %v464 = vld [vmem:[%s1 + $0x688] sm:$0xff]
      %v465 = vld [vmem:[%s1 + $0x690] sm:$0xff]
      %v466 = vld [vmem:[%s1 + $0x698] sm:$0xff]
      %v467 = vld [vmem:[%s1 + $0x6a0] sm:$0xff]
      %v468 = vld [vmem:[%s1 + $0x6a8] sm:$0xff]
      %v469 = vld [vmem:[%s1 + $0x6b0] sm:$0xff]
      %v470 = vld [vmem:[%s1 + $0x6b8] sm:$0xff]
      %v471 = vld [vmem:[%s1 + $0x6c0] sm:$0xff]
      %v472 = vld [vmem:[%s1 + $0x6c8] sm:$0xff]
      %v473 = vld [vmem:[%s1 + $0x6d0] sm:$0xff]
      %v474 = vld [vmem:[%s1 + $0x6d8] sm:$0xff]
      %v475 = vld [vmem:[%s1 + $0x6e0] sm:$0xff]
      %v476 = vld [vmem:[%s1 + $0x6e8] sm:$0xff]
      %v477 = vld [vmem:[%s1 + $0x6f0] sm:$0xff]
      %v478 = vld [vmem:[%s1 + $0x6f8] sm:$0xff]
      %v479 = vld [vmem:[%s1 + $0x700] sm:$0xff]
      %v480 = vld [vmem:[%s1 + $0x708] sm:$0xff]
      %v481 = vld [vmem:[%s1 + $0x710] sm:$0xff]
      %v482 = vld [vmem:[%s1 + $0x718] sm:$0xff]
      %v483 = vld [vmem:[%s1 + $0x720] sm:$0xff]
      %v484 = vld [vmem:[%s1 + $0x728] sm:$0xff]
      %v485 = vld [vmem:[%s1 + $0x730] sm:$0xff]
      %v486 = vld [vmem:[%s1 + $0x738] sm:$0xff]
      %v487 = vld [vmem:[%s1 + $0x740] sm:$0xff]
      %v488 = vld [vmem:[%s1 + $0x748] sm:$0xff]
      %v489 = vld [vmem:[%s1 + $0x750] sm:$0xff]
      %v490 = vld [vmem:[%s1 + $0x758] sm:$0xff]
      %v491 = vld [vmem:[%s1 + $0x760] sm:$0xff]
      %v492 = vld [vmem:[%s1 + $0x768] sm:$0xff]
      %v493 = vld [vmem:[%s1 + $0x770] sm:$0xff]
      %v494 = vld [vmem:[%s1 + $0x778] sm:$0xff]
      %v495 = vld [vmem:[%s1 + $0x780] sm:$0xff]
      %v496 = vld [vmem:[%s1 + $0x788] sm:$0xff]
      %v497 = vld [vmem:[%s1 + $0x790] sm:$0xff]
      %v498 = vld [vmem:[%s1 + $0x798] sm:$0xff]
      %v499 = vld [vmem:[%s1 + $0x7a0] sm:$0xff]
      %v500 = vld [vmem:[%s1 + $0x7a8] sm:$0xff]
      %v501 = vld [vmem:[%s1 + $0x7b0] sm:$0xff]
      %v502 = vld [vmem:[%s1 + $0x7b8] sm:$0xff]
      %v503 = vld [vmem:[%s1 + $0x7c0] sm:$0xff]
      %v504 = vld [vmem:[%s1 + $0x7c8] sm:$0xff]
      %v505 = vld [vmem:[%s1 + $0x7d0] sm:$0xff]
      %v506 = vld [vmem:[%s1 + $0x7d8] sm:$0xff]
      %v507 = vld [vmem:[%s1 + $0x7e0] sm:$0xff]
      %v508 = vld [vmem:[%s1 + $0x7e8] sm:$0xff]
      %v509 = vld [vmem:[%s1 + $0x7f0] sm:$0xff]
      %v510 = vld [vmem:[%s1 + $0x7f8] sm:$0xff]
      %v513 = vunpack.c.l.b16 %v253
      %v514 = vunpack.c.h.b16 %v253
      %v515 = vunpack.c.l.b16 %v254
      %v516 = vunpack.c.h.b16 %v254
      %v517 = vpack.c.b16 %v513, %v513
      %v518 = vpack.c.b16 %v514, %v514
      %v519 = vpack.c.b16 %v515, %v515
      %v520 = vpack.c.b16 %v516, %v516
      %v781 = vunpack.c.l.b16 %v255
      %v782 = vunpack.c.h.b16 %v255
      %v783 = vunpack.c.l.b16 %v256
      %v784 = vunpack.c.h.b16 %v256
      %v785 = vunpack.c.l.b16 %v257
      %v786 = vunpack.c.h.b16 %v257
      %v787 = vunpack.c.l.b16 %v258
      %v788 = vunpack.c.h.b16 %v258
      %v789 = vunpack.c.l.b16 %v259
      %v790 = vunpack.c.h.b16 %v259
      %v791 = vunpack.c.l.b16 %v260
      %v792 = vunpack.c.h.b16 %v260
      %v793 = vunpack.c.l.b16 %v261
      %v794 = vunpack.c.h.b16 %v261
      %v795 = vunpack.c.l.b16 %v262
      %v796 = vunpack.c.h.b16 %v262
      %v797 = vunpack.c.l.b16 %v263
      %v798 = vunpack.c.h.b16 %v263
      %v799 = vunpack.c.l.b16 %v264
      %v800 = vunpack.c.h.b16 %v264
      %v801 = vunpack.c.l.b16 %v265
      %v802 = vunpack.c.h.b16 %v265
      %v803 = vunpack.c.l.b16 %v266
      %v804 = vunpack.c.h.b16 %v266
      %v805 = vunpack.c.l.b16 %v267
      %v806 = vunpack.c.h.b16 %v267
      %v807 = vunpack.c.l.b16 %v268
      %v808 = vunpack.c.h.b16 %v268
      %v809 = vunpack.c.l.b16 %v269
      %v810 = vunpack.c.h.b16 %v269
      %v811 = vunpack.c.l.b16 %v270
      %v812 = vunpack.c.h.b16 %v270
      %v813 = vunpack.c.l.b16 %v271
      %v814 = vunpack.c.h.b16 %v271
      %v815 = vunpack.c.l.b16 %v272
      %v816 = vunpack.c.h.b16 %v272
      %v817 = vunpack.c.l.b16 %v273
      %v818 = vunpack.c.h.b16 %v273
      %v819 = vunpack.c.l.b16 %v274
      %v820 = vunpack.c.h.b16 %v274
      %v821 = vunpack.c.l.b16 %v275
      %v822 = vunpack.c.h.b16 %v275
      %v823 = vunpack.c.l.b16 %v276
      %v824 = vunpack.c.h.b16 %v276
      %v825 = vunpack.c.l.b16 %v277
      %v826 = vunpack.c.h.b16 %v277
      %v827 = vunpack.c.l.b16 %v278
      %v828 = vunpack.c.h.b16 %v278
      %v829 = vunpack.c.l.b16 %v279
      %v830 = vunpack.c.h.b16 %v279
      %v831 = vunpack.c.l.b16 %v280
      %v832 = vunpack.c.h.b16 %v280
      %v833 = vunpack.c.l.b16 %v281
      %v834 = vunpack.c.h.b16 %v281
      %v835 = vunpack.c.l.b16 %v282
      %v836 = vunpack.c.h.b16 %v282
      %v837 = vunpack.c.l.b16 %v283
      %v838 = vunpack.c.h.b16 %v283
      %v839 = vunpack.c.l.b16 %v284
      %v840 = vunpack.c.h.b16 %v284
      %v841 = vunpack.c.l.b16 %v285
      %v842 = vunpack.c.h.b16 %v285
      %v843 = vunpack.c.l.b16 %v286
      %v844 = vunpack.c.h.b16 %v286
      %v845 = vunpack.c.l.b16 %v287
      %v846 = vunpack.c.h.b16 %v287
      %v847 = vunpack.c.l.b16 %v288
      %v848 = vunpack.c.h.b16 %v288
      %v849 = vunpack.c.l.b16 %v289
      %v850 = vunpack.c.h.b16 %v289
      %v851 = vunpack.c.l.b16 %v290
      %v852 = vunpack.c.h.b16 %v290
      %v853 = vunpack.c.l.b16 %v291
      %v854 = vunpack.c.h.b16 %v291
      %v855 = vunpack.c.l.b16 %v292
      %v856 = vunpack.c.h.b16 %v292
      %v857 = vunpack.c.l.b16 %v293
      %v858 = vunpack.c.h.b16 %v293
      %v859 = vunpack.c.l.b16 %v294
      %v860 = vunpack.c.h.b16 %v294
      %v861 = vunpack.c.l.b16 %v295
      %v862 = vunpack.c.h.b16 %v295
      %v863 = vunpack.c.l.b16 %v296
      %v864 = vunpack.c.h.b16 %v296
      %v865 = vunpack.c.l.b16 %v297
      %v866 = vunpack.c.h.b16 %v297
      %v867 = vunpack.c.l.b16 %v298
      %v868 = vunpack.c.h.b16 %v298
      %v869 = vunpack.c.l.b16 %v299
      %v870 = vunpack.c.h.b16 %v299
      %v871 = vunpack.c.l.b16 %v300
      %v872 = vunpack.c.h.b16 %v300
      %v873 = vunpack.c.l.b16 %v301
      %v874 = vunpack.c.h.b16 %v301
      %v875 = vunpack.c.l.b16 %v302
      %v876 = vunpack.c.h.b16 %v302
      %v877 = vunpack.c.l.b16 %v303
      %v878 = vunpack.c.h.b16 %v303
      %v879 = vunpack.c.l.b16 %v304
      %v880 = vunpack.c.h.b16 %v304
      %v881 = vunpack.c.l.b16 %v305
      %v882 = vunpack.c.h.b16 %v305
      %v883 = vunpack.c.l.b16 %v306
      %v884 = vunpack.c.h.b16 %v306
      %v885 = vunpack.c.l.b16 %v307
      %v886 = vunpack.c.h.b16 %v307
      %v887 = vunpack.c.l.b16 %v308
      %v888 = vunpack.c.h.b16 %v308
      %v889 = vunpack.c.l.b16 %v309
      %v890 = vunpack.c.h.b16 %v309
      %v891 = vunpack.c.l.b16 %v310
      %v892 = vunpack.c.h.b16 %v310
      %v893 = vunpack.c.l.b16 %v311
      %v894 = vunpack.c.h.b16 %v311
      %v895 = vunpack.c.l.b16 %v312
      %v896 = vunpack.c.h.b16 %v312
      %v897 = vunpack.c.l.b16 %v313
      %v898 = vunpack.c.h.b16 %v313
      %v899 = vunpack.c.l.b16 %v314
      %v900 = vunpack.c.h.b16 %v314
      %v901 = vunpack.c.l.b16 %v315
      %v902 = vunpack.c.h.b16 %v315
      %v903 = vunpack.c.l.b16 %v316
      %v904 = vunpack.c.h.b16 %v316
      %v905 = vunpack.c.l.b16 %v317
      %v906 = vunpack.c.h.b16 %v317
      %v907 = vunpack.c.l.b16 %v318
      %v908 = vunpack.c.h.b16 %v318
      %v909 = vunpack.c.l.b16 %v319
      %v910 = vunpack.c.h.b16 %v319
      %v911 = vunpack.c.l.b16 %v320
      %v912 = vunpack.c.h.b16 %v320
      %v913 = vunpack.c.l.b16 %v321
      %v914 = vunpack.c.h.b16 %v321
      %v915 = vunpack.c.l.b16 %v322
      %v916 = vunpack.c.h.b16 %v322
      %v917 = vunpack.c.l.b16 %v323
      %v918 = vunpack.c.h.b16 %v323
      %v919 = vunpack.c.l.b16 %v324
      %v920 = vunpack.c.h.b16 %v324
      %v921 = vunpack.c.l.b16 %v325
      %v922 = vunpack.c.h.b16 %v325
      %v923 = vunpack.c.l.b16 %v326
      %v924 = vunpack.c.h.b16 %v326
      %v925 = vunpack.c.l.b16 %v327
      %v926 = vunpack.c.h.b16 %v327
      %v927 = vunpack.c.l.b16 %v328
      %v928 = vunpack.c.h.b16 %v328
      %v929 = vunpack.c.l.b16 %v329
      %v930 = vunpack.c.h.b16 %v329
      %v931 = vunpack.c.l.b16 %v330
      %v932 = vunpack.c.h.b16 %v330
      %v933 = vunpack.c.l.b16 %v331
      %v934 = vunpack.c.h.b16 %v331
      %v935 = vunpack.c.l.b16 %v332
      %v936 = vunpack.c.h.b16 %v332
      %v937 = vunpack.c.l.b16 %v333
      %v938 = vunpack.c.h.b16 %v333
      %v939 = vunpack.c.l.b16 %v334
      %v940 = vunpack.c.h.b16 %v334
      %v941 = vunpack.c.l.b16 %v335
      %v942 = vunpack.c.h.b16 %v335
      %v943 = vunpack.c.l.b16 %v336
      %v944 = vunpack.c.h.b16 %v336
      %v945 = vunpack.c.l.b16 %v337
      %v946 = vunpack.c.h.b16 %v337
      %v947 = vunpack.c.l.b16 %v338
      %v948 = vunpack.c.h.b16 %v338
      %v949 = vunpack.c.l.b16 %v339
      %v950 = vunpack.c.h.b16 %v339
      %v951 = vunpack.c.l.b16 %v340
      %v952 = vunpack.c.h.b16 %v340
      %v953 = vunpack.c.l.b16 %v341
      %v954 = vunpack.c.h.b16 %v341
      %v955 = vunpack.c.l.b16 %v342
      %v956 = vunpack.c.h.b16 %v342
      %v957 = vunpack.c.l.b16 %v343
      %v958 = vunpack.c.h.b16 %v343
      %v959 = vunpack.c.l.b16 %v344
      %v960 = vunpack.c.h.b16 %v344
      %v961 = vunpack.c.l.b16 %v345
      %v962 = vunpack.c.h.b16 %v345
      %v963 = vunpack.c.l.b16 %v346
      %v964 = vunpack.c.h.b16 %v346
      %v965 = vunpack.c.l.b16 %v347
      %v966 = vunpack.c.h.b16 %v347
      %v967 = vunpack.c.l.b16 %v348
      %v968 = vunpack.c.h.b16 %v348
      %v969 = vunpack.c.l.b16 %v349
      %v970 = vunpack.c.h.b16 %v349
      %v971 = vunpack.c.l.b16 %v350
      %v972 = vunpack.c.h.b16 %v350
      %v973 = vunpack.c.l.b16 %v351
      %v974 = vunpack.c.h.b16 %v351
      %v975 = vunpack.c.l.b16 %v352
      %v976 = vunpack.c.h.b16 %v352
      %v977 = vunpack.c.l.b16 %v353
      %v978 = vunpack.c.h.b16 %v353
      %v979 = vunpack.c.l.b16 %v354
      %v980 = vunpack.c.h.b16 %v354
      %v981 = vunpack.c.l.b16 %v355
      %v982 = vunpack.c.h.b16 %v355
      %v983 = vunpack.c.l.b16 %v356
      %v984 = vunpack.c.h.b16 %v356
      %v985 = vunpack.c.l.b16 %v357
      %v986 = vunpack.c.h.b16 %v357
      %v987 = vunpack.c.l.b16 %v358
      %v988 = vunpack.c.h.b16 %v358
      %v989 = vunpack.c.l.b16 %v359
      %v990 = vunpack.c.h.b16 %v359
      %v991 = vunpack.c.l.b16 %v360
      %v992 = vunpack.c.h.b16 %v360
      %v993 = vunpack.c.l.b16 %v361
      %v994 = vunpack.c.h.b16 %v361
      %v995 = vunpack.c.l.b16 %v362
      %v996 = vunpack.c.h.b16 %v362
      %v997 = vunpack.c.l.b16 %v363
      %v998 = vunpack.c.h.b16 %v363
      %v999 = vunpack.c.l.b16 %v364
      %v1000 = vunpack.c.h.b16 %v364
      %v1001 = vunpack.c.l.b16 %v365
      %v1002 = vunpack.c.h.b16 %v365
      %v1003 = vunpack.c.l.b16 %v366
      %v1004 = vunpack.c.h.b16 %v366
      %v1005 = vunpack.c.l.b16 %v367
      %v1006 = vunpack.c.h.b16 %v367
      %v1007 = vunpack.c.l.b16 %v368
      %v1008 = vunpack.c.h.b16 %v368
      %v1009 = vunpack.c.l.b16 %v369
      %v1010 = vunpack.c.h.b16 %v369
      %v1011 = vunpack.c.l.b16 %v370
      %v1012 = vunpack.c.h.b16 %v370
      %v1013 = vunpack.c.l.b16 %v371
      %v1014 = vunpack.c.h.b16 %v371
      %v1015 = vunpack.c.l.b16 %v372
      %v1016 = vunpack.c.h.b16 %v372
      %v1017 = vunpack.c.l.b16 %v373
      %v1018 = vunpack.c.h.b16 %v373
      %v1019 = vunpack.c.l.b16 %v374
      %v1020 = vunpack.c.h.b16 %v374
      %v1021 = vunpack.c.l.b16 %v375
      %v1022 = vunpack.c.h.b16 %v375
      %v1023 = vunpack.c.l.b16 %v376
      %v1024 = vunpack.c.h.b16 %v376
      %v1025 = vunpack.c.l.b16 %v377
      %v1026 = vunpack.c.h.b16 %v377
      %v1027 = vunpack.c.l.b16 %v378
      %v1028 = vunpack.c.h.b16 %v378
      %v1029 = vunpack.c.l.b16 %v379
      %v1030 = vunpack.c.h.b16 %v379
      %v1031 = vunpack.c.l.b16 %v380
      %v1032 = vunpack.c.h.b16 %v380
      %v1033 = vunpack.c.l.b16 %v381
      %v1034 = vunpack.c.h.b16 %v381
      %v1035 = vunpack.c.l.b16 %v382
      %v1036 = vunpack.c.h.b16 %v382
      %v1037 = vunpack.c.l.b16 %v383
      %v1038 = vunpack.c.h.b16 %v383
      %v1039 = vunpack.c.l.b16 %v384
      %v1040 = vunpack.c.h.b16 %v384
      %v1041 = vunpack.c.l.b16 %v385
      %v1042 = vunpack.c.h.b16 %v385
      %v1043 = vunpack.c.l.b16 %v386
      %v1044 = vunpack.c.h.b16 %v386
      %v1045 = vunpack.c.l.b16 %v387
      %v1046 = vunpack.c.h.b16 %v387
      %v1047 = vunpack.c.l.b16 %v388
      %v1048 = vunpack.c.h.b16 %v388
      %v1049 = vunpack.c.l.b16 %v389
      %v1050 = vunpack.c.h.b16 %v389
      %v1051 = vunpack.c.l.b16 %v390
      %v1052 = vunpack.c.h.b16 %v390
      %v1053 = vunpack.c.l.b16 %v391
      %v1054 = vunpack.c.h.b16 %v391
      %v1055 = vunpack.c.l.b16 %v392
      %v1056 = vunpack.c.h.b16 %v392
      %v1057 = vunpack.c.l.b16 %v393
      %v1058 = vunpack.c.h.b16 %v393
      %v1059 = vunpack.c.l.b16 %v394
      %v1060 = vunpack.c.h.b16 %v394
      %v1061 = vunpack.c.l.b16 %v395
      %v1062 = vunpack.c.h.b16 %v395
      %v1063 = vunpack.c.l.b16 %v396
      %v1064 = vunpack.c.h.b16 %v396
      %v1065 = vunpack.c.l.b16 %v397
      %v1066 = vunpack.c.h.b16 %v397
      %v1067 = vunpack.c.l.b16 %v398
      %v1068 = vunpack.c.h.b16 %v398
      %v1069 = vunpack.c.l.b16 %v399
      %v1070 = vunpack.c.h.b16 %v399
      %v1071 = vunpack.c.l.b16 %v400
      %v1072 = vunpack.c.h.b16 %v400
      %v1073 = vunpack.c.l.b16 %v401
      %v1074 = vunpack.c.h.b16 %v401
      %v1075 = vunpack.c.l.b16 %v402
      %v1076 = vunpack.c.h.b16 %v402
      %v1077 = vunpack.c.l.b16 %v403
      %v1078 = vunpack.c.h.b16 %v403
      %v1079 = vunpack.c.l.b16 %v404
      %v1080 = vunpack.c.h.b16 %v404
      %v1081 = vunpack.c.l.b16 %v405
      %v1082 = vunpack.c.h.b16 %v405
      %v1083 = vunpack.c.l.b16 %v406
      %v1084 = vunpack.c.h.b16 %v406
      %v1085 = vunpack.c.l.b16 %v407
      %v1086 = vunpack.c.h.b16 %v407
      %v1087 = vunpack.c.l.b16 %v408
      %v1088 = vunpack.c.h.b16 %v408
      %v1089 = vunpack.c.l.b16 %v409
      %v1090 = vunpack.c.h.b16 %v409
      %v1091 = vunpack.c.l.b16 %v410
      %v1092 = vunpack.c.h.b16 %v410
      %v1093 = vunpack.c.l.b16 %v411
      %v1094 = vunpack.c.h.b16 %v411
      %v1095 = vunpack.c.l.b16 %v412
      %v1096 = vunpack.c.h.b16 %v412
      %v1097 = vunpack.c.l.b16 %v413
      %v1098 = vunpack.c.h.b16 %v413
      %v1099 = vunpack.c.l.b16 %v414
      %v1100 = vunpack.c.h.b16 %v414
      %v1101 = vunpack.c.l.b16 %v415
      %v1102 = vunpack.c.h.b16 %v415
      %v1103 = vunpack.c.l.b16 %v416
      %v1104 = vunpack.c.h.b16 %v416
      %v1105 = vunpack.c.l.b16 %v417
      %v1106 = vunpack.c.h.b16 %v417
      %v1107 = vunpack.c.l.b16 %v418
      %v1108 = vunpack.c.h.b16 %v418
      %v1109 = vunpack.c.l.b16 %v419
      %v1110 = vunpack.c.h.b16 %v419
      %v1111 = vunpack.c.l.b16 %v420
      %v1112 = vunpack.c.h.b16 %v420
      %v1113 = vunpack.c.l.b16 %v421
      %v1114 = vunpack.c.h.b16 %v421
      %v1115 = vunpack.c.l.b16 %v422
      %v1116 = vunpack.c.h.b16 %v422
      %v1117 = vunpack.c.l.b16 %v423
      %v1118 = vunpack.c.h.b16 %v423
      %v1119 = vunpack.c.l.b16 %v424
      %v1120 = vunpack.c.h.b16 %v424
      %v1121 = vunpack.c.l.b16 %v425
      %v1122 = vunpack.c.h.b16 %v425
      %v1123 = vunpack.c.l.b16 %v426
      %v1124 = vunpack.c.h.b16 %v426
      %v1125 = vunpack.c.l.b16 %v427
      %v1126 = vunpack.c.h.b16 %v427
      %v1127 = vunpack.c.l.b16 %v428
      %v1128 = vunpack.c.h.b16 %v428
      %v1129 = vunpack.c.l.b16 %v429
      %v1130 = vunpack.c.h.b16 %v429
      %v1131 = vunpack.c.l.b16 %v430
      %v1132 = vunpack.c.h.b16 %v430
      %v1133 = vunpack.c.l.b16 %v431
      %v1134 = vunpack.c.h.b16 %v431
      %v1135 = vunpack.c.l.b16 %v432
      %v1136 = vunpack.c.h.b16 %v432
      %v1137 = vunpack.c.l.b16 %v433
      %v1138 = vunpack.c.h.b16 %v433
      %v1139 = vunpack.c.l.b16 %v434
      %v1140 = vunpack.c.h.b16 %v434
      %v1141 = vunpack.c.l.b16 %v435
      %v1142 = vunpack.c.h.b16 %v435
      %v1143 = vunpack.c.l.b16 %v436
      %v1144 = vunpack.c.h.b16 %v436
      %v1145 = vunpack.c.l.b16 %v437
      %v1146 = vunpack.c.h.b16 %v437
      %v1147 = vunpack.c.l.b16 %v438
      %v1148 = vunpack.c.h.b16 %v438
      %v1149 = vunpack.c.l.b16 %v439
      %v1150 = vunpack.c.h.b16 %v439
      %v1151 = vunpack.c.l.b16 %v440
      %v1152 = vunpack.c.h.b16 %v440
      %v1153 = vunpack.c.l.b16 %v441
      %v1154 = vunpack.c.h.b16 %v441
      %v1155 = vunpack.c.l.b16 %v442
      %v1156 = vunpack.c.h.b16 %v442
      %v1157 = vunpack.c.l.b16 %v443
      %v1158 = vunpack.c.h.b16 %v443
      %v1159 = vunpack.c.l.b16 %v444
      %v1160 = vunpack.c.h.b16 %v444
      %v1161 = vunpack.c.l.b16 %v445
      %v1162 = vunpack.c.h.b16 %v445
      %v1163 = vunpack.c.l.b16 %v446
      %v1164 = vunpack.c.h.b16 %v446
      %v1165 = vunpack.c.l.b16 %v447
      %v1166 = vunpack.c.h.b16 %v447
      %v1167 = vunpack.c.l.b16 %v448
      %v1168 = vunpack.c.h.b16 %v448
      %v1169 = vunpack.c.l.b16 %v449
      %v1170 = vunpack.c.h.b16 %v449
      %v1171 = vunpack.c.l.b16 %v450
      %v1172 = vunpack.c.h.b16 %v450
      %v1173 = vunpack.c.l.b16 %v451
      %v1174 = vunpack.c.h.b16 %v451
      %v1175 = vunpack.c.l.b16 %v452
      %v1176 = vunpack.c.h.b16 %v452
      %v1177 = vunpack.c.l.b16 %v453
      %v1178 = vunpack.c.h.b16 %v453
      %v1179 = vunpack.c.l.b16 %v454
      %v1180 = vunpack.c.h.b16 %v454
      %v1181 = vunpack.c.l.b16 %v455
      %v1182 = vunpack.c.h.b16 %v455
      %v1183 = vunpack.c.l.b16 %v456
      %v1184 = vunpack.c.h.b16 %v456
      %v1185 = vunpack.c.l.b16 %v457
      %v1186 = vunpack.c.h.b16 %v457
      %v1187 = vunpack.c.l.b16 %v458
      %v1188 = vunpack.c.h.b16 %v458
      %v1189 = vunpack.c.l.b16 %v459
      %v1190 = vunpack.c.h.b16 %v459
      %v1191 = vunpack.c.l.b16 %v460
      %v1192 = vunpack.c.h.b16 %v460
      %v1193 = vunpack.c.l.b16 %v461
      %v1194 = vunpack.c.h.b16 %v461
      %v1195 = vunpack.c.l.b16 %v462
      %v1196 = vunpack.c.h.b16 %v462
      %v1197 = vunpack.c.l.b16 %v463
      %v1198 = vunpack.c.h.b16 %v463
      %v1199 = vunpack.c.l.b16 %v464
      %v1200 = vunpack.c.h.b16 %v464
      %v1201 = vunpack.c.l.b16 %v465
      %v1202 = vunpack.c.h.b16 %v465
      %v1203 = vunpack.c.l.b16 %v466
      %v1204 = vunpack.c.h.b16 %v466
      %v1205 = vunpack.c.l.b16 %v467
      %v1206 = vunpack.c.h.b16 %v467
      %v1207 = vunpack.c.l.b16 %v468
      %v1208 = vunpack.c.h.b16 %v468
      %v1209 = vunpack.c.l.b16 %v469
      %v1210 = vunpack.c.h.b16 %v469
      %v1211 = vunpack.c.l.b16 %v470
      %v1212 = vunpack.c.h.b16 %v470
      %v1213 = vunpack.c.l.b16 %v471
      %v1214 = vunpack.c.h.b16 %v471
      %v1215 = vunpack.c.l.b16 %v472
      %v1216 = vunpack.c.h.b16 %v472
      %v1217 = vunpack.c.l.b16 %v473
      %v1218 = vunpack.c.h.b16 %v473
      %v1219 = vunpack.c.l.b16 %v474
      %v1220 = vunpack.c.h.b16 %v474
      %v1221 = vunpack.c.l.b16 %v475
      %v1222 = vunpack.c.h.b16 %v475
      %v1223 = vunpack.c.l.b16 %v476
      %v1224 = vunpack.c.h.b16 %v476
      %v1225 = vunpack.c.l.b16 %v477
      %v1226 = vunpack.c.h.b16 %v477
      %v1227 = vunpack.c.l.b16 %v478
      %v1228 = vunpack.c.h.b16 %v478
      %v1229 = vunpack.c.l.b16 %v479
      %v1230 = vunpack.c.h.b16 %v479
      %v1231 = vunpack.c.l.b16 %v480
      %v1232 = vunpack.c.h.b16 %v480
      %v1233 = vunpack.c.l.b16 %v481
      %v1234 = vunpack.c.h.b16 %v481
      %v1235 = vunpack.c.l.b16 %v482
      %v1236 = vunpack.c.h.b16 %v482
      %v1237 = vunpack.c.l.b16 %v483
      %v1238 = vunpack.c.h.b16 %v483
      %v1239 = vunpack.c.l.b16 %v484
      %v1240 = vunpack.c.h.b16 %v484
      %v1241 = vunpack.c.l.b16 %v485
      %v1242 = vunpack.c.h.b16 %v485
      %v1243 = vunpack.c.l.b16 %v486
      %v1244 = vunpack.c.h.b16 %v486
      %v1245 = vunpack.c.l.b16 %v487
      %v1246 = vunpack.c.h.b16 %v487
      %v1247 = vunpack.c.l.b16 %v488
      %v1248 = vunpack.c.h.b16 %v488
      %v1249 = vunpack.c.l.b16 %v489
      %v1250 = vunpack.c.h.b16 %v489
      %v1251 = vunpack.c.l.b16 %v490
      %v1252 = vunpack.c.h.b16 %v490
      %v1253 = vunpack.c.l.b16 %v491
      %v1254 = vunpack.c.h.b16 %v491
      %v1255 = vunpack.c.l.b16 %v492
      %v1256 = vunpack.c.h.b16 %v492
      %v1257 = vunpack.c.l.b16 %v493
      %v1258 = vunpack.c.h.b16 %v493
      %v1259 = vunpack.c.l.b16 %v494
      %v1260 = vunpack.c.h.b16 %v494
      %v1261 = vunpack.c.l.b16 %v495
      %v1262 = vunpack.c.h.b16 %v495
      %v1263 = vunpack.c.l.b16 %v496
      %v1264 = vunpack.c.h.b16 %v496
      %v1265 = vunpack.c.l.b16 %v497
      %v1266 = vunpack.c.h.b16 %v497
      %v1267 = vunpack.c.l.b16 %v498
      %v1268 = vunpack.c.h.b16 %v498
      %v1269 = vunpack.c.l.b16 %v499
      %v1270 = vunpack.c.h.b16 %v499
      %v1271 = vunpack.c.l.b16 %v500
      %v1272 = vunpack.c.h.b16 %v500
      %v1273 = vunpack.c.l.b16 %v501
      %v1274 = vunpack.c.h.b16 %v501
      %v1275 = vunpack.c.l.b16 %v502
      %v1276 = vunpack.c.h.b16 %v502
      %v1277 = vunpack.c.l.b16 %v503
      %v1278 = vunpack.c.h.b16 %v503
      %v1279 = vunpack.c.l.b16 %v504
      %v1280 = vunpack.c.h.b16 %v504
      %v1281 = vunpack.c.l.b16 %v505
      %v1282 = vunpack.c.h.b16 %v505
      %v1283 = vunpack.c.l.b16 %v506
      %v1284 = vunpack.c.h.b16 %v506
      %v1285 = vunpack.c.l.b16 %v507
      %v1286 = vunpack.c.h.b16 %v507
      %v1287 = vunpack.c.l.b16 %v508
      %v1288 = vunpack.c.h.b16 %v508
      %v1289 = vunpack.c.l.b16 %v509
      %v1290 = vunpack.c.h.b16 %v509
      %v1291 = vunpack.c.l.b16 %v510
      %v1292 = vunpack.c.h.b16 %v510
      %v1293 = vpack.c.b16 %v789, %v781
      %v1294 = vpack.c.b16 %v790, %v782
      %v1295 = vpack.c.b16 %v791, %v783
      %v1296 = vpack.c.b16 %v792, %v784
      %v1297 = vpack.c.b16 %v793, %v785
      %v1298 = vpack.c.b16 %v794, %v786
      %v1299 = vpack.c.b16 %v795, %v787
      %v1300 = vpack.c.b16 %v796, %v788
      %v1301 = vpack.c.b16 %v805, %v797
      %v1302 = vpack.c.b16 %v806, %v798
      %v1303 = vpack.c.b16 %v807, %v799
      %v1304 = vpack.c.b16 %v808, %v800
      %v1305 = vpack.c.b16 %v809, %v801
      %v1306 = vpack.c.b16 %v810, %v802
      %v1307 = vpack.c.b16 %v811, %v803
      %v1308 = vpack.c.b16 %v812, %v804
      %v1309 = vpack.c.b16 %v821, %v813
      %v1310 = vpack.c.b16 %v822, %v814
      %v1311 = vpack.c.b16 %v823, %v815
      %v1312 = vpack.c.b16 %v824, %v816
      %v1313 = vpack.c.b16 %v825, %v817
      %v1314 = vpack.c.b16 %v826, %v818
      %v1315 = vpack.c.b16 %v827, %v819
      %v1316 = vpack.c.b16 %v828, %v820
      %v1317 = vpack.c.b16 %v837, %v829
      %v1318 = vpack.c.b16 %v838, %v830
      %v1319 = vpack.c.b16 %v839, %v831
      %v1320 = vpack.c.b16 %v840, %v832
      %v1321 = vpack.c.b16 %v841, %v833
      %v1322 = vpack.c.b16 %v842, %v834
      %v1323 = vpack.c.b16 %v843, %v835
      %v1324 = vpack.c.b16 %v844, %v836
      %v1325 = vpack.c.b16 %v853, %v845
      %v1326 = vpack.c.b16 %v854, %v846
      %v1327 = vpack.c.b16 %v855, %v847
      %v1328 = vpack.c.b16 %v856, %v848
      %v1329 = vpack.c.b16 %v857, %v849
      %v1330 = vpack.c.b16 %v858, %v850
      %v1331 = vpack.c.b16 %v859, %v851
      %v1332 = vpack.c.b16 %v860, %v852
      %v1333 = vpack.c.b16 %v869, %v861
      %v1334 = vpack.c.b16 %v870, %v862
      %v1335 = vpack.c.b16 %v871, %v863
      %v1336 = vpack.c.b16 %v872, %v864
      %v1337 = vpack.c.b16 %v873, %v865
      %v1338 = vpack.c.b16 %v874, %v866
      %v1339 = vpack.c.b16 %v875, %v867
      %v1340 = vpack.c.b16 %v876, %v868
      %v1341 = vpack.c.b16 %v885, %v877
      %v1342 = vpack.c.b16 %v886, %v878
      %v1343 = vpack.c.b16 %v887, %v879
      %v1344 = vpack.c.b16 %v888, %v880
      %v1345 = vpack.c.b16 %v889, %v881
      %v1346 = vpack.c.b16 %v890, %v882
      %v1347 = vpack.c.b16 %v891, %v883
      %v1348 = vpack.c.b16 %v892, %v884
      %v1349 = vpack.c.b16 %v901, %v893
      %v1350 = vpack.c.b16 %v902, %v894
      %v1351 = vpack.c.b16 %v903, %v895
      %v1352 = vpack.c.b16 %v904, %v896
      %v1353 = vpack.c.b16 %v905, %v897
      %v1354 = vpack.c.b16 %v906, %v898
      %v1355 = vpack.c.b16 %v907, %v899
      %v1356 = vpack.c.b16 %v908, %v900
      %v1357 = vpack.c.b16 %v917, %v909
      %v1358 = vpack.c.b16 %v918, %v910
      %v1359 = vpack.c.b16 %v919, %v911
      %v1360 = vpack.c.b16 %v920, %v912
      %v1361 = vpack.c.b16 %v921, %v913
      %v1362 = vpack.c.b16 %v922, %v914
      %v1363 = vpack.c.b16 %v923, %v915
      %v1364 = vpack.c.b16 %v924, %v916
      %v1365 = vpack.c.b16 %v933, %v925
      %v1366 = vpack.c.b16 %v934, %v926
      %v1367 = vpack.c.b16 %v935, %v927
      %v1368 = vpack.c.b16 %v936, %v928
      %v1369 = vpack.c.b16 %v937, %v929
      %v1370 = vpack.c.b16 %v938, %v930
      %v1371 = vpack.c.b16 %v939, %v931
      %v1372 = vpack.c.b16 %v940, %v932
      %v1373 = vpack.c.b16 %v949, %v941
      %v1374 = vpack.c.b16 %v950, %v942
      %v1375 = vpack.c.b16 %v951, %v943
      %v1376 = vpack.c.b16 %v952, %v944
      %v1377 = vpack.c.b16 %v953, %v945
      %v1378 = vpack.c.b16 %v954, %v946
      %v1379 = vpack.c.b16 %v955, %v947
      %v1380 = vpack.c.b16 %v956, %v948
      %v1381 = vpack.c.b16 %v965, %v957
      %v1382 = vpack.c.b16 %v966, %v958
      %v1383 = vpack.c.b16 %v967, %v959
      %v1384 = vpack.c.b16 %v968, %v960
      %v1385 = vpack.c.b16 %v969, %v961
      %v1386 = vpack.c.b16 %v970, %v962
      %v1387 = vpack.c.b16 %v971, %v963
      %v1388 = vpack.c.b16 %v972, %v964
      %v1389 = vpack.c.b16 %v981, %v973
      %v1390 = vpack.c.b16 %v982, %v974
      %v1391 = vpack.c.b16 %v983, %v975
      %v1392 = vpack.c.b16 %v984, %v976
      %v1393 = vpack.c.b16 %v985, %v977
      %v1394 = vpack.c.b16 %v986, %v978
      %v1395 = vpack.c.b16 %v987, %v979
      %v1396 = vpack.c.b16 %v988, %v980
      %v1397 = vpack.c.b16 %v997, %v989
      %v1398 = vpack.c.b16 %v998, %v990
      %v1399 = vpack.c.b16 %v999, %v991
      %v1400 = vpack.c.b16 %v1000, %v992
      %v1401 = vpack.c.b16 %v1001, %v993
      %v1402 = vpack.c.b16 %v1002, %v994
      %v1403 = vpack.c.b16 %v1003, %v995
      %v1404 = vpack.c.b16 %v1004, %v996
      %v1405 = vpack.c.b16 %v1013, %v1005
      %v1406 = vpack.c.b16 %v1014, %v1006
      %v1407 = vpack.c.b16 %v1015, %v1007
      %v1408 = vpack.c.b16 %v1016, %v1008
      %v1409 = vpack.c.b16 %v1017, %v1009
      %v1410 = vpack.c.b16 %v1018, %v1010
      %v1411 = vpack.c.b16 %v1019, %v1011
      %v1412 = vpack.c.b16 %v1020, %v1012
      %v1413 = vpack.c.b16 %v1029, %v1021
      %v1414 = vpack.c.b16 %v1030, %v1022
      %v1415 = vpack.c.b16 %v1031, %v1023
      %v1416 = vpack.c.b16 %v1032, %v1024
      %v1417 = vpack.c.b16 %v1033, %v1025
      %v1418 = vpack.c.b16 %v1034, %v1026
      %v1419 = vpack.c.b16 %v1035, %v1027
      %v1420 = vpack.c.b16 %v1036, %v1028
      %v1421 = vpack.c.b16 %v1045, %v1037
      %v1422 = vpack.c.b16 %v1046, %v1038
      %v1423 = vpack.c.b16 %v1047, %v1039
      %v1424 = vpack.c.b16 %v1048, %v1040
      %v1425 = vpack.c.b16 %v1049, %v1041
      %v1426 = vpack.c.b16 %v1050, %v1042
      %v1427 = vpack.c.b16 %v1051, %v1043
      %v1428 = vpack.c.b16 %v1052, %v1044
      %v1429 = vpack.c.b16 %v1061, %v1053
      %v1430 = vpack.c.b16 %v1062, %v1054
      %v1431 = vpack.c.b16 %v1063, %v1055
      %v1432 = vpack.c.b16 %v1064, %v1056
      %v1433 = vpack.c.b16 %v1065, %v1057
      %v1434 = vpack.c.b16 %v1066, %v1058
      %v1435 = vpack.c.b16 %v1067, %v1059
      %v1436 = vpack.c.b16 %v1068, %v1060
      %v1437 = vpack.c.b16 %v1077, %v1069
      %v1438 = vpack.c.b16 %v1078, %v1070
      %v1439 = vpack.c.b16 %v1079, %v1071
      %v1440 = vpack.c.b16 %v1080, %v1072
      %v1441 = vpack.c.b16 %v1081, %v1073
      %v1442 = vpack.c.b16 %v1082, %v1074
      %v1443 = vpack.c.b16 %v1083, %v1075
      %v1444 = vpack.c.b16 %v1084, %v1076
      %v1445 = vpack.c.b16 %v1093, %v1085
      %v1446 = vpack.c.b16 %v1094, %v1086
      %v1447 = vpack.c.b16 %v1095, %v1087
      %v1448 = vpack.c.b16 %v1096, %v1088
      %v1449 = vpack.c.b16 %v1097, %v1089
      %v1450 = vpack.c.b16 %v1098, %v1090
      %v1451 = vpack.c.b16 %v1099, %v1091
      %v1452 = vpack.c.b16 %v1100, %v1092
      %v1453 = vpack.c.b16 %v1109, %v1101
      %v1454 = vpack.c.b16 %v1110, %v1102
      %v1455 = vpack.c.b16 %v1111, %v1103
      %v1456 = vpack.c.b16 %v1112, %v1104
      %v1457 = vpack.c.b16 %v1113, %v1105
      %v1458 = vpack.c.b16 %v1114, %v1106
      %v1459 = vpack.c.b16 %v1115, %v1107
      %v1460 = vpack.c.b16 %v1116, %v1108
      %v1461 = vpack.c.b16 %v1125, %v1117
      %v1462 = vpack.c.b16 %v1126, %v1118
      %v1463 = vpack.c.b16 %v1127, %v1119
      %v1464 = vpack.c.b16 %v1128, %v1120
      %v1465 = vpack.c.b16 %v1129, %v1121
      %v1466 = vpack.c.b16 %v1130, %v1122
      %v1467 = vpack.c.b16 %v1131, %v1123
      %v1468 = vpack.c.b16 %v1132, %v1124
      %v1469 = vpack.c.b16 %v1141, %v1133
      %v1470 = vpack.c.b16 %v1142, %v1134
      %v1471 = vpack.c.b16 %v1143, %v1135
      %v1472 = vpack.c.b16 %v1144, %v1136
      %v1473 = vpack.c.b16 %v1145, %v1137
      %v1474 = vpack.c.b16 %v1146, %v1138
      %v1475 = vpack.c.b16 %v1147, %v1139
      %v1476 = vpack.c.b16 %v1148, %v1140
      %v1477 = vpack.c.b16 %v1157, %v1149
      %v1478 = vpack.c.b16 %v1158, %v1150
      %v1479 = vpack.c.b16 %v1159, %v1151
      %v1480 = vpack.c.b16 %v1160, %v1152
      %v1481 = vpack.c.b16 %v1161, %v1153
      %v1482 = vpack.c.b16 %v1162, %v1154
      %v1483 = vpack.c.b16 %v1163, %v1155
      %v1484 = vpack.c.b16 %v1164, %v1156
      %v1485 = vpack.c.b16 %v1173, %v1165
      %v1486 = vpack.c.b16 %v1174, %v1166
      %v1487 = vpack.c.b16 %v1175, %v1167
      %v1488 = vpack.c.b16 %v1176, %v1168
      %v1489 = vpack.c.b16 %v1177, %v1169
      %v1490 = vpack.c.b16 %v1178, %v1170
      %v1491 = vpack.c.b16 %v1179, %v1171
      %v1492 = vpack.c.b16 %v1180, %v1172
      %v1493 = vpack.c.b16 %v1189, %v1181
      %v1494 = vpack.c.b16 %v1190, %v1182
      %v1495 = vpack.c.b16 %v1191, %v1183
      %v1496 = vpack.c.b16 %v1192, %v1184
      %v1497 = vpack.c.b16 %v1193, %v1185
      %v1498 = vpack.c.b16 %v1194, %v1186
      %v1499 = vpack.c.b16 %v1195, %v1187
      %v1500 = vpack.c.b16 %v1196, %v1188
      %v1501 = vpack.c.b16 %v1205, %v1197
      %v1502 = vpack.c.b16 %v1206, %v1198
      %v1503 = vpack.c.b16 %v1207, %v1199
      %v1504 = vpack.c.b16 %v1208, %v1200
      %v1505 = vpack.c.b16 %v1209, %v1201
      %v1506 = vpack.c.b16 %v1210, %v1202
      %v1507 = vpack.c.b16 %v1211, %v1203
      %v1508 = vpack.c.b16 %v1212, %v1204
      %v1509 = vpack.c.b16 %v1221, %v1213
      %v1510 = vpack.c.b16 %v1222, %v1214
      %v1511 = vpack.c.b16 %v1223, %v1215
      %v1512 = vpack.c.b16 %v1224, %v1216
      %v1513 = vpack.c.b16 %v1225, %v1217
      %v1514 = vpack.c.b16 %v1226, %v1218
      %v1515 = vpack.c.b16 %v1227, %v1219
      %v1516 = vpack.c.b16 %v1228, %v1220
      %v1517 = vpack.c.b16 %v1237, %v1229
      %v1518 = vpack.c.b16 %v1238, %v1230
      %v1519 = vpack.c.b16 %v1239, %v1231
      %v1520 = vpack.c.b16 %v1240, %v1232
      %v1521 = vpack.c.b16 %v1241, %v1233
      %v1522 = vpack.c.b16 %v1242, %v1234
      %v1523 = vpack.c.b16 %v1243, %v1235
      %v1524 = vpack.c.b16 %v1244, %v1236
      %v1525 = vpack.c.b16 %v1253, %v1245
      %v1526 = vpack.c.b16 %v1254, %v1246
      %v1527 = vpack.c.b16 %v1255, %v1247
      %v1528 = vpack.c.b16 %v1256, %v1248
      %v1529 = vpack.c.b16 %v1257, %v1249
      %v1530 = vpack.c.b16 %v1258, %v1250
      %v1531 = vpack.c.b16 %v1259, %v1251
      %v1532 = vpack.c.b16 %v1260, %v1252
      %v1533 = vpack.c.b16 %v1269, %v1261
      %v1534 = vpack.c.b16 %v1270, %v1262
      %v1535 = vpack.c.b16 %v1271, %v1263
      %v1536 = vpack.c.b16 %v1272, %v1264
      %v1537 = vpack.c.b16 %v1273, %v1265
      %v1538 = vpack.c.b16 %v1274, %v1266
      %v1539 = vpack.c.b16 %v1275, %v1267
      %v1540 = vpack.c.b16 %v1276, %v1268
      %v1541 = vpack.c.b16 %v1285, %v1277
      %v1542 = vpack.c.b16 %v1286, %v1278
      %v1543 = vpack.c.b16 %v1287, %v1279
      %v1544 = vpack.c.b16 %v1288, %v1280
      %v1545 = vpack.c.b16 %v1289, %v1281
      %v1546 = vpack.c.b16 %v1290, %v1282
      %v1547 = vpack.c.b16 %v1291, %v1283
      %v1548 = vpack.c.b16 %v1292, %v1284
      %1805 = vmatprep.subr.bf16.mxu0 %v1294
      %1806 = vmatpush1.bf16.msra.mxu0 %v1293
      %1807 = vmatprep.subr.bf16.mxu0 %v1302
      %1808 = vmatpush1.bf16.msra.mxu0 %v1301
      %1809 = vmatprep.subr.bf16.mxu0 %v1310
      %1810 = vmatpush1.bf16.msra.mxu0 %v1309
      %1811 = vmatprep.subr.bf16.mxu0 %v1318
      %1812 = vmatpush1.bf16.msra.mxu0 %v1317
      %1813 = vmatprep.subr.bf16.mxu0 %v1326
      %1814 = vmatpush1.bf16.msra.mxu0 %v1325
      %1815 = vmatprep.subr.bf16.mxu0 %v1334
      %1816 = vmatpush1.bf16.msra.mxu0 %v1333
      %1817 = vmatprep.subr.bf16.mxu0 %v1342
      %1818 = vmatpush1.bf16.msra.mxu0 %v1341
      %1819 = vmatprep.subr.bf16.mxu0 %v1350
      %1820 = vmatpush1.bf16.msra.mxu0 %v1349
      %1821 = vmatprep.subr.bf16.mxu0 %v1358
      %1822 = vmatpush1.bf16.msra.mxu0 %v1357
      %1823 = vmatprep.subr.bf16.mxu0 %v1366
      %1824 = vmatpush1.bf16.msra.mxu0 %v1365
      %1825 = vmatprep.subr.bf16.mxu0 %v1374
      %1826 = vmatpush1.bf16.msra.mxu0 %v1373
      %1827 = vmatprep.subr.bf16.mxu0 %v1382
      %1828 = vmatpush1.bf16.msra.mxu0 %v1381
      %1829 = vmatprep.subr.bf16.mxu0 %v1390
      %1830 = vmatpush1.bf16.msra.mxu0 %v1389
      %1831 = vmatprep.subr.bf16.mxu0 %v1398
      %1832 = vmatpush1.bf16.msra.mxu0 %v1397
      %1833 = vmatprep.subr.bf16.mxu0 %v1406
      %1834 = vmatpush1.bf16.msra.mxu0 %v1405
      %1835 = vmatprep.subr.bf16.mxu0 %v1414
      %1836 = vmatpush1.bf16.msra.mxu0 %v1413
      %1837 = vmatprep.mubr.bf16.mxu0 %v518
      %1838 = vmatmul.mubr.bf16.gmra.mrb[0].mxu0 %v517
      %v1839 = vpop.f32.mrb[0].mxu0
      %v1840 = vadd.f32 0.0, %v1839
      %v1841 = vpop.f32.mrb[0].mxu0
      %v1842 = vadd.f32 0.0, %v1841
      %v1843 = vpop.f32.mrb[0].mxu0
      %v1844 = vpop.f32.mrb[0].mxu0
      %1845 = vdwg.mxu0
      %1846 = vmatprep.subr.bf16.mxu0 %v1422
      %1847 = vmatpush1.bf16.msra.mxu0 %v1421
      %1848 = vmatprep.subr.bf16.mxu0 %v1430
      %1849 = vmatpush1.bf16.msra.mxu0 %v1429
      %1850 = vmatprep.subr.bf16.mxu0 %v1438
      %1851 = vmatpush1.bf16.msra.mxu0 %v1437
      %1852 = vmatprep.subr.bf16.mxu0 %v1446
      %1853 = vmatpush1.bf16.msra.mxu0 %v1445
      %1854 = vmatprep.subr.bf16.mxu0 %v1454
      %1855 = vmatpush1.bf16.msra.mxu0 %v1453
      %1856 = vmatprep.subr.bf16.mxu0 %v1462
      %1857 = vmatpush1.bf16.msra.mxu0 %v1461
      %1858 = vmatprep.subr.bf16.mxu0 %v1470
      %1859 = vmatpush1.bf16.msra.mxu0 %v1469
      %1860 = vmatprep.subr.bf16.mxu0 %v1478
      %1861 = vmatpush1.bf16.msra.mxu0 %v1477
      %1862 = vmatprep.subr.bf16.mxu0 %v1486
      %1863 = vmatpush1.bf16.msra.mxu0 %v1485
      %1864 = vmatprep.subr.bf16.mxu0 %v1494
      %1865 = vmatpush1.bf16.msra.mxu0 %v1493
      %1866 = vmatprep.subr.bf16.mxu0 %v1502
      %1867 = vmatpush1.bf16.msra.mxu0 %v1501
      %1868 = vmatprep.subr.bf16.mxu0 %v1510
      %1869 = vmatpush1.bf16.msra.mxu0 %v1509
      %1870 = vmatprep.subr.bf16.mxu0 %v1518
      %1871 = vmatpush1.bf16.msra.mxu0 %v1517
      %1872 = vmatprep.subr.bf16.mxu0 %v1526
      %1873 = vmatpush1.bf16.msra.mxu0 %v1525
      %1874 = vmatprep.subr.bf16.mxu0 %v1534
      %1875 = vmatpush1.bf16.msra.mxu0 %v1533
      %1876 = vmatprep.subr.bf16.mxu0 %v1542
      %1877 = vmatpush1.bf16.msra.mxu0 %v1541
      %1878 = vmatprep.mubr.bf16.mxu0 %v520
      %1879 = vmatmul.mubr.bf16.gmra.mrb[0].mxu0 %v519
      %v1880 = vpop.f32.mrb[0].mxu0
      %v1881 = vadd.f32 %v1840, %v1880
      %v1882 = vpop.f32.mrb[0].mxu0
      %v1883 = vadd.f32 %v1842, %v1882
      %v1884 = vpop.f32.mrb[0].mxu0
      %v1885 = vpop.f32.mrb[0].mxu0
      %1886 = vdwg.mxu0
      %1887 = vmatprep.subr.bf16.mxu0 %v1296
      %1888 = vmatpush1.bf16.msra.mxu0 %v1295
      %1889 = vmatprep.subr.bf16.mxu0 %v1304
      %1890 = vmatpush1.bf16.msra.mxu0 %v1303
      %1891 = vmatprep.subr.bf16.mxu0 %v1312
      %1892 = vmatpush1.bf16.msra.mxu0 %v1311
      %1893 = vmatprep.subr.bf16.mxu0 %v1320
      %1894 = vmatpush1.bf16.msra.mxu0 %v1319
      %1895 = vmatprep.subr.bf16.mxu0 %v1328
      %1896 = vmatpush1.bf16.msra.mxu0 %v1327
      %1897 = vmatprep.subr.bf16.mxu0 %v1336
      %1898 = vmatpush1.bf16.msra.mxu0 %v1335
      %1899 = vmatprep.subr.bf16.mxu0 %v1344
      %1900 = vmatpush1.bf16.msra.mxu0 %v1343
      %1901 = vmatprep.subr.bf16.mxu0 %v1352
      %1902 = vmatpush1.bf16.msra.mxu0 %v1351
      %1903 = vmatprep.subr.bf16.mxu0 %v1360
      %1904 = vmatpush1.bf16.msra.mxu0 %v1359
      %1905 = vmatprep.subr.bf16.mxu0 %v1368
      %1906 = vmatpush1.bf16.msra.mxu0 %v1367
      %1907 = vmatprep.subr.bf16.mxu0 %v1376
      %1908 = vmatpush1.bf16.msra.mxu0 %v1375
      %1909 = vmatprep.subr.bf16.mxu0 %v1384
      %1910 = vmatpush1.bf16.msra.mxu0 %v1383
      %1911 = vmatprep.subr.bf16.mxu0 %v1392
      %1912 = vmatpush1.bf16.msra.mxu0 %v1391
      %1913 = vmatprep.subr.bf16.mxu0 %v1400
      %1914 = vmatpush1.bf16.msra.mxu0 %v1399
      %1915 = vmatprep.subr.bf16.mxu0 %v1408
      %1916 = vmatpush1.bf16.msra.mxu0 %v1407
      %1917 = vmatprep.subr.bf16.mxu0 %v1416
      %1918 = vmatpush1.bf16.msra.mxu0 %v1415
      %1919 = vmatprep.mubr.bf16.mxu0 %v518
      %1920 = vmatmul.mubr.bf16.gmra.mrb[0].mxu0 %v517
      %v1921 = vpop.f32.mrb[0].mxu0
      %v1922 = vadd.f32 0.0, %v1921
      %v1923 = vpop.f32.mrb[0].mxu0
      %v1924 = vadd.f32 0.0, %v1923
      %v1925 = vpop.f32.mrb[0].mxu0
      %v1926 = vpop.f32.mrb[0].mxu0
      %1927 = vdwg.mxu0
      %1928 = vmatprep.subr.bf16.mxu0 %v1424
      %1929 = vmatpush1.bf16.msra.mxu0 %v1423
      %1930 = vmatprep.subr.bf16.mxu0 %v1432
      %1931 = vmatpush1.bf16.msra.mxu0 %v1431
      %1932 = vmatprep.subr.bf16.mxu0 %v1440
      %1933 = vmatpush1.bf16.msra.mxu0 %v1439
      %1934 = vmatprep.subr.bf16.mxu0 %v1448
      %1935 = vmatpush1.bf16.msra.mxu0 %v1447
      %1936 = vmatprep.subr.bf16.mxu0 %v1456
      %1937 = vmatpush1.bf16.msra.mxu0 %v1455
      %1938 = vmatprep.subr.bf16.mxu0 %v1464
      %1939 = vmatpush1.bf16.msra.mxu0 %v1463
      %1940 = vmatprep.subr.bf16.mxu0 %v1472
      %1941 = vmatpush1.bf16.msra.mxu0 %v1471
      %1942 = vmatprep.subr.bf16.mxu0 %v1480
      %1943 = vmatpush1.bf16.msra.mxu0 %v1479
      %1944 = vmatprep.subr.bf16.mxu0 %v1488
      %1945 = vmatpush1.bf16.msra.mxu0 %v1487
      %1946 = vmatprep.subr.bf16.mxu0 %v1496
      %1947 = vmatpush1.bf16.msra.mxu0 %v1495
      %1948 = vmatprep.subr.bf16.mxu0 %v1504
      %1949 = vmatpush1.bf16.msra.mxu0 %v1503
      %1950 = vmatprep.subr.bf16.mxu0 %v1512
      %1951 = vmatpush1.bf16.msra.mxu0 %v1511
      %1952 = vmatprep.subr.bf16.mxu0 %v1520
      %1953 = vmatpush1.bf16.msra.mxu0 %v1519
      %1954 = vmatprep.subr.bf16.mxu0 %v1528
      %1955 = vmatpush1.bf16.msra.mxu0 %v1527
      %1956 = vmatprep.subr.bf16.mxu0 %v1536
      %1957 = vmatpush1.bf16.msra.mxu0 %v1535
      %1958 = vmatprep.subr.bf16.mxu0 %v1544
      %1959 = vmatpush1.bf16.msra.mxu0 %v1543
      %1960 = vmatprep.mubr.bf16.mxu0 %v520
      %1961 = vmatmul.mubr.bf16.gmra.mrb[0].mxu0 %v519
      %v1962 = vpop.f32.mrb[0].mxu0
      %v1963 = vadd.f32 %v1922, %v1962
      %v1964 = vpop.f32.mrb[0].mxu0
      %v1965 = vadd.f32 %v1924, %v1964
      %v1966 = vpop.f32.mrb[0].mxu0
      %v1967 = vpop.f32.mrb[0].mxu0
      %1968 = vdwg.mxu0
      %1969 = vmatprep.subr.bf16.mxu0 %v1298
      %1970 = vmatpush1.bf16.msra.mxu0 %v1297
      %1971 = vmatprep.subr.bf16.mxu0 %v1306
      %1972 = vmatpush1.bf16.msra.mxu0 %v1305
      %1973 = vmatprep.subr.bf16.mxu0 %v1314
      %1974 = vmatpush1.bf16.msra.mxu0 %v1313
      %1975 = vmatprep.subr.bf16.mxu0 %v1322
      %1976 = vmatpush1.bf16.msra.mxu0 %v1321
      %1977 = vmatprep.subr.bf16.mxu0 %v1330
      %1978 = vmatpush1.bf16.msra.mxu0 %v1329
      %1979 = vmatprep.subr.bf16.mxu0 %v1338
      %1980 = vmatpush1.bf16.msra.mxu0 %v1337
      %1981 = vmatprep.subr.bf16.mxu0 %v1346
      %1982 = vmatpush1.bf16.msra.mxu0 %v1345
      %1983 = vmatprep.subr.bf16.mxu0 %v1354
      %1984 = vmatpush1.bf16.msra.mxu0 %v1353
      %1985 = vmatprep.subr.bf16.mxu0 %v1362
      %1986 = vmatpush1.bf16.msra.mxu0 %v1361
      %1987 = vmatprep.subr.bf16.mxu0 %v1370
      %1988 = vmatpush1.bf16.msra.mxu0 %v1369
      %1989 = vmatprep.subr.bf16.mxu0 %v1378
      %1990 = vmatpush1.bf16.msra.mxu0 %v1377
      %1991 = vmatprep.subr.bf16.mxu0 %v1386
      %1992 = vmatpush1.bf16.msra.mxu0 %v1385
      %1993 = vmatprep.subr.bf16.mxu0 %v1394
      %1994 = vmatpush1.bf16.msra.mxu0 %v1393
      %1995 = vmatprep.subr.bf16.mxu0 %v1402
      %1996 = vmatpush1.bf16.msra.mxu0 %v1401
      %1997 = vmatprep.subr.bf16.mxu0 %v1410
      %1998 = vmatpush1.bf16.msra.mxu0 %v1409
      %1999 = vmatprep.subr.bf16.mxu0 %v1418
      %2000 = vmatpush1.bf16.msra.mxu0 %v1417
      %2001 = vmatprep.mubr.bf16.mxu0 %v518
      %2002 = vmatmul.mubr.bf16.gmra.mrb[0].mxu0 %v517
      %v2003 = vpop.f32.mrb[0].mxu0
      %v2004 = vadd.f32 0.0, %v2003
      %v2005 = vpop.f32.mrb[0].mxu0
      %v2006 = vadd.f32 0.0, %v2005
      %v2007 = vpop.f32.mrb[0].mxu0
      %v2008 = vpop.f32.mrb[0].mxu0
      %2009 = vdwg.mxu0
      %2010 = vmatprep.subr.bf16.mxu0 %v1426
      %2011 = vmatpush1.bf16.msra.mxu0 %v1425
      %2012 = vmatprep.subr.bf16.mxu0 %v1434
      %2013 = vmatpush1.bf16.msra.mxu0 %v1433
      %2014 = vmatprep.subr.bf16.mxu0 %v1442
      %2015 = vmatpush1.bf16.msra.mxu0 %v1441
      %2016 = vmatprep.subr.bf16.mxu0 %v1450
      %2017 = vmatpush1.bf16.msra.mxu0 %v1449
      %2018 = vmatprep.subr.bf16.mxu0 %v1458
      %2019 = vmatpush1.bf16.msra.mxu0 %v1457
      %2020 = vmatprep.subr.bf16.mxu0 %v1466
      %2021 = vmatpush1.bf16.msra.mxu0 %v1465
      %2022 = vmatprep.subr.bf16.mxu0 %v1474
      %2023 = vmatpush1.bf16.msra.mxu0 %v1473
      %2024 = vmatprep.subr.bf16.mxu0 %v1482
      %2025 = vmatpush1.bf16.msra.mxu0 %v1481
      %2026 = vmatprep.subr.bf16.mxu0 %v1490
      %2027 = vmatpush1.bf16.msra.mxu0 %v1489
      %2028 = vmatprep.subr.bf16.mxu0 %v1498
      %2029 = vmatpush1.bf16.msra.mxu0 %v1497
      %2030 = vmatprep.subr.bf16.mxu0 %v1506
      %2031 = vmatpush1.bf16.msra.mxu0 %v1505
      %2032 = vmatprep.subr.bf16.mxu0 %v1514
      %2033 = vmatpush1.bf16.msra.mxu0 %v1513
      %2034 = vmatprep.subr.bf16.mxu0 %v1522
      %2035 = vmatpush1.bf16.msra.mxu0 %v1521
      %2036 = vmatprep.subr.bf16.mxu0 %v1530
      %2037 = vmatpush1.bf16.msra.mxu0 %v1529
      %2038 = vmatprep.subr.bf16.mxu0 %v1538
      %2039 = vmatpush1.bf16.msra.mxu0 %v1537
      %2040 = vmatprep.subr.bf16.mxu0 %v1546
      %2041 = vmatpush1.bf16.msra.mxu0 %v1545
      %2042 = vmatprep.mubr.bf16.mxu0 %v520
      %2043 = vmatmul.mubr.bf16.gmra.mrb[0].mxu0 %v519
      %v2044 = vpop.f32.mrb[0].mxu0
      %v2045 = vadd.f32 %v2004, %v2044
      %v2046 = vpop.f32.mrb[0].mxu0
      %v2047 = vadd.f32 %v2006, %v2046
      %v2048 = vpop.f32.mrb[0].mxu0
      %v2049 = vpop.f32.mrb[0].mxu0
      %2050 = vdwg.mxu0
      %2051 = vmatprep.subr.bf16.mxu0 %v1300
      %2052 = vmatpush1.bf16.msra.mxu0 %v1299
      %2053 = vmatprep.subr.bf16.mxu0 %v1308
      %2054 = vmatpush1.bf16.msra.mxu0 %v1307
      %2055 = vmatprep.subr.bf16.mxu0 %v1316
      %2056 = vmatpush1.bf16.msra.mxu0 %v1315
      %2057 = vmatprep.subr.bf16.mxu0 %v1324
      %2058 = vmatpush1.bf16.msra.mxu0 %v1323
      %2059 = vmatprep.subr.bf16.mxu0 %v1332
      %2060 = vmatpush1.bf16.msra.mxu0 %v1331
      %2061 = vmatprep.subr.bf16.mxu0 %v1340
      %2062 = vmatpush1.bf16.msra.mxu0 %v1339
      %2063 = vmatprep.subr.bf16.mxu0 %v1348
      %2064 = vmatpush1.bf16.msra.mxu0 %v1347
      %2065 = vmatprep.subr.bf16.mxu0 %v1356
      %2066 = vmatpush1.bf16.msra.mxu0 %v1355
      %2067 = vmatprep.subr.bf16.mxu0 %v1364
      %2068 = vmatpush1.bf16.msra.mxu0 %v1363
      %2069 = vmatprep.subr.bf16.mxu0 %v1372
      %2070 = vmatpush1.bf16.msra.mxu0 %v1371
      %2071 = vmatprep.subr.bf16.mxu0 %v1380
      %2072 = vmatpush1.bf16.msra.mxu0 %v1379
      %2073 = vmatprep.subr.bf16.mxu0 %v1388
      %2074 = vmatpush1.bf16.msra.mxu0 %v1387
      %2075 = vmatprep.subr.bf16.mxu0 %v1396
      %2076 = vmatpush1.bf16.msra.mxu0 %v1395
      %2077 = vmatprep.subr.bf16.mxu0 %v1404
      %2078 = vmatpush1.bf16.msra.mxu0 %v1403
      %2079 = vmatprep.subr.bf16.mxu0 %v1412
      %2080 = vmatpush1.bf16.msra.mxu0 %v1411
      %2081 = vmatprep.subr.bf16.mxu0 %v1420
      %2082 = vmatpush1.bf16.msra.mxu0 %v1419
      %2083 = vmatprep.mubr.bf16.mxu0 %v518
      %2084 = vmatmul.mubr.bf16.gmra.mrb[0].mxu0 %v517
      %v2085 = vpop.f32.mrb[0].mxu0
      %v2086 = vadd.f32 0.0, %v2085
      %v2087 = vpop.f32.mrb[0].mxu0
      %v2088 = vadd.f32 0.0, %v2087
      %v2089 = vpop.f32.mrb[0].mxu0
      %v2090 = vpop.f32.mrb[0].mxu0
      %2091 = vdwg.mxu0
      %2092 = vmatprep.subr.bf16.mxu0 %v1428
      %2093 = vmatpush1.bf16.msra.mxu0 %v1427
      %2094 = vmatprep.subr.bf16.mxu0 %v1436
      %2095 = vmatpush1.bf16.msra.mxu0 %v1435
      %2096 = vmatprep.subr.bf16.mxu0 %v1444
      %2097 = vmatpush1.bf16.msra.mxu0 %v1443
      %2098 = vmatprep.subr.bf16.mxu0 %v1452
      %2099 = vmatpush1.bf16.msra.mxu0 %v1451
      %2100 = vmatprep.subr.bf16.mxu0 %v1460
      %2101 = vmatpush1.bf16.msra.mxu0 %v1459
      %2102 = vmatprep.subr.bf16.mxu0 %v1468
      %2103 = vmatpush1.bf16.msra.mxu0 %v1467
      %2104 = vmatprep.subr.bf16.mxu0 %v1476
      %2105 = vmatpush1.bf16.msra.mxu0 %v1475
      %2106 = vmatprep.subr.bf16.mxu0 %v1484
      %2107 = vmatpush1.bf16.msra.mxu0 %v1483
      %2108 = vmatprep.subr.bf16.mxu0 %v1492
      %2109 = vmatpush1.bf16.msra.mxu0 %v1491
      %2110 = vmatprep.subr.bf16.mxu0 %v1500
      %2111 = vmatpush1.bf16.msra.mxu0 %v1499
      %2112 = vmatprep.subr.bf16.mxu0 %v1508
      %2113 = vmatpush1.bf16.msra.mxu0 %v1507
      %2114 = vmatprep.subr.bf16.mxu0 %v1516
      %2115 = vmatpush1.bf16.msra.mxu0 %v1515
      %2116 = vmatprep.subr.bf16.mxu0 %v1524
      %2117 = vmatpush1.bf16.msra.mxu0 %v1523
      %2118 = vmatprep.subr.bf16.mxu0 %v1532
      %2119 = vmatpush1.bf16.msra.mxu0 %v1531
      %2120 = vmatprep.subr.bf16.mxu0 %v1540
      %2121 = vmatpush1.bf16.msra.mxu0 %v1539
      %2122 = vmatprep.subr.bf16.mxu0 %v1548
      %2123 = vmatpush1.bf16.msra.mxu0 %v1547
      %2124 = vmatprep.mubr.bf16.mxu0 %v520
      %2125 = vmatmul.mubr.bf16.gmra.mrb[0].mxu0 %v519
      %v2126 = vpop.f32.mrb[0].mxu0
      %v2127 = vadd.f32 %v2086, %v2126
      %v2128 = vpop.f32.mrb[0].mxu0
      %v2129 = vadd.f32 %v2088, %v2128
      %v2130 = vpop.f32.mrb[0].mxu0
      %v2131 = vpop.f32.mrb[0].mxu0
      %2132 = vdwg.mxu0
      %v2133 = vld [vmem:[%s2] sm:$0xff]
      %v2135 = vlaneseq
      %v2136 = vshrl.u32 %v2135, 7
      %v2137 = vsub.s32 0, %v2136
      %v2138 = vrot.slane %v2133, %v2137
      %v2139 = vlaneseq
      %v2140 = vshrl.u32 %v2139, 7
      %v2141 = vsub.s32 1, %v2140
      %v2142 = vrot.slane %v2133, %v2141
      %v2143 = vlaneseq
      %v2144 = vshrl.u32 %v2143, 7
      %v2145 = vsub.s32 2, %v2144
      %v2146 = vrot.slane %v2133, %v2145
      %v2147 = vlaneseq
      %v2148 = vshrl.u32 %v2147, 7
      %v2149 = vsub.s32 3, %v2148
      %v2150 = vrot.slane %v2133, %v2149
      %v2151 = vlaneseq
      %v2152 = vshrl.u32 %v2151, 7
      %v2153 = vsub.s32 4, %v2152
      %v2154 = vrot.slane %v2133, %v2153
      %v2155 = vlaneseq
      %v2156 = vshrl.u32 %v2155, 7
      %v2157 = vsub.s32 5, %v2156
      %v2158 = vrot.slane %v2133, %v2157
      %v2159 = vlaneseq
      %v2160 = vshrl.u32 %v2159, 7
      %v2161 = vsub.s32 6, %v2160
      %v2162 = vrot.slane %v2133, %v2161
      %v2163 = vlaneseq
      %v2164 = vshrl.u32 %v2163, 7
      %v2165 = vsub.s32 7, %v2164
      %v2166 = vrot.slane %v2133, %v2165
      %v2175 = vmul.f32 %v1881, %v2138
      %v2176 = vmul.f32 %v1883, %v2142
      %v2177 = vmul.f32 %v1963, %v2146
      %v2178 = vmul.f32 %v1965, %v2150
      %v2179 = vmul.f32 %v2045, %v2154
      %v2180 = vmul.f32 %v2047, %v2158
      %v2181 = vmul.f32 %v2127, %v2162
      %v2182 = vmul.f32 %v2129, %v2166
      %v2183 = vld [vmem:[%s3] sm:$0xff]
      %v2185 = vlaneseq
      %v2186 = vshrl.u32 %v2185, 7
      %v2187 = vsub.s32 0, %v2186
      %v2188 = vrot.slane %v2183, %v2187
      %v2189 = vlaneseq
      %v2190 = vshrl.u32 %v2189, 7
      %v2191 = vsub.s32 1, %v2190
      %v2192 = vrot.slane %v2183, %v2191
      %v2193 = vlaneseq
      %v2194 = vshrl.u32 %v2193, 7
      %v2195 = vsub.s32 2, %v2194
      %v2196 = vrot.slane %v2183, %v2195
      %v2197 = vlaneseq
      %v2198 = vshrl.u32 %v2197, 7
      %v2199 = vsub.s32 3, %v2198
      %v2200 = vrot.slane %v2183, %v2199
      %v2201 = vlaneseq
      %v2202 = vshrl.u32 %v2201, 7
      %v2203 = vsub.s32 4, %v2202
      %v2204 = vrot.slane %v2183, %v2203
      %v2205 = vlaneseq
      %v2206 = vshrl.u32 %v2205, 7
      %v2207 = vsub.s32 5, %v2206
      %v2208 = vrot.slane %v2183, %v2207
      %v2209 = vlaneseq
      %v2210 = vshrl.u32 %v2209, 7
      %v2211 = vsub.s32 6, %v2210
      %v2212 = vrot.slane %v2183, %v2211
      %v2213 = vlaneseq
      %v2214 = vshrl.u32 %v2213, 7
      %v2215 = vsub.s32 7, %v2214
      %v2216 = vrot.slane %v2183, %v2215
      %v2225 = vadd.f32 %v2175, %v2188
      %v2226 = vadd.f32 %v2176, %v2192
      %v2227 = vadd.f32 %v2177, %v2196
      %v2228 = vadd.f32 %v2178, %v2200
      %v2229 = vadd.f32 %v2179, %v2204
      %v2230 = vadd.f32 %v2180, %v2208
      %v2231 = vadd.f32 %v2181, %v2212
      %v2232 = vadd.f32 %v2182, %v2216
      %v2233 = vmax.f32 %v2225, 0.0
      %v2234 = vmax.f32 %v2226, 0.0
      %v2235 = vmax.f32 %v2227, 0.0
      %v2236 = vmax.f32 %v2228, 0.0
      %v2237 = vmax.f32 %v2229, 0.0
      %v2238 = vmax.f32 %v2230, 0.0
      %v2239 = vmax.f32 %v2231, 0.0
      %v2240 = vmax.f32 %v2232, 0.0
      %v2241 = vpack.c.bf16 %v2233, %v2233
      %v2242 = vpack.c.bf16 %v2234, %v2234
      %v2243 = vpack.c.bf16 %v2235, %v2235
      %v2244 = vpack.c.bf16 %v2236, %v2236
      %v2245 = vpack.c.bf16 %v2237, %v2237
      %v2246 = vpack.c.bf16 %v2238, %v2238
      %v2247 = vpack.c.bf16 %v2239, %v2239
      %v2248 = vpack.c.bf16 %v2240, %v2240
      %v2249 = vld [vmem:[%s4] sm:$0xff]
      %v2250 = vld [vmem:[%s4 + $0x8] sm:$0xff]
      %v2251 = vld [vmem:[%s4 + $0x10] sm:$0xf]
      %v2252 = vld [vmem:[%s4 + $0x14] sm:$0xff]
      %v2253 = vld [vmem:[%s4 + $0x1c] sm:$0xff]
      %v2254 = vld [vmem:[%s4 + $0x24] sm:$0xf]
      %v2255 = vld [vmem:[%s4 + $0x28] sm:$0xff]
      %v2256 = vld [vmem:[%s4 + $0x30] sm:$0xff]
      %v2257 = vld [vmem:[%s4 + $0x38] sm:$0xf]
      %v2258 = vld [vmem:[%s4 + $0x3c] sm:$0xff]
      %v2259 = vld [vmem:[%s4 + $0x44] sm:$0xff]
      %v2260 = vld [vmem:[%s4 + $0x4c] sm:$0xf]
      %v2261 = vld [vmem:[%s4 + $0x50] sm:$0xff]
      %v2262 = vld [vmem:[%s4 + $0x58] sm:$0xff]
      %v2263 = vld [vmem:[%s4 + $0x60] sm:$0xf]
      %v2264 = vld [vmem:[%s4 + $0x64] sm:$0xff]
      %v2265 = vld [vmem:[%s4 + $0x6c] sm:$0xff]
      %v2266 = vld [vmem:[%s4 + $0x74] sm:$0xf]
      %v2267 = vld [vmem:[%s4 + $0x78] sm:$0xff]
      %v2268 = vld [vmem:[%s4 + $0x80] sm:$0xff]
      %v2269 = vld [vmem:[%s4 + $0x88] sm:$0xf]
      %v2270 = vld [vmem:[%s4 + $0x8c] sm:$0xff]
      %v2271 = vld [vmem:[%s4 + $0x94] sm:$0xff]
      %v2272 = vld [vmem:[%s4 + $0x9c] sm:$0xf]
      %v2273 = vld [vmem:[%s4 + $0xa0] sm:$0xff]
      %v2274 = vld [vmem:[%s4 + $0xa8] sm:$0xff]
      %v2275 = vld [vmem:[%s4 + $0xb0] sm:$0xf]
      %v2276 = vld [vmem:[%s4 + $0xb4] sm:$0xff]
      %v2277 = vld [vmem:[%s4 + $0xbc] sm:$0xff]
      %v2278 = vld [vmem:[%s4 + $0xc4] sm:$0xf]
      %v2279 = vld [vmem:[%s4 + $0xc8] sm:$0xff]
      %v2280 = vld [vmem:[%s4 + $0xd0] sm:$0xff]
      %v2281 = vld [vmem:[%s4 + $0xd8] sm:$0xf]
      %v2282 = vld [vmem:[%s4 + $0xdc] sm:$0xff]
      %v2283 = vld [vmem:[%s4 + $0xe4] sm:$0xff]
      %v2284 = vld [vmem:[%s4 + $0xec] sm:$0xf]
      %v2285 = vld [vmem:[%s4 + $0xf0] sm:$0xff]
      %v2286 = vld [vmem:[%s4 + $0xf8] sm:$0xff]
      %v2287 = vld [vmem:[%s4 + $0x100] sm:$0xf]
      %v2288 = vld [vmem:[%s4 + $0x104] sm:$0xff]
      %v2289 = vld [vmem:[%s4 + $0x10c] sm:$0xff]
      %v2290 = vld [vmem:[%s4 + $0x114] sm:$0xf]
      %v2291 = vld [vmem:[%s4 + $0x118] sm:$0xff]
      %v2292 = vld [vmem:[%s4 + $0x120] sm:$0xff]
      %v2293 = vld [vmem:[%s4 + $0x128] sm:$0xf]
      %v2294 = vld [vmem:[%s4 + $0x12c] sm:$0xff]
      %v2295 = vld [vmem:[%s4 + $0x134] sm:$0xff]
      %v2296 = vld [vmem:[%s4 + $0x13c] sm:$0xf]
      %v2297 = vld [vmem:[%s4 + $0x140] sm:$0xff]
      %v2298 = vld [vmem:[%s4 + $0x148] sm:$0xff]
      %v2299 = vld [vmem:[%s4 + $0x150] sm:$0xf]
      %v2300 = vld [vmem:[%s4 + $0x154] sm:$0xff]
      %v2301 = vld [vmem:[%s4 + $0x15c] sm:$0xff]
      %v2302 = vld [vmem:[%s4 + $0x164] sm:$0xf]
      %v2303 = vld [vmem:[%s4 + $0x168] sm:$0xff]
      %v2304 = vld [vmem:[%s4 + $0x170] sm:$0xff]
      %v2305 = vld [vmem:[%s4 + $0x178] sm:$0xf]
      %v2306 = vld [vmem:[%s4 + $0x17c] sm:$0xff]
      %v2307 = vld [vmem:[%s4 + $0x184] sm:$0xff]
      %v2308 = vld [vmem:[%s4 + $0x18c] sm:$0xf]
      %v2309 = vld [vmem:[%s4 + $0x190] sm:$0xff]
      %v2310 = vld [vmem:[%s4 + $0x198] sm:$0xff]
      %v2311 = vld [vmem:[%s4 + $0x1a0] sm:$0xf]
      %v2312 = vld [vmem:[%s4 + $0x1a4] sm:$0xff]
      %v2313 = vld [vmem:[%s4 + $0x1ac] sm:$0xff]
      %v2314 = vld [vmem:[%s4 + $0x1b4] sm:$0xf]
      %v2315 = vld [vmem:[%s4 + $0x1b8] sm:$0xff]
      %v2316 = vld [vmem:[%s4 + $0x1c0] sm:$0xff]
      %v2317 = vld [vmem:[%s4 + $0x1c8] sm:$0xf]
      %v2318 = vld [vmem:[%s4 + $0x1cc] sm:$0xff]
      %v2319 = vld [vmem:[%s4 + $0x1d4] sm:$0xff]
      %v2320 = vld [vmem:[%s4 + $0x1dc] sm:$0xf]
      %v2321 = vld [vmem:[%s4 + $0x1e0] sm:$0xff]
      %v2322 = vld [vmem:[%s4 + $0x1e8] sm:$0xff]
      %v2323 = vld [vmem:[%s4 + $0x1f0] sm:$0xf]
      %v2324 = vld [vmem:[%s4 + $0x1f4] sm:$0xff]
      %v2325 = vld [vmem:[%s4 + $0x1fc] sm:$0xff]
      %v2326 = vld [vmem:[%s4 + $0x204] sm:$0xf]
      %v2327 = vld [vmem:[%s4 + $0x208] sm:$0xff]
      %v2328 = vld [vmem:[%s4 + $0x210] sm:$0xff]
      %v2329 = vld [vmem:[%s4 + $0x218] sm:$0xf]
      %v2330 = vld [vmem:[%s4 + $0x21c] sm:$0xff]
      %v2331 = vld [vmem:[%s4 + $0x224] sm:$0xff]
      %v2332 = vld [vmem:[%s4 + $0x22c] sm:$0xf]
      %v2333 = vld [vmem:[%s4 + $0x230] sm:$0xff]
      %v2334 = vld [vmem:[%s4 + $0x238] sm:$0xff]
      %v2335 = vld [vmem:[%s4 + $0x240] sm:$0xf]
      %v2336 = vld [vmem:[%s4 + $0x244] sm:$0xff]
      %v2337 = vld [vmem:[%s4 + $0x24c] sm:$0xff]
      %v2338 = vld [vmem:[%s4 + $0x254] sm:$0xf]
      %v2339 = vld [vmem:[%s4 + $0x258] sm:$0xff]
      %v2340 = vld [vmem:[%s4 + $0x260] sm:$0xff]
      %v2341 = vld [vmem:[%s4 + $0x268] sm:$0xf]
      %v2342 = vld [vmem:[%s4 + $0x26c] sm:$0xff]
      %v2343 = vld [vmem:[%s4 + $0x274] sm:$0xff]
      %v2344 = vld [vmem:[%s4 + $0x27c] sm:$0xf]
      %v2345 = vld [vmem:[%s4 + $0x280] sm:$0xff]
      %v2346 = vld [vmem:[%s4 + $0x288] sm:$0xff]
      %v2347 = vld [vmem:[%s4 + $0x290] sm:$0xf]
      %v2348 = vld [vmem:[%s4 + $0x294] sm:$0xff]
      %v2349 = vld [vmem:[%s4 + $0x29c] sm:$0xff]
      %v2350 = vld [vmem:[%s4 + $0x2a4] sm:$0xf]
      %v2351 = vld [vmem:[%s4 + $0x2a8] sm:$0xff]
      %v2352 = vld [vmem:[%s4 + $0x2b0] sm:$0xff]
      %v2353 = vld [vmem:[%s4 + $0x2b8] sm:$0xf]
      %v2354 = vld [vmem:[%s4 + $0x2bc] sm:$0xff]
      %v2355 = vld [vmem:[%s4 + $0x2c4] sm:$0xff]
      %v2356 = vld [vmem:[%s4 + $0x2cc] sm:$0xf]
      %v2357 = vld [vmem:[%s4 + $0x2d0] sm:$0xff]
      %v2358 = vld [vmem:[%s4 + $0x2d8] sm:$0xff]
      %v2359 = vld [vmem:[%s4 + $0x2e0] sm:$0xf]
      %v2360 = vld [vmem:[%s4 + $0x2e4] sm:$0xff]
      %v2361 = vld [vmem:[%s4 + $0x2ec] sm:$0xff]
      %v2362 = vld [vmem:[%s4 + $0x2f4] sm:$0xf]
      %v2363 = vld [vmem:[%s4 + $0x2f8] sm:$0xff]
      %v2364 = vld [vmem:[%s4 + $0x300] sm:$0xff]
      %v2365 = vld [vmem:[%s4 + $0x308] sm:$0xf]
      %v2366 = vld [vmem:[%s4 + $0x30c] sm:$0xff]
      %v2367 = vld [vmem:[%s4 + $0x314] sm:$0xff]
      %v2368 = vld [vmem:[%s4 + $0x31c] sm:$0xf]
      %v2369 = vld [vmem:[%s4 + $0x320] sm:$0xff]
      %v2370 = vld [vmem:[%s4 + $0x328] sm:$0xff]
      %v2371 = vld [vmem:[%s4 + $0x330] sm:$0xf]
      %v2372 = vld [vmem:[%s4 + $0x334] sm:$0xff]
      %v2373 = vld [vmem:[%s4 + $0x33c] sm:$0xff]
      %v2374 = vld [vmem:[%s4 + $0x344] sm:$0xf]
      %v2375 = vld [vmem:[%s4 + $0x348] sm:$0xff]
      %v2376 = vld [vmem:[%s4 + $0x350] sm:$0xff]
      %v2377 = vld [vmem:[%s4 + $0x358] sm:$0xf]
      %v2378 = vld [vmem:[%s4 + $0x35c] sm:$0xff]
      %v2379 = vld [vmem:[%s4 + $0x364] sm:$0xff]
      %v2380 = vld [vmem:[%s4 + $0x36c] sm:$0xf]
      %v2381 = vld [vmem:[%s4 + $0x370] sm:$0xff]
      %v2382 = vld [vmem:[%s4 + $0x378] sm:$0xff]
      %v2383 = vld [vmem:[%s4 + $0x380] sm:$0xf]
      %v2384 = vld [vmem:[%s4 + $0x384] sm:$0xff]
      %v2385 = vld [vmem:[%s4 + $0x38c] sm:$0xff]
      %v2386 = vld [vmem:[%s4 + $0x394] sm:$0xf]
      %v2387 = vld [vmem:[%s4 + $0x398] sm:$0xff]
      %v2388 = vld [vmem:[%s4 + $0x3a0] sm:$0xff]
      %v2389 = vld [vmem:[%s4 + $0x3a8] sm:$0xf]
      %v2390 = vld [vmem:[%s4 + $0x3ac] sm:$0xff]
      %v2391 = vld [vmem:[%s4 + $0x3b4] sm:$0xff]
      %v2392 = vld [vmem:[%s4 + $0x3bc] sm:$0xf]
      %v2393 = vld [vmem:[%s4 + $0x3c0] sm:$0xff]
      %v2394 = vld [vmem:[%s4 + $0x3c8] sm:$0xff]
      %v2395 = vld [vmem:[%s4 + $0x3d0] sm:$0xf]
      %v2396 = vld [vmem:[%s4 + $0x3d4] sm:$0xff]
      %v2397 = vld [vmem:[%s4 + $0x3dc] sm:$0xff]
      %v2398 = vld [vmem:[%s4 + $0x3e4] sm:$0xf]
      %v2399 = vld [vmem:[%s4 + $0x3e8] sm:$0xff]
      %v2400 = vld [vmem:[%s4 + $0x3f0] sm:$0xff]
      %v2401 = vld [vmem:[%s4 + $0x3f8] sm:$0xf]
      %v2402 = vld [vmem:[%s4 + $0x3fc] sm:$0xff]
      %v2403 = vld [vmem:[%s4 + $0x404] sm:$0xff]
      %v2404 = vld [vmem:[%s4 + $0x40c] sm:$0xf]
      %v2405 = vld [vmem:[%s4 + $0x410] sm:$0xff]
      %v2406 = vld [vmem:[%s4 + $0x418] sm:$0xff]
      %v2407 = vld [vmem:[%s4 + $0x420] sm:$0xf]
      %v2408 = vld [vmem:[%s4 + $0x424] sm:$0xff]
      %v2409 = vld [vmem:[%s4 + $0x42c] sm:$0xff]
      %v2410 = vld [vmem:[%s4 + $0x434] sm:$0xf]
      %v2411 = vld [vmem:[%s4 + $0x438] sm:$0xff]
      %v2412 = vld [vmem:[%s4 + $0x440] sm:$0xff]
      %v2413 = vld [vmem:[%s4 + $0x448] sm:$0xf]
      %v2414 = vld [vmem:[%s4 + $0x44c] sm:$0xff]
      %v2415 = vld [vmem:[%s4 + $0x454] sm:$0xff]
      %v2416 = vld [vmem:[%s4 + $0x45c] sm:$0xf]
      %v2417 = vld [vmem:[%s4 + $0x460] sm:$0xff]
      %v2418 = vld [vmem:[%s4 + $0x468] sm:$0xff]
      %v2419 = vld [vmem:[%s4 + $0x470] sm:$0xf]
      %v2420 = vld [vmem:[%s4 + $0x474] sm:$0xff]
      %v2421 = vld [vmem:[%s4 + $0x47c] sm:$0xff]
      %v2422 = vld [vmem:[%s4 + $0x484] sm:$0xf]
      %v2423 = vld [vmem:[%s4 + $0x488] sm:$0xff]
      %v2424 = vld [vmem:[%s4 + $0x490] sm:$0xff]
      %v2425 = vld [vmem:[%s4 + $0x498] sm:$0xf]
      %v2426 = vld [vmem:[%s4 + $0x49c] sm:$0xff]
      %v2427 = vld [vmem:[%s4 + $0x4a4] sm:$0xff]
      %v2428 = vld [vmem:[%s4 + $0x4ac] sm:$0xf]
      %v2429 = vld [vmem:[%s4 + $0x4b0] sm:$0xff]
      %v2430 = vld [vmem:[%s4 + $0x4b8] sm:$0xff]
      %v2431 = vld [vmem:[%s4 + $0x4c0] sm:$0xf]
      %v2432 = vld [vmem:[%s4 + $0x4c4] sm:$0xff]
      %v2433 = vld [vmem:[%s4 + $0x4cc] sm:$0xff]
      %v2434 = vld [vmem:[%s4 + $0x4d4] sm:$0xf]
      %v2435 = vld [vmem:[%s4 + $0x4d8] sm:$0xff]
      %v2436 = vld [vmem:[%s4 + $0x4e0] sm:$0xff]
      %v2437 = vld [vmem:[%s4 + $0x4e8] sm:$0xf]
      %v2438 = vld [vmem:[%s4 + $0x4ec] sm:$0xff]
      %v2439 = vld [vmem:[%s4 + $0x4f4] sm:$0xff]
      %v2440 = vld [vmem:[%s4 + $0x4fc] sm:$0xf]
      %v2441 = vld [vmem:[%s4 + $0x500] sm:$0xff]
      %v2442 = vld [vmem:[%s4 + $0x508] sm:$0xff]
      %v2443 = vld [vmem:[%s4 + $0x510] sm:$0xf]
      %v2444 = vld [vmem:[%s4 + $0x514] sm:$0xff]
      %v2445 = vld [vmem:[%s4 + $0x51c] sm:$0xff]
      %v2446 = vld [vmem:[%s4 + $0x524] sm:$0xf]
      %v2447 = vld [vmem:[%s4 + $0x528] sm:$0xff]
      %v2448 = vld [vmem:[%s4 + $0x530] sm:$0xff]
      %v2449 = vld [vmem:[%s4 + $0x538] sm:$0xf]
      %v2450 = vld [vmem:[%s4 + $0x53c] sm:$0xff]
      %v2451 = vld [vmem:[%s4 + $0x544] sm:$0xff]
      %v2452 = vld [vmem:[%s4 + $0x54c] sm:$0xf]
      %v2453 = vld [vmem:[%s4 + $0x550] sm:$0xff]
      %v2454 = vld [vmem:[%s4 + $0x558] sm:$0xff]
      %v2455 = vld [vmem:[%s4 + $0x560] sm:$0xf]
      %v2456 = vld [vmem:[%s4 + $0x564] sm:$0xff]
      %v2457 = vld [vmem:[%s4 + $0x56c] sm:$0xff]
      %v2458 = vld [vmem:[%s4 + $0x574] sm:$0xf]
      %v2459 = vld [vmem:[%s4 + $0x578] sm:$0xff]
      %v2460 = vld [vmem:[%s4 + $0x580] sm:$0xff]
      %v2461 = vld [vmem:[%s4 + $0x588] sm:$0xf]
      %v2462 = vld [vmem:[%s4 + $0x58c] sm:$0xff]
      %v2463 = vld [vmem:[%s4 + $0x594] sm:$0xff]
      %v2464 = vld [vmem:[%s4 + $0x59c] sm:$0xf]
      %v2465 = vld [vmem:[%s4 + $0x5a0] sm:$0xff]
      %v2466 = vld [vmem:[%s4 + $0x5a8] sm:$0xff]
      %v2467 = vld [vmem:[%s4 + $0x5b0] sm:$0xf]
      %v2468 = vld [vmem:[%s4 + $0x5b4] sm:$0xff]
      %v2469 = vld [vmem:[%s4 + $0x5bc] sm:$0xff]
      %v2470 = vld [vmem:[%s4 + $0x5c4] sm:$0xf]
      %v2471 = vld [vmem:[%s4 + $0x5c8] sm:$0xff]
      %v2472 = vld [vmem:[%s4 + $0x5d0] sm:$0xff]
      %v2473 = vld [vmem:[%s4 + $0x5d8] sm:$0xf]
      %v2474 = vld [vmem:[%s4 + $0x5dc] sm:$0xff]
      %v2475 = vld [vmem:[%s4 + $0x5e4] sm:$0xff]
      %v2476 = vld [vmem:[%s4 + $0x5ec] sm:$0xf]
      %v2477 = vld [vmem:[%s4 + $0x5f0] sm:$0xff]
      %v2478 = vld [vmem:[%s4 + $0x5f8] sm:$0xff]
      %v2479 = vld [vmem:[%s4 + $0x600] sm:$0xf]
      %v2480 = vld [vmem:[%s4 + $0x604] sm:$0xff]
      %v2481 = vld [vmem:[%s4 + $0x60c] sm:$0xff]
      %v2482 = vld [vmem:[%s4 + $0x614] sm:$0xf]
      %v2483 = vld [vmem:[%s4 + $0x618] sm:$0xff]
      %v2484 = vld [vmem:[%s4 + $0x620] sm:$0xff]
      %v2485 = vld [vmem:[%s4 + $0x628] sm:$0xf]
      %v2486 = vld [vmem:[%s4 + $0x62c] sm:$0xff]
      %v2487 = vld [vmem:[%s4 + $0x634] sm:$0xff]
      %v2488 = vld [vmem:[%s4 + $0x63c] sm:$0xf]
      %v2489 = vld [vmem:[%s4 + $0x640] sm:$0xff]
      %v2490 = vld [vmem:[%s4 + $0x648] sm:$0xff]
      %v2491 = vld [vmem:[%s4 + $0x650] sm:$0xf]
      %v2492 = vld [vmem:[%s4 + $0x654] sm:$0xff]
      %v2493 = vld [vmem:[%s4 + $0x65c] sm:$0xff]
      %v2494 = vld [vmem:[%s4 + $0x664] sm:$0xf]
      %v2495 = vld [vmem:[%s4 + $0x668] sm:$0xff]
      %v2496 = vld [vmem:[%s4 + $0x670] sm:$0xff]
      %v2497 = vld [vmem:[%s4 + $0x678] sm:$0xf]
      %v2498 = vld [vmem:[%s4 + $0x67c] sm:$0xff]
      %v2499 = vld [vmem:[%s4 + $0x684] sm:$0xff]
      %v2500 = vld [vmem:[%s4 + $0x68c] sm:$0xf]
      %v2501 = vld [vmem:[%s4 + $0x690] sm:$0xff]
      %v2502 = vld [vmem:[%s4 + $0x698] sm:$0xff]
      %v2503 = vld [vmem:[%s4 + $0x6a0] sm:$0xf]
      %v2504 = vld [vmem:[%s4 + $0x6a4] sm:$0xff]
      %v2505 = vld [vmem:[%s4 + $0x6ac] sm:$0xff]
      %v2506 = vld [vmem:[%s4 + $0x6b4] sm:$0xf]
      %v2507 = vld [vmem:[%s4 + $0x6b8] sm:$0xff]
      %v2508 = vld [vmem:[%s4 + $0x6c0] sm:$0xff]
      %v2509 = vld [vmem:[%s4 + $0x6c8] sm:$0xf]
      %v2510 = vld [vmem:[%s4 + $0x6cc] sm:$0xff]
      %v2511 = vld [vmem:[%s4 + $0x6d4] sm:$0xff]
      %v2512 = vld [vmem:[%s4 + $0x6dc] sm:$0xf]
      %v2513 = vld [vmem:[%s4 + $0x6e0] sm:$0xff]
      %v2514 = vld [vmem:[%s4 + $0x6e8] sm:$0xff]
      %v2515 = vld [vmem:[%s4 + $0x6f0] sm:$0xf]
      %v2516 = vld [vmem:[%s4 + $0x6f4] sm:$0xff]
      %v2517 = vld [vmem:[%s4 + $0x6fc] sm:$0xff]
      %v2518 = vld [vmem:[%s4 + $0x704] sm:$0xf]
      %v2519 = vld [vmem:[%s4 + $0x708] sm:$0xff]
      %v2520 = vld [vmem:[%s4 + $0x710] sm:$0xff]
      %v2521 = vld [vmem:[%s4 + $0x718] sm:$0xf]
      %v2522 = vld [vmem:[%s4 + $0x71c] sm:$0xff]
      %v2523 = vld [vmem:[%s4 + $0x724] sm:$0xff]
      %v2524 = vld [vmem:[%s4 + $0x72c] sm:$0xf]
      %v2525 = vld [vmem:[%s4 + $0x730] sm:$0xff]
      %v2526 = vld [vmem:[%s4 + $0x738] sm:$0xff]
      %v2527 = vld [vmem:[%s4 + $0x740] sm:$0xf]
      %v2528 = vld [vmem:[%s4 + $0x744] sm:$0xff]
      %v2529 = vld [vmem:[%s4 + $0x74c] sm:$0xff]
      %v2530 = vld [vmem:[%s4 + $0x754] sm:$0xf]
      %v2531 = vld [vmem:[%s4 + $0x758] sm:$0xff]
      %v2532 = vld [vmem:[%s4 + $0x760] sm:$0xff]
      %v2533 = vld [vmem:[%s4 + $0x768] sm:$0xf]
      %v2534 = vld [vmem:[%s4 + $0x76c] sm:$0xff]
      %v2535 = vld [vmem:[%s4 + $0x774] sm:$0xff]
      %v2536 = vld [vmem:[%s4 + $0x77c] sm:$0xf]
      %v2537 = vld [vmem:[%s4 + $0x780] sm:$0xff]
      %v2538 = vld [vmem:[%s4 + $0x788] sm:$0xff]
      %v2539 = vld [vmem:[%s4 + $0x790] sm:$0xf]
      %v2540 = vld [vmem:[%s4 + $0x794] sm:$0xff]
      %v2541 = vld [vmem:[%s4 + $0x79c] sm:$0xff]
      %v2542 = vld [vmem:[%s4 + $0x7a4] sm:$0xf]
      %v2543 = vld [vmem:[%s4 + $0x7a8] sm:$0xff]
      %v2544 = vld [vmem:[%s4 + $0x7b0] sm:$0xff]
      %v2545 = vld [vmem:[%s4 + $0x7b8] sm:$0xf]
      %v2546 = vld [vmem:[%s4 + $0x7bc] sm:$0xff]
      %v2547 = vld [vmem:[%s4 + $0x7c4] sm:$0xff]
      %v2548 = vld [vmem:[%s4 + $0x7cc] sm:$0xf]
      %v2549 = vld [vmem:[%s4 + $0x7d0] sm:$0xff]
      %v2550 = vld [vmem:[%s4 + $0x7d8] sm:$0xff]
      %v2551 = vld [vmem:[%s4 + $0x7e0] sm:$0xf]
      %v2552 = vld [vmem:[%s4 + $0x7e4] sm:$0xff]
      %v2553 = vld [vmem:[%s4 + $0x7ec] sm:$0xff]
      %v2554 = vld [vmem:[%s4 + $0x7f4] sm:$0xf]
      %v2555 = vld [vmem:[%s4 + $0x7f8] sm:$0xff]
      %v2556 = vld [vmem:[%s4 + $0x800] sm:$0xff]
      %v2557 = vld [vmem:[%s4 + $0x808] sm:$0xf]
      %v2558 = vld [vmem:[%s4 + $0x80c] sm:$0xff]
      %v2559 = vld [vmem:[%s4 + $0x814] sm:$0xff]
      %v2560 = vld [vmem:[%s4 + $0x81c] sm:$0xf]
      %v2561 = vld [vmem:[%s4 + $0x820] sm:$0xff]
      %v2562 = vld [vmem:[%s4 + $0x828] sm:$0xff]
      %v2563 = vld [vmem:[%s4 + $0x830] sm:$0xf]
      %v2564 = vld [vmem:[%s4 + $0x834] sm:$0xff]
      %v2565 = vld [vmem:[%s4 + $0x83c] sm:$0xff]
      %v2566 = vld [vmem:[%s4 + $0x844] sm:$0xf]
      %v2567 = vld [vmem:[%s4 + $0x848] sm:$0xff]
      %v2568 = vld [vmem:[%s4 + $0x850] sm:$0xff]
      %v2569 = vld [vmem:[%s4 + $0x858] sm:$0xf]
      %v2570 = vld [vmem:[%s4 + $0x85c] sm:$0xff]
      %v2571 = vld [vmem:[%s4 + $0x864] sm:$0xff]
      %v2572 = vld [vmem:[%s4 + $0x86c] sm:$0xf]
      %v2573 = vld [vmem:[%s4 + $0x870] sm:$0xff]
      %v2574 = vld [vmem:[%s4 + $0x878] sm:$0xff]
      %v2575 = vld [vmem:[%s4 + $0x880] sm:$0xf]
      %v2576 = vld [vmem:[%s4 + $0x884] sm:$0xff]
      %v2577 = vld [vmem:[%s4 + $0x88c] sm:$0xff]
      %v2578 = vld [vmem:[%s4 + $0x894] sm:$0xf]
      %v2579 = vld [vmem:[%s4 + $0x898] sm:$0xff]
      %v2580 = vld [vmem:[%s4 + $0x8a0] sm:$0xff]
      %v2581 = vld [vmem:[%s4 + $0x8a8] sm:$0xf]
      %v2582 = vld [vmem:[%s4 + $0x8ac] sm:$0xff]
      %v2583 = vld [vmem:[%s4 + $0x8b4] sm:$0xff]
      %v2584 = vld [vmem:[%s4 + $0x8bc] sm:$0xf]
      %v2585 = vld [vmem:[%s4 + $0x8c0] sm:$0xff]
      %v2586 = vld [vmem:[%s4 + $0x8c8] sm:$0xff]
      %v2587 = vld [vmem:[%s4 + $0x8d0] sm:$0xf]
      %v2588 = vld [vmem:[%s4 + $0x8d4] sm:$0xff]
      %v2589 = vld [vmem:[%s4 + $0x8dc] sm:$0xff]
      %v2590 = vld [vmem:[%s4 + $0x8e4] sm:$0xf]
      %v2591 = vld [vmem:[%s4 + $0x8e8] sm:$0xff]
      %v2592 = vld [vmem:[%s4 + $0x8f0] sm:$0xff]
      %v2593 = vld [vmem:[%s4 + $0x8f8] sm:$0xf]
      %v2594 = vld [vmem:[%s4 + $0x8fc] sm:$0xff]
      %v2595 = vld [vmem:[%s4 + $0x904] sm:$0xff]
      %v2596 = vld [vmem:[%s4 + $0x90c] sm:$0xf]
      %v2597 = vld [vmem:[%s4 + $0x910] sm:$0xff]
      %v2598 = vld [vmem:[%s4 + $0x918] sm:$0xff]
      %v2599 = vld [vmem:[%s4 + $0x920] sm:$0xf]
      %v2600 = vld [vmem:[%s4 + $0x924] sm:$0xff]
      %v2601 = vld [vmem:[%s4 + $0x92c] sm:$0xff]
      %v2602 = vld [vmem:[%s4 + $0x934] sm:$0xf]
      %v2603 = vld [vmem:[%s4 + $0x938] sm:$0xff]
      %v2604 = vld [vmem:[%s4 + $0x940] sm:$0xff]
      %v2605 = vld [vmem:[%s4 + $0x948] sm:$0xf]
      %v2606 = vld [vmem:[%s4 + $0x94c] sm:$0xff]
      %v2607 = vld [vmem:[%s4 + $0x954] sm:$0xff]
      %v2608 = vld [vmem:[%s4 + $0x95c] sm:$0xf]
      %v2609 = vld [vmem:[%s4 + $0x960] sm:$0xff]
      %v2610 = vld [vmem:[%s4 + $0x968] sm:$0xff]
      %v2611 = vld [vmem:[%s4 + $0x970] sm:$0xf]
      %v2612 = vld [vmem:[%s4 + $0x974] sm:$0xff]
      %v2613 = vld [vmem:[%s4 + $0x97c] sm:$0xff]
      %v2614 = vld [vmem:[%s4 + $0x984] sm:$0xf]
      %v2615 = vld [vmem:[%s4 + $0x988] sm:$0xff]
      %v2616 = vld [vmem:[%s4 + $0x990] sm:$0xff]
      %v2617 = vld [vmem:[%s4 + $0x998] sm:$0xf]
      %v2618 = vld [vmem:[%s4 + $0x99c] sm:$0xff]
      %v2619 = vld [vmem:[%s4 + $0x9a4] sm:$0xff]
      %v2620 = vld [vmem:[%s4 + $0x9ac] sm:$0xf]
      %v2621 = vld [vmem:[%s4 + $0x9b0] sm:$0xff]
      %v2622 = vld [vmem:[%s4 + $0x9b8] sm:$0xff]
      %v2623 = vld [vmem:[%s4 + $0x9c0] sm:$0xf]
      %v2624 = vld [vmem:[%s4 + $0x9c4] sm:$0xff]
      %v2625 = vld [vmem:[%s4 + $0x9cc] sm:$0xff]
      %v2626 = vld [vmem:[%s4 + $0x9d4] sm:$0xf]
      %v2627 = vld [vmem:[%s4 + $0x9d8] sm:$0xff]
      %v2628 = vld [vmem:[%s4 + $0x9e0] sm:$0xff]
      %v2629 = vld [vmem:[%s4 + $0x9e8] sm:$0xf]
      %v2630 = vld [vmem:[%s4 + $0x9ec] sm:$0xff]
      %v2631 = vld [vmem:[%s4 + $0x9f4] sm:$0xff]
      %v2632 = vld [vmem:[%s4 + $0x9fc] sm:$0xf]
      %v2633 = vld [vmem:[%s5] sm:$0x1f]
      %v2635 = vlaneseq
      %v2636 = vshrl.u32 %v2635, 7
      %v2637 = vsub.s32 0, %v2636
      %v2638 = vrot.slane %v2633, %v2637
      %v2639 = vlaneseq
      %v2640 = vshrl.u32 %v2639, 7
      %v2641 = vsub.s32 1, %v2640
      %v2642 = vrot.slane %v2633, %v2641
      %v2643 = vlaneseq
      %v2644 = vshrl.u32 %v2643, 7
      %v2645 = vsub.s32 2, %v2644
      %v2646 = vrot.slane %v2633, %v2645
      %v2647 = vlaneseq
      %v2648 = vshrl.u32 %v2647, 7
      %v2649 = vsub.s32 3, %v2648
      %v2650 = vrot.slane %v2633, %v2649
      %v2651 = vlaneseq
      %v2652 = vshrl.u32 %v2651, 7
      %v2653 = vsub.s32 4, %v2652
      %v2654 = vrot.slane %v2633, %v2653
      %v3044 = vunpack.c.l.b16 %v2249
      %v3045 = vunpack.c.h.b16 %v2249
      %v3046 = vunpack.c.l.b16 %v2250
      %v3047 = vunpack.c.h.b16 %v2250
      %v3048 = vunpack.c.l.b16 %v2251
      %v3049 = vunpack.c.l.b16 %v2252
      %v3050 = vunpack.c.h.b16 %v2252
      %v3051 = vunpack.c.l.b16 %v2253
      %v3052 = vunpack.c.h.b16 %v2253
      %v3053 = vunpack.c.l.b16 %v2254
      %v3054 = vunpack.c.l.b16 %v2255
      %v3055 = vunpack.c.h.b16 %v2255
      %v3056 = vunpack.c.l.b16 %v2256
      %v3057 = vunpack.c.h.b16 %v2256
      %v3058 = vunpack.c.l.b16 %v2257
      %v3059 = vunpack.c.l.b16 %v2258
      %v3060 = vunpack.c.h.b16 %v2258
      %v3061 = vunpack.c.l.b16 %v2259
      %v3062 = vunpack.c.h.b16 %v2259
      %v3063 = vunpack.c.l.b16 %v2260
      %v3064 = vunpack.c.l.b16 %v2261
      %v3065 = vunpack.c.h.b16 %v2261
      %v3066 = vunpack.c.l.b16 %v2262
      %v3067 = vunpack.c.h.b16 %v2262
      %v3068 = vunpack.c.l.b16 %v2263
      %v3069 = vunpack.c.l.b16 %v2264
      %v3070 = vunpack.c.h.b16 %v2264
      %v3071 = vunpack.c.l.b16 %v2265
      %v3072 = vunpack.c.h.b16 %v2265
      %v3073 = vunpack.c.l.b16 %v2266
      %v3074 = vunpack.c.l.b16 %v2267
      %v3075 = vunpack.c.h.b16 %v2267
      %v3076 = vunpack.c.l.b16 %v2268
      %v3077 = vunpack.c.h.b16 %v2268
      %v3078 = vunpack.c.l.b16 %v2269
      %v3079 = vunpack.c.l.b16 %v2270
      %v3080 = vunpack.c.h.b16 %v2270
      %v3081 = vunpack.c.l.b16 %v2271
      %v3082 = vunpack.c.h.b16 %v2271
      %v3083 = vunpack.c.l.b16 %v2272
      %v3084 = vunpack.c.l.b16 %v2273
      %v3085 = vunpack.c.h.b16 %v2273
      %v3086 = vunpack.c.l.b16 %v2274
      %v3087 = vunpack.c.h.b16 %v2274
      %v3088 = vunpack.c.l.b16 %v2275
      %v3089 = vunpack.c.l.b16 %v2276
      %v3090 = vunpack.c.h.b16 %v2276
      %v3091 = vunpack.c.l.b16 %v2277
      %v3092 = vunpack.c.h.b16 %v2277
      %v3093 = vunpack.c.l.b16 %v2278
      %v3094 = vunpack.c.l.b16 %v2279
      %v3095 = vunpack.c.h.b16 %v2279
      %v3096 = vunpack.c.l.b16 %v2280
      %v3097 = vunpack.c.h.b16 %v2280
      %v3098 = vunpack.c.l.b16 %v2281
      %v3099 = vunpack.c.l.b16 %v2282
      %v3100 = vunpack.c.h.b16 %v2282
      %v3101 = vunpack.c.l.b16 %v2283
      %v3102 = vunpack.c.h.b16 %v2283
      %v3103 = vunpack.c.l.b16 %v2284
      %v3104 = vunpack.c.l.b16 %v2285
      %v3105 = vunpack.c.h.b16 %v2285
      %v3106 = vunpack.c.l.b16 %v2286
      %v3107 = vunpack.c.h.b16 %v2286
      %v3108 = vunpack.c.l.b16 %v2287
      %v3109 = vunpack.c.l.b16 %v2288
      %v3110 = vunpack.c.h.b16 %v2288
      %v3111 = vunpack.c.l.b16 %v2289
      %v3112 = vunpack.c.h.b16 %v2289
      %v3113 = vunpack.c.l.b16 %v2290
      %v3114 = vunpack.c.l.b16 %v2291
      %v3115 = vunpack.c.h.b16 %v2291
      %v3116 = vunpack.c.l.b16 %v2292
      %v3117 = vunpack.c.h.b16 %v2292
      %v3118 = vunpack.c.l.b16 %v2293
      %v3119 = vunpack.c.l.b16 %v2294
      %v3120 = vunpack.c.h.b16 %v2294
      %v3121 = vunpack.c.l.b16 %v2295
      %v3122 = vunpack.c.h.b16 %v2295
      %v3123 = vunpack.c.l.b16 %v2296
      %v3124 = vunpack.c.l.b16 %v2297
      %v3125 = vunpack.c.h.b16 %v2297
      %v3126 = vunpack.c.l.b16 %v2298
      %v3127 = vunpack.c.h.b16 %v2298
      %v3128 = vunpack.c.l.b16 %v2299
      %v3129 = vunpack.c.l.b16 %v2300
      %v3130 = vunpack.c.h.b16 %v2300
      %v3131 = vunpack.c.l.b16 %v2301
      %v3132 = vunpack.c.h.b16 %v2301
      %v3133 = vunpack.c.l.b16 %v2302
      %v3134 = vunpack.c.l.b16 %v2303
      %v3135 = vunpack.c.h.b16 %v2303
      %v3136 = vunpack.c.l.b16 %v2304
      %v3137 = vunpack.c.h.b16 %v2304
      %v3138 = vunpack.c.l.b16 %v2305
      %v3139 = vunpack.c.l.b16 %v2306
      %v3140 = vunpack.c.h.b16 %v2306
      %v3141 = vunpack.c.l.b16 %v2307
      %v3142 = vunpack.c.h.b16 %v2307
      %v3143 = vunpack.c.l.b16 %v2308
      %v3144 = vunpack.c.l.b16 %v2309
      %v3145 = vunpack.c.h.b16 %v2309
      %v3146 = vunpack.c.l.b16 %v2310
      %v3147 = vunpack.c.h.b16 %v2310
      %v3148 = vunpack.c.l.b16 %v2311
      %v3149 = vunpack.c.l.b16 %v2312
      %v3150 = vunpack.c.h.b16 %v2312
      %v3151 = vunpack.c.l.b16 %v2313
      %v3152 = vunpack.c.h.b16 %v2313
      %v3153 = vunpack.c.l.b16 %v2314
      %v3154 = vunpack.c.l.b16 %v2315
      %v3155 = vunpack.c.h.b16 %v2315
      %v3156 = vunpack.c.l.b16 %v2316
      %v3157 = vunpack.c.h.b16 %v2316
      %v3158 = vunpack.c.l.b16 %v2317
      %v3159 = vunpack.c.l.b16 %v2318
      %v3160 = vunpack.c.h.b16 %v2318
      %v3161 = vunpack.c.l.b16 %v2319
      %v3162 = vunpack.c.h.b16 %v2319
      %v3163 = vunpack.c.l.b16 %v2320
      %v3164 = vunpack.c.l.b16 %v2321
      %v3165 = vunpack.c.h.b16 %v2321
      %v3166 = vunpack.c.l.b16 %v2322
      %v3167 = vunpack.c.h.b16 %v2322
      %v3168 = vunpack.c.l.b16 %v2323
      %v3169 = vunpack.c.l.b16 %v2324
      %v3170 = vunpack.c.h.b16 %v2324
      %v3171 = vunpack.c.l.b16 %v2325
      %v3172 = vunpack.c.h.b16 %v2325
      %v3173 = vunpack.c.l.b16 %v2326
      %v3174 = vunpack.c.l.b16 %v2327
      %v3175 = vunpack.c.h.b16 %v2327
      %v3176 = vunpack.c.l.b16 %v2328
      %v3177 = vunpack.c.h.b16 %v2328
      %v3178 = vunpack.c.l.b16 %v2329
      %v3179 = vunpack.c.l.b16 %v2330
      %v3180 = vunpack.c.h.b16 %v2330
      %v3181 = vunpack.c.l.b16 %v2331
      %v3182 = vunpack.c.h.b16 %v2331
      %v3183 = vunpack.c.l.b16 %v2332
      %v3184 = vunpack.c.l.b16 %v2333
      %v3185 = vunpack.c.h.b16 %v2333
      %v3186 = vunpack.c.l.b16 %v2334
      %v3187 = vunpack.c.h.b16 %v2334
      %v3188 = vunpack.c.l.b16 %v2335
      %v3189 = vunpack.c.l.b16 %v2336
      %v3190 = vunpack.c.h.b16 %v2336
      %v3191 = vunpack.c.l.b16 %v2337
      %v3192 = vunpack.c.h.b16 %v2337
      %v3193 = vunpack.c.l.b16 %v2338
      %v3194 = vunpack.c.l.b16 %v2339
      %v3195 = vunpack.c.h.b16 %v2339
      %v3196 = vunpack.c.l.b16 %v2340
      %v3197 = vunpack.c.h.b16 %v2340
      %v3198 = vunpack.c.l.b16 %v2341
      %v3199 = vunpack.c.l.b16 %v2342
      %v3200 = vunpack.c.h.b16 %v2342
      %v3201 = vunpack.c.l.b16 %v2343
      %v3202 = vunpack.c.h.b16 %v2343
      %v3203 = vunpack.c.l.b16 %v2344
      %v3204 = vunpack.c.l.b16 %v2345
      %v3205 = vunpack.c.h.b16 %v2345
      %v3206 = vunpack.c.l.b16 %v2346
      %v3207 = vunpack.c.h.b16 %v2346
      %v3208 = vunpack.c.l.b16 %v2347
      %v3209 = vunpack.c.l.b16 %v2348
      %v3210 = vunpack.c.h.b16 %v2348
      %v3211 = vunpack.c.l.b16 %v2349
      %v3212 = vunpack.c.h.b16 %v2349
      %v3213 = vunpack.c.l.b16 %v2350
      %v3214 = vunpack.c.l.b16 %v2351
      %v3215 = vunpack.c.h.b16 %v2351
      %v3216 = vunpack.c.l.b16 %v2352
      %v3217 = vunpack.c.h.b16 %v2352
      %v3218 = vunpack.c.l.b16 %v2353
      %v3219 = vunpack.c.l.b16 %v2354
      %v3220 = vunpack.c.h.b16 %v2354
      %v3221 = vunpack.c.l.b16 %v2355
      %v3222 = vunpack.c.h.b16 %v2355
      %v3223 = vunpack.c.l.b16 %v2356
      %v3224 = vunpack.c.l.b16 %v2357
      %v3225 = vunpack.c.h.b16 %v2357
      %v3226 = vunpack.c.l.b16 %v2358
      %v3227 = vunpack.c.h.b16 %v2358
      %v3228 = vunpack.c.l.b16 %v2359
      %v3229 = vunpack.c.l.b16 %v2360
      %v3230 = vunpack.c.h.b16 %v2360
      %v3231 = vunpack.c.l.b16 %v2361
      %v3232 = vunpack.c.h.b16 %v2361
      %v3233 = vunpack.c.l.b16 %v2362
      %v3234 = vunpack.c.l.b16 %v2363
      %v3235 = vunpack.c.h.b16 %v2363
      %v3236 = vunpack.c.l.b16 %v2364
      %v3237 = vunpack.c.h.b16 %v2364
      %v3238 = vunpack.c.l.b16 %v2365
      %v3239 = vunpack.c.l.b16 %v2366
      %v3240 = vunpack.c.h.b16 %v2366
      %v3241 = vunpack.c.l.b16 %v2367
      %v3242 = vunpack.c.h.b16 %v2367
      %v3243 = vunpack.c.l.b16 %v2368
      %v3244 = vunpack.c.l.b16 %v2369
      %v3245 = vunpack.c.h.b16 %v2369
      %v3246 = vunpack.c.l.b16 %v2370
      %v3247 = vunpack.c.h.b16 %v2370
      %v3248 = vunpack.c.l.b16 %v2371
      %v3249 = vunpack.c.l.b16 %v2372
      %v3250 = vunpack.c.h.b16 %v2372
      %v3251 = vunpack.c.l.b16 %v2373
      %v3252 = vunpack.c.h.b16 %v2373
      %v3253 = vunpack.c.l.b16 %v2374
      %v3254 = vunpack.c.l.b16 %v2375
      %v3255 = vunpack.c.h.b16 %v2375
      %v3256 = vunpack.c.l.b16 %v2376
      %v3257 = vunpack.c.h.b16 %v2376
      %v3258 = vunpack.c.l.b16 %v2377
      %v3259 = vunpack.c.l.b16 %v2378
      %v3260 = vunpack.c.h.b16 %v2378
      %v3261 = vunpack.c.l.b16 %v2379
      %v3262 = vunpack.c.h.b16 %v2379
      %v3263 = vunpack.c.l.b16 %v2380
      %v3264 = vunpack.c.l.b16 %v2381
      %v3265 = vunpack.c.h.b16 %v2381
      %v3266 = vunpack.c.l.b16 %v2382
      %v3267 = vunpack.c.h.b16 %v2382
      %v3268 = vunpack.c.l.b16 %v2383
      %v3269 = vunpack.c.l.b16 %v2384
      %v3270 = vunpack.c.h.b16 %v2384
      %v3271 = vunpack.c.l.b16 %v2385
      %v3272 = vunpack.c.h.b16 %v2385
      %v3273 = vunpack.c.l.b16 %v2386
      %v3274 = vunpack.c.l.b16 %v2387
      %v3275 = vunpack.c.h.b16 %v2387
      %v3276 = vunpack.c.l.b16 %v2388
      %v3277 = vunpack.c.h.b16 %v2388
      %v3278 = vunpack.c.l.b16 %v2389
      %v3279 = vunpack.c.l.b16 %v2390
      %v3280 = vunpack.c.h.b16 %v2390
      %v3281 = vunpack.c.l.b16 %v2391
      %v3282 = vunpack.c.h.b16 %v2391
      %v3283 = vunpack.c.l.b16 %v2392
      %v3284 = vunpack.c.l.b16 %v2393
      %v3285 = vunpack.c.h.b16 %v2393
      %v3286 = vunpack.c.l.b16 %v2394
      %v3287 = vunpack.c.h.b16 %v2394
      %v3288 = vunpack.c.l.b16 %v2395
      %v3289 = vunpack.c.l.b16 %v2396
      %v3290 = vunpack.c.h.b16 %v2396
      %v3291 = vunpack.c.l.b16 %v2397
      %v3292 = vunpack.c.h.b16 %v2397
      %v3293 = vunpack.c.l.b16 %v2398
      %v3294 = vunpack.c.l.b16 %v2399
      %v3295 = vunpack.c.h.b16 %v2399
      %v3296 = vunpack.c.l.b16 %v2400
      %v3297 = vunpack.c.h.b16 %v2400
      %v3298 = vunpack.c.l.b16 %v2401
      %v3299 = vunpack.c.l.b16 %v2402
      %v3300 = vunpack.c.h.b16 %v2402
      %v3301 = vunpack.c.l.b16 %v2403
      %v3302 = vunpack.c.h.b16 %v2403
      %v3303 = vunpack.c.l.b16 %v2404
      %v3304 = vunpack.c.l.b16 %v2405
      %v3305 = vunpack.c.h.b16 %v2405
      %v3306 = vunpack.c.l.b16 %v2406
      %v3307 = vunpack.c.h.b16 %v2406
      %v3308 = vunpack.c.l.b16 %v2407
      %v3309 = vunpack.c.l.b16 %v2408
      %v3310 = vunpack.c.h.b16 %v2408
      %v3311 = vunpack.c.l.b16 %v2409
      %v3312 = vunpack.c.h.b16 %v2409
      %v3313 = vunpack.c.l.b16 %v2410
      %v3314 = vunpack.c.l.b16 %v2411
      %v3315 = vunpack.c.h.b16 %v2411
      %v3316 = vunpack.c.l.b16 %v2412
      %v3317 = vunpack.c.h.b16 %v2412
      %v3318 = vunpack.c.l.b16 %v2413
      %v3319 = vunpack.c.l.b16 %v2414
      %v3320 = vunpack.c.h.b16 %v2414
      %v3321 = vunpack.c.l.b16 %v2415
      %v3322 = vunpack.c.h.b16 %v2415
      %v3323 = vunpack.c.l.b16 %v2416
      %v3324 = vunpack.c.l.b16 %v2417
      %v3325 = vunpack.c.h.b16 %v2417
      %v3326 = vunpack.c.l.b16 %v2418
      %v3327 = vunpack.c.h.b16 %v2418
      %v3328 = vunpack.c.l.b16 %v2419
      %v3329 = vunpack.c.l.b16 %v2420
      %v3330 = vunpack.c.h.b16 %v2420
      %v3331 = vunpack.c.l.b16 %v2421
      %v3332 = vunpack.c.h.b16 %v2421
      %v3333 = vunpack.c.l.b16 %v2422
      %v3334 = vunpack.c.l.b16 %v2423
      %v3335 = vunpack.c.h.b16 %v2423
      %v3336 = vunpack.c.l.b16 %v2424
      %v3337 = vunpack.c.h.b16 %v2424
      %v3338 = vunpack.c.l.b16 %v2425
      %v3339 = vunpack.c.l.b16 %v2426
      %v3340 = vunpack.c.h.b16 %v2426
      %v3341 = vunpack.c.l.b16 %v2427
      %v3342 = vunpack.c.h.b16 %v2427
      %v3343 = vunpack.c.l.b16 %v2428
      %v3344 = vunpack.c.l.b16 %v2429
      %v3345 = vunpack.c.h.b16 %v2429
      %v3346 = vunpack.c.l.b16 %v2430
      %v3347 = vunpack.c.h.b16 %v2430
      %v3348 = vunpack.c.l.b16 %v2431
      %v3349 = vunpack.c.l.b16 %v2432
      %v3350 = vunpack.c.h.b16 %v2432
      %v3351 = vunpack.c.l.b16 %v2433
      %v3352 = vunpack.c.h.b16 %v2433
      %v3353 = vunpack.c.l.b16 %v2434
      %v3354 = vunpack.c.l.b16 %v2435
      %v3355 = vunpack.c.h.b16 %v2435
      %v3356 = vunpack.c.l.b16 %v2436
      %v3357 = vunpack.c.h.b16 %v2436
      %v3358 = vunpack.c.l.b16 %v2437
      %v3359 = vunpack.c.l.b16 %v2438
      %v3360 = vunpack.c.h.b16 %v2438
      %v3361 = vunpack.c.l.b16 %v2439
      %v3362 = vunpack.c.h.b16 %v2439
      %v3363 = vunpack.c.l.b16 %v2440
      %v3364 = vunpack.c.l.b16 %v2441
      %v3365 = vunpack.c.h.b16 %v2441
      %v3366 = vunpack.c.l.b16 %v2442
      %v3367 = vunpack.c.h.b16 %v2442
      %v3368 = vunpack.c.l.b16 %v2443
      %v3369 = vunpack.c.l.b16 %v2444
      %v3370 = vunpack.c.h.b16 %v2444
      %v3371 = vunpack.c.l.b16 %v2445
      %v3372 = vunpack.c.h.b16 %v2445
      %v3373 = vunpack.c.l.b16 %v2446
      %v3374 = vunpack.c.l.b16 %v2447
      %v3375 = vunpack.c.h.b16 %v2447
      %v3376 = vunpack.c.l.b16 %v2448
      %v3377 = vunpack.c.h.b16 %v2448
      %v3378 = vunpack.c.l.b16 %v2449
      %v3379 = vunpack.c.l.b16 %v2450
      %v3380 = vunpack.c.h.b16 %v2450
      %v3381 = vunpack.c.l.b16 %v2451
      %v3382 = vunpack.c.h.b16 %v2451
      %v3383 = vunpack.c.l.b16 %v2452
      %v3384 = vunpack.c.l.b16 %v2453
      %v3385 = vunpack.c.h.b16 %v2453
      %v3386 = vunpack.c.l.b16 %v2454
      %v3387 = vunpack.c.h.b16 %v2454
      %v3388 = vunpack.c.l.b16 %v2455
      %v3389 = vunpack.c.l.b16 %v2456
      %v3390 = vunpack.c.h.b16 %v2456
      %v3391 = vunpack.c.l.b16 %v2457
      %v3392 = vunpack.c.h.b16 %v2457
      %v3393 = vunpack.c.l.b16 %v2458
      %v3394 = vunpack.c.l.b16 %v2459
      %v3395 = vunpack.c.h.b16 %v2459
      %v3396 = vunpack.c.l.b16 %v2460
      %v3397 = vunpack.c.h.b16 %v2460
      %v3398 = vunpack.c.l.b16 %v2461
      %v3399 = vunpack.c.l.b16 %v2462
      %v3400 = vunpack.c.h.b16 %v2462
      %v3401 = vunpack.c.l.b16 %v2463
      %v3402 = vunpack.c.h.b16 %v2463
      %v3403 = vunpack.c.l.b16 %v2464
      %v3404 = vunpack.c.l.b16 %v2465
      %v3405 = vunpack.c.h.b16 %v2465
      %v3406 = vunpack.c.l.b16 %v2466
      %v3407 = vunpack.c.h.b16 %v2466
      %v3408 = vunpack.c.l.b16 %v2467
      %v3409 = vunpack.c.l.b16 %v2468
      %v3410 = vunpack.c.h.b16 %v2468
      %v3411 = vunpack.c.l.b16 %v2469
      %v3412 = vunpack.c.h.b16 %v2469
      %v3413 = vunpack.c.l.b16 %v2470
      %v3414 = vunpack.c.l.b16 %v2471
      %v3415 = vunpack.c.h.b16 %v2471
      %v3416 = vunpack.c.l.b16 %v2472
      %v3417 = vunpack.c.h.b16 %v2472
      %v3418 = vunpack.c.l.b16 %v2473
      %v3419 = vunpack.c.l.b16 %v2474
      %v3420 = vunpack.c.h.b16 %v2474
      %v3421 = vunpack.c.l.b16 %v2475
      %v3422 = vunpack.c.h.b16 %v2475
      %v3423 = vunpack.c.l.b16 %v2476
      %v3424 = vunpack.c.l.b16 %v2477
      %v3425 = vunpack.c.h.b16 %v2477
      %v3426 = vunpack.c.l.b16 %v2478
      %v3427 = vunpack.c.h.b16 %v2478
      %v3428 = vunpack.c.l.b16 %v2479
      %v3429 = vunpack.c.l.b16 %v2480
      %v3430 = vunpack.c.h.b16 %v2480
      %v3431 = vunpack.c.l.b16 %v2481
      %v3432 = vunpack.c.h.b16 %v2481
      %v3433 = vunpack.c.l.b16 %v2482
      %v3434 = vunpack.c.l.b16 %v2483
      %v3435 = vunpack.c.h.b16 %v2483
      %v3436 = vunpack.c.l.b16 %v2484
      %v3437 = vunpack.c.h.b16 %v2484
      %v3438 = vunpack.c.l.b16 %v2485
      %v3439 = vunpack.c.l.b16 %v2486
      %v3440 = vunpack.c.h.b16 %v2486
      %v3441 = vunpack.c.l.b16 %v2487
      %v3442 = vunpack.c.h.b16 %v2487
      %v3443 = vunpack.c.l.b16 %v2488
      %v3444 = vunpack.c.l.b16 %v2489
      %v3445 = vunpack.c.h.b16 %v2489
      %v3446 = vunpack.c.l.b16 %v2490
      %v3447 = vunpack.c.h.b16 %v2490
      %v3448 = vunpack.c.l.b16 %v2491
      %v3449 = vunpack.c.l.b16 %v2492
      %v3450 = vunpack.c.h.b16 %v2492
      %v3451 = vunpack.c.l.b16 %v2493
      %v3452 = vunpack.c.h.b16 %v2493
      %v3453 = vunpack.c.l.b16 %v2494
      %v3454 = vunpack.c.l.b16 %v2495
      %v3455 = vunpack.c.h.b16 %v2495
      %v3456 = vunpack.c.l.b16 %v2496
      %v3457 = vunpack.c.h.b16 %v2496
      %v3458 = vunpack.c.l.b16 %v2497
      %v3459 = vunpack.c.l.b16 %v2498
      %v3460 = vunpack.c.h.b16 %v2498
      %v3461 = vunpack.c.l.b16 %v2499
      %v3462 = vunpack.c.h.b16 %v2499
      %v3463 = vunpack.c.l.b16 %v2500
      %v3464 = vunpack.c.l.b16 %v2501
      %v3465 = vunpack.c.h.b16 %v2501
      %v3466 = vunpack.c.l.b16 %v2502
      %v3467 = vunpack.c.h.b16 %v2502
      %v3468 = vunpack.c.l.b16 %v2503
      %v3469 = vunpack.c.l.b16 %v2504
      %v3470 = vunpack.c.h.b16 %v2504
      %v3471 = vunpack.c.l.b16 %v2505
      %v3472 = vunpack.c.h.b16 %v2505
      %v3473 = vunpack.c.l.b16 %v2506
      %v3474 = vunpack.c.l.b16 %v2507
      %v3475 = vunpack.c.h.b16 %v2507
      %v3476 = vunpack.c.l.b16 %v2508
      %v3477 = vunpack.c.h.b16 %v2508
      %v3478 = vunpack.c.l.b16 %v2509
      %v3479 = vunpack.c.l.b16 %v2510
      %v3480 = vunpack.c.h.b16 %v2510
      %v3481 = vunpack.c.l.b16 %v2511
      %v3482 = vunpack.c.h.b16 %v2511
      %v3483 = vunpack.c.l.b16 %v2512
      %v3484 = vunpack.c.l.b16 %v2513
      %v3485 = vunpack.c.h.b16 %v2513
      %v3486 = vunpack.c.l.b16 %v2514
      %v3487 = vunpack.c.h.b16 %v2514
      %v3488 = vunpack.c.l.b16 %v2515
      %v3489 = vunpack.c.l.b16 %v2516
      %v3490 = vunpack.c.h.b16 %v2516
      %v3491 = vunpack.c.l.b16 %v2517
      %v3492 = vunpack.c.h.b16 %v2517
      %v3493 = vunpack.c.l.b16 %v2518
      %v3494 = vunpack.c.l.b16 %v2519
      %v3495 = vunpack.c.h.b16 %v2519
      %v3496 = vunpack.c.l.b16 %v2520
      %v3497 = vunpack.c.h.b16 %v2520
      %v3498 = vunpack.c.l.b16 %v2521
      %v3499 = vunpack.c.l.b16 %v2522
      %v3500 = vunpack.c.h.b16 %v2522
      %v3501 = vunpack.c.l.b16 %v2523
      %v3502 = vunpack.c.h.b16 %v2523
      %v3503 = vunpack.c.l.b16 %v2524
      %v3504 = vunpack.c.l.b16 %v2525
      %v3505 = vunpack.c.h.b16 %v2525
      %v3506 = vunpack.c.l.b16 %v2526
      %v3507 = vunpack.c.h.b16 %v2526
      %v3508 = vunpack.c.l.b16 %v2527
      %v3509 = vunpack.c.l.b16 %v2528
      %v3510 = vunpack.c.h.b16 %v2528
      %v3511 = vunpack.c.l.b16 %v2529
      %v3512 = vunpack.c.h.b16 %v2529
      %v3513 = vunpack.c.l.b16 %v2530
      %v3514 = vunpack.c.l.b16 %v2531
      %v3515 = vunpack.c.h.b16 %v2531
      %v3516 = vunpack.c.l.b16 %v2532
      %v3517 = vunpack.c.h.b16 %v2532
      %v3518 = vunpack.c.l.b16 %v2533
      %v3519 = vunpack.c.l.b16 %v2534
      %v3520 = vunpack.c.h.b16 %v2534
      %v3521 = vunpack.c.l.b16 %v2535
      %v3522 = vunpack.c.h.b16 %v2535
      %v3523 = vunpack.c.l.b16 %v2536
      %v3524 = vunpack.c.l.b16 %v2537
      %v3525 = vunpack.c.h.b16 %v2537
      %v3526 = vunpack.c.l.b16 %v2538
      %v3527 = vunpack.c.h.b16 %v2538
      %v3528 = vunpack.c.l.b16 %v2539
      %v3529 = vunpack.c.l.b16 %v2540
      %v3530 = vunpack.c.h.b16 %v2540
      %v3531 = vunpack.c.l.b16 %v2541
      %v3532 = vunpack.c.h.b16 %v2541
      %v3533 = vunpack.c.l.b16 %v2542
      %v3534 = vunpack.c.l.b16 %v2543
      %v3535 = vunpack.c.h.b16 %v2543
      %v3536 = vunpack.c.l.b16 %v2544
      %v3537 = vunpack.c.h.b16 %v2544
      %v3538 = vunpack.c.l.b16 %v2545
      %v3539 = vunpack.c.l.b16 %v2546
      %v3540 = vunpack.c.h.b16 %v2546
      %v3541 = vunpack.c.l.b16 %v2547
      %v3542 = vunpack.c.h.b16 %v2547
      %v3543 = vunpack.c.l.b16 %v2548
      %v3544 = vunpack.c.l.b16 %v2549
      %v3545 = vunpack.c.h.b16 %v2549
      %v3546 = vunpack.c.l.b16 %v2550
      %v3547 = vunpack.c.h.b16 %v2550
      %v3548 = vunpack.c.l.b16 %v2551
      %v3549 = vunpack.c.l.b16 %v2552
      %v3550 = vunpack.c.h.b16 %v2552
      %v3551 = vunpack.c.l.b16 %v2553
      %v3552 = vunpack.c.h.b16 %v2553
      %v3553 = vunpack.c.l.b16 %v2554
      %v3554 = vunpack.c.l.b16 %v2555
      %v3555 = vunpack.c.h.b16 %v2555
      %v3556 = vunpack.c.l.b16 %v2556
      %v3557 = vunpack.c.h.b16 %v2556
      %v3558 = vunpack.c.l.b16 %v2557
      %v3559 = vunpack.c.l.b16 %v2558
      %v3560 = vunpack.c.h.b16 %v2558
      %v3561 = vunpack.c.l.b16 %v2559
      %v3562 = vunpack.c.h.b16 %v2559
      %v3563 = vunpack.c.l.b16 %v2560
      %v3564 = vunpack.c.l.b16 %v2561
      %v3565 = vunpack.c.h.b16 %v2561
      %v3566 = vunpack.c.l.b16 %v2562
      %v3567 = vunpack.c.h.b16 %v2562
      %v3568 = vunpack.c.l.b16 %v2563
      %v3569 = vunpack.c.l.b16 %v2564
      %v3570 = vunpack.c.h.b16 %v2564
      %v3571 = vunpack.c.l.b16 %v2565
      %v3572 = vunpack.c.h.b16 %v2565
      %v3573 = vunpack.c.l.b16 %v2566
      %v3574 = vunpack.c.l.b16 %v2567
      %v3575 = vunpack.c.h.b16 %v2567
      %v3576 = vunpack.c.l.b16 %v2568
      %v3577 = vunpack.c.h.b16 %v2568
      %v3578 = vunpack.c.l.b16 %v2569
      %v3579 = vunpack.c.l.b16 %v2570
      %v3580 = vunpack.c.h.b16 %v2570
      %v3581 = vunpack.c.l.b16 %v2571
      %v3582 = vunpack.c.h.b16 %v2571
      %v3583 = vunpack.c.l.b16 %v2572
      %v3584 = vunpack.c.l.b16 %v2573
      %v3585 = vunpack.c.h.b16 %v2573
      %v3586 = vunpack.c.l.b16 %v2574
      %v3587 = vunpack.c.h.b16 %v2574
      %v3588 = vunpack.c.l.b16 %v2575
      %v3589 = vunpack.c.l.b16 %v2576
      %v3590 = vunpack.c.h.b16 %v2576
      %v3591 = vunpack.c.l.b16 %v2577
      %v3592 = vunpack.c.h.b16 %v2577
      %v3593 = vunpack.c.l.b16 %v2578
      %v3594 = vunpack.c.l.b16 %v2579
      %v3595 = vunpack.c.h.b16 %v2579
      %v3596 = vunpack.c.l.b16 %v2580
      %v3597 = vunpack.c.h.b16 %v2580
      %v3598 = vunpack.c.l.b16 %v2581
      %v3599 = vunpack.c.l.b16 %v2582
      %v3600 = vunpack.c.h.b16 %v2582
      %v3601 = vunpack.c.l.b16 %v2583
      %v3602 = vunpack.c.h.b16 %v2583
      %v3603 = vunpack.c.l.b16 %v2584
      %v3604 = vunpack.c.l.b16 %v2585
      %v3605 = vunpack.c.h.b16 %v2585
      %v3606 = vunpack.c.l.b16 %v2586
      %v3607 = vunpack.c.h.b16 %v2586
      %v3608 = vunpack.c.l.b16 %v2587
      %v3609 = vunpack.c.l.b16 %v2588
      %v3610 = vunpack.c.h.b16 %v2588
      %v3611 = vunpack.c.l.b16 %v2589
      %v3612 = vunpack.c.h.b16 %v2589
      %v3613 = vunpack.c.l.b16 %v2590
      %v3614 = vunpack.c.l.b16 %v2591
      %v3615 = vunpack.c.h.b16 %v2591
      %v3616 = vunpack.c.l.b16 %v2592
      %v3617 = vunpack.c.h.b16 %v2592
      %v3618 = vunpack.c.l.b16 %v2593
      %v3619 = vunpack.c.l.b16 %v2594
      %v3620 = vunpack.c.h.b16 %v2594
      %v3621 = vunpack.c.l.b16 %v2595
      %v3622 = vunpack.c.h.b16 %v2595
      %v3623 = vunpack.c.l.b16 %v2596
      %v3624 = vunpack.c.l.b16 %v2597
      %v3625 = vunpack.c.h.b16 %v2597
      %v3626 = vunpack.c.l.b16 %v2598
      %v3627 = vunpack.c.h.b16 %v2598
      %v3628 = vunpack.c.l.b16 %v2599
      %v3629 = vunpack.c.l.b16 %v2600
      %v3630 = vunpack.c.h.b16 %v2600
      %v3631 = vunpack.c.l.b16 %v2601
      %v3632 = vunpack.c.h.b16 %v2601
      %v3633 = vunpack.c.l.b16 %v2602
      %v3634 = vunpack.c.l.b16 %v2603
      %v3635 = vunpack.c.h.b16 %v2603
      %v3636 = vunpack.c.l.b16 %v2604
      %v3637 = vunpack.c.h.b16 %v2604
      %v3638 = vunpack.c.l.b16 %v2605
      %v3639 = vunpack.c.l.b16 %v2606
      %v3640 = vunpack.c.h.b16 %v2606
      %v3641 = vunpack.c.l.b16 %v2607
      %v3642 = vunpack.c.h.b16 %v2607
      %v3643 = vunpack.c.l.b16 %v2608
      %v3644 = vunpack.c.l.b16 %v2609
      %v3645 = vunpack.c.h.b16 %v2609
      %v3646 = vunpack.c.l.b16 %v2610
      %v3647 = vunpack.c.h.b16 %v2610
      %v3648 = vunpack.c.l.b16 %v2611
      %v3649 = vunpack.c.l.b16 %v2612
      %v3650 = vunpack.c.h.b16 %v2612
      %v3651 = vunpack.c.l.b16 %v2613
      %v3652 = vunpack.c.h.b16 %v2613
      %v3653 = vunpack.c.l.b16 %v2614
      %v3654 = vunpack.c.l.b16 %v2615
      %v3655 = vunpack.c.h.b16 %v2615
      %v3656 = vunpack.c.l.b16 %v2616
      %v3657 = vunpack.c.h.b16 %v2616
      %v3658 = vunpack.c.l.b16 %v2617
      %v3659 = vunpack.c.l.b16 %v2618
      %v3660 = vunpack.c.h.b16 %v2618
      %v3661 = vunpack.c.l.b16 %v2619
      %v3662 = vunpack.c.h.b16 %v2619
      %v3663 = vunpack.c.l.b16 %v2620
      %v3664 = vunpack.c.l.b16 %v2621
      %v3665 = vunpack.c.h.b16 %v2621
      %v3666 = vunpack.c.l.b16 %v2622
      %v3667 = vunpack.c.h.b16 %v2622
      %v3668 = vunpack.c.l.b16 %v2623
      %v3669 = vunpack.c.l.b16 %v2624
      %v3670 = vunpack.c.h.b16 %v2624
      %v3671 = vunpack.c.l.b16 %v2625
      %v3672 = vunpack.c.h.b16 %v2625
      %v3673 = vunpack.c.l.b16 %v2626
      %v3674 = vunpack.c.l.b16 %v2627
      %v3675 = vunpack.c.h.b16 %v2627
      %v3676 = vunpack.c.l.b16 %v2628
      %v3677 = vunpack.c.h.b16 %v2628
      %v3678 = vunpack.c.l.b16 %v2629
      %v3679 = vunpack.c.l.b16 %v2630
      %v3680 = vunpack.c.h.b16 %v2630
      %v3681 = vunpack.c.l.b16 %v2631
      %v3682 = vunpack.c.h.b16 %v2631
      %v3683 = vunpack.c.l.b16 %v2632
      %v3684 = vpack.c.b16 %v3049, %v3044
      %v3685 = vpack.c.b16 %v3050, %v3045
      %v3686 = vpack.c.b16 %v3051, %v3046
      %v3687 = vpack.c.b16 %v3052, %v3047
      %v3688 = vpack.c.b16 %v3053, %v3048
      %v3689 = vpack.c.b16 %v3059, %v3054
      %v3690 = vpack.c.b16 %v3060, %v3055
      %v3691 = vpack.c.b16 %v3061, %v3056
      %v3692 = vpack.c.b16 %v3062, %v3057
      %v3693 = vpack.c.b16 %v3063, %v3058
      %v3694 = vpack.c.b16 %v3069, %v3064
      %v3695 = vpack.c.b16 %v3070, %v3065
      %v3696 = vpack.c.b16 %v3071, %v3066
      %v3697 = vpack.c.b16 %v3072, %v3067
      %v3698 = vpack.c.b16 %v3073, %v3068
      %v3699 = vpack.c.b16 %v3079, %v3074
      %v3700 = vpack.c.b16 %v3080, %v3075
      %v3701 = vpack.c.b16 %v3081, %v3076
      %v3702 = vpack.c.b16 %v3082, %v3077
      %v3703 = vpack.c.b16 %v3083, %v3078
      %v3704 = vpack.c.b16 %v3089, %v3084
      %v3705 = vpack.c.b16 %v3090, %v3085
      %v3706 = vpack.c.b16 %v3091, %v3086
      %v3707 = vpack.c.b16 %v3092, %v3087
      %v3708 = vpack.c.b16 %v3093, %v3088
      %v3709 = vpack.c.b16 %v3099, %v3094
      %v3710 = vpack.c.b16 %v3100, %v3095
      %v3711 = vpack.c.b16 %v3101, %v3096
      %v3712 = vpack.c.b16 %v3102, %v3097
      %v3713 = vpack.c.b16 %v3103, %v3098
      %v3714 = vpack.c.b16 %v3109, %v3104
      %v3715 = vpack.c.b16 %v3110, %v3105
      %v3716 = vpack.c.b16 %v3111, %v3106
      %v3717 = vpack.c.b16 %v3112, %v3107
      %v3718 = vpack.c.b16 %v3113, %v3108
      %v3719 = vpack.c.b16 %v3119, %v3114
      %v3720 = vpack.c.b16 %v3120, %v3115
      %v3721 = vpack.c.b16 %v3121, %v3116
      %v3722 = vpack.c.b16 %v3122, %v3117
      %v3723 = vpack.c.b16 %v3123, %v3118
      %v3724 = vpack.c.b16 %v3129, %v3124
      %v3725 = vpack.c.b16 %v3130, %v3125
      %v3726 = vpack.c.b16 %v3131, %v3126
      %v3727 = vpack.c.b16 %v3132, %v3127
      %v3728 = vpack.c.b16 %v3133, %v3128
      %v3729 = vpack.c.b16 %v3139, %v3134
      %v3730 = vpack.c.b16 %v3140, %v3135
      %v3731 = vpack.c.b16 %v3141, %v3136
      %v3732 = vpack.c.b16 %v3142, %v3137
      %v3733 = vpack.c.b16 %v3143, %v3138
      %v3734 = vpack.c.b16 %v3149, %v3144
      %v3735 = vpack.c.b16 %v3150, %v3145
      %v3736 = vpack.c.b16 %v3151, %v3146
      %v3737 = vpack.c.b16 %v3152, %v3147
      %v3738 = vpack.c.b16 %v3153, %v3148
      %v3739 = vpack.c.b16 %v3159, %v3154
      %v3740 = vpack.c.b16 %v3160, %v3155
      %v3741 = vpack.c.b16 %v3161, %v3156
      %v3742 = vpack.c.b16 %v3162, %v3157
      %v3743 = vpack.c.b16 %v3163, %v3158
      %v3744 = vpack.c.b16 %v3169, %v3164
      %v3745 = vpack.c.b16 %v3170, %v3165
      %v3746 = vpack.c.b16 %v3171, %v3166
      %v3747 = vpack.c.b16 %v3172, %v3167
      %v3748 = vpack.c.b16 %v3173, %v3168
      %v3749 = vpack.c.b16 %v3179, %v3174
      %v3750 = vpack.c.b16 %v3180, %v3175
      %v3751 = vpack.c.b16 %v3181, %v3176
      %v3752 = vpack.c.b16 %v3182, %v3177
      %v3753 = vpack.c.b16 %v3183, %v3178
      %v3754 = vpack.c.b16 %v3189, %v3184
      %v3755 = vpack.c.b16 %v3190, %v3185
      %v3756 = vpack.c.b16 %v3191, %v3186
      %v3757 = vpack.c.b16 %v3192, %v3187
      %v3758 = vpack.c.b16 %v3193, %v3188
      %v3759 = vpack.c.b16 %v3199, %v3194
      %v3760 = vpack.c.b16 %v3200, %v3195
      %v3761 = vpack.c.b16 %v3201, %v3196
      %v3762 = vpack.c.b16 %v3202, %v3197
      %v3763 = vpack.c.b16 %v3203, %v3198
      %v3764 = vpack.c.b16 %v3209, %v3204
      %v3765 = vpack.c.b16 %v3210, %v3205
      %v3766 = vpack.c.b16 %v3211, %v3206
      %v3767 = vpack.c.b16 %v3212, %v3207
      %v3768 = vpack.c.b16 %v3213, %v3208
      %v3769 = vpack.c.b16 %v3219, %v3214
      %v3770 = vpack.c.b16 %v3220, %v3215
      %v3771 = vpack.c.b16 %v3221, %v3216
      %v3772 = vpack.c.b16 %v3222, %v3217
      %v3773 = vpack.c.b16 %v3223, %v3218
      %v3774 = vpack.c.b16 %v3229, %v3224
      %v3775 = vpack.c.b16 %v3230, %v3225
      %v3776 = vpack.c.b16 %v3231, %v3226
      %v3777 = vpack.c.b16 %v3232, %v3227
      %v3778 = vpack.c.b16 %v3233, %v3228
      %v3779 = vpack.c.b16 %v3239, %v3234
      %v3780 = vpack.c.b16 %v3240, %v3235
      %v3781 = vpack.c.b16 %v3241, %v3236
      %v3782 = vpack.c.b16 %v3242, %v3237
      %v3783 = vpack.c.b16 %v3243, %v3238
      %v3784 = vpack.c.b16 %v3249, %v3244
      %v3785 = vpack.c.b16 %v3250, %v3245
      %v3786 = vpack.c.b16 %v3251, %v3246
      %v3787 = vpack.c.b16 %v3252, %v3247
      %v3788 = vpack.c.b16 %v3253, %v3248
      %v3789 = vpack.c.b16 %v3259, %v3254
      %v3790 = vpack.c.b16 %v3260, %v3255
      %v3791 = vpack.c.b16 %v3261, %v3256
      %v3792 = vpack.c.b16 %v3262, %v3257
      %v3793 = vpack.c.b16 %v3263, %v3258
      %v3794 = vpack.c.b16 %v3269, %v3264
      %v3795 = vpack.c.b16 %v3270, %v3265
      %v3796 = vpack.c.b16 %v3271, %v3266
      %v3797 = vpack.c.b16 %v3272, %v3267
      %v3798 = vpack.c.b16 %v3273, %v3268
      %v3799 = vpack.c.b16 %v3279, %v3274
      %v3800 = vpack.c.b16 %v3280, %v3275
      %v3801 = vpack.c.b16 %v3281, %v3276
      %v3802 = vpack.c.b16 %v3282, %v3277
      %v3803 = vpack.c.b16 %v3283, %v3278
      %v3804 = vpack.c.b16 %v3289, %v3284
      %v3805 = vpack.c.b16 %v3290, %v3285
      %v3806 = vpack.c.b16 %v3291, %v3286
      %v3807 = vpack.c.b16 %v3292, %v3287
      %v3808 = vpack.c.b16 %v3293, %v3288
      %v3809 = vpack.c.b16 %v3299, %v3294
      %v3810 = vpack.c.b16 %v3300, %v3295
      %v3811 = vpack.c.b16 %v3301, %v3296
      %v3812 = vpack.c.b16 %v3302, %v3297
      %v3813 = vpack.c.b16 %v3303, %v3298
      %v3814 = vpack.c.b16 %v3309, %v3304
      %v3815 = vpack.c.b16 %v3310, %v3305
      %v3816 = vpack.c.b16 %v3311, %v3306
      %v3817 = vpack.c.b16 %v3312, %v3307
      %v3818 = vpack.c.b16 %v3313, %v3308
      %v3819 = vpack.c.b16 %v3319, %v3314
      %v3820 = vpack.c.b16 %v3320, %v3315
      %v3821 = vpack.c.b16 %v3321, %v3316
      %v3822 = vpack.c.b16 %v3322, %v3317
      %v3823 = vpack.c.b16 %v3323, %v3318
      %v3824 = vpack.c.b16 %v3329, %v3324
      %v3825 = vpack.c.b16 %v3330, %v3325
      %v3826 = vpack.c.b16 %v3331, %v3326
      %v3827 = vpack.c.b16 %v3332, %v3327
      %v3828 = vpack.c.b16 %v3333, %v3328
      %v3829 = vpack.c.b16 %v3339, %v3334
      %v3830 = vpack.c.b16 %v3340, %v3335
      %v3831 = vpack.c.b16 %v3341, %v3336
      %v3832 = vpack.c.b16 %v3342, %v3337
      %v3833 = vpack.c.b16 %v3343, %v3338
      %v3834 = vpack.c.b16 %v3349, %v3344
      %v3835 = vpack.c.b16 %v3350, %v3345
      %v3836 = vpack.c.b16 %v3351, %v3346
      %v3837 = vpack.c.b16 %v3352, %v3347
      %v3838 = vpack.c.b16 %v3353, %v3348
      %v3839 = vpack.c.b16 %v3359, %v3354
      %v3840 = vpack.c.b16 %v3360, %v3355
      %v3841 = vpack.c.b16 %v3361, %v3356
      %v3842 = vpack.c.b16 %v3362, %v3357
      %v3843 = vpack.c.b16 %v3363, %v3358
      %v3844 = vpack.c.b16 %v3369, %v3364
      %v3845 = vpack.c.b16 %v3370, %v3365
      %v3846 = vpack.c.b16 %v3371, %v3366
      %v3847 = vpack.c.b16 %v3372, %v3367
      %v3848 = vpack.c.b16 %v3373, %v3368
      %v3849 = vpack.c.b16 %v3379, %v3374
      %v3850 = vpack.c.b16 %v3380, %v3375
      %v3851 = vpack.c.b16 %v3381, %v3376
      %v3852 = vpack.c.b16 %v3382, %v3377
      %v3853 = vpack.c.b16 %v3383, %v3378
      %v3854 = vpack.c.b16 %v3389, %v3384
      %v3855 = vpack.c.b16 %v3390, %v3385
      %v3856 = vpack.c.b16 %v3391, %v3386
      %v3857 = vpack.c.b16 %v3392, %v3387
      %v3858 = vpack.c.b16 %v3393, %v3388
      %v3859 = vpack.c.b16 %v3399, %v3394
      %v3860 = vpack.c.b16 %v3400, %v3395
      %v3861 = vpack.c.b16 %v3401, %v3396
      %v3862 = vpack.c.b16 %v3402, %v3397
      %v3863 = vpack.c.b16 %v3403, %v3398
      %v3864 = vpack.c.b16 %v3409, %v3404
      %v3865 = vpack.c.b16 %v3410, %v3405
      %v3866 = vpack.c.b16 %v3411, %v3406
      %v3867 = vpack.c.b16 %v3412, %v3407
      %v3868 = vpack.c.b16 %v3413, %v3408
      %v3869 = vpack.c.b16 %v3419, %v3414
      %v3870 = vpack.c.b16 %v3420, %v3415
      %v3871 = vpack.c.b16 %v3421, %v3416
      %v3872 = vpack.c.b16 %v3422, %v3417
      %v3873 = vpack.c.b16 %v3423, %v3418
      %v3874 = vpack.c.b16 %v3429, %v3424
      %v3875 = vpack.c.b16 %v3430, %v3425
      %v3876 = vpack.c.b16 %v3431, %v3426
      %v3877 = vpack.c.b16 %v3432, %v3427
      %v3878 = vpack.c.b16 %v3433, %v3428
      %v3879 = vpack.c.b16 %v3439, %v3434
      %v3880 = vpack.c.b16 %v3440, %v3435
      %v3881 = vpack.c.b16 %v3441, %v3436
      %v3882 = vpack.c.b16 %v3442, %v3437
      %v3883 = vpack.c.b16 %v3443, %v3438
      %v3884 = vpack.c.b16 %v3449, %v3444
      %v3885 = vpack.c.b16 %v3450, %v3445
      %v3886 = vpack.c.b16 %v3451, %v3446
      %v3887 = vpack.c.b16 %v3452, %v3447
      %v3888 = vpack.c.b16 %v3453, %v3448
      %v3889 = vpack.c.b16 %v3459, %v3454
      %v3890 = vpack.c.b16 %v3460, %v3455
      %v3891 = vpack.c.b16 %v3461, %v3456
      %v3892 = vpack.c.b16 %v3462, %v3457
      %v3893 = vpack.c.b16 %v3463, %v3458
      %v3894 = vpack.c.b16 %v3469, %v3464
      %v3895 = vpack.c.b16 %v3470, %v3465
      %v3896 = vpack.c.b16 %v3471, %v3466
      %v3897 = vpack.c.b16 %v3472, %v3467
      %v3898 = vpack.c.b16 %v3473, %v3468
      %v3899 = vpack.c.b16 %v3479, %v3474
      %v3900 = vpack.c.b16 %v3480, %v3475
      %v3901 = vpack.c.b16 %v3481, %v3476
      %v3902 = vpack.c.b16 %v3482, %v3477
      %v3903 = vpack.c.b16 %v3483, %v3478
      %v3904 = vpack.c.b16 %v3489, %v3484
      %v3905 = vpack.c.b16 %v3490, %v3485
      %v3906 = vpack.c.b16 %v3491, %v3486
      %v3907 = vpack.c.b16 %v3492, %v3487
      %v3908 = vpack.c.b16 %v3493, %v3488
      %v3909 = vpack.c.b16 %v3499, %v3494
      %v3910 = vpack.c.b16 %v3500, %v3495
      %v3911 = vpack.c.b16 %v3501, %v3496
      %v3912 = vpack.c.b16 %v3502, %v3497
      %v3913 = vpack.c.b16 %v3503, %v3498
      %v3914 = vpack.c.b16 %v3509, %v3504
      %v3915 = vpack.c.b16 %v3510, %v3505
      %v3916 = vpack.c.b16 %v3511, %v3506
      %v3917 = vpack.c.b16 %v3512, %v3507
      %v3918 = vpack.c.b16 %v3513, %v3508
      %v3919 = vpack.c.b16 %v3519, %v3514
      %v3920 = vpack.c.b16 %v3520, %v3515
      %v3921 = vpack.c.b16 %v3521, %v3516
      %v3922 = vpack.c.b16 %v3522, %v3517
      %v3923 = vpack.c.b16 %v3523, %v3518
      %v3924 = vpack.c.b16 %v3529, %v3524
      %v3925 = vpack.c.b16 %v3530, %v3525
      %v3926 = vpack.c.b16 %v3531, %v3526
      %v3927 = vpack.c.b16 %v3532, %v3527
      %v3928 = vpack.c.b16 %v3533, %v3528
      %v3929 = vpack.c.b16 %v3539, %v3534
      %v3930 = vpack.c.b16 %v3540, %v3535
      %v3931 = vpack.c.b16 %v3541, %v3536
      %v3932 = vpack.c.b16 %v3542, %v3537
      %v3933 = vpack.c.b16 %v3543, %v3538
      %v3934 = vpack.c.b16 %v3549, %v3544
      %v3935 = vpack.c.b16 %v3550, %v3545
      %v3936 = vpack.c.b16 %v3551, %v3546
      %v3937 = vpack.c.b16 %v3552, %v3547
      %v3938 = vpack.c.b16 %v3553, %v3548
      %v3939 = vpack.c.b16 %v3559, %v3554
      %v3940 = vpack.c.b16 %v3560, %v3555
      %v3941 = vpack.c.b16 %v3561, %v3556
      %v3942 = vpack.c.b16 %v3562, %v3557
      %v3943 = vpack.c.b16 %v3563, %v3558
      %v3944 = vpack.c.b16 %v3569, %v3564
      %v3945 = vpack.c.b16 %v3570, %v3565
      %v3946 = vpack.c.b16 %v3571, %v3566
      %v3947 = vpack.c.b16 %v3572, %v3567
      %v3948 = vpack.c.b16 %v3573, %v3568
      %v3949 = vpack.c.b16 %v3579, %v3574
      %v3950 = vpack.c.b16 %v3580, %v3575
      %v3951 = vpack.c.b16 %v3581, %v3576
      %v3952 = vpack.c.b16 %v3582, %v3577
      %v3953 = vpack.c.b16 %v3583, %v3578
      %v3954 = vpack.c.b16 %v3589, %v3584
      %v3955 = vpack.c.b16 %v3590, %v3585
      %v3956 = vpack.c.b16 %v3591, %v3586
      %v3957 = vpack.c.b16 %v3592, %v3587
      %v3958 = vpack.c.b16 %v3593, %v3588
      %v3959 = vpack.c.b16 %v3599, %v3594
      %v3960 = vpack.c.b16 %v3600, %v3595
      %v3961 = vpack.c.b16 %v3601, %v3596
      %v3962 = vpack.c.b16 %v3602, %v3597
      %v3963 = vpack.c.b16 %v3603, %v3598
      %v3964 = vpack.c.b16 %v3609, %v3604
      %v3965 = vpack.c.b16 %v3610, %v3605
      %v3966 = vpack.c.b16 %v3611, %v3606
      %v3967 = vpack.c.b16 %v3612, %v3607
      %v3968 = vpack.c.b16 %v3613, %v3608
      %v3969 = vpack.c.b16 %v3619, %v3614
      %v3970 = vpack.c.b16 %v3620, %v3615
      %v3971 = vpack.c.b16 %v3621, %v3616
      %v3972 = vpack.c.b16 %v3622, %v3617
      %v3973 = vpack.c.b16 %v3623, %v3618
      %v3974 = vpack.c.b16 %v3629, %v3624
      %v3975 = vpack.c.b16 %v3630, %v3625
      %v3976 = vpack.c.b16 %v3631, %v3626
      %v3977 = vpack.c.b16 %v3632, %v3627
      %v3978 = vpack.c.b16 %v3633, %v3628
      %v3979 = vpack.c.b16 %v3639, %v3634
      %v3980 = vpack.c.b16 %v3640, %v3635
      %v3981 = vpack.c.b16 %v3641, %v3636
      %v3982 = vpack.c.b16 %v3642, %v3637
      %v3983 = vpack.c.b16 %v3643, %v3638
      %v3984 = vpack.c.b16 %v3649, %v3644
      %v3985 = vpack.c.b16 %v3650, %v3645
      %v3986 = vpack.c.b16 %v3651, %v3646
      %v3987 = vpack.c.b16 %v3652, %v3647
      %v3988 = vpack.c.b16 %v3653, %v3648
      %v3989 = vpack.c.b16 %v3659, %v3654
      %v3990 = vpack.c.b16 %v3660, %v3655
      %v3991 = vpack.c.b16 %v3661, %v3656
      %v3992 = vpack.c.b16 %v3662, %v3657
      %v3993 = vpack.c.b16 %v3663, %v3658
      %v3994 = vpack.c.b16 %v3669, %v3664
      %v3995 = vpack.c.b16 %v3670, %v3665
      %v3996 = vpack.c.b16 %v3671, %v3666
      %v3997 = vpack.c.b16 %v3672, %v3667
      %v3998 = vpack.c.b16 %v3673, %v3668
      %v3999 = vpack.c.b16 %v3679, %v3674
      %v4000 = vpack.c.b16 %v3680, %v3675
      %v4001 = vpack.c.b16 %v3681, %v3676
      %v4002 = vpack.c.b16 %v3682, %v3677
      %v4003 = vpack.c.b16 %v3683, %v3678
      %4324 = vmatprep.subr.bf16.mxu0 %v3685
      %4325 = vmatpush1.bf16.msra.mxu0 %v3684
      %4326 = vmatprep.subr.bf16.mxu0 %v3690
      %4327 = vmatpush1.bf16.msra.mxu0 %v3689
      %4328 = vmatprep.subr.bf16.mxu0 %v3695
      %4329 = vmatpush1.bf16.msra.mxu0 %v3694
      %4330 = vmatprep.subr.bf16.mxu0 %v3700
      %4331 = vmatpush1.bf16.msra.mxu0 %v3699
      %4332 = vmatprep.subr.bf16.mxu0 %v3705
      %4333 = vmatpush1.bf16.msra.mxu0 %v3704
      %4334 = vmatprep.subr.bf16.mxu0 %v3710
      %4335 = vmatpush1.bf16.msra.mxu0 %v3709
      %4336 = vmatprep.subr.bf16.mxu0 %v3715
      %4337 = vmatpush1.bf16.msra.mxu0 %v3714
      %4338 = vmatprep.subr.bf16.mxu0 %v3720
      %4339 = vmatpush1.bf16.msra.mxu0 %v3719
      %4340 = vmatprep.subr.bf16.mxu0 %v3725
      %4341 = vmatpush1.bf16.msra.mxu0 %v3724
      %4342 = vmatprep.subr.bf16.mxu0 %v3730
      %4343 = vmatpush1.bf16.msra.mxu0 %v3729
      %4344 = vmatprep.subr.bf16.mxu0 %v3735
      %4345 = vmatpush1.bf16.msra.mxu0 %v3734
      %4346 = vmatprep.subr.bf16.mxu0 %v3740
      %4347 = vmatpush1.bf16.msra.mxu0 %v3739
      %4348 = vmatprep.subr.bf16.mxu0 %v3745
      %4349 = vmatpush1.bf16.msra.mxu0 %v3744
      %4350 = vmatprep.subr.bf16.mxu0 %v3750
      %4351 = vmatpush1.bf16.msra.mxu0 %v3749
      %4352 = vmatprep.subr.bf16.mxu0 %v3755
      %4353 = vmatpush1.bf16.msra.mxu0 %v3754
      %4354 = vmatprep.subr.bf16.mxu0 %v3760
      %4355 = vmatpush1.bf16.msra.mxu0 %v3759
      %4356 = vmatprep.mubr.bf16.mxu0 %v2242
      %4357 = vmatmul.mubr.bf16.gmra.mrb[0].mxu0 %v2241
      %v4358 = vpop.f32.mrb[0].mxu0
      %v4359 = vadd.f32 %v2638, %v4358
      %v4360 = vpop.f32.mrb[0].mxu0
      %v4361 = vadd.f32 %v2642, %v4360
      %v4362 = vpop.f32.mrb[0].mxu0
      %v4363 = vpop.f32.mrb[0].mxu0
      %4364 = vdwg.mxu0
      %4365 = vmatprep.subr.bf16.mxu0 %v3765
      %4366 = vmatpush1.bf16.msra.mxu0 %v3764
      %4367 = vmatprep.subr.bf16.mxu0 %v3770
      %4368 = vmatpush1.bf16.msra.mxu0 %v3769
      %4369 = vmatprep.subr.bf16.mxu0 %v3775
      %4370 = vmatpush1.bf16.msra.mxu0 %v3774
      %4371 = vmatprep.subr.bf16.mxu0 %v3780
      %4372 = vmatpush1.bf16.msra.mxu0 %v3779
      %4373 = vmatprep.subr.bf16.mxu0 %v3785
      %4374 = vmatpush1.bf16.msra.mxu0 %v3784
      %4375 = vmatprep.subr.bf16.mxu0 %v3790
      %4376 = vmatpush1.bf16.msra.mxu0 %v3789
      %4377 = vmatprep.subr.bf16.mxu0 %v3795
      %4378 = vmatpush1.bf16.msra.mxu0 %v3794
      %4379 = vmatprep.subr.bf16.mxu0 %v3800
      %4380 = vmatpush1.bf16.msra.mxu0 %v3799
      %4381 = vmatprep.subr.bf16.mxu0 %v3805
      %4382 = vmatpush1.bf16.msra.mxu0 %v3804
      %4383 = vmatprep.subr.bf16.mxu0 %v3810
      %4384 = vmatpush1.bf16.msra.mxu0 %v3809
      %4385 = vmatprep.subr.bf16.mxu0 %v3815
      %4386 = vmatpush1.bf16.msra.mxu0 %v3814
      %4387 = vmatprep.subr.bf16.mxu0 %v3820
      %4388 = vmatpush1.bf16.msra.mxu0 %v3819
      %4389 = vmatprep.subr.bf16.mxu0 %v3825
      %4390 = vmatpush1.bf16.msra.mxu0 %v3824
      %4391 = vmatprep.subr.bf16.mxu0 %v3830
      %4392 = vmatpush1.bf16.msra.mxu0 %v3829
      %4393 = vmatprep.subr.bf16.mxu0 %v3835
      %4394 = vmatpush1.bf16.msra.mxu0 %v3834
      %4395 = vmatprep.subr.bf16.mxu0 %v3840
      %4396 = vmatpush1.bf16.msra.mxu0 %v3839
      %4397 = vmatprep.mubr.bf16.mxu0 %v2244
      %4398 = vmatmul.mubr.bf16.gmra.mrb[0].mxu0 %v2243
      %v4399 = vpop.f32.mrb[0].mxu0
      %v4400 = vadd.f32 %v4359, %v4399
      %v4401 = vpop.f32.mrb[0].mxu0
      %v4402 = vadd.f32 %v4361, %v4401
      %v4403 = vpop.f32.mrb[0].mxu0
      %v4404 = vpop.f32.mrb[0].mxu0
      %4405 = vdwg.mxu0
      %4406 = vmatprep.subr.bf16.mxu0 %v3845
      %4407 = vmatpush1.bf16.msra.mxu0 %v3844
      %4408 = vmatprep.subr.bf16.mxu0 %v3850
      %4409 = vmatpush1.bf16.msra.mxu0 %v3849
      %4410 = vmatprep.subr.bf16.mxu0 %v3855
      %4411 = vmatpush1.bf16.msra.mxu0 %v3854
      %4412 = vmatprep.subr.bf16.mxu0 %v3860
      %4413 = vmatpush1.bf16.msra.mxu0 %v3859
      %4414 = vmatprep.subr.bf16.mxu0 %v3865
      %4415 = vmatpush1.bf16.msra.mxu0 %v3864
      %4416 = vmatprep.subr.bf16.mxu0 %v3870
      %4417 = vmatpush1.bf16.msra.mxu0 %v3869
      %4418 = vmatprep.subr.bf16.mxu0 %v3875
      %4419 = vmatpush1.bf16.msra.mxu0 %v3874
      %4420 = vmatprep.subr.bf16.mxu0 %v3880
      %4421 = vmatpush1.bf16.msra.mxu0 %v3879
      %4422 = vmatprep.subr.bf16.mxu0 %v3885
      %4423 = vmatpush1.bf16.msra.mxu0 %v3884
      %4424 = vmatprep.subr.bf16.mxu0 %v3890
      %4425 = vmatpush1.bf16.msra.mxu0 %v3889
      %4426 = vmatprep.subr.bf16.mxu0 %v3895
      %4427 = vmatpush1.bf16.msra.mxu0 %v3894
      %4428 = vmatprep.subr.bf16.mxu0 %v3900
      %4429 = vmatpush1.bf16.msra.mxu0 %v3899
      %4430 = vmatprep.subr.bf16.mxu0 %v3905
      %4431 = vmatpush1.bf16.msra.mxu0 %v3904
      %4432 = vmatprep.subr.bf16.mxu0 %v3910
      %4433 = vmatpush1.bf16.msra.mxu0 %v3909
      %4434 = vmatprep.subr.bf16.mxu0 %v3915
      %4435 = vmatpush1.bf16.msra.mxu0 %v3914
      %4436 = vmatprep.subr.bf16.mxu0 %v3920
      %4437 = vmatpush1.bf16.msra.mxu0 %v3919
      %4438 = vmatprep.mubr.bf16.mxu0 %v2246
      %4439 = vmatmul.mubr.bf16.gmra.mrb[0].mxu0 %v2245
      %v4440 = vpop.f32.mrb[0].mxu0
      %v4441 = vadd.f32 %v4400, %v4440
      %v4442 = vpop.f32.mrb[0].mxu0
      %v4443 = vadd.f32 %v4402, %v4442
      %v4444 = vpop.f32.mrb[0].mxu0
      %v4445 = vpop.f32.mrb[0].mxu0
      %4446 = vdwg.mxu0
      %4447 = vmatprep.subr.bf16.mxu0 %v3925
      %4448 = vmatpush1.bf16.msra.mxu0 %v3924
      %4449 = vmatprep.subr.bf16.mxu0 %v3930
      %4450 = vmatpush1.bf16.msra.mxu0 %v3929
      %4451 = vmatprep.subr.bf16.mxu0 %v3935
      %4452 = vmatpush1.bf16.msra.mxu0 %v3934
      %4453 = vmatprep.subr.bf16.mxu0 %v3940
      %4454 = vmatpush1.bf16.msra.mxu0 %v3939
      %4455 = vmatprep.subr.bf16.mxu0 %v3945
      %4456 = vmatpush1.bf16.msra.mxu0 %v3944
      %4457 = vmatprep.subr.bf16.mxu0 %v3950
      %4458 = vmatpush1.bf16.msra.mxu0 %v3949
      %4459 = vmatprep.subr.bf16.mxu0 %v3955
      %4460 = vmatpush1.bf16.msra.mxu0 %v3954
      %4461 = vmatprep.subr.bf16.mxu0 %v3960
      %4462 = vmatpush1.bf16.msra.mxu0 %v3959
      %4463 = vmatprep.subr.bf16.mxu0 %v3965
      %4464 = vmatpush1.bf16.msra.mxu0 %v3964
      %4465 = vmatprep.subr.bf16.mxu0 %v3970
      %4466 = vmatpush1.bf16.msra.mxu0 %v3969
      %4467 = vmatprep.subr.bf16.mxu0 %v3975
      %4468 = vmatpush1.bf16.msra.mxu0 %v3974
      %4469 = vmatprep.subr.bf16.mxu0 %v3980
      %4470 = vmatpush1.bf16.msra.mxu0 %v3979
      %4471 = vmatprep.subr.bf16.mxu0 %v3985
      %4472 = vmatpush1.bf16.msra.mxu0 %v3984
      %4473 = vmatprep.subr.bf16.mxu0 %v3990
      %4474 = vmatpush1.bf16.msra.mxu0 %v3989
      %4475 = vmatprep.subr.bf16.mxu0 %v3995
      %4476 = vmatpush1.bf16.msra.mxu0 %v3994
      %4477 = vmatprep.subr.bf16.mxu0 %v4000
      %4478 = vmatpush1.bf16.msra.mxu0 %v3999
      %4479 = vmatprep.mubr.bf16.mxu0 %v2248
      %4480 = vmatmul.mubr.bf16.gmra.mrb[0].mxu0 %v2247
      %v4481 = vpop.f32.mrb[0].mxu0
      %v4482 = vadd.f32 %v4441, %v4481
      %v4483 = vpop.f32.mrb[0].mxu0
      %v4484 = vadd.f32 %v4443, %v4483
      %v4485 = vpop.f32.mrb[0].mxu0
      %v4486 = vpop.f32.mrb[0].mxu0
      %4487 = vdwg.mxu0
      %4488 = vmatprep.subr.bf16.mxu0 %v3687
      %4489 = vmatpush1.bf16.msra.mxu0 %v3686
      %4490 = vmatprep.subr.bf16.mxu0 %v3692
      %4491 = vmatpush1.bf16.msra.mxu0 %v3691
      %4492 = vmatprep.subr.bf16.mxu0 %v3697
      %4493 = vmatpush1.bf16.msra.mxu0 %v3696
      %4494 = vmatprep.subr.bf16.mxu0 %v3702
      %4495 = vmatpush1.bf16.msra.mxu0 %v3701
      %4496 = vmatprep.subr.bf16.mxu0 %v3707
      %4497 = vmatpush1.bf16.msra.mxu0 %v3706
      %4498 = vmatprep.subr.bf16.mxu0 %v3712
      %4499 = vmatpush1.bf16.msra.mxu0 %v3711
      %4500 = vmatprep.subr.bf16.mxu0 %v3717
      %4501 = vmatpush1.bf16.msra.mxu0 %v3716
      %4502 = vmatprep.subr.bf16.mxu0 %v3722
      %4503 = vmatpush1.bf16.msra.mxu0 %v3721
      %4504 = vmatprep.subr.bf16.mxu0 %v3727
      %4505 = vmatpush1.bf16.msra.mxu0 %v3726
      %4506 = vmatprep.subr.bf16.mxu0 %v3732
      %4507 = vmatpush1.bf16.msra.mxu0 %v3731
      %4508 = vmatprep.subr.bf16.mxu0 %v3737
      %4509 = vmatpush1.bf16.msra.mxu0 %v3736
      %4510 = vmatprep.subr.bf16.mxu0 %v3742
      %4511 = vmatpush1.bf16.msra.mxu0 %v3741
      %4512 = vmatprep.subr.bf16.mxu0 %v3747
      %4513 = vmatpush1.bf16.msra.mxu0 %v3746
      %4514 = vmatprep.subr.bf16.mxu0 %v3752
      %4515 = vmatpush1.bf16.msra.mxu0 %v3751
      %4516 = vmatprep.subr.bf16.mxu0 %v3757
      %4517 = vmatpush1.bf16.msra.mxu0 %v3756
      %4518 = vmatprep.subr.bf16.mxu0 %v3762
      %4519 = vmatpush1.bf16.msra.mxu0 %v3761
      %4520 = vmatprep.mubr.bf16.mxu0 %v2242
      %4521 = vmatmul.mubr.bf16.gmra.mrb[0].mxu0 %v2241
      %v4522 = vpop.f32.mrb[0].mxu0
      %v4523 = vadd.f32 %v2646, %v4522
      %v4524 = vpop.f32.mrb[0].mxu0
      %v4525 = vadd.f32 %v2650, %v4524
      %v4526 = vpop.f32.mrb[0].mxu0
      %v4527 = vpop.f32.mrb[0].mxu0
      %4528 = vdwg.mxu0
      %4529 = vmatprep.subr.bf16.mxu0 %v3767
      %4530 = vmatpush1.bf16.msra.mxu0 %v3766
      %4531 = vmatprep.subr.bf16.mxu0 %v3772
      %4532 = vmatpush1.bf16.msra.mxu0 %v3771
      %4533 = vmatprep.subr.bf16.mxu0 %v3777
      %4534 = vmatpush1.bf16.msra.mxu0 %v3776
      %4535 = vmatprep.subr.bf16.mxu0 %v3782
      %4536 = vmatpush1.bf16.msra.mxu0 %v3781
      %4537 = vmatprep.subr.bf16.mxu0 %v3787
      %4538 = vmatpush1.bf16.msra.mxu0 %v3786
      %4539 = vmatprep.subr.bf16.mxu0 %v3792
      %4540 = vmatpush1.bf16.msra.mxu0 %v3791
      %4541 = vmatprep.subr.bf16.mxu0 %v3797
      %4542 = vmatpush1.bf16.msra.mxu0 %v3796
      %4543 = vmatprep.subr.bf16.mxu0 %v3802
      %4544 = vmatpush1.bf16.msra.mxu0 %v3801
      %4545 = vmatprep.subr.bf16.mxu0 %v3807
      %4546 = vmatpush1.bf16.msra.mxu0 %v3806
      %4547 = vmatprep.subr.bf16.mxu0 %v3812
      %4548 = vmatpush1.bf16.msra.mxu0 %v3811
      %4549 = vmatprep.subr.bf16.mxu0 %v3817
      %4550 = vmatpush1.bf16.msra.mxu0 %v3816
      %4551 = vmatprep.subr.bf16.mxu0 %v3822
      %4552 = vmatpush1.bf16.msra.mxu0 %v3821
      %4553 = vmatprep.subr.bf16.mxu0 %v3827
      %4554 = vmatpush1.bf16.msra.mxu0 %v3826
      %4555 = vmatprep.subr.bf16.mxu0 %v3832
      %4556 = vmatpush1.bf16.msra.mxu0 %v3831
      %4557 = vmatprep.subr.bf16.mxu0 %v3837
      %4558 = vmatpush1.bf16.msra.mxu0 %v3836
      %4559 = vmatprep.subr.bf16.mxu0 %v3842
      %4560 = vmatpush1.bf16.msra.mxu0 %v3841
      %4561 = vmatprep.mubr.bf16.mxu0 %v2244
      %4562 = vmatmul.mubr.bf16.gmra.mrb[0].mxu0 %v2243
      %v4563 = vpop.f32.mrb[0].mxu0
      %v4564 = vadd.f32 %v4523, %v4563
      %v4565 = vpop.f32.mrb[0].mxu0
      %v4566 = vadd.f32 %v4525, %v4565
      %v4567 = vpop.f32.mrb[0].mxu0
      %v4568 = vpop.f32.mrb[0].mxu0
      %4569 = vdwg.mxu0
      %4570 = vmatprep.subr.bf16.mxu0 %v3847
      %4571 = vmatpush1.bf16.msra.mxu0 %v3846
      %4572 = vmatprep.subr.bf16.mxu0 %v3852
      %4573 = vmatpush1.bf16.msra.mxu0 %v3851
      %4574 = vmatprep.subr.bf16.mxu0 %v3857
      %4575 = vmatpush1.bf16.msra.mxu0 %v3856
      %4576 = vmatprep.subr.bf16.mxu0 %v3862
      %4577 = vmatpush1.bf16.msra.mxu0 %v3861
      %4578 = vmatprep.subr.bf16.mxu0 %v3867
      %4579 = vmatpush1.bf16.msra.mxu0 %v3866
      %4580 = vmatprep.subr.bf16.mxu0 %v3872
      %4581 = vmatpush1.bf16.msra.mxu0 %v3871
      %4582 = vmatprep.subr.bf16.mxu0 %v3877
      %4583 = vmatpush1.bf16.msra.mxu0 %v3876
      %4584 = vmatprep.subr.bf16.mxu0 %v3882
      %4585 = vmatpush1.bf16.msra.mxu0 %v3881
      %4586 = vmatprep.subr.bf16.mxu0 %v3887
      %4587 = vmatpush1.bf16.msra.mxu0 %v3886
      %4588 = vmatprep.subr.bf16.mxu0 %v3892
      %4589 = vmatpush1.bf16.msra.mxu0 %v3891
      %4590 = vmatprep.subr.bf16.mxu0 %v3897
      %4591 = vmatpush1.bf16.msra.mxu0 %v3896
      %4592 = vmatprep.subr.bf16.mxu0 %v3902
      %4593 = vmatpush1.bf16.msra.mxu0 %v3901
      %4594 = vmatprep.subr.bf16.mxu0 %v3907
      %4595 = vmatpush1.bf16.msra.mxu0 %v3906
      %4596 = vmatprep.subr.bf16.mxu0 %v3912
      %4597 = vmatpush1.bf16.msra.mxu0 %v3911
      %4598 = vmatprep.subr.bf16.mxu0 %v3917
      %4599 = vmatpush1.bf16.msra.mxu0 %v3916
      %4600 = vmatprep.subr.bf16.mxu0 %v3922
      %4601 = vmatpush1.bf16.msra.mxu0 %v3921
      %4602 = vmatprep.mubr.bf16.mxu0 %v2246
      %4603 = vmatmul.mubr.bf16.gmra.mrb[0].mxu0 %v2245
      %v4604 = vpop.f32.mrb[0].mxu0
      %v4605 = vadd.f32 %v4564, %v4604
      %v4606 = vpop.f32.mrb[0].mxu0
      %v4607 = vadd.f32 %v4566, %v4606
      %v4608 = vpop.f32.mrb[0].mxu0
      %v4609 = vpop.f32.mrb[0].mxu0
      %4610 = vdwg.mxu0
      %4611 = vmatprep.subr.bf16.mxu0 %v3927
      %4612 = vmatpush1.bf16.msra.mxu0 %v3926
      %4613 = vmatprep.subr.bf16.mxu0 %v3932
      %4614 = vmatpush1.bf16.msra.mxu0 %v3931
      %4615 = vmatprep.subr.bf16.mxu0 %v3937
      %4616 = vmatpush1.bf16.msra.mxu0 %v3936
      %4617 = vmatprep.subr.bf16.mxu0 %v3942
      %4618 = vmatpush1.bf16.msra.mxu0 %v3941
      %4619 = vmatprep.subr.bf16.mxu0 %v3947
      %4620 = vmatpush1.bf16.msra.mxu0 %v3946
      %4621 = vmatprep.subr.bf16.mxu0 %v3952
      %4622 = vmatpush1.bf16.msra.mxu0 %v3951
      %4623 = vmatprep.subr.bf16.mxu0 %v3957
      %4624 = vmatpush1.bf16.msra.mxu0 %v3956
      %4625 = vmatprep.subr.bf16.mxu0 %v3962
      %4626 = vmatpush1.bf16.msra.mxu0 %v3961
      %4627 = vmatprep.subr.bf16.mxu0 %v3967
      %4628 = vmatpush1.bf16.msra.mxu0 %v3966
      %4629 = vmatprep.subr.bf16.mxu0 %v3972
      %4630 = vmatpush1.bf16.msra.mxu0 %v3971
      %4631 = vmatprep.subr.bf16.mxu0 %v3977
      %4632 = vmatpush1.bf16.msra.mxu0 %v3976
      %4633 = vmatprep.subr.bf16.mxu0 %v3982
      %4634 = vmatpush1.bf16.msra.mxu0 %v3981
      %4635 = vmatprep.subr.bf16.mxu0 %v3987
      %4636 = vmatpush1.bf16.msra.mxu0 %v3986
      %4637 = vmatprep.subr.bf16.mxu0 %v3992
      %4638 = vmatpush1.bf16.msra.mxu0 %v3991
      %4639 = vmatprep.subr.bf16.mxu0 %v3997
      %4640 = vmatpush1.bf16.msra.mxu0 %v3996
      %4641 = vmatprep.subr.bf16.mxu0 %v4002
      %4642 = vmatpush1.bf16.msra.mxu0 %v4001
      %4643 = vmatprep.mubr.bf16.mxu0 %v2248
      %4644 = vmatmul.mubr.bf16.gmra.mrb[0].mxu0 %v2247
      %v4645 = vpop.f32.mrb[0].mxu0
      %v4646 = vadd.f32 %v4605, %v4645
      %v4647 = vpop.f32.mrb[0].mxu0
      %v4648 = vadd.f32 %v4607, %v4647
      %v4649 = vpop.f32.mrb[0].mxu0
      %v4650 = vpop.f32.mrb[0].mxu0
      %4651 = vdwg.mxu0
      %4652 = vmatprep.subr.bf16.mxu0 0
      %4653 = vmatpush1.bf16.msra.mxu0 %v3688
      %4654 = vmatprep.subr.bf16.mxu0 0
      %4655 = vmatpush1.bf16.msra.mxu0 %v3693
      %4656 = vmatprep.subr.bf16.mxu0 0
      %4657 = vmatpush1.bf16.msra.mxu0 %v3698
      %4658 = vmatprep.subr.bf16.mxu0 0
      %4659 = vmatpush1.bf16.msra.mxu0 %v3703
      %4660 = vmatprep.subr.bf16.mxu0 0
      %4661 = vmatpush1.bf16.msra.mxu0 %v3708
      %4662 = vmatprep.subr.bf16.mxu0 0
      %4663 = vmatpush1.bf16.msra.mxu0 %v3713
      %4664 = vmatprep.subr.bf16.mxu0 0
      %4665 = vmatpush1.bf16.msra.mxu0 %v3718
      %4666 = vmatprep.subr.bf16.mxu0 0
      %4667 = vmatpush1.bf16.msra.mxu0 %v3723
      %4668 = vmatprep.subr.bf16.mxu0 0
      %4669 = vmatpush1.bf16.msra.mxu0 %v3728
      %4670 = vmatprep.subr.bf16.mxu0 0
      %4671 = vmatpush1.bf16.msra.mxu0 %v3733
      %4672 = vmatprep.subr.bf16.mxu0 0
      %4673 = vmatpush1.bf16.msra.mxu0 %v3738
      %4674 = vmatprep.subr.bf16.mxu0 0
      %4675 = vmatpush1.bf16.msra.mxu0 %v3743
      %4676 = vmatprep.subr.bf16.mxu0 0
      %4677 = vmatpush1.bf16.msra.mxu0 %v3748
      %4678 = vmatprep.subr.bf16.mxu0 0
      %4679 = vmatpush1.bf16.msra.mxu0 %v3753
      %4680 = vmatprep.subr.bf16.mxu0 0
      %4681 = vmatpush1.bf16.msra.mxu0 %v3758
      %4682 = vmatprep.subr.bf16.mxu0 0
      %4683 = vmatpush1.bf16.msra.mxu0 %v3763
      %4684 = vmatprep.mubr.bf16.mxu0 %v2242
      %4685 = vmatmul.mubr.bf16.gmra.mrb[0].mxu0 %v2241
      %v4686 = vpop.f32.mrb[0].mxu0
      %v4687 = vadd.f32 %v2654, %v4686
      %v4688 = vpop.f32.mrb[0].mxu0
      %v4689 = vpop.f32.mrb[0].mxu0
      %v4690 = vpop.f32.mrb[0].mxu0
      %4691 = vdwg.mxu0
      %4692 = vmatprep.subr.bf16.mxu0 0
      %4693 = vmatpush1.bf16.msra.mxu0 %v3768
      %4694 = vmatprep.subr.bf16.mxu0 0
      %4695 = vmatpush1.bf16.msra.mxu0 %v3773
      %4696 = vmatprep.subr.bf16.mxu0 0
      %4697 = vmatpush1.bf16.msra.mxu0 %v3778
      %4698 = vmatprep.subr.bf16.mxu0 0
      %4699 = vmatpush1.bf16.msra.mxu0 %v3783
      %4700 = vmatprep.subr.bf16.mxu0 0
      %4701 = vmatpush1.bf16.msra.mxu0 %v3788
      %4702 = vmatprep.subr.bf16.mxu0 0
      %4703 = vmatpush1.bf16.msra.mxu0 %v3793
      %4704 = vmatprep.subr.bf16.mxu0 0
      %4705 = vmatpush1.bf16.msra.mxu0 %v3798
      %4706 = vmatprep.subr.bf16.mxu0 0
      %4707 = vmatpush1.bf16.msra.mxu0 %v3803
      %4708 = vmatprep.subr.bf16.mxu0 0
      %4709 = vmatpush1.bf16.msra.mxu0 %v3808
      %4710 = vmatprep.subr.bf16.mxu0 0
      %4711 = vmatpush1.bf16.msra.mxu0 %v3813
      %4712 = vmatprep.subr.bf16.mxu0 0
      %4713 = vmatpush1.bf16.msra.mxu0 %v3818
      %4714 = vmatprep.subr.bf16.mxu0 0
      %4715 = vmatpush1.bf16.msra.mxu0 %v3823
      %4716 = vmatprep.subr.bf16.mxu0 0
      %4717 = vmatpush1.bf16.msra.mxu0 %v3828
      %4718 = vmatprep.subr.bf16.mxu0 0
      %4719 = vmatpush1.bf16.msra.mxu0 %v3833
      %4720 = vmatprep.subr.bf16.mxu0 0
      %4721 = vmatpush1.bf16.msra.mxu0 %v3838
      %4722 = vmatprep.subr.bf16.mxu0 0
      %4723 = vmatpush1.bf16.msra.mxu0 %v3843
      %4724 = vmatprep.mubr.bf16.mxu0 %v2244
      %4725 = vmatmul.mubr.bf16.gmra.mrb[0].mxu0 %v2243
      %v4726 = vpop.f32.mrb[0].mxu0
      %v4727 = vadd.f32 %v4687, %v4726
      %v4728 = vpop.f32.mrb[0].mxu0
      %v4729 = vpop.f32.mrb[0].mxu0
      %v4730 = vpop.f32.mrb[0].mxu0
      %4731 = vdwg.mxu0
      %4732 = vmatprep.subr.bf16.mxu0 0
      %4733 = vmatpush1.bf16.msra.mxu0 %v3848
      %4734 = vmatprep.subr.bf16.mxu0 0
      %4735 = vmatpush1.bf16.msra.mxu0 %v3853
      %4736 = vmatprep.subr.bf16.mxu0 0
      %4737 = vmatpush1.bf16.msra.mxu0 %v3858
      %4738 = vmatprep.subr.bf16.mxu0 0
      %4739 = vmatpush1.bf16.msra.mxu0 %v3863
      %4740 = vmatprep.subr.bf16.mxu0 0
      %4741 = vmatpush1.bf16.msra.mxu0 %v3868
      %4742 = vmatprep.subr.bf16.mxu0 0
      %4743 = vmatpush1.bf16.msra.mxu0 %v3873
      %4744 = vmatprep.subr.bf16.mxu0 0
      %4745 = vmatpush1.bf16.msra.mxu0 %v3878
      %4746 = vmatprep.subr.bf16.mxu0 0
      %4747 = vmatpush1.bf16.msra.mxu0 %v3883
      %4748 = vmatprep.subr.bf16.mxu0 0
      %4749 = vmatpush1.bf16.msra.mxu0 %v3888
      %4750 = vmatprep.subr.bf16.mxu0 0
      %4751 = vmatpush1.bf16.msra.mxu0 %v3893
      %4752 = vmatprep.subr.bf16.mxu0 0
      %4753 = vmatpush1.bf16.msra.mxu0 %v3898
      %4754 = vmatprep.subr.bf16.mxu0 0
      %4755 = vmatpush1.bf16.msra.mxu0 %v3903
      %4756 = vmatprep.subr.bf16.mxu0 0
      %4757 = vmatpush1.bf16.msra.mxu0 %v3908
      %4758 = vmatprep.subr.bf16.mxu0 0
      %4759 = vmatpush1.bf16.msra.mxu0 %v3913
      %4760 = vmatprep.subr.bf16.mxu0 0
      %4761 = vmatpush1.bf16.msra.mxu0 %v3918
      %4762 = vmatprep.subr.bf16.mxu0 0
      %4763 = vmatpush1.bf16.msra.mxu0 %v3923
      %4764 = vmatprep.mubr.bf16.mxu0 %v2246
      %4765 = vmatmul.mubr.bf16.gmra.mrb[0].mxu0 %v2245
      %v4766 = vpop.f32.mrb[0].mxu0
      %v4767 = vadd.f32 %v4727, %v4766
      %v4768 = vpop.f32.mrb[0].mxu0
      %v4769 = vpop.f32.mrb[0].mxu0
      %v4770 = vpop.f32.mrb[0].mxu0
      %4771 = vdwg.mxu0
      %4772 = vmatprep.subr.bf16.mxu0 0
      %4773 = vmatpush1.bf16.msra.mxu0 %v3928
      %4774 = vmatprep.subr.bf16.mxu0 0
      %4775 = vmatpush1.bf16.msra.mxu0 %v3933
      %4776 = vmatprep.subr.bf16.mxu0 0
      %4777 = vmatpush1.bf16.msra.mxu0 %v3938
      %4778 = vmatprep.subr.bf16.mxu0 0
      %4779 = vmatpush1.bf16.msra.mxu0 %v3943
      %4780 = vmatprep.subr.bf16.mxu0 0
      %4781 = vmatpush1.bf16.msra.mxu0 %v3948
      %4782 = vmatprep.subr.bf16.mxu0 0
      %4783 = vmatpush1.bf16.msra.mxu0 %v3953
      %4784 = vmatprep.subr.bf16.mxu0 0
      %4785 = vmatpush1.bf16.msra.mxu0 %v3958
      %4786 = vmatprep.subr.bf16.mxu0 0
      %4787 = vmatpush1.bf16.msra.mxu0 %v3963
      %4788 = vmatprep.subr.bf16.mxu0 0
      %4789 = vmatpush1.bf16.msra.mxu0 %v3968
      %4790 = vmatprep.subr.bf16.mxu0 0
      %4791 = vmatpush1.bf16.msra.mxu0 %v3973
      %4792 = vmatprep.subr.bf16.mxu0 0
      %4793 = vmatpush1.bf16.msra.mxu0 %v3978
      %4794 = vmatprep.subr.bf16.mxu0 0
      %4795 = vmatpush1.bf16.msra.mxu0 %v3983
      %4796 = vmatprep.subr.bf16.mxu0 0
      %4797 = vmatpush1.bf16.msra.mxu0 %v3988
      %4798 = vmatprep.subr.bf16.mxu0 0
      %4799 = vmatpush1.bf16.msra.mxu0 %v3993
      %4800 = vmatprep.subr.bf16.mxu0 0
      %4801 = vmatpush1.bf16.msra.mxu0 %v3998
      %4802 = vmatprep.subr.bf16.mxu0 0
      %4803 = vmatpush1.bf16.msra.mxu0 %v4003
      %4804 = vmatprep.mubr.bf16.mxu0 %v2248
      %4805 = vmatmul.mubr.bf16.gmra.mrb[0].mxu0 %v2247
      %v4806 = vpop.f32.mrb[0].mxu0
      %v4807 = vadd.f32 %v4767, %v4806
      %v4808 = vpop.f32.mrb[0].mxu0
      %v4809 = vpop.f32.mrb[0].mxu0
      %v4810 = vpop.f32.mrb[0].mxu0
      %4811 = vdwg.mxu0
      %4812 = vst [vmem:[%s251] sm:$0xff] %v4482
      %4813 = vst [vmem:[%s251 + $0x8] sm:$0xff] %v4484
      %4814 = vst [vmem:[%s251 + $0x10] sm:$0xff] %v4646
      %4815 = vst [vmem:[%s251 + $0x18] sm:$0xff] %v4648
      %4816 = vst [vmem:[%s251 + $0x20] sm:$0xff] %v4807
      %p4817 = scmp.lt.s32.totalorder %s17, 1
      %s4818 = scalar_select %p4817, %s17, 1
      %s4819 = smul.addr %s4818, 5
      %s4820 = smul.addr %s4819, 8
      %s4821 = scalar_lea.vmem %s6, %s4820
      // Predicated region
      $region45: #{part_seg_forward.3} parent=43 // pred_check
        %p4822 = pneg %p166
      $region46: #{part_seg_forward.3} parent=43 // pred_check_branch
        %4824 = sbr.rel (%p4822) target = $region48
      $region47: #{part_seg_forward.3} parent=43 // pred_region
        _
      $region48: #{part_seg_forward.3} parent=43 // pred_fallthru
        _
    $region44: #{part_seg_forward.3} parent=5 // pred_fallthru
      _
    %p4825 = scmp.le.s32.totalorder 2, %s12
    // Predicated region
    $region49: #{part_seg_forward.3} parent=5 // pred_check
      %p4826 = pneg %p4825
    $region50: #{part_seg_forward.3} parent=5 // pred_check_branch
      %4828 = sbr.rel (%p4826) target = $region52
    $region51: #{part_seg_forward.3} parent=5 // pred_region
      %s4829 = ssub.s32 %s12, 2
      // Predicated region
      $region53: #{part_seg_forward.3} parent=51 // pred_check
        %p4830 = pneg %p172
      $region54: #{part_seg_forward.3} parent=51 // pred_check_branch
        %4832 = sbr.rel (%p4830) target = $region56
      $region55: #{part_seg_forward.3} parent=51 // pred_region
        %p4833 = scmp.lt.s32.totalorder %s18, 1
        %s4834 = scalar_select %p4833, %s18, 1
        %s4835 = smul.addr %s4834, 5
        %s4836 = smul.addr %s4835, 8
        %s4837 = scalar_lea.vmem %s6, %s4836
      $region56: #{part_seg_forward.3} parent=51 // pred_fallthru
        _
    $region52: #{part_seg_forward.3} parent=5 // pred_fallthru
      _
  $region6: #{part_seg_forward.3} parent=0 // loop_footer
    %s16 = sadd.s32 1, %s12
  $region7: #{part_seg_forward.3} parent=0 // loop_footer_branch
    %11 = sbr.rel target = $region3
  $region8: #{part_seg_forward.3} parent=0 // loop_exit
    _

</llo_original>
